<compile_context>
chip_gen: v7x
topology: tpu7x:2x2x1
jax: 0.10.0
libtpu: 0.0.40
codegen_flags: <defaults>
</compile_context>

<pallas_src>
import functools

import jax
import jax.numpy as jnp
from jax.experimental import pallas as pl
from jax.experimental.pallas import tpu as pltpu


_TM_MAX = 256                       # M tile (multiple of 8, per perf review)
_VMEM_LIMIT = 48 * 1024 * 1024      # explicit budget, safe on v7x's 64 MiB


def _round_up(x, m):
    return (x + m - 1) // m * m


# ----------------------------------------------------------------------------
# Pallas kernels
# ----------------------------------------------------------------------------
def _matmul_bias_kernel(a_ref, w_ref, b_ref, o_ref):
    # a: (TM, K) bf16 im2col patches, w: (K, Cout) bf16, b: (1, Cout) f32
    acc = jnp.dot(a_ref[...], w_ref[...], preferred_element_type=jnp.float32)
    o_ref[...] = (acc + b_ref[...]).astype(o_ref.dtype)     # f32 epilogue


def _maxpool_kernel(taps_ref, o_ref, acc_ref):
    # taps block: (1, TM, C); running max over the tap grid axis in acc_ref.
    t = pl.program_id(1)

    @pl.when(t == 0)
    def _():
        acc_ref[...] = jnp.full(acc_ref.shape, -jnp.inf, acc_ref.dtype)

    acc_ref[...] = jnp.maximum(acc_ref[...], taps_ref[0].astype(jnp.float32))

    @pl.when(t == pl.num_programs(1) - 1)
    def _():
        o_ref[...] = acc_ref[...].astype(o_ref.dtype)


# ----------------------------------------------------------------------------
# Pallas call wrappers
# ----------------------------------------------------------------------------
def _matmul_bias(a, w, b):
    """a: (M, K) bf16, w: (K, N) bf16, b: (1, N) f32 -> (M, N) f32."""
    M, K = a.shape
    N = w.shape[1]

    tm = min(_TM_MAX, _round_up(M, 8))
    m_pad = _round_up(M, tm)
    if m_pad != M:
        a = jnp.pad(a, ((0, m_pad - M), (0, 0)))   # zero rows, sliced off below

    out = pl.pallas_call(
        _matmul_bias_kernel,
        out_shape=jax.ShapeDtypeStruct((m_pad, N), jnp.float32),
        grid=(m_pad // tm,),
        in_specs=[
            pl.BlockSpec((tm, K), lambda i: (i, 0)),
            pl.BlockSpec((K, N), lambda i: (0, 0)),   # constant idx: no re-DMA
            pl.BlockSpec((1, N), lambda i: (0, 0)),
        ],
        out_specs=pl.BlockSpec((tm, N), lambda i: (i, 0)),
        compiler_params=pltpu.CompilerParams(
            dimension_semantics=("parallel",),
            vmem_limit_bytes=_VMEM_LIMIT,
        ),
    )(a, w, b)

    return out[:M] if m_pad != M else out


def _extract_taps(x, kh, kw, sh, sw):
    """x: (N, H, W, C) (already padded). Returns list of (N, Ho, Wo, C) taps."""
    N, H, W, C = x.shape
    Ho = (H - kh) // sh + 1
    Wo = (W - kw) // sw + 1
    taps = []
    for i in range(kh):
        for j in range(kw):
            taps.append(
                jax.lax.slice(
                    x,
                    (0, i, j, 0),
                    (N, i + sh * (Ho - 1) + 1, j + sw * (Wo - 1) + 1, C),
                    (1, sh, sw, 1),
                )
            )
    return taps, (N, Ho, Wo)


def conv2d(x, w, b, stride, padding):
    """x: (N,H,W,Cin) NHWC; w: (KH,KW,Cin,Cout); b: (Cout,)."""
    kh, kw, cin, cout = w.shape
    sh, sw = (stride, stride) if isinstance(stride, int) else stride

    if padding == "same":
        ph, pw = (kh - 1) // 2, (kw - 1) // 2   # symmetric: all kernels odd
        if ph or pw:
            x = jnp.pad(x, ((0, 0), (ph, ph), (pw, pw), (0, 0)))

    if kh == 1 and kw == 1 and sh == 1 and sw == 1:
        # 1x1 conv: no im2col needed, just flatten spatial dims.
        N, Ho, Wo, _ = x.shape
        patches = x.reshape(N * Ho * Wo, cin)
    else:
        taps, (N, Ho, Wo) = _extract_taps(x, kh, kw, sh, sw)
        # (N*Ho*Wo, KH*KW*Cin), ordered (kh, kw, cin) to match w.reshape below.
        patches = jnp.stack(taps, axis=3).reshape(N * Ho * Wo, kh * kw * cin)

    wm = w.reshape(kh * kw * cin, cout)
    out = _matmul_bias(
        patches.astype(jnp.bfloat16),          # bf16 MXU operands
        wm.astype(jnp.bfloat16),
        b.reshape(1, cout).astype(jnp.float32),  # f32 bias / accumulation
    )
    return out.reshape(N, Ho, Wo, cout)


def maxpool2d(x, k, s):
    """x: (N,H,W,C) NHWC; kernel k, stride s, no padding (nn.MaxPool2d)."""
    taps, (N, Ho, Wo) = _extract_taps(x, k, k, s, s)
    C = x.shape[-1]
    T = k * k
    M = N * Ho * Wo

    tm = min(_TM_MAX, _round_up(M, 8))
    m_pad = _round_up(M, tm)

    taps = jnp.stack(taps, axis=0).reshape(T, M, C)
    if m_pad != M:
        taps = jnp.pad(taps, ((0, 0), (0, m_pad - M), (0, 0)))

    out = pl.pallas_call(
        _maxpool_kernel,
        out_shape=jax.ShapeDtypeStruct((m_pad, C), x.dtype),
        grid=(m_pad // tm, T),                     # T = reduction axis (last)
        in_specs=[pl.BlockSpec((1, tm, C), lambda i, t: (t, i, 0))],
        out_specs=pl.BlockSpec((tm, C), lambda i, t: (i, 0)),
        scratch_shapes=[pltpu.VMEM((tm, C), jnp.float32)],
        compiler_params=pltpu.CompilerParams(
            dimension_semantics=("parallel", "arbitrary"),
            vmem_limit_bytes=_VMEM_LIMIT,
        ),
    )(taps)

    out = out[:M] if m_pad != M else out
    return out.reshape(N, Ho, Wo, C)


# ----------------------------------------------------------------------------
# Parameter construction (deterministic, synthetic)
# ----------------------------------------------------------------------------
def _make_conv_params(key, kh, kw, cin, cout):
    kw_key, kb_key = jax.random.split(key)
    fan_in = kh * kw * cin
    w = jax.random.normal(kw_key, (kh, kw, cin, cout), jnp.float32) * (fan_in ** -0.5)
    b = jax.random.normal(kb_key, (cout,), jnp.float32) * 0.01
    return {"w": w, "b": b}


def init_stem_params(key, in_channel):
    specs = {
        # name: (kh, kw, cin, cout)
        "b1c1_0": (3, 3, in_channel, 32),
        "b1c1_1": (3, 3, 32, 32),
        "b1c1_2": (3, 3, 32, 64),
        "b1c2":   (3, 3, 64, 96),
        "b2c1_0": (1, 1, 160, 64),
        "b2c1_1": (7, 1, 64, 64),
        "b2c1_2": (1, 7, 64, 64),
        "b2c1_3": (3, 3, 64, 96),
        "b2c2_0": (1, 1, 160, 64),
        "b2c2_1": (3, 3, 64, 96),
        "b3c":    (3, 3, 192, 192),
    }
    keys = jax.random.split(key, len(specs))
    return {name: _make_conv_params(k, *spec)
            for k, (name, spec) in zip(keys, specs.items())}


# ----------------------------------------------------------------------------
# Stem forward
# ----------------------------------------------------------------------------
@functools.partial(jax.jit, static_argnums=())
def stem_forward(params, x_nchw):
    p = params
    x = jnp.transpose(x_nchw, (0, 2, 3, 1))  # NCHW -> NHWC

    # b1_conv1 = Seq(Conv(in,32,3,s2,valid), Conv(32,32,3,s1,valid), Conv(32,64,3,s1,same))
    h = conv2d(x, p["b1c1_0"]["w"], p["b1c1_0"]["b"], 2, "valid")
    h = conv2d(h, p["b1c1_1"]["w"], p["b1c1_1"]["b"], 1, "valid")
    b1_conv1 = conv2d(h, p["b1c1_2"]["w"], p["b1c1_2"]["b"], 1, "same")

    # b1 = cat(Conv(64,96,3,s2,valid)(b1_conv1), MaxPool(3,2)(b1_conv1)), channel axis
    b1 = jnp.concatenate(
        [conv2d(b1_conv1, p["b1c2"]["w"], p["b1c2"]["b"], 2, "valid"),
         maxpool2d(b1_conv1, 3, 2)],
        axis=-1,
    )

    # b2 branch 1: 1x1 same, (7,1) same, (1,7) same, 3x3 valid
    h = conv2d(b1, p["b2c1_0"]["w"], p["b2c1_0"]["b"], 1, "same")
    h = conv2d(h, p["b2c1_1"]["w"], p["b2c1_1"]["b"], 1, "same")
    h = conv2d(h, p["b2c1_2"]["w"], p["b2c1_2"]["b"], 1, "same")
    b2a = conv2d(h, p["b2c1_3"]["w"], p["b2c1_3"]["b"], 1, "valid")

    # b2 branch 2: 1x1 same, 3x3 valid
    h = conv2d(b1, p["b2c2_0"]["w"], p["b2c2_0"]["b"], 1, "same")
    b2b = conv2d(h, p["b2c2_1"]["w"], p["b2c2_1"]["b"], 1, "valid")

    b2 = jnp.concatenate([b2a, b2b], axis=-1)

    # b3 = cat(MaxPool(3,2)(b2), Conv(192,192,3,s2,valid)(b2))
    b3 = jnp.concatenate(
        [maxpool2d(b2, 3, 2),
         conv2d(b2, p["b3c"]["w"], p["b3c"]["b"], 2, "valid")],
        axis=-1,
    )

    return jnp.transpose(b3, (0, 3, 1, 2))  # NHWC -> NCHW


# ----------------------------------------------------------------------------
if __name__ == "__main__":
    key = jax.random.PRNGKey(0)
    pkey, xkey = jax.random.split(key)

    in_channel = 4
    # 35x35 is the smallest-ish spatial size giving a non-degenerate 2x2 output.
    x = jax.random.normal(xkey, (2, in_channel, 35, 35), jnp.float32)  # NCHW

    params = init_stem_params(pkey, in_channel)

    out = stem_forward(params, x)
    out = jax.block_until_ready(out)

    assert out.shape == (2, 384, 2, 2), out.shape
    assert jnp.all(jnp.isfinite(out))
    print("KERNEL_OK")
</pallas_src>

<mosaic_0001>
module attributes {stable_mosaic.version = 11 : i64} {
  func.func @_matmul_bias_kernel(%arg0: i32, %arg1: memref<256x36xbf16, #tpu.memory_space<vmem>>, %arg2: memref<36x32xbf16, #tpu.memory_space<vmem>>, %arg3: memref<1x32xf32, #tpu.memory_space<vmem>>, %arg4: memref<256x32xf32, #tpu.memory_space<vmem>>) attributes {dimension_semantics = [#tpu.dimension_semantics<parallel>], iteration_bounds = array<i64: 3>, scalar_prefetch = 0 : i64, scratch_operands = 0 : i64, tpu.core_type = #tpu.core_type<tc>, window_params = [{transform_indices = @transform_0, window_bounds = array<i64: 256, 36>}, {pipeline_mode = #tpu.pipeline_mode<synchronous>, transform_indices = @transform_1, window_bounds = array<i64: 36, 32>}, {pipeline_mode = #tpu.pipeline_mode<synchronous>, transform_indices = @transform_2, window_bounds = array<i64: 1, 32>}, {transform_indices = @transform_3, window_bounds = array<i64: 256, 32>}]} {
    %c0 = arith.constant 0 : index
    %c0_0 = arith.constant 0 : index
    %0 = vector.load %arg1[%c0, %c0_0] : memref<256x36xbf16, #tpu.memory_space<vmem>>, vector<256x36xbf16>
    %c0_1 = arith.constant 0 : index
    %c0_2 = arith.constant 0 : index
    %1 = vector.load %arg2[%c0_1, %c0_2] : memref<36x32xbf16, #tpu.memory_space<vmem>>, vector<36x32xbf16>
    %cst = arith.constant dense<0.000000e+00> : vector<256x32xf32>
    %2 = tpu.matmul %0, %1, %cst {dimension_numbers = #tpu.dot_dimension_numbers<[1], [0], [0], [1], [0, 0, 1, 1], [], []>} : vector<256x36xbf16>, vector<36x32xbf16>, vector<256x32xf32> -> vector<256x32xf32>
    %c0_3 = arith.constant 0 : index
    %c0_4 = arith.constant 0 : index
    %3 = vector.load %arg3[%c0_3, %c0_4] : memref<1x32xf32, #tpu.memory_space<vmem>>, vector<1x32xf32>
    %4 = vector.broadcast %3 : vector<1x32xf32> to vector<256x32xf32>
    %5 = arith.addf %2, %4 : vector<256x32xf32>
    %c0_5 = arith.constant 0 : index
    %c0_6 = arith.constant 0 : index
    %6 = vector.load %arg4[%c0_5, %c0_6] : memref<256x32xf32, #tpu.memory_space<vmem>>, vector<256x32xf32>
    tpu.vector_store %arg4[%c0_5, %c0_6], %5 {strides = array<i32>} : memref<256x32xf32, #tpu.memory_space<vmem>>, vector<256x32xf32>,
    return
  }
  func.func @transform_0(%arg0: i32) -> (i32, i32) {
    %c0_i32 = arith.constant 0 : i32
    %c0_i32_0 = arith.constant 0 : i32
    return %arg0, %c0_i32 : i32, i32
  }
  func.func @transform_1(%arg0: i32) -> (i32, i32) {
    %c0_i32 = arith.constant 0 : i32
    %c0_i32_0 = arith.constant 0 : i32
    %c0_i32_1 = arith.constant 0 : i32
    return %c0_i32, %c0_i32_0 : i32, i32
  }
  func.func @transform_2(%arg0: i32) -> (i32, i32) {
    %c0_i32 = arith.constant 0 : i32
    %c0_i32_0 = arith.constant 0 : i32
    %c0_i32_1 = arith.constant 0 : i32
    return %c0_i32, %c0_i32_0 : i32, i32
  }
  func.func @transform_3(%arg0: i32) -> (i32, i32) {
    %c0_i32 = arith.constant 0 : i32
    %c0_i32_0 = arith.constant 0 : i32
    return %arg0, %c0_i32 : i32, i32
  }
}

module attributes {stable_mosaic.version = 11 : i64} {
  func.func @_matmul_bias_kernel(%arg0: i32, %arg1: memref<256x288xbf16, #tpu.memory_space<vmem>>, %arg2: memref<288x32xbf16, #tpu.memory_space<vmem>>, %arg3: memref<1x32xf32, #tpu.memory_space<vmem>>, %arg4: memref<256x32xf32, #tpu.memory_space<vmem>>) attributes {dimension_semantics = [#tpu.dimension_semantics<parallel>], iteration_bounds = array<i64: 2>, scalar_prefetch = 0 : i64, scratch_operands = 0 : i64, tpu.core_type = #tpu.core_type<tc>, window_params = [{transform_indices = @transform_0, window_bounds = array<i64: 256, 288>}, {pipeline_mode = #tpu.pipeline_mode<synchronous>, transform_indices = @transform_1, window_bounds = array<i64: 288, 32>}, {pipeline_mode = #tpu.pipeline_mode<synchronous>, transform_indices = @transform_2, window_bounds = array<i64: 1, 32>}, {transform_indices = @transform_3, window_bounds = array<i64: 256, 32>}]} {
    %c0 = arith.constant 0 : index
    %c0_0 = arith.constant 0 : index
    %0 = vector.load %arg1[%c0, %c0_0] : memref<256x288xbf16, #tpu.memory_space<vmem>>, vector<256x288xbf16>
    %c0_1 = arith.constant 0 : index
    %c0_2 = arith.constant 0 : index
    %1 = vector.load %arg2[%c0_1, %c0_2] : memref<288x32xbf16, #tpu.memory_space<vmem>>, vector<288x32xbf16>
    %cst = arith.constant dense<0.000000e+00> : vector<256x32xf32>
    %2 = tpu.matmul %0, %1, %cst {dimension_numbers = #tpu.dot_dimension_numbers<[1], [0], [0], [1], [0, 0, 1, 1], [], []>} : vector<256x288xbf16>, vector<288x32xbf16>, vector<256x32xf32> -> vector<256x32xf32>
    %c0_3 = arith.constant 0 : index
    %c0_4 = arith.constant 0 : index
    %3 = vector.load %arg3[%c0_3, %c0_4] : memref<1x32xf32, #tpu.memory_space<vmem>>, vector<1x32xf32>
    %4 = vector.broadcast %3 : vector<1x32xf32> to vector<256x32xf32>
    %5 = arith.addf %2, %4 : vector<256x32xf32>
    %c0_5 = arith.constant 0 : index
    %c0_6 = arith.constant 0 : index
    %6 = vector.load %arg4[%c0_5, %c0_6] : memref<256x32xf32, #tpu.memory_space<vmem>>, vector<256x32xf32>
    tpu.vector_store %arg4[%c0_5, %c0_6], %5 {strides = array<i32>} : memref<256x32xf32, #tpu.memory_space<vmem>>, vector<256x32xf32>,
    return
  }
  func.func @transform_0(%arg0: i32) -> (i32, i32) {
    %c0_i32 = arith.constant 0 : i32
    %c0_i32_0 = arith.constant 0 : i32
    return %arg0, %c0_i32 : i32, i32
  }
  func.func @transform_1(%arg0: i32) -> (i32, i32) {
    %c0_i32 = arith.constant 0 : i32
    %c0_i32_0 = arith.constant 0 : i32
    %c0_i32_1 = arith.constant 0 : i32
    return %c0_i32, %c0_i32_0 : i32, i32
  }
  func.func @transform_2(%arg0: i32) -> (i32, i32) {
    %c0_i32 = arith.constant 0 : i32
    %c0_i32_0 = arith.constant 0 : i32
    %c0_i32_1 = arith.constant 0 : i32
    return %c0_i32, %c0_i32_0 : i32, i32
  }
  func.func @transform_3(%arg0: i32) -> (i32, i32) {
    %c0_i32 = arith.constant 0 : i32
    %c0_i32_0 = arith.constant 0 : i32
    return %arg0, %c0_i32 : i32, i32
  }
}

module attributes {stable_mosaic.version = 11 : i64} {
  func.func @_matmul_bias_kernel(%arg0: i32, %arg1: memref<256x288xbf16, #tpu.memory_space<vmem>>, %arg2: memref<288x64xbf16, #tpu.memory_space<vmem>>, %arg3: memref<1x64xf32, #tpu.memory_space<vmem>>, %arg4: memref<256x64xf32, #tpu.memory_space<vmem>>) attributes {dimension_semantics = [#tpu.dimension_semantics<parallel>], iteration_bounds = array<i64: 2>, scalar_prefetch = 0 : i64, scratch_operands = 0 : i64, tpu.core_type = #tpu.core_type<tc>, window_params = [{transform_indices = @transform_0, window_bounds = array<i64: 256, 288>}, {pipeline_mode = #tpu.pipeline_mode<synchronous>, transform_indices = @transform_1, window_bounds = array<i64: 288, 64>}, {pipeline_mode = #tpu.pipeline_mode<synchronous>, transform_indices = @transform_2, window_bounds = array<i64: 1, 64>}, {transform_indices = @transform_3, window_bounds = array<i64: 256, 64>}]} {
    %c0 = arith.constant 0 : index
    %c0_0 = arith.constant 0 : index
    %0 = vector.load %arg1[%c0, %c0_0] : memref<256x288xbf16, #tpu.memory_space<vmem>>, vector<256x288xbf16>
    %c0_1 = arith.constant 0 : index
    %c0_2 = arith.constant 0 : index
    %1 = vector.load %arg2[%c0_1, %c0_2] : memref<288x64xbf16, #tpu.memory_space<vmem>>, vector<288x64xbf16>
    %cst = arith.constant dense<0.000000e+00> : vector<256x64xf32>
    %2 = tpu.matmul %0, %1, %cst {dimension_numbers = #tpu.dot_dimension_numbers<[1], [0], [0], [1], [0, 0, 1, 1], [], []>} : vector<256x288xbf16>, vector<288x64xbf16>, vector<256x64xf32> -> vector<256x64xf32>
    %c0_3 = arith.constant 0 : index
    %c0_4 = arith.constant 0 : index
    %3 = vector.load %arg3[%c0_3, %c0_4] : memref<1x64xf32, #tpu.memory_space<vmem>>, vector<1x64xf32>
    %4 = vector.broadcast %3 : vector<1x64xf32> to vector<256x64xf32>
    %5 = arith.addf %2, %4 : vector<256x64xf32>
    %c0_5 = arith.constant 0 : index
    %c0_6 = arith.constant 0 : index
    %6 = vector.load %arg4[%c0_5, %c0_6] : memref<256x64xf32, #tpu.memory_space<vmem>>, vector<256x64xf32>
    tpu.vector_store %arg4[%c0_5, %c0_6], %5 {strides = array<i32>} : memref<256x64xf32, #tpu.memory_space<vmem>>, vector<256x64xf32>,
    return
  }
  func.func @transform_0(%arg0: i32) -> (i32, i32) {
    %c0_i32 = arith.constant 0 : i32
    %c0_i32_0 = arith.constant 0 : i32
    return %arg0, %c0_i32 : i32, i32
  }
  func.func @transform_1(%arg0: i32) -> (i32, i32) {
    %c0_i32 = arith.constant 0 : i32
    %c0_i32_0 = arith.constant 0 : i32
    %c0_i32_1 = arith.constant 0 : i32
    return %c0_i32, %c0_i32_0 : i32, i32
  }
  func.func @transform_2(%arg0: i32) -> (i32, i32) {
    %c0_i32 = arith.constant 0 : i32
    %c0_i32_0 = arith.constant 0 : i32
    %c0_i32_1 = arith.constant 0 : i32
    return %c0_i32, %c0_i32_0 : i32, i32
  }
  func.func @transform_3(%arg0: i32) -> (i32, i32) {
    %c0_i32 = arith.constant 0 : i32
    %c0_i32_0 = arith.constant 0 : i32
    return %arg0, %c0_i32 : i32, i32
  }
}

module attributes {stable_mosaic.version = 11 : i64} {
  func.func @_matmul_bias_kernel(%arg0: i32, %arg1: memref<104x576xbf16, #tpu.memory_space<vmem>>, %arg2: memref<576x96xbf16, #tpu.memory_space<vmem>>, %arg3: memref<1x96xf32, #tpu.memory_space<vmem>>, %arg4: memref<104x96xf32, #tpu.memory_space<vmem>>) attributes {dimension_semantics = [#tpu.dimension_semantics<parallel>], iteration_bounds = array<i64: 1>, scalar_prefetch = 0 : i64, scratch_operands = 0 : i64, tpu.core_type = #tpu.core_type<tc>, window_params = [{transform_indices = @transform_0, window_bounds = array<i64: 104, 576>}, {pipeline_mode = #tpu.pipeline_mode<synchronous>, transform_indices = @transform_1, window_bounds = array<i64: 576, 96>}, {pipeline_mode = #tpu.pipeline_mode<synchronous>, transform_indices = @transform_2, window_bounds = array<i64: 1, 96>}, {transform_indices = @transform_3, window_bounds = array<i64: 104, 96>}]} {
    %c0 = arith.constant 0 : index
    %c0_0 = arith.constant 0 : index
    %0 = vector.load %arg1[%c0, %c0_0] : memref<104x576xbf16, #tpu.memory_space<vmem>>, vector<104x576xbf16>
    %c0_1 = arith.constant 0 : index
    %c0_2 = arith.constant 0 : index
    %1 = vector.load %arg2[%c0_1, %c0_2] : memref<576x96xbf16, #tpu.memory_space<vmem>>, vector<576x96xbf16>
    %cst = arith.constant dense<0.000000e+00> : vector<104x96xf32>
    %2 = tpu.matmul %0, %1, %cst {dimension_numbers = #tpu.dot_dimension_numbers<[1], [0], [0], [1], [0, 0, 1, 1], [], []>} : vector<104x576xbf16>, vector<576x96xbf16>, vector<104x96xf32> -> vector<104x96xf32>
    %c0_3 = arith.constant 0 : index
    %c0_4 = arith.constant 0 : index
    %3 = vector.load %arg3[%c0_3, %c0_4] : memref<1x96xf32, #tpu.memory_space<vmem>>, vector<1x96xf32>
    %4 = vector.broadcast %3 : vector<1x96xf32> to vector<104x96xf32>
    %5 = arith.addf %2, %4 : vector<104x96xf32>
    %c0_5 = arith.constant 0 : index
    %c0_6 = arith.constant 0 : index
    %6 = vector.load %arg4[%c0_5, %c0_6] : memref<104x96xf32, #tpu.memory_space<vmem>>, vector<104x96xf32>
    tpu.vector_store %arg4[%c0_5, %c0_6], %5 {strides = array<i32>} : memref<104x96xf32, #tpu.memory_space<vmem>>, vector<104x96xf32>,
    return
  }
  func.func @transform_0(%arg0: i32) -> (i32, i32) {
    %c0_i32 = arith.constant 0 : i32
    %c0_i32_0 = arith.constant 0 : i32
    return %arg0, %c0_i32 : i32, i32
  }
  func.func @transform_1(%arg0: i32) -> (i32, i32) {
    %c0_i32 = arith.constant 0 : i32
    %c0_i32_0 = arith.constant 0 : i32
    %c0_i32_1 = arith.constant 0 : i32
    return %c0_i32, %c0_i32_0 : i32, i32
  }
  func.func @transform_2(%arg0: i32) -> (i32, i32) {
    %c0_i32 = arith.constant 0 : i32
    %c0_i32_0 = arith.constant 0 : i32
    %c0_i32_1 = arith.constant 0 : i32
    return %c0_i32, %c0_i32_0 : i32, i32
  }
  func.func @transform_3(%arg0: i32) -> (i32, i32) {
    %c0_i32 = arith.constant 0 : i32
    %c0_i32_0 = arith.constant 0 : i32
    return %arg0, %c0_i32 : i32, i32
  }
}

module attributes {stable_mosaic.version = 11 : i64} {
  func.func @_maxpool_kernel(%arg0: i32, %arg1: i32, %arg2: memref<1x104x64xf32, #tpu.memory_space<vmem>>, %arg3: memref<104x64xf32, #tpu.memory_space<vmem>>, %arg4: memref<104x64xf32, #tpu.memory_space<vmem>>) attributes {dimension_semantics = [#tpu.dimension_semantics<parallel>, #tpu.dimension_semantics<arbitrary>], iteration_bounds = array<i64: 1, 9>, scalar_prefetch = 0 : i64, scratch_operands = 1 : i64, tpu.core_type = #tpu.core_type<tc>, window_params = [{transform_indices = @transform_0, window_bounds = array<i64: 1, 104, 64>}, {transform_indices = @transform_1, window_bounds = array<i64: 104, 64>}]} {
    %c0_i32 = arith.constant 0 : i32
    %0 = arith.cmpi eq, %arg1, %c0_i32 : i32
    %1 = arith.extui %0 : i1 to i32
    %c0_i32_0 = arith.constant 0 : i32
    %2 = arith.cmpi ne, %1, %c0_i32_0 : i32
    scf.if %2 {
      %cst = arith.constant 0xFF800000 : f32
      %11 = vector.broadcast %cst : f32 to vector<104x64xf32>
      %c0_8 = arith.constant 0 : index
      %c0_9 = arith.constant 0 : index
      %12 = vector.load %arg4[%c0_8, %c0_9] : memref<104x64xf32, #tpu.memory_space<vmem>>, vector<104x64xf32>
      tpu.vector_store %arg4[%c0_8, %c0_9], %11 {strides = array<i32>} : memref<104x64xf32, #tpu.memory_space<vmem>>, vector<104x64xf32>,
    } else {
    }
    %c0 = arith.constant 0 : index
    %c0_1 = arith.constant 0 : index
    %3 = vector.load %arg4[%c0, %c0_1] : memref<104x64xf32, #tpu.memory_space<vmem>>, vector<104x64xf32>
    %c0_2 = arith.constant 0 : index
    %c0_3 = arith.constant 0 : index
    %c0_4 = arith.constant 0 : index
    %4 = vector.load %arg2[%c0_2, %c0_3, %c0_4] : memref<1x104x64xf32, #tpu.memory_space<vmem>>, vector<1x104x64xf32>
    %5 = vector.shape_cast %4 : vector<1x104x64xf32> to vector<104x64xf32>
    %6 = arith.maximumf %3, %5 : vector<104x64xf32>
    %c0_5 = arith.constant 0 : index
    %c0_6 = arith.constant 0 : index
    %7 = vector.load %arg4[%c0_5, %c0_6] : memref<104x64xf32, #tpu.memory_space<vmem>>, vector<104x64xf32>
    tpu.vector_store %arg4[%c0_5, %c0_6], %6 {strides = array<i32>} : memref<104x64xf32, #tpu.memory_space<vmem>>, vector<104x64xf32>,
    %c8_i32 = arith.constant 8 : i32
    %8 = arith.cmpi eq, %arg1, %c8_i32 : i32
    %9 = arith.extui %8 : i1 to i32
    %c0_i32_7 = arith.constant 0 : i32
    %10 = arith.cmpi ne, %9, %c0_i32_7 : i32
    scf.if %10 {
      %c0_8 = arith.constant 0 : index
      %c0_9 = arith.constant 0 : index
      %11 = vector.load %arg4[%c0_8, %c0_9] : memref<104x64xf32, #tpu.memory_space<vmem>>, vector<104x64xf32>
      %c0_10 = arith.constant 0 : index
      %c0_11 = arith.constant 0 : index
      %12 = vector.load %arg3[%c0_10, %c0_11] : memref<104x64xf32, #tpu.memory_space<vmem>>, vector<104x64xf32>
      tpu.vector_store %arg3[%c0_10, %c0_11], %11 {strides = array<i32>} : memref<104x64xf32, #tpu.memory_space<vmem>>, vector<104x64xf32>,
    } else {
    }
    return
  }
  func.func @transform_0(%arg0: i32, %arg1: i32) -> (i32, i32, i32) {
    %c0_i32 = arith.constant 0 : i32
    %c0_i32_0 = arith.constant 0 : i32
    return %arg1, %arg0, %c0_i32 : i32, i32, i32
  }
  func.func @transform_1(%arg0: i32, %arg1: i32) -> (i32, i32) {
    %c0_i32 = arith.constant 0 : i32
    %c0_i32_0 = arith.constant 0 : i32
    return %arg0, %c0_i32 : i32, i32
  }
}

module attributes {stable_mosaic.version = 11 : i64} {
  func.func @_matmul_bias_kernel(%arg0: i32, %arg1: memref<104x160xbf16, #tpu.memory_space<vmem>>, %arg2: memref<160x64xbf16, #tpu.memory_space<vmem>>, %arg3: memref<1x64xf32, #tpu.memory_space<vmem>>, %arg4: memref<104x64xf32, #tpu.memory_space<vmem>>) attributes {dimension_semantics = [#tpu.dimension_semantics<parallel>], iteration_bounds = array<i64: 1>, scalar_prefetch = 0 : i64, scratch_operands = 0 : i64, tpu.core_type = #tpu.core_type<tc>, window_params = [{transform_indices = @transform_0, window_bounds = array<i64: 104, 160>}, {pipeline_mode = #tpu.pipeline_mode<synchronous>, transform_indices = @transform_1, window_bounds = array<i64: 160, 64>}, {pipeline_mode = #tpu.pipeline_mode<synchronous>, transform_indices = @transform_2, window_bounds = array<i64: 1, 64>}, {transform_indices = @transform_3, window_bounds = array<i64: 104, 64>}]} {
    %c0 = arith.constant 0 : index
    %c0_0 = arith.constant 0 : index
    %0 = vector.load %arg1[%c0, %c0_0] : memref<104x160xbf16, #tpu.memory_space<vmem>>, vector<104x160xbf16>
    %c0_1 = arith.constant 0 : index
    %c0_2 = arith.constant 0 : index
    %1 = vector.load %arg2[%c0_1, %c0_2] : memref<160x64xbf16, #tpu.memory_space<vmem>>, vector<160x64xbf16>
    %cst = arith.constant dense<0.000000e+00> : vector<104x64xf32>
    %2 = tpu.matmul %0, %1, %cst {dimension_numbers = #tpu.dot_dimension_numbers<[1], [0], [0], [1], [0, 0, 1, 1], [], []>} : vector<104x160xbf16>, vector<160x64xbf16>, vector<104x64xf32> -> vector<104x64xf32>
    %c0_3 = arith.constant 0 : index
    %c0_4 = arith.constant 0 : index
    %3 = vector.load %arg3[%c0_3, %c0_4] : memref<1x64xf32, #tpu.memory_space<vmem>>, vector<1x64xf32>
    %4 = vector.broadcast %3 : vector<1x64xf32> to vector<104x64xf32>
    %5 = arith.addf %2, %4 : vector<104x64xf32>
    %c0_5 = arith.constant 0 : index
    %c0_6 = arith.constant 0 : index
    %6 = vector.load %arg4[%c0_5, %c0_6] : memref<104x64xf32, #tpu.memory_space<vmem>>, vector<104x64xf32>
    tpu.vector_store %arg4[%c0_5, %c0_6], %5 {strides = array<i32>} : memref<104x64xf32, #tpu.memory_space<vmem>>, vector<104x64xf32>,
    return
  }
  func.func @transform_0(%arg0: i32) -> (i32, i32) {
    %c0_i32 = arith.constant 0 : i32
    %c0_i32_0 = arith.constant 0 : i32
    return %arg0, %c0_i32 : i32, i32
  }
  func.func @transform_1(%arg0: i32) -> (i32, i32) {
    %c0_i32 = arith.constant 0 : i32
    %c0_i32_0 = arith.constant 0 : i32
    %c0_i32_1 = arith.constant 0 : i32
    return %c0_i32, %c0_i32_0 : i32, i32
  }
  func.func @transform_2(%arg0: i32) -> (i32, i32) {
    %c0_i32 = arith.constant 0 : i32
    %c0_i32_0 = arith.constant 0 : i32
    %c0_i32_1 = arith.constant 0 : i32
    return %c0_i32, %c0_i32_0 : i32, i32
  }
  func.func @transform_3(%arg0: i32) -> (i32, i32) {
    %c0_i32 = arith.constant 0 : i32
    %c0_i32_0 = arith.constant 0 : i32
    return %arg0, %c0_i32 : i32, i32
  }
}

module attributes {stable_mosaic.version = 11 : i64} {
  func.func @_matmul_bias_kernel(%arg0: i32, %arg1: memref<104x448xbf16, #tpu.memory_space<vmem>>, %arg2: memref<448x64xbf16, #tpu.memory_space<vmem>>, %arg3: memref<1x64xf32, #tpu.memory_space<vmem>>, %arg4: memref<104x64xf32, #tpu.memory_space<vmem>>) attributes {dimension_semantics = [#tpu.dimension_semantics<parallel>], iteration_bounds = array<i64: 1>, scalar_prefetch = 0 : i64, scratch_operands = 0 : i64, tpu.core_type = #tpu.core_type<tc>, window_params = [{transform_indices = @transform_0, window_bounds = array<i64: 104, 448>}, {pipeline_mode = #tpu.pipeline_mode<synchronous>, transform_indices = @transform_1, window_bounds = array<i64: 448, 64>}, {pipeline_mode = #tpu.pipeline_mode<synchronous>, transform_indices = @transform_2, window_bounds = array<i64: 1, 64>}, {transform_indices = @transform_3, window_bounds = array<i64: 104, 64>}]} {
    %c0 = arith.constant 0 : index
    %c0_0 = arith.constant 0 : index
    %0 = vector.load %arg1[%c0, %c0_0] : memref<104x448xbf16, #tpu.memory_space<vmem>>, vector<104x448xbf16>
    %c0_1 = arith.constant 0 : index
    %c0_2 = arith.constant 0 : index
    %1 = vector.load %arg2[%c0_1, %c0_2] : memref<448x64xbf16, #tpu.memory_space<vmem>>, vector<448x64xbf16>
    %cst = arith.constant dense<0.000000e+00> : vector<104x64xf32>
    %2 = tpu.matmul %0, %1, %cst {dimension_numbers = #tpu.dot_dimension_numbers<[1], [0], [0], [1], [0, 0, 1, 1], [], []>} : vector<104x448xbf16>, vector<448x64xbf16>, vector<104x64xf32> -> vector<104x64xf32>
    %c0_3 = arith.constant 0 : index
    %c0_4 = arith.constant 0 : index
    %3 = vector.load %arg3[%c0_3, %c0_4] : memref<1x64xf32, #tpu.memory_space<vmem>>, vector<1x64xf32>
    %4 = vector.broadcast %3 : vector<1x64xf32> to vector<104x64xf32>
    %5 = arith.addf %2, %4 : vector<104x64xf32>
    %c0_5 = arith.constant 0 : index
    %c0_6 = arith.constant 0 : index
    %6 = vector.load %arg4[%c0_5, %c0_6] : memref<104x64xf32, #tpu.memory_space<vmem>>, vector<104x64xf32>
    tpu.vector_store %arg4[%c0_5, %c0_6], %5 {strides = array<i32>} : memref<104x64xf32, #tpu.memory_space<vmem>>, vector<104x64xf32>,
    return
  }
  func.func @transform_0(%arg0: i32) -> (i32, i32) {
    %c0_i32 = arith.constant 0 : i32
    %c0_i32_0 = arith.constant 0 : i32
    return %arg0, %c0_i32 : i32, i32
  }
  func.func @transform_1(%arg0: i32) -> (i32, i32) {
    %c0_i32 = arith.constant 0 : i32
    %c0_i32_0 = arith.constant 0 : i32
    %c0_i32_1 = arith.constant 0 : i32
    return %c0_i32, %c0_i32_0 : i32, i32
  }
  func.func @transform_2(%arg0: i32) -> (i32, i32) {
    %c0_i32 = arith.constant 0 : i32
    %c0_i32_0 = arith.constant 0 : i32
    %c0_i32_1 = arith.constant 0 : i32
    return %c0_i32, %c0_i32_0 : i32, i32
  }
  func.func @transform_3(%arg0: i32) -> (i32, i32) {
    %c0_i32 = arith.constant 0 : i32
    %c0_i32_0 = arith.constant 0 : i32
    return %arg0, %c0_i32 : i32, i32
  }
}

module attributes {stable_mosaic.version = 11 : i64} {
  func.func @_matmul_bias_kernel(%arg0: i32, %arg1: memref<56x576xbf16, #tpu.memory_space<vmem>>, %arg2: memref<576x96xbf16, #tpu.memory_space<vmem>>, %arg3: memref<1x96xf32, #tpu.memory_space<vmem>>, %arg4: memref<56x96xf32, #tpu.memory_space<vmem>>) attributes {dimension_semantics = [#tpu.dimension_semantics<parallel>], iteration_bounds = array<i64: 1>, scalar_prefetch = 0 : i64, scratch_operands = 0 : i64, tpu.core_type = #tpu.core_type<tc>, window_params = [{transform_indices = @transform_0, window_bounds = array<i64: 56, 576>}, {pipeline_mode = #tpu.pipeline_mode<synchronous>, transform_indices = @transform_1, window_bounds = array<i64: 576, 96>}, {pipeline_mode = #tpu.pipeline_mode<synchronous>, transform_indices = @transform_2, window_bounds = array<i64: 1, 96>}, {transform_indices = @transform_3, window_bounds = array<i64: 56, 96>}]} {
    %c0 = arith.constant 0 : index
    %c0_0 = arith.constant 0 : index
    %0 = vector.load %arg1[%c0, %c0_0] : memref<56x576xbf16, #tpu.memory_space<vmem>>, vector<56x576xbf16>
    %c0_1 = arith.constant 0 : index
    %c0_2 = arith.constant 0 : index
    %1 = vector.load %arg2[%c0_1, %c0_2] : memref<576x96xbf16, #tpu.memory_space<vmem>>, vector<576x96xbf16>
    %cst = arith.constant dense<0.000000e+00> : vector<56x96xf32>
    %2 = tpu.matmul %0, %1, %cst {dimension_numbers = #tpu.dot_dimension_numbers<[1], [0], [0], [1], [0, 0, 1, 1], [], []>} : vector<56x576xbf16>, vector<576x96xbf16>, vector<56x96xf32> -> vector<56x96xf32>
    %c0_3 = arith.constant 0 : index
    %c0_4 = arith.constant 0 : index
    %3 = vector.load %arg3[%c0_3, %c0_4] : memref<1x96xf32, #tpu.memory_space<vmem>>, vector<1x96xf32>
    %4 = vector.broadcast %3 : vector<1x96xf32> to vector<56x96xf32>
    %5 = arith.addf %2, %4 : vector<56x96xf32>
    %c0_5 = arith.constant 0 : index
    %c0_6 = arith.constant 0 : index
    %6 = vector.load %arg4[%c0_5, %c0_6] : memref<56x96xf32, #tpu.memory_space<vmem>>, vector<56x96xf32>
    tpu.vector_store %arg4[%c0_5, %c0_6], %5 {strides = array<i32>} : memref<56x96xf32, #tpu.memory_space<vmem>>, vector<56x96xf32>,
    return
  }
  func.func @transform_0(%arg0: i32) -> (i32, i32) {
    %c0_i32 = arith.constant 0 : i32
    %c0_i32_0 = arith.constant 0 : i32
    return %arg0, %c0_i32 : i32, i32
  }
  func.func @transform_1(%arg0: i32) -> (i32, i32) {
    %c0_i32 = arith.constant 0 : i32
    %c0_i32_0 = arith.constant 0 : i32
    %c0_i32_1 = arith.constant 0 : i32
    return %c0_i32, %c0_i32_0 : i32, i32
  }
  func.func @transform_2(%arg0: i32) -> (i32, i32) {
    %c0_i32 = arith.constant 0 : i32
    %c0_i32_0 = arith.constant 0 : i32
    %c0_i32_1 = arith.constant 0 : i32
    return %c0_i32, %c0_i32_0 : i32, i32
  }
  func.func @transform_3(%arg0: i32) -> (i32, i32) {
    %c0_i32 = arith.constant 0 : i32
    %c0_i32_0 = arith.constant 0 : i32
    return %arg0, %c0_i32 : i32, i32
  }
}

module attributes {stable_mosaic.version = 11 : i64} {
  func.func @_maxpool_kernel(%arg0: i32, %arg1: i32, %arg2: memref<1x8x192xf32, #tpu.memory_space<vmem>>, %arg3: memref<8x192xf32, #tpu.memory_space<vmem>>, %arg4: memref<8x192xf32, #tpu.memory_space<vmem>>) attributes {dimension_semantics = [#tpu.dimension_semantics<parallel>, #tpu.dimension_semantics<arbitrary>], iteration_bounds = array<i64: 1, 9>, scalar_prefetch = 0 : i64, scratch_operands = 1 : i64, tpu.core_type = #tpu.core_type<tc>, window_params = [{transform_indices = @transform_0, window_bounds = array<i64: 1, 8, 192>}, {transform_indices = @transform_1, window_bounds = array<i64: 8, 192>}]} {
    %c0_i32 = arith.constant 0 : i32
    %0 = arith.cmpi eq, %arg1, %c0_i32 : i32
    %1 = arith.extui %0 : i1 to i32
    %c0_i32_0 = arith.constant 0 : i32
    %2 = arith.cmpi ne, %1, %c0_i32_0 : i32
    scf.if %2 {
      %cst = arith.constant 0xFF800000 : f32
      %11 = vector.broadcast %cst : f32 to vector<8x192xf32>
      %c0_8 = arith.constant 0 : index
      %c0_9 = arith.constant 0 : index
      %12 = vector.load %arg4[%c0_8, %c0_9] : memref<8x192xf32, #tpu.memory_space<vmem>>, vector<8x192xf32>
      tpu.vector_store %arg4[%c0_8, %c0_9], %11 {strides = array<i32>} : memref<8x192xf32, #tpu.memory_space<vmem>>, vector<8x192xf32>,
    } else {
    }
    %c0 = arith.constant 0 : index
    %c0_1 = arith.constant 0 : index
    %3 = vector.load %arg4[%c0, %c0_1] : memref<8x192xf32, #tpu.memory_space<vmem>>, vector<8x192xf32>
    %c0_2 = arith.constant 0 : index
    %c0_3 = arith.constant 0 : index
    %c0_4 = arith.constant 0 : index
    %4 = vector.load %arg2[%c0_2, %c0_3, %c0_4] : memref<1x8x192xf32, #tpu.memory_space<vmem>>, vector<1x8x192xf32>
    %5 = vector.shape_cast %4 : vector<1x8x192xf32> to vector<8x192xf32>
    %6 = arith.maximumf %3, %5 : vector<8x192xf32>
    %c0_5 = arith.constant 0 : index
    %c0_6 = arith.constant 0 : index
    %7 = vector.load %arg4[%c0_5, %c0_6] : memref<8x192xf32, #tpu.memory_space<vmem>>, vector<8x192xf32>
    tpu.vector_store %arg4[%c0_5, %c0_6], %6 {strides = array<i32>} : memref<8x192xf32, #tpu.memory_space<vmem>>, vector<8x192xf32>,
    %c8_i32 = arith.constant 8 : i32
    %8 = arith.cmpi eq, %arg1, %c8_i32 : i32
    %9 = arith.extui %8 : i1 to i32
    %c0_i32_7 = arith.constant 0 : i32
    %10 = arith.cmpi ne, %9, %c0_i32_7 : i32
    scf.if %10 {
      %c0_8 = arith.constant 0 : index
      %c0_9 = arith.constant 0 : index
      %11 = vector.load %arg4[%c0_8, %c0_9] : memref<8x192xf32, #tpu.memory_space<vmem>>, vector<8x192xf32>
      %c0_10 = arith.constant 0 : index
      %c0_11 = arith.constant 0 : index
      %12 = vector.load %arg3[%c0_10, %c0_11] : memref<8x192xf32, #tpu.memory_space<vmem>>, vector<8x192xf32>
      tpu.vector_store %arg3[%c0_10, %c0_11], %11 {strides = array<i32>} : memref<8x192xf32, #tpu.memory_space<vmem>>, vector<8x192xf32>,
    } else {
    }
    return
  }
  func.func @transform_0(%arg0: i32, %arg1: i32) -> (i32, i32, i32) {
    %c0_i32 = arith.constant 0 : i32
    %c0_i32_0 = arith.constant 0 : i32
    return %arg1, %arg0, %c0_i32 : i32, i32, i32
  }
  func.func @transform_1(%arg0: i32, %arg1: i32) -> (i32, i32) {
    %c0_i32 = arith.constant 0 : i32
    %c0_i32_0 = arith.constant 0 : i32
    return %arg0, %c0_i32 : i32, i32
  }
}

module attributes {stable_mosaic.version = 11 : i64} {
  func.func @_matmul_bias_kernel(%arg0: i32, %arg1: memref<8x1728xbf16, #tpu.memory_space<vmem>>, %arg2: memref<1728x192xbf16, #tpu.memory_space<vmem>>, %arg3: memref<1x192xf32, #tpu.memory_space<vmem>>, %arg4: memref<8x192xf32, #tpu.memory_space<vmem>>) attributes {dimension_semantics = [#tpu.dimension_semantics<parallel>], iteration_bounds = array<i64: 1>, scalar_prefetch = 0 : i64, scratch_operands = 0 : i64, tpu.core_type = #tpu.core_type<tc>, window_params = [{transform_indices = @transform_0, window_bounds = array<i64: 8, 1728>}, {pipeline_mode = #tpu.pipeline_mode<synchronous>, transform_indices = @transform_1, window_bounds = array<i64: 1728, 192>}, {pipeline_mode = #tpu.pipeline_mode<synchronous>, transform_indices = @transform_2, window_bounds = array<i64: 1, 192>}, {transform_indices = @transform_3, window_bounds = array<i64: 8, 192>}]} {
    %c0 = arith.constant 0 : index
    %c0_0 = arith.constant 0 : index
    %0 = vector.load %arg1[%c0, %c0_0] : memref<8x1728xbf16, #tpu.memory_space<vmem>>, vector<8x1728xbf16>
    %c0_1 = arith.constant 0 : index
    %c0_2 = arith.constant 0 : index
    %1 = vector.load %arg2[%c0_1, %c0_2] : memref<1728x192xbf16, #tpu.memory_space<vmem>>, vector<1728x192xbf16>
    %cst = arith.constant dense<0.000000e+00> : vector<8x192xf32>
    %2 = tpu.matmul %0, %1, %cst {dimension_numbers = #tpu.dot_dimension_numbers<[1], [0], [0], [1], [0, 0, 1, 1], [], []>} : vector<8x1728xbf16>, vector<1728x192xbf16>, vector<8x192xf32> -> vector<8x192xf32>
    %c0_3 = arith.constant 0 : index
    %c0_4 = arith.constant 0 : index
    %3 = vector.load %arg3[%c0_3, %c0_4] : memref<1x192xf32, #tpu.memory_space<vmem>>, vector<1x192xf32>
    %4 = vector.broadcast %3 : vector<1x192xf32> to vector<8x192xf32>
    %5 = arith.addf %2, %4 : vector<8x192xf32>
    %c0_5 = arith.constant 0 : index
    %c0_6 = arith.constant 0 : index
    %6 = vector.load %arg4[%c0_5, %c0_6] : memref<8x192xf32, #tpu.memory_space<vmem>>, vector<8x192xf32>
    tpu.vector_store %arg4[%c0_5, %c0_6], %5 {strides = array<i32>} : memref<8x192xf32, #tpu.memory_space<vmem>>, vector<8x192xf32>,
    return
  }
  func.func @transform_0(%arg0: i32) -> (i32, i32) {
    %c0_i32 = arith.constant 0 : i32
    %c0_i32_0 = arith.constant 0 : i32
    return %arg0, %c0_i32 : i32, i32
  }
  func.func @transform_1(%arg0: i32) -> (i32, i32) {
    %c0_i32 = arith.constant 0 : i32
    %c0_i32_0 = arith.constant 0 : i32
    %c0_i32_1 = arith.constant 0 : i32
    return %c0_i32, %c0_i32_0 : i32, i32
  }
  func.func @transform_2(%arg0: i32) -> (i32, i32) {
    %c0_i32 = arith.constant 0 : i32
    %c0_i32_0 = arith.constant 0 : i32
    %c0_i32_1 = arith.constant 0 : i32
    return %c0_i32, %c0_i32_0 : i32, i32
  }
  func.func @transform_3(%arg0: i32) -> (i32, i32) {
    %c0_i32 = arith.constant 0 : i32
    %c0_i32_0 = arith.constant 0 : i32
    return %arg0, %c0_i32 : i32, i32
  }
}

</mosaic_0001>

<llo_original>
// kernel: stem_forward.13
$region0: #{stem_forward.13}
  #allocation0 [shape = 'u32[]', space=smem, size = 0x4, offset = 0x4, fixed_abs, tag = 'smem constant byte address 0x4 - core index']
  #allocation1 [shape = 'u32[144,128]{1,0:T(1,128)}', space=vmem, size = 0x12000, scoped, tag = 'internal scratch']
  %s0 = inlined_call_operand.vmem [shape: bf16[768,36], index: 0, kind: input, shape index: {}]
  %s1 = inlined_call_operand.vmem [shape: bf16[36,32], index: 1, kind: input, shape index: {}]
  %s2 = inlined_call_operand.vmem [shape: f32[1,32], index: 2, kind: input, shape index: {}]
  %s3 = inlined_call_operand.vmem [shape: f32[768,32], index: 3, kind: output, shape index: {}]
  %s4 = sld [smem:[#allocation0]]
  $region45: #{stem_forward.13} parent=0
    _
  %s6 = ssub.s32 1, %s4
  %s7 = scalar_select 0, %s6, %s4
  loop: start=0, step=1, limit=5
  $region2: #{stem_forward.13} parent=0 // loop_pre_header
    _
  $region3: #{stem_forward.13} parent=0 // loop_header
    %s9 = sphi 0, %s13
    %p10 = scmp.ge.s32.totalorder %s9, 5
    %s19 = sphi 0, %s21
    %s22 = sphi 0, %s19
    %s23 = sphi 0, %s22
    %s39 = sphi 0, %s23
    %s43 = sphi 0, %s43
    %s45 = sphi 0, %s43
    %s46 = sphi 0, %s45
    %s60 = sphi 0, %s46
    %s64 = sphi 0, %s64
    %s66 = sphi 0, %s64
    %s67 = sphi 0, %s66
    %s81 = sphi 0, %s67
    %s87 = sphi 0, %s89
    %s90 = sphi 0, %s87
    %s91 = sphi 0, %s90
    %s107 = sphi 0, %s91
  $region4: #{stem_forward.13} parent=0 // loop_header_branch
    %12 = sbr.rel (%p10) target = $region8
  $region5: #{stem_forward.13} parent=0 // loop_body
    %s14 = ssub.s32 %s9, 1
    %s15 = ssub.s32 %s9, 2
    %s16 = sadd.s32 %s9, 1
    %s17 = ssub.s32 %s9, %s16
    %p18 = scmp.eq.s32.totalorder %s17, 0
    %s20 = sadd.s32 %s19, 1
    %s21 = scalar_select %p18, %s19, %s20
    %p24 = pneg %p18
    %p25 = scmp.eq.s32.totalorder %s9, 2
    %p26 = por %p24, %p25
    %p27 = scmp.ne.s32.totalorder %s19, %s22
    %p28 = scmp.eq.s32.totalorder %s9, 0
    %p29 = por %p27, %p28
    %p30 = scmp.ne.s32.totalorder %s19, %s22
    %p31 = scmp.eq.s32.totalorder %s14, 2
    %p32 = por %p30, %p31
    %p33 = scmp.ne.s32.totalorder %s22, %s23
    %p34 = scmp.eq.s32.totalorder %s14, 0
    %p35 = por %p33, %p34
    %p36 = scmp.ne.s32.totalorder %s22, %s23
    %p37 = scmp.eq.s32.totalorder %s15, 2
    %p38 = por %p36, %p37
    %p40 = scmp.ne.s32.totalorder %s23, %s39
    %p41 = scmp.eq.s32.totalorder %s15, 0
    %p42 = por %p40, %p41
    %s44 = sadd.s32 %s43, 1
    %p47 = scmp.eq.s32.totalorder %s9, 2
    %p48 = scmp.ne.s32.totalorder %s43, %s45
    %p49 = scmp.eq.s32.totalorder %s9, 0
    %p50 = por %p48, %p49
    %p51 = scmp.ne.s32.totalorder %s43, %s45
    %p52 = scmp.eq.s32.totalorder %s14, 2
    %p53 = por %p51, %p52
    %p54 = scmp.ne.s32.totalorder %s45, %s46
    %p55 = scmp.eq.s32.totalorder %s14, 0
    %p56 = por %p54, %p55
    %p57 = scmp.ne.s32.totalorder %s45, %s46
    %p58 = scmp.eq.s32.totalorder %s15, 2
    %p59 = por %p57, %p58
    %p61 = scmp.ne.s32.totalorder %s46, %s60
    %p62 = scmp.eq.s32.totalorder %s15, 0
    %p63 = por %p61, %p62
    %s65 = sadd.s32 %s64, 1
    %p68 = scmp.eq.s32.totalorder %s9, 2
    %p69 = scmp.ne.s32.totalorder %s64, %s66
    %p70 = scmp.eq.s32.totalorder %s9, 0
    %p71 = por %p69, %p70
    %p72 = scmp.ne.s32.totalorder %s64, %s66
    %p73 = scmp.eq.s32.totalorder %s14, 2
    %p74 = por %p72, %p73
    %p75 = scmp.ne.s32.totalorder %s66, %s67
    %p76 = scmp.eq.s32.totalorder %s14, 0
    %p77 = por %p75, %p76
    %p78 = scmp.ne.s32.totalorder %s66, %s67
    %p79 = scmp.eq.s32.totalorder %s15, 2
    %p80 = por %p78, %p79
    %p82 = scmp.ne.s32.totalorder %s67, %s81
    %p83 = scmp.eq.s32.totalorder %s15, 0
    %p84 = por %p82, %p83
    %s85 = ssub.s32 %s9, %s16
    %p86 = scmp.eq.s32.totalorder %s85, 0
    %s88 = sadd.s32 %s87, 1
    %s89 = scalar_select %p86, %s87, %s88
    %p92 = pneg %p86
    %p93 = scmp.eq.s32.totalorder %s9, 2
    %p94 = por %p92, %p93
    %p95 = scmp.ne.s32.totalorder %s87, %s90
    %p96 = scmp.eq.s32.totalorder %s9, 0
    %p97 = por %p95, %p96
    %p98 = scmp.ne.s32.totalorder %s87, %s90
    %p99 = scmp.eq.s32.totalorder %s14, 2
    %p100 = por %p98, %p99
    %p101 = scmp.ne.s32.totalorder %s90, %s91
    %p102 = scmp.eq.s32.totalorder %s14, 0
    %p103 = por %p101, %p102
    %p104 = scmp.ne.s32.totalorder %s90, %s91
    %p105 = scmp.eq.s32.totalorder %s15, 2
    %p106 = por %p104, %p105
    %p108 = scmp.ne.s32.totalorder %s91, %s107
    %p109 = scmp.eq.s32.totalorder %s15, 0
    %p110 = por %p108, %p109
    %p111 = scmp.le.s32.totalorder 1, %s9
    %p112 = scmp.lt.s32.totalorder %s9, 4
    %p113 = pnand %p111, %p112
    %p114 = pneg %p113
    // Predicated region
    $region9: #{stem_forward.13} parent=5 // pred_check
      _
    $region10: #{stem_forward.13} parent=5 // pred_check_branch
      %116 = sbr.rel (%p113) target = $region12
    $region11: #{stem_forward.13} parent=5 // pred_region
      %s117 = ssub.s32 %s9, 1
      // Predicated region
      $region13: #{stem_forward.13} parent=11 // pred_check
        %p118 = pneg %p56
      $region14: #{stem_forward.13} parent=11 // pred_check_branch
        %120 = sbr.rel (%p118) target = $region16
      $region15: #{stem_forward.13} parent=11 // pred_region
        _
      $region16: #{stem_forward.13} parent=11 // pred_fallthru
        _
      // Predicated region
      $region17: #{stem_forward.13} parent=11 // pred_check
        %p121 = pneg %p77
      $region18: #{stem_forward.13} parent=11 // pred_check_branch
        %123 = sbr.rel (%p121) target = $region20
      $region19: #{stem_forward.13} parent=11 // pred_region
        _
      $region20: #{stem_forward.13} parent=11 // pred_fallthru
        _
    $region12: #{stem_forward.13} parent=5 // pred_fallthru
      _
    %p124 = scmp.lt.s32.totalorder %s9, 3
    // Predicated region
    $region21: #{stem_forward.13} parent=5 // pred_check
      %p125 = pneg %p124
    $region22: #{stem_forward.13} parent=5 // pred_check_branch
      %127 = sbr.rel (%p125) target = $region24
    $region23: #{stem_forward.13} parent=5 // pred_region
      // Predicated region
      $region25: #{stem_forward.13} parent=23 // pred_check
        %p128 = pneg %p29
      $region26: #{stem_forward.13} parent=23 // pred_check_branch
        %130 = sbr.rel (%p128) target = $region28
      $region27: #{stem_forward.13} parent=23 // pred_region
        %s131 = smul.u32 32, %s9
        %p132 = scmp.lt.s32.totalorder %s131, 95
        %s133 = scalar_select %p132, %s131, 95
        %s134 = smul.addr %s133, 4
        %s135 = scalar_lea.vmem %s0, %s134
        %s136 = smul.u32 32, %s9
      $region28: #{stem_forward.13} parent=23 // pred_fallthru
        _
    $region24: #{stem_forward.13} parent=5 // pred_fallthru
      _
    %p137 = scmp.le.s32.totalorder 1, %s9
    %p138 = scmp.lt.s32.totalorder %s9, 4
    %p139 = pnand %p137, %p138
    %p140 = pneg %p139
    // Predicated region
    $region29: #{stem_forward.13} parent=5 // pred_check
      _
    $region30: #{stem_forward.13} parent=5 // pred_check_branch
      %142 = sbr.rel (%p139) target = $region32
    $region31: #{stem_forward.13} parent=5 // pred_region
      %s143 = ssub.s32 %s9, 1
      %s144 = smul.u32 32, %s14
      %p145 = scmp.lt.s32.totalorder %s144, 95
      %s146 = scalar_select %p145, %s144, 95
      %s147 = smul.addr %s146, 4
      %s148 = scalar_lea.vmem %s0, %s147
      %p149 = pneg %p35
      %p150 = pneg %p32
      %p151 = pneg %p56
      %p152 = pneg %p53
      %p153 = pneg %p77
      %p154 = pneg %p74
      %p155 = pneg %p103
      %p156 = pneg %p100
      %s157 = smul.u32 32, %s14
      %p158 = scmp.lt.s32.totalorder %s157, 95
      %s159 = scalar_select %p158, %s157, 95
      %s160 = smul.addr %s159, 8
      %s161 = scalar_lea.vmem %s3, %s160
      %s162 = smul.u32 32, %s14
      %p163 = scmp.lt.s32.totalorder %s162, 95
      %s164 = scalar_select %p163, %s162, 95
      %s165 = smul.addr %s164, 4
      %s166 = scalar_lea.vmem %s0, %s165
      %s167 = smul.u32 32, %s14
      %s168 = smul.u32 32, %s14
      %p169 = scmp.lt.s32.totalorder %s168, 95
      %s170 = scalar_select %p169, %s168, 95
      %s171 = smul.addr %s170, 8
      %s172 = scalar_lea.vmem %s3, %s171
      %s173 = smul.u32 32, %s14
      %v175 = vld [vmem:[%s166] sm:$0xf]
      %v176 = vld [vmem:[%s166 + $0x4] sm:$0xf]
      %v177 = vld [vmem:[%s166 + $0x8] sm:$0xf]
      %v178 = vld [vmem:[%s166 + $0xc] sm:$0xf]
      %v179 = vld [vmem:[%s166 + $0x10] sm:$0xf]
      %v180 = vld [vmem:[%s166 + $0x14] sm:$0xf]
      %v181 = vld [vmem:[%s166 + $0x18] sm:$0xf]
      %v182 = vld [vmem:[%s166 + $0x1c] sm:$0xf]
      %v183 = vld [vmem:[%s166 + $0x20] sm:$0xf]
      %v184 = vld [vmem:[%s166 + $0x24] sm:$0xf]
      %v185 = vld [vmem:[%s166 + $0x28] sm:$0xf]
      %v186 = vld [vmem:[%s166 + $0x2c] sm:$0xf]
      %v187 = vld [vmem:[%s166 + $0x30] sm:$0xf]
      %v188 = vld [vmem:[%s166 + $0x34] sm:$0xf]
      %v189 = vld [vmem:[%s166 + $0x38] sm:$0xf]
      %v190 = vld [vmem:[%s166 + $0x3c] sm:$0xf]
      %v191 = vld [vmem:[%s166 + $0x40] sm:$0xf]
      %v192 = vld [vmem:[%s166 + $0x44] sm:$0xf]
      %v193 = vld [vmem:[%s166 + $0x48] sm:$0xf]
      %v194 = vld [vmem:[%s166 + $0x4c] sm:$0xf]
      %v195 = vld [vmem:[%s166 + $0x50] sm:$0xf]
      %v196 = vld [vmem:[%s166 + $0x54] sm:$0xf]
      %v197 = vld [vmem:[%s166 + $0x58] sm:$0xf]
      %v198 = vld [vmem:[%s166 + $0x5c] sm:$0xf]
      %v199 = vld [vmem:[%s166 + $0x60] sm:$0xf]
      %v200 = vld [vmem:[%s166 + $0x64] sm:$0xf]
      %v201 = vld [vmem:[%s166 + $0x68] sm:$0xf]
      %v202 = vld [vmem:[%s166 + $0x6c] sm:$0xf]
      %v203 = vld [vmem:[%s166 + $0x70] sm:$0xf]
      %v204 = vld [vmem:[%s166 + $0x74] sm:$0xf]
      %v205 = vld [vmem:[%s166 + $0x78] sm:$0xf]
      %v206 = vld [vmem:[%s166 + $0x7c] sm:$0xf]
      %v207 = vld [vmem:[%s1] sm:$0xf]
      %v208 = vld [vmem:[%s1 + $0x4] sm:$0xf]
      %v209 = vld [vmem:[%s1 + $0x8] sm:$0xf]
      %v210 = vld [vmem:[%s1 + $0xc] sm:$0xf]
      %v211 = vld [vmem:[%s1 + $0x10] sm:$0x3]
      %v212 = vld [vmem:[%s2] sm:$0x1]
      %v214 = vlaneseq
      %v215 = vshrl.u32 %v214, 7
      %v216 = vsub.s32 0, %v215
      %v217 = vrot.slane %v212, %v216
      %v251 = vunpack.c.l.b16 %v175
      %v252 = vunpack.c.l.b16 %v176
      %v253 = vunpack.c.l.b16 %v177
      %v254 = vunpack.c.l.b16 %v178
      %v255 = vunpack.c.l.b16 %v179
      %v256 = vunpack.c.l.b16 %v180
      %v257 = vunpack.c.l.b16 %v181
      %v258 = vunpack.c.l.b16 %v182
      %v259 = vunpack.c.l.b16 %v183
      %v260 = vunpack.c.l.b16 %v184
      %v261 = vunpack.c.l.b16 %v185
      %v262 = vunpack.c.l.b16 %v186
      %v263 = vunpack.c.l.b16 %v187
      %v264 = vunpack.c.l.b16 %v188
      %v265 = vunpack.c.l.b16 %v189
      %v266 = vunpack.c.l.b16 %v190
      %v267 = vunpack.c.l.b16 %v191
      %v268 = vunpack.c.l.b16 %v192
      %v269 = vunpack.c.l.b16 %v193
      %v270 = vunpack.c.l.b16 %v194
      %v271 = vunpack.c.l.b16 %v195
      %v272 = vunpack.c.l.b16 %v196
      %v273 = vunpack.c.l.b16 %v197
      %v274 = vunpack.c.l.b16 %v198
      %v275 = vunpack.c.l.b16 %v199
      %v276 = vunpack.c.l.b16 %v200
      %v277 = vunpack.c.l.b16 %v201
      %v278 = vunpack.c.l.b16 %v202
      %v279 = vunpack.c.l.b16 %v203
      %v280 = vunpack.c.l.b16 %v204
      %v281 = vunpack.c.l.b16 %v205
      %v282 = vunpack.c.l.b16 %v206
      %v283 = vpack.c.b16 %v252, %v251
      %v284 = vpack.c.b16 %v254, %v253
      %v285 = vpack.c.b16 %v256, %v255
      %v286 = vpack.c.b16 %v258, %v257
      %v287 = vpack.c.b16 %v260, %v259
      %v288 = vpack.c.b16 %v262, %v261
      %v289 = vpack.c.b16 %v264, %v263
      %v290 = vpack.c.b16 %v266, %v265
      %v291 = vpack.c.b16 %v268, %v267
      %v292 = vpack.c.b16 %v270, %v269
      %v293 = vpack.c.b16 %v272, %v271
      %v294 = vpack.c.b16 %v274, %v273
      %v295 = vpack.c.b16 %v276, %v275
      %v296 = vpack.c.b16 %v278, %v277
      %v297 = vpack.c.b16 %v280, %v279
      %v298 = vpack.c.b16 %v282, %v281
      %v304 = vunpack.c.l.b16 %v207
      %v305 = vunpack.c.l.b16 %v208
      %v306 = vunpack.c.l.b16 %v209
      %v307 = vunpack.c.l.b16 %v210
      %v308 = vunpack.c.l.b16 %v211
      %v309 = vpack.c.b16 %v305, %v304
      %v310 = vpack.c.b16 %v307, %v306
      %v311 = vpack.c.b16 %v308, %v308
      %vm314 = vcmask 293888
      %v316 = vsel %vm314, %v283, 0
      %v319 = vsel %vm314, %v284, 0
      %v322 = vsel %vm314, %v285, 0
      %v325 = vsel %vm314, %v286, 0
      %v328 = vsel %vm314, %v287, 0
      %v331 = vsel %vm314, %v288, 0
      %v334 = vsel %vm314, %v289, 0
      %v337 = vsel %vm314, %v290, 0
      %v340 = vsel %vm314, %v291, 0
      %v343 = vsel %vm314, %v292, 0
      %v346 = vsel %vm314, %v293, 0
      %v349 = vsel %vm314, %v294, 0
      %v352 = vsel %vm314, %v295, 0
      %v355 = vsel %vm314, %v296, 0
      %v358 = vsel %vm314, %v297, 0
      %v361 = vsel %vm314, %v298, 0
      %vm363 = vcmask 1041408
      %v365 = vsel %vm363, %v311, 0
      %367 = vmatprep.subr.bf16.mxu0 0
      %368 = vmatpush1.bf16.msra.mxu0 %v309
      %369 = vmatprep.subr.bf16.mxu0 0
      %370 = vmatpush1.bf16.msra.mxu0 %v310
      %371 = vmatprep.subr.bf16.mxu0 0
      %372 = vmatpush1.bf16.msra.mxu0 %v365
      %373 = vmatprep.subr.bf16.mxu0 0
      %374 = vmatpush1.bf16.msra.mxu0 0
      %375 = vmatprep.subr.bf16.mxu0 0
      %376 = vmatpush1.bf16.msra.mxu0 0
      %377 = vmatprep.subr.bf16.mxu0 0
      %378 = vmatpush1.bf16.msra.mxu0 0
      %379 = vmatprep.subr.bf16.mxu0 0
      %380 = vmatpush1.bf16.msra.mxu0 0
      %381 = vmatprep.subr.bf16.mxu0 0
      %382 = vmatpush1.bf16.msra.mxu0 0
      %383 = vmatprep.subr.bf16.mxu0 0
      %384 = vmatpush1.bf16.msra.mxu0 0
      %385 = vmatprep.subr.bf16.mxu0 0
      %386 = vmatpush1.bf16.msra.mxu0 0
      %387 = vmatprep.subr.bf16.mxu0 0
      %388 = vmatpush1.bf16.msra.mxu0 0
      %389 = vmatprep.subr.bf16.mxu0 0
      %390 = vmatpush1.bf16.msra.mxu0 0
      %391 = vmatprep.subr.bf16.mxu0 0
      %392 = vmatpush1.bf16.msra.mxu0 0
      %393 = vmatprep.subr.bf16.mxu0 0
      %394 = vmatpush1.bf16.msra.mxu0 0
      %395 = vmatprep.subr.bf16.mxu0 0
      %396 = vmatpush1.bf16.msra.mxu0 0
      %397 = vmatprep.subr.bf16.mxu0 0
      %398 = vmatpush1.bf16.msra.mxu0 0
      %399 = vmatprep.mubr.bf16.mxu0 0
      %400 = vmatmul.mubr.bf16.gmra.mrb[0].mxu0 %v316
      %v401 = vpop.f32.mrb[0].mxu0
      %v402 = vadd.f32 %v217, %v401
      %v403 = vpop.f32.mrb[0].mxu0
      %v404 = vpop.f32.mrb[0].mxu0
      %v405 = vadd.f32 %v217, %v404
      %v406 = vpop.f32.mrb[0].mxu0
      %407 = vmatprep.mubr.bf16.mxu0 0
      %408 = vmatmul.mubr.bf16.gmra.mrb[0].mxu0 %v319
      %v409 = vpop.f32.mrb[0].mxu0
      %v410 = vadd.f32 %v217, %v409
      %v411 = vpop.f32.mrb[0].mxu0
      %v412 = vpop.f32.mrb[0].mxu0
      %v413 = vadd.f32 %v217, %v412
      %v414 = vpop.f32.mrb[0].mxu0
      %415 = vmatprep.mubr.bf16.mxu0 0
      %416 = vmatmul.mubr.bf16.gmra.mrb[0].mxu0 %v322
      %v417 = vpop.f32.mrb[0].mxu0
      %v418 = vadd.f32 %v217, %v417
      %v419 = vpop.f32.mrb[0].mxu0
      %v420 = vpop.f32.mrb[0].mxu0
      %v421 = vadd.f32 %v217, %v420
      %v422 = vpop.f32.mrb[0].mxu0
      %423 = vmatprep.mubr.bf16.mxu0 0
      %424 = vmatmul.mubr.bf16.gmra.mrb[0].mxu0 %v325
      %v425 = vpop.f32.mrb[0].mxu0
      %v426 = vadd.f32 %v217, %v425
      %v427 = vpop.f32.mrb[0].mxu0
      %v428 = vpop.f32.mrb[0].mxu0
      %v429 = vadd.f32 %v217, %v428
      %v430 = vpop.f32.mrb[0].mxu0
      %431 = vmatprep.mubr.bf16.mxu0 0
      %432 = vmatmul.mubr.bf16.gmra.mrb[0].mxu0 %v328
      %v433 = vpop.f32.mrb[0].mxu0
      %v434 = vadd.f32 %v217, %v433
      %v435 = vpop.f32.mrb[0].mxu0
      %v436 = vpop.f32.mrb[0].mxu0
      %v437 = vadd.f32 %v217, %v436
      %v438 = vpop.f32.mrb[0].mxu0
      %439 = vmatprep.mubr.bf16.mxu0 0
      %440 = vmatmul.mubr.bf16.gmra.mrb[0].mxu0 %v331
      %v441 = vpop.f32.mrb[0].mxu0
      %v442 = vadd.f32 %v217, %v441
      %v443 = vpop.f32.mrb[0].mxu0
      %v444 = vpop.f32.mrb[0].mxu0
      %v445 = vadd.f32 %v217, %v444
      %v446 = vpop.f32.mrb[0].mxu0
      %447 = vmatprep.mubr.bf16.mxu0 0
      %448 = vmatmul.mubr.bf16.gmra.mrb[0].mxu0 %v334
      %v449 = vpop.f32.mrb[0].mxu0
      %v450 = vadd.f32 %v217, %v449
      %v451 = vpop.f32.mrb[0].mxu0
      %v452 = vpop.f32.mrb[0].mxu0
      %v453 = vadd.f32 %v217, %v452
      %v454 = vpop.f32.mrb[0].mxu0
      %455 = vmatprep.mubr.bf16.mxu0 0
      %456 = vmatmul.mubr.bf16.gmra.mrb[0].mxu0 %v337
      %v457 = vpop.f32.mrb[0].mxu0
      %v458 = vadd.f32 %v217, %v457
      %v459 = vpop.f32.mrb[0].mxu0
      %v460 = vpop.f32.mrb[0].mxu0
      %v461 = vadd.f32 %v217, %v460
      %v462 = vpop.f32.mrb[0].mxu0
      %463 = vmatprep.mubr.bf16.mxu0 0
      %464 = vmatmul.mubr.bf16.gmra.mrb[0].mxu0 %v340
      %v465 = vpop.f32.mrb[0].mxu0
      %v466 = vadd.f32 %v217, %v465
      %v467 = vpop.f32.mrb[0].mxu0
      %v468 = vpop.f32.mrb[0].mxu0
      %v469 = vadd.f32 %v217, %v468
      %v470 = vpop.f32.mrb[0].mxu0
      %471 = vmatprep.mubr.bf16.mxu0 0
      %472 = vmatmul.mubr.bf16.gmra.mrb[0].mxu0 %v343
      %v473 = vpop.f32.mrb[0].mxu0
      %v474 = vadd.f32 %v217, %v473
      %v475 = vpop.f32.mrb[0].mxu0
      %v476 = vpop.f32.mrb[0].mxu0
      %v477 = vadd.f32 %v217, %v476
      %v478 = vpop.f32.mrb[0].mxu0
      %479 = vmatprep.mubr.bf16.mxu0 0
      %480 = vmatmul.mubr.bf16.gmra.mrb[0].mxu0 %v346
      %v481 = vpop.f32.mrb[0].mxu0
      %v482 = vadd.f32 %v217, %v481
      %v483 = vpop.f32.mrb[0].mxu0
      %v484 = vpop.f32.mrb[0].mxu0
      %v485 = vadd.f32 %v217, %v484
      %v486 = vpop.f32.mrb[0].mxu0
      %487 = vmatprep.mubr.bf16.mxu0 0
      %488 = vmatmul.mubr.bf16.gmra.mrb[0].mxu0 %v349
      %v489 = vpop.f32.mrb[0].mxu0
      %v490 = vadd.f32 %v217, %v489
      %v491 = vpop.f32.mrb[0].mxu0
      %v492 = vpop.f32.mrb[0].mxu0
      %v493 = vadd.f32 %v217, %v492
      %v494 = vpop.f32.mrb[0].mxu0
      %495 = vmatprep.mubr.bf16.mxu0 0
      %496 = vmatmul.mubr.bf16.gmra.mrb[0].mxu0 %v352
      %v497 = vpop.f32.mrb[0].mxu0
      %v498 = vadd.f32 %v217, %v497
      %v499 = vpop.f32.mrb[0].mxu0
      %v500 = vpop.f32.mrb[0].mxu0
      %v501 = vadd.f32 %v217, %v500
      %v502 = vpop.f32.mrb[0].mxu0
      %503 = vmatprep.mubr.bf16.mxu0 0
      %504 = vmatmul.mubr.bf16.gmra.mrb[0].mxu0 %v355
      %v505 = vpop.f32.mrb[0].mxu0
      %v506 = vadd.f32 %v217, %v505
      %v507 = vpop.f32.mrb[0].mxu0
      %v508 = vpop.f32.mrb[0].mxu0
      %v509 = vadd.f32 %v217, %v508
      %v510 = vpop.f32.mrb[0].mxu0
      %511 = vmatprep.mubr.bf16.mxu0 0
      %512 = vmatmul.mubr.bf16.gmra.mrb[0].mxu0 %v358
      %v513 = vpop.f32.mrb[0].mxu0
      %v514 = vadd.f32 %v217, %v513
      %v515 = vpop.f32.mrb[0].mxu0
      %v516 = vpop.f32.mrb[0].mxu0
      %v517 = vadd.f32 %v217, %v516
      %v518 = vpop.f32.mrb[0].mxu0
      %519 = vmatprep.mubr.bf16.mxu0 0
      %520 = vmatmul.mubr.bf16.gmra.mrb[0].mxu0 %v361
      %v521 = vpop.f32.mrb[0].mxu0
      %v522 = vadd.f32 %v217, %v521
      %v523 = vpop.f32.mrb[0].mxu0
      %v524 = vpop.f32.mrb[0].mxu0
      %v525 = vadd.f32 %v217, %v524
      %v526 = vpop.f32.mrb[0].mxu0
      %527 = vdwg.mxu0
      %vm528 = vcmask 261120
      %529 = vst.msk [vmem:[%s172] sm:$0xff] %vm528, %v402
      %530 = vst.msk [vmem:[%s172 + $0x8] sm:$0xff] %vm528, %v405
      %531 = vst.msk [vmem:[%s172 + $0x10] sm:$0xff] %vm528, %v410
      %532 = vst.msk [vmem:[%s172 + $0x18] sm:$0xff] %vm528, %v413
      %533 = vst.msk [vmem:[%s172 + $0x20] sm:$0xff] %vm528, %v418
      %534 = vst.msk [vmem:[%s172 + $0x28] sm:$0xff] %vm528, %v421
      %535 = vst.msk [vmem:[%s172 + $0x30] sm:$0xff] %vm528, %v426
      %536 = vst.msk [vmem:[%s172 + $0x38] sm:$0xff] %vm528, %v429
      %537 = vst.msk [vmem:[%s172 + $0x40] sm:$0xff] %vm528, %v434
      %538 = vst.msk [vmem:[%s172 + $0x48] sm:$0xff] %vm528, %v437
      %539 = vst.msk [vmem:[%s172 + $0x50] sm:$0xff] %vm528, %v442
      %540 = vst.msk [vmem:[%s172 + $0x58] sm:$0xff] %vm528, %v445
      %541 = vst.msk [vmem:[%s172 + $0x60] sm:$0xff] %vm528, %v450
      %542 = vst.msk [vmem:[%s172 + $0x68] sm:$0xff] %vm528, %v453
      %543 = vst.msk [vmem:[%s172 + $0x70] sm:$0xff] %vm528, %v458
      %544 = vst.msk [vmem:[%s172 + $0x78] sm:$0xff] %vm528, %v461
      %545 = vst.msk [vmem:[%s172 + $0x80] sm:$0xff] %vm528, %v466
      %546 = vst.msk [vmem:[%s172 + $0x88] sm:$0xff] %vm528, %v469
      %547 = vst.msk [vmem:[%s172 + $0x90] sm:$0xff] %vm528, %v474
      %548 = vst.msk [vmem:[%s172 + $0x98] sm:$0xff] %vm528, %v477
      %549 = vst.msk [vmem:[%s172 + $0xa0] sm:$0xff] %vm528, %v482
      %550 = vst.msk [vmem:[%s172 + $0xa8] sm:$0xff] %vm528, %v485
      %551 = vst.msk [vmem:[%s172 + $0xb0] sm:$0xff] %vm528, %v490
      %552 = vst.msk [vmem:[%s172 + $0xb8] sm:$0xff] %vm528, %v493
      %553 = vst.msk [vmem:[%s172 + $0xc0] sm:$0xff] %vm528, %v498
      %554 = vst.msk [vmem:[%s172 + $0xc8] sm:$0xff] %vm528, %v501
      %555 = vst.msk [vmem:[%s172 + $0xd0] sm:$0xff] %vm528, %v506
      %556 = vst.msk [vmem:[%s172 + $0xd8] sm:$0xff] %vm528, %v509
      %557 = vst.msk [vmem:[%s172 + $0xe0] sm:$0xff] %vm528, %v514
      %558 = vst.msk [vmem:[%s172 + $0xe8] sm:$0xff] %vm528, %v517
      %559 = vst.msk [vmem:[%s172 + $0xf0] sm:$0xff] %vm528, %v522
      %560 = vst.msk [vmem:[%s172 + $0xf8] sm:$0xff] %vm528, %v525
      %s561 = smul.u32 32, %s14
      %p562 = scmp.lt.s32.totalorder %s561, 95
      %s563 = scalar_select %p562, %s561, 95
      %s564 = smul.addr %s563, 8
      %s565 = scalar_lea.vmem %s3, %s564
      // Predicated region
      $region33: #{stem_forward.13} parent=31 // pred_check
        %p566 = pneg %p100
      $region34: #{stem_forward.13} parent=31 // pred_check_branch
        %568 = sbr.rel (%p566) target = $region36
      $region35: #{stem_forward.13} parent=31 // pred_region
        %s569 = smul.u32 32, %s14
      $region36: #{stem_forward.13} parent=31 // pred_fallthru
        _
    $region32: #{stem_forward.13} parent=5 // pred_fallthru
      _
    %p570 = scmp.le.s32.totalorder 2, %s9
    // Predicated region
    $region37: #{stem_forward.13} parent=5 // pred_check
      %p571 = pneg %p570
    $region38: #{stem_forward.13} parent=5 // pred_check_branch
      %573 = sbr.rel (%p571) target = $region40
    $region39: #{stem_forward.13} parent=5 // pred_region
      %s574 = ssub.s32 %s9, 2
      // Predicated region
      $region41: #{stem_forward.13} parent=39 // pred_check
        %p575 = pneg %p106
      $region42: #{stem_forward.13} parent=39 // pred_check_branch
        %577 = sbr.rel (%p575) target = $region44
      $region43: #{stem_forward.13} parent=39 // pred_region
        %s578 = smul.u32 32, %s15
        %p579 = scmp.lt.s32.totalorder %s578, 95
        %s580 = scalar_select %p579, %s578, 95
        %s581 = smul.addr %s580, 8
        %s582 = scalar_lea.vmem %s3, %s581
      $region44: #{stem_forward.13} parent=39 // pred_fallthru
        _
    $region40: #{stem_forward.13} parent=5 // pred_fallthru
      _
  $region6: #{stem_forward.13} parent=0 // loop_footer
    %s13 = sadd.s32 1, %s9
  $region7: #{stem_forward.13} parent=0 // loop_footer_branch
    %8 = sbr.rel target = $region3
  $region8: #{stem_forward.13} parent=0 // loop_exit
    _

// kernel: stem_forward.14
$region0: #{stem_forward.14}
  #allocation0 [shape = 'u32[]', space=smem, size = 0x4, offset = 0x4, fixed_abs, tag = 'smem constant byte address 0x4 - core index']
  #allocation1 [shape = 'u32[144,128]{1,0:T(1,128)}', space=vmem, size = 0x12000, scoped, tag = 'internal scratch']
  %s0 = inlined_call_operand.vmem [shape: bf16[512,288], index: 0, kind: input, shape index: {}]
  %s1 = inlined_call_operand.vmem [shape: bf16[288,32], index: 1, kind: input, shape index: {}]
  %s2 = inlined_call_operand.vmem [shape: f32[1,32], index: 2, kind: input, shape index: {}]
  %s3 = inlined_call_operand.vmem [shape: f32[512,32], index: 3, kind: output, shape index: {}]
  %s4 = sld [smem:[#allocation0]]
  $region45: #{stem_forward.14} parent=0
    _
  %s6 = ssub.s32 1, %s4
  %s7 = scalar_select 0, %s6, %s4
  loop: start=0, step=1, limit=4
  $region2: #{stem_forward.14} parent=0 // loop_pre_header
    _
  $region3: #{stem_forward.14} parent=0 // loop_header
    %s9 = sphi 0, %s13
    %p10 = scmp.ge.s32.totalorder %s9, 4
    %s19 = sphi 0, %s21
    %s22 = sphi 0, %s19
    %s23 = sphi 0, %s22
    %s39 = sphi 0, %s23
    %s43 = sphi 0, %s43
    %s45 = sphi 0, %s43
    %s46 = sphi 0, %s45
    %s60 = sphi 0, %s46
    %s64 = sphi 0, %s64
    %s66 = sphi 0, %s64
    %s67 = sphi 0, %s66
    %s81 = sphi 0, %s67
    %s87 = sphi 0, %s89
    %s90 = sphi 0, %s87
    %s91 = sphi 0, %s90
    %s107 = sphi 0, %s91
  $region4: #{stem_forward.14} parent=0 // loop_header_branch
    %12 = sbr.rel (%p10) target = $region8
  $region5: #{stem_forward.14} parent=0 // loop_body
    %s14 = ssub.s32 %s9, 1
    %s15 = ssub.s32 %s9, 2
    %s16 = sadd.s32 %s9, 1
    %s17 = ssub.s32 %s9, %s16
    %p18 = scmp.eq.s32.totalorder %s17, 0
    %s20 = sadd.s32 %s19, 1
    %s21 = scalar_select %p18, %s19, %s20
    %p24 = pneg %p18
    %p25 = scmp.eq.s32.totalorder %s9, 1
    %p26 = por %p24, %p25
    %p27 = scmp.ne.s32.totalorder %s19, %s22
    %p28 = scmp.eq.s32.totalorder %s9, 0
    %p29 = por %p27, %p28
    %p30 = scmp.ne.s32.totalorder %s19, %s22
    %p31 = scmp.eq.s32.totalorder %s14, 1
    %p32 = por %p30, %p31
    %p33 = scmp.ne.s32.totalorder %s22, %s23
    %p34 = scmp.eq.s32.totalorder %s14, 0
    %p35 = por %p33, %p34
    %p36 = scmp.ne.s32.totalorder %s22, %s23
    %p37 = scmp.eq.s32.totalorder %s15, 1
    %p38 = por %p36, %p37
    %p40 = scmp.ne.s32.totalorder %s23, %s39
    %p41 = scmp.eq.s32.totalorder %s15, 0
    %p42 = por %p40, %p41
    %s44 = sadd.s32 %s43, 1
    %p47 = scmp.eq.s32.totalorder %s9, 1
    %p48 = scmp.ne.s32.totalorder %s43, %s45
    %p49 = scmp.eq.s32.totalorder %s9, 0
    %p50 = por %p48, %p49
    %p51 = scmp.ne.s32.totalorder %s43, %s45
    %p52 = scmp.eq.s32.totalorder %s14, 1
    %p53 = por %p51, %p52
    %p54 = scmp.ne.s32.totalorder %s45, %s46
    %p55 = scmp.eq.s32.totalorder %s14, 0
    %p56 = por %p54, %p55
    %p57 = scmp.ne.s32.totalorder %s45, %s46
    %p58 = scmp.eq.s32.totalorder %s15, 1
    %p59 = por %p57, %p58
    %p61 = scmp.ne.s32.totalorder %s46, %s60
    %p62 = scmp.eq.s32.totalorder %s15, 0
    %p63 = por %p61, %p62
    %s65 = sadd.s32 %s64, 1
    %p68 = scmp.eq.s32.totalorder %s9, 1
    %p69 = scmp.ne.s32.totalorder %s64, %s66
    %p70 = scmp.eq.s32.totalorder %s9, 0
    %p71 = por %p69, %p70
    %p72 = scmp.ne.s32.totalorder %s64, %s66
    %p73 = scmp.eq.s32.totalorder %s14, 1
    %p74 = por %p72, %p73
    %p75 = scmp.ne.s32.totalorder %s66, %s67
    %p76 = scmp.eq.s32.totalorder %s14, 0
    %p77 = por %p75, %p76
    %p78 = scmp.ne.s32.totalorder %s66, %s67
    %p79 = scmp.eq.s32.totalorder %s15, 1
    %p80 = por %p78, %p79
    %p82 = scmp.ne.s32.totalorder %s67, %s81
    %p83 = scmp.eq.s32.totalorder %s15, 0
    %p84 = por %p82, %p83
    %s85 = ssub.s32 %s9, %s16
    %p86 = scmp.eq.s32.totalorder %s85, 0
    %s88 = sadd.s32 %s87, 1
    %s89 = scalar_select %p86, %s87, %s88
    %p92 = pneg %p86
    %p93 = scmp.eq.s32.totalorder %s9, 1
    %p94 = por %p92, %p93
    %p95 = scmp.ne.s32.totalorder %s87, %s90
    %p96 = scmp.eq.s32.totalorder %s9, 0
    %p97 = por %p95, %p96
    %p98 = scmp.ne.s32.totalorder %s87, %s90
    %p99 = scmp.eq.s32.totalorder %s14, 1
    %p100 = por %p98, %p99
    %p101 = scmp.ne.s32.totalorder %s90, %s91
    %p102 = scmp.eq.s32.totalorder %s14, 0
    %p103 = por %p101, %p102
    %p104 = scmp.ne.s32.totalorder %s90, %s91
    %p105 = scmp.eq.s32.totalorder %s15, 1
    %p106 = por %p104, %p105
    %p108 = scmp.ne.s32.totalorder %s91, %s107
    %p109 = scmp.eq.s32.totalorder %s15, 0
    %p110 = por %p108, %p109
    %p111 = scmp.le.s32.totalorder 1, %s9
    %p112 = scmp.lt.s32.totalorder %s9, 3
    %p113 = pnand %p111, %p112
    %p114 = pneg %p113
    // Predicated region
    $region9: #{stem_forward.14} parent=5 // pred_check
      _
    $region10: #{stem_forward.14} parent=5 // pred_check_branch
      %116 = sbr.rel (%p113) target = $region12
    $region11: #{stem_forward.14} parent=5 // pred_region
      %s117 = ssub.s32 %s9, 1
      // Predicated region
      $region13: #{stem_forward.14} parent=11 // pred_check
        %p118 = pneg %p56
      $region14: #{stem_forward.14} parent=11 // pred_check_branch
        %120 = sbr.rel (%p118) target = $region16
      $region15: #{stem_forward.14} parent=11 // pred_region
        _
      $region16: #{stem_forward.14} parent=11 // pred_fallthru
        _
      // Predicated region
      $region17: #{stem_forward.14} parent=11 // pred_check
        %p121 = pneg %p77
      $region18: #{stem_forward.14} parent=11 // pred_check_branch
        %123 = sbr.rel (%p121) target = $region20
      $region19: #{stem_forward.14} parent=11 // pred_region
        _
      $region20: #{stem_forward.14} parent=11 // pred_fallthru
        _
    $region12: #{stem_forward.14} parent=5 // pred_fallthru
      _
    %p124 = scmp.lt.s32.totalorder %s9, 2
    // Predicated region
    $region21: #{stem_forward.14} parent=5 // pred_check
      %p125 = pneg %p124
    $region22: #{stem_forward.14} parent=5 // pred_check_branch
      %127 = sbr.rel (%p125) target = $region24
    $region23: #{stem_forward.14} parent=5 // pred_region
      // Predicated region
      $region25: #{stem_forward.14} parent=23 // pred_check
        %p128 = pneg %p29
      $region26: #{stem_forward.14} parent=23 // pred_check_branch
        %130 = sbr.rel (%p128) target = $region28
      $region27: #{stem_forward.14} parent=23 // pred_region
        %s131 = smul.u32 32, %s9
        %p132 = scmp.lt.s32.totalorder %s131, 63
        %s133 = scalar_select %p132, %s131, 63
        %s134 = smul.addr %s133, 3
        %s135 = smul.addr %s134, 4
        %s136 = scalar_lea.vmem %s0, %s135
        %s137 = smul.u32 32, %s9
      $region28: #{stem_forward.14} parent=23 // pred_fallthru
        _
    $region24: #{stem_forward.14} parent=5 // pred_fallthru
      _
    %p138 = scmp.le.s32.totalorder 1, %s9
    %p139 = scmp.lt.s32.totalorder %s9, 3
    %p140 = pnand %p138, %p139
    %p141 = pneg %p140
    // Predicated region
    $region29: #{stem_forward.14} parent=5 // pred_check
      _
    $region30: #{stem_forward.14} parent=5 // pred_check_branch
      %143 = sbr.rel (%p140) target = $region32
    $region31: #{stem_forward.14} parent=5 // pred_region
      %s144 = ssub.s32 %s9, 1
      %s145 = smul.u32 32, %s14
      %p146 = scmp.lt.s32.totalorder %s145, 63
      %s147 = scalar_select %p146, %s145, 63
      %s148 = smul.addr %s147, 3
      %s149 = smul.addr %s148, 4
      %s150 = scalar_lea.vmem %s0, %s149
      %p151 = pneg %p35
      %p152 = pneg %p32
      %p153 = pneg %p56
      %p154 = pneg %p53
      %p155 = pneg %p77
      %p156 = pneg %p74
      %p157 = pneg %p103
      %p158 = pneg %p100
      %s159 = smul.u32 32, %s14
      %p160 = scmp.lt.s32.totalorder %s159, 63
      %s161 = scalar_select %p160, %s159, 63
      %s162 = smul.addr %s161, 8
      %s163 = scalar_lea.vmem %s3, %s162
      %s164 = smul.u32 32, %s14
      %p165 = scmp.lt.s32.totalorder %s164, 63
      %s166 = scalar_select %p165, %s164, 63
      %s167 = smul.addr %s166, 3
      %s168 = smul.addr %s167, 4
      %s169 = scalar_lea.vmem %s0, %s168
      %s170 = smul.u32 32, %s14
      %s171 = smul.u32 32, %s14
      %p172 = scmp.lt.s32.totalorder %s171, 63
      %s173 = scalar_select %p172, %s171, 63
      %s174 = smul.addr %s173, 8
      %s175 = scalar_lea.vmem %s3, %s174
      %s176 = smul.u32 32, %s14
      %v178 = vld [vmem:[%s169] sm:$0xff]
      %v179 = vld [vmem:[%s169 + $0x8] sm:$0xf]
      %v180 = vld [vmem:[%s169 + $0xc] sm:$0xff]
      %v181 = vld [vmem:[%s169 + $0x14] sm:$0xf]
      %v182 = vld [vmem:[%s169 + $0x18] sm:$0xff]
      %v183 = vld [vmem:[%s169 + $0x20] sm:$0xf]
      %v184 = vld [vmem:[%s169 + $0x24] sm:$0xff]
      %v185 = vld [vmem:[%s169 + $0x2c] sm:$0xf]
      %v186 = vld [vmem:[%s169 + $0x30] sm:$0xff]
      %v187 = vld [vmem:[%s169 + $0x38] sm:$0xf]
      %v188 = vld [vmem:[%s169 + $0x3c] sm:$0xff]
      %v189 = vld [vmem:[%s169 + $0x44] sm:$0xf]
      %v190 = vld [vmem:[%s169 + $0x48] sm:$0xff]
      %v191 = vld [vmem:[%s169 + $0x50] sm:$0xf]
      %v192 = vld [vmem:[%s169 + $0x54] sm:$0xff]
      %v193 = vld [vmem:[%s169 + $0x5c] sm:$0xf]
      %v194 = vld [vmem:[%s169 + $0x60] sm:$0xff]
      %v195 = vld [vmem:[%s169 + $0x68] sm:$0xf]
      %v196 = vld [vmem:[%s169 + $0x6c] sm:$0xff]
      %v197 = vld [vmem:[%s169 + $0x74] sm:$0xf]
      %v198 = vld [vmem:[%s169 + $0x78] sm:$0xff]
      %v199 = vld [vmem:[%s169 + $0x80] sm:$0xf]
      %v200 = vld [vmem:[%s169 + $0x84] sm:$0xff]
      %v201 = vld [vmem:[%s169 + $0x8c] sm:$0xf]
      %v202 = vld [vmem:[%s169 + $0x90] sm:$0xff]
      %v203 = vld [vmem:[%s169 + $0x98] sm:$0xf]
      %v204 = vld [vmem:[%s169 + $0x9c] sm:$0xff]
      %v205 = vld [vmem:[%s169 + $0xa4] sm:$0xf]
      %v206 = vld [vmem:[%s169 + $0xa8] sm:$0xff]
      %v207 = vld [vmem:[%s169 + $0xb0] sm:$0xf]
      %v208 = vld [vmem:[%s169 + $0xb4] sm:$0xff]
      %v209 = vld [vmem:[%s169 + $0xbc] sm:$0xf]
      %v210 = vld [vmem:[%s169 + $0xc0] sm:$0xff]
      %v211 = vld [vmem:[%s169 + $0xc8] sm:$0xf]
      %v212 = vld [vmem:[%s169 + $0xcc] sm:$0xff]
      %v213 = vld [vmem:[%s169 + $0xd4] sm:$0xf]
      %v214 = vld [vmem:[%s169 + $0xd8] sm:$0xff]
      %v215 = vld [vmem:[%s169 + $0xe0] sm:$0xf]
      %v216 = vld [vmem:[%s169 + $0xe4] sm:$0xff]
      %v217 = vld [vmem:[%s169 + $0xec] sm:$0xf]
      %v218 = vld [vmem:[%s169 + $0xf0] sm:$0xff]
      %v219 = vld [vmem:[%s169 + $0xf8] sm:$0xf]
      %v220 = vld [vmem:[%s169 + $0xfc] sm:$0xff]
      %v221 = vld [vmem:[%s169 + $0x104] sm:$0xf]
      %v222 = vld [vmem:[%s169 + $0x108] sm:$0xff]
      %v223 = vld [vmem:[%s169 + $0x110] sm:$0xf]
      %v224 = vld [vmem:[%s169 + $0x114] sm:$0xff]
      %v225 = vld [vmem:[%s169 + $0x11c] sm:$0xf]
      %v226 = vld [vmem:[%s169 + $0x120] sm:$0xff]
      %v227 = vld [vmem:[%s169 + $0x128] sm:$0xf]
      %v228 = vld [vmem:[%s169 + $0x12c] sm:$0xff]
      %v229 = vld [vmem:[%s169 + $0x134] sm:$0xf]
      %v230 = vld [vmem:[%s169 + $0x138] sm:$0xff]
      %v231 = vld [vmem:[%s169 + $0x140] sm:$0xf]
      %v232 = vld [vmem:[%s169 + $0x144] sm:$0xff]
      %v233 = vld [vmem:[%s169 + $0x14c] sm:$0xf]
      %v234 = vld [vmem:[%s169 + $0x150] sm:$0xff]
      %v235 = vld [vmem:[%s169 + $0x158] sm:$0xf]
      %v236 = vld [vmem:[%s169 + $0x15c] sm:$0xff]
      %v237 = vld [vmem:[%s169 + $0x164] sm:$0xf]
      %v238 = vld [vmem:[%s169 + $0x168] sm:$0xff]
      %v239 = vld [vmem:[%s169 + $0x170] sm:$0xf]
      %v240 = vld [vmem:[%s169 + $0x174] sm:$0xff]
      %v241 = vld [vmem:[%s169 + $0x17c] sm:$0xf]
      %v242 = vld [vmem:[%s1] sm:$0xf]
      %v243 = vld [vmem:[%s1 + $0x4] sm:$0xf]
      %v244 = vld [vmem:[%s1 + $0x8] sm:$0xf]
      %v245 = vld [vmem:[%s1 + $0xc] sm:$0xf]
      %v246 = vld [vmem:[%s1 + $0x10] sm:$0xf]
      %v247 = vld [vmem:[%s1 + $0x14] sm:$0xf]
      %v248 = vld [vmem:[%s1 + $0x18] sm:$0xf]
      %v249 = vld [vmem:[%s1 + $0x1c] sm:$0xf]
      %v250 = vld [vmem:[%s1 + $0x20] sm:$0xf]
      %v251 = vld [vmem:[%s1 + $0x24] sm:$0xf]
      %v252 = vld [vmem:[%s1 + $0x28] sm:$0xf]
      %v253 = vld [vmem:[%s1 + $0x2c] sm:$0xf]
      %v254 = vld [vmem:[%s1 + $0x30] sm:$0xf]
      %v255 = vld [vmem:[%s1 + $0x34] sm:$0xf]
      %v256 = vld [vmem:[%s1 + $0x38] sm:$0xf]
      %v257 = vld [vmem:[%s1 + $0x3c] sm:$0xf]
      %v258 = vld [vmem:[%s1 + $0x40] sm:$0xf]
      %v259 = vld [vmem:[%s1 + $0x44] sm:$0xf]
      %v260 = vld [vmem:[%s1 + $0x48] sm:$0xf]
      %v261 = vld [vmem:[%s1 + $0x4c] sm:$0xf]
      %v262 = vld [vmem:[%s1 + $0x50] sm:$0xf]
      %v263 = vld [vmem:[%s1 + $0x54] sm:$0xf]
      %v264 = vld [vmem:[%s1 + $0x58] sm:$0xf]
      %v265 = vld [vmem:[%s1 + $0x5c] sm:$0xf]
      %v266 = vld [vmem:[%s1 + $0x60] sm:$0xf]
      %v267 = vld [vmem:[%s1 + $0x64] sm:$0xf]
      %v268 = vld [vmem:[%s1 + $0x68] sm:$0xf]
      %v269 = vld [vmem:[%s1 + $0x6c] sm:$0xf]
      %v270 = vld [vmem:[%s1 + $0x70] sm:$0xf]
      %v271 = vld [vmem:[%s1 + $0x74] sm:$0xf]
      %v272 = vld [vmem:[%s1 + $0x78] sm:$0xf]
      %v273 = vld [vmem:[%s1 + $0x7c] sm:$0xf]
      %v274 = vld [vmem:[%s1 + $0x80] sm:$0xf]
      %v275 = vld [vmem:[%s1 + $0x84] sm:$0xf]
      %v276 = vld [vmem:[%s1 + $0x88] sm:$0xf]
      %v277 = vld [vmem:[%s1 + $0x8c] sm:$0xf]
      %v278 = vld [vmem:[%s2] sm:$0x1]
      %v280 = vlaneseq
      %v281 = vshrl.u32 %v280, 7
      %v282 = vsub.s32 0, %v281
      %v283 = vrot.slane %v278, %v282
      %v349 = vunpack.c.l.b16 %v178
      %v350 = vunpack.c.h.b16 %v178
      %v351 = vunpack.c.l.b16 %v179
      %v352 = vunpack.c.l.b16 %v180
      %v353 = vunpack.c.h.b16 %v180
      %v354 = vunpack.c.l.b16 %v181
      %v355 = vunpack.c.l.b16 %v182
      %v356 = vunpack.c.h.b16 %v182
      %v357 = vunpack.c.l.b16 %v183
      %v358 = vunpack.c.l.b16 %v184
      %v359 = vunpack.c.h.b16 %v184
      %v360 = vunpack.c.l.b16 %v185
      %v361 = vunpack.c.l.b16 %v186
      %v362 = vunpack.c.h.b16 %v186
      %v363 = vunpack.c.l.b16 %v187
      %v364 = vunpack.c.l.b16 %v188
      %v365 = vunpack.c.h.b16 %v188
      %v366 = vunpack.c.l.b16 %v189
      %v367 = vunpack.c.l.b16 %v190
      %v368 = vunpack.c.h.b16 %v190
      %v369 = vunpack.c.l.b16 %v191
      %v370 = vunpack.c.l.b16 %v192
      %v371 = vunpack.c.h.b16 %v192
      %v372 = vunpack.c.l.b16 %v193
      %v373 = vunpack.c.l.b16 %v194
      %v374 = vunpack.c.h.b16 %v194
      %v375 = vunpack.c.l.b16 %v195
      %v376 = vunpack.c.l.b16 %v196
      %v377 = vunpack.c.h.b16 %v196
      %v378 = vunpack.c.l.b16 %v197
      %v379 = vunpack.c.l.b16 %v198
      %v380 = vunpack.c.h.b16 %v198
      %v381 = vunpack.c.l.b16 %v199
      %v382 = vunpack.c.l.b16 %v200
      %v383 = vunpack.c.h.b16 %v200
      %v384 = vunpack.c.l.b16 %v201
      %v385 = vunpack.c.l.b16 %v202
      %v386 = vunpack.c.h.b16 %v202
      %v387 = vunpack.c.l.b16 %v203
      %v388 = vunpack.c.l.b16 %v204
      %v389 = vunpack.c.h.b16 %v204
      %v390 = vunpack.c.l.b16 %v205
      %v391 = vunpack.c.l.b16 %v206
      %v392 = vunpack.c.h.b16 %v206
      %v393 = vunpack.c.l.b16 %v207
      %v394 = vunpack.c.l.b16 %v208
      %v395 = vunpack.c.h.b16 %v208
      %v396 = vunpack.c.l.b16 %v209
      %v397 = vunpack.c.l.b16 %v210
      %v398 = vunpack.c.h.b16 %v210
      %v399 = vunpack.c.l.b16 %v211
      %v400 = vunpack.c.l.b16 %v212
      %v401 = vunpack.c.h.b16 %v212
      %v402 = vunpack.c.l.b16 %v213
      %v403 = vunpack.c.l.b16 %v214
      %v404 = vunpack.c.h.b16 %v214
      %v405 = vunpack.c.l.b16 %v215
      %v406 = vunpack.c.l.b16 %v216
      %v407 = vunpack.c.h.b16 %v216
      %v408 = vunpack.c.l.b16 %v217
      %v409 = vunpack.c.l.b16 %v218
      %v410 = vunpack.c.h.b16 %v218
      %v411 = vunpack.c.l.b16 %v219
      %v412 = vunpack.c.l.b16 %v220
      %v413 = vunpack.c.h.b16 %v220
      %v414 = vunpack.c.l.b16 %v221
      %v415 = vunpack.c.l.b16 %v222
      %v416 = vunpack.c.h.b16 %v222
      %v417 = vunpack.c.l.b16 %v223
      %v418 = vunpack.c.l.b16 %v224
      %v419 = vunpack.c.h.b16 %v224
      %v420 = vunpack.c.l.b16 %v225
      %v421 = vunpack.c.l.b16 %v226
      %v422 = vunpack.c.h.b16 %v226
      %v423 = vunpack.c.l.b16 %v227
      %v424 = vunpack.c.l.b16 %v228
      %v425 = vunpack.c.h.b16 %v228
      %v426 = vunpack.c.l.b16 %v229
      %v427 = vunpack.c.l.b16 %v230
      %v428 = vunpack.c.h.b16 %v230
      %v429 = vunpack.c.l.b16 %v231
      %v430 = vunpack.c.l.b16 %v232
      %v431 = vunpack.c.h.b16 %v232
      %v432 = vunpack.c.l.b16 %v233
      %v433 = vunpack.c.l.b16 %v234
      %v434 = vunpack.c.h.b16 %v234
      %v435 = vunpack.c.l.b16 %v235
      %v436 = vunpack.c.l.b16 %v236
      %v437 = vunpack.c.h.b16 %v236
      %v438 = vunpack.c.l.b16 %v237
      %v439 = vunpack.c.l.b16 %v238
      %v440 = vunpack.c.h.b16 %v238
      %v441 = vunpack.c.l.b16 %v239
      %v442 = vunpack.c.l.b16 %v240
      %v443 = vunpack.c.h.b16 %v240
      %v444 = vunpack.c.l.b16 %v241
      %v445 = vpack.c.b16 %v352, %v349
      %v446 = vpack.c.b16 %v353, %v350
      %v447 = vpack.c.b16 %v354, %v351
      %v448 = vpack.c.b16 %v358, %v355
      %v449 = vpack.c.b16 %v359, %v356
      %v450 = vpack.c.b16 %v360, %v357
      %v451 = vpack.c.b16 %v364, %v361
      %v452 = vpack.c.b16 %v365, %v362
      %v453 = vpack.c.b16 %v366, %v363
      %v454 = vpack.c.b16 %v370, %v367
      %v455 = vpack.c.b16 %v371, %v368
      %v456 = vpack.c.b16 %v372, %v369
      %v457 = vpack.c.b16 %v376, %v373
      %v458 = vpack.c.b16 %v377, %v374
      %v459 = vpack.c.b16 %v378, %v375
      %v460 = vpack.c.b16 %v382, %v379
      %v461 = vpack.c.b16 %v383, %v380
      %v462 = vpack.c.b16 %v384, %v381
      %v463 = vpack.c.b16 %v388, %v385
      %v464 = vpack.c.b16 %v389, %v386
      %v465 = vpack.c.b16 %v390, %v387
      %v466 = vpack.c.b16 %v394, %v391
      %v467 = vpack.c.b16 %v395, %v392
      %v468 = vpack.c.b16 %v396, %v393
      %v469 = vpack.c.b16 %v400, %v397
      %v470 = vpack.c.b16 %v401, %v398
      %v471 = vpack.c.b16 %v402, %v399
      %v472 = vpack.c.b16 %v406, %v403
      %v473 = vpack.c.b16 %v407, %v404
      %v474 = vpack.c.b16 %v408, %v405
      %v475 = vpack.c.b16 %v412, %v409
      %v476 = vpack.c.b16 %v413, %v410
      %v477 = vpack.c.b16 %v414, %v411
      %v478 = vpack.c.b16 %v418, %v415
      %v479 = vpack.c.b16 %v419, %v416
      %v480 = vpack.c.b16 %v420, %v417
      %v481 = vpack.c.b16 %v424, %v421
      %v482 = vpack.c.b16 %v425, %v422
      %v483 = vpack.c.b16 %v426, %v423
      %v484 = vpack.c.b16 %v430, %v427
      %v485 = vpack.c.b16 %v431, %v428
      %v486 = vpack.c.b16 %v432, %v429
      %v487 = vpack.c.b16 %v436, %v433
      %v488 = vpack.c.b16 %v437, %v434
      %v489 = vpack.c.b16 %v438, %v435
      %v490 = vpack.c.b16 %v442, %v439
      %v491 = vpack.c.b16 %v443, %v440
      %v492 = vpack.c.b16 %v444, %v441
      %v561 = vunpack.c.l.b16 %v242
      %v562 = vunpack.c.l.b16 %v243
      %v563 = vunpack.c.l.b16 %v244
      %v564 = vunpack.c.l.b16 %v245
      %v565 = vunpack.c.l.b16 %v246
      %v566 = vunpack.c.l.b16 %v247
      %v567 = vunpack.c.l.b16 %v248
      %v568 = vunpack.c.l.b16 %v249
      %v569 = vunpack.c.l.b16 %v250
      %v570 = vunpack.c.l.b16 %v251
      %v571 = vunpack.c.l.b16 %v252
      %v572 = vunpack.c.l.b16 %v253
      %v573 = vunpack.c.l.b16 %v254
      %v574 = vunpack.c.l.b16 %v255
      %v575 = vunpack.c.l.b16 %v256
      %v576 = vunpack.c.l.b16 %v257
      %v577 = vunpack.c.l.b16 %v258
      %v578 = vunpack.c.l.b16 %v259
      %v579 = vunpack.c.l.b16 %v260
      %v580 = vunpack.c.l.b16 %v261
      %v581 = vunpack.c.l.b16 %v262
      %v582 = vunpack.c.l.b16 %v263
      %v583 = vunpack.c.l.b16 %v264
      %v584 = vunpack.c.l.b16 %v265
      %v585 = vunpack.c.l.b16 %v266
      %v586 = vunpack.c.l.b16 %v267
      %v587 = vunpack.c.l.b16 %v268
      %v588 = vunpack.c.l.b16 %v269
      %v589 = vunpack.c.l.b16 %v270
      %v590 = vunpack.c.l.b16 %v271
      %v591 = vunpack.c.l.b16 %v272
      %v592 = vunpack.c.l.b16 %v273
      %v593 = vunpack.c.l.b16 %v274
      %v594 = vunpack.c.l.b16 %v275
      %v595 = vunpack.c.l.b16 %v276
      %v596 = vunpack.c.l.b16 %v277
      %v597 = vpack.c.b16 %v562, %v561
      %v598 = vpack.c.b16 %v564, %v563
      %v599 = vpack.c.b16 %v566, %v565
      %v600 = vpack.c.b16 %v568, %v567
      %v601 = vpack.c.b16 %v570, %v569
      %v602 = vpack.c.b16 %v572, %v571
      %v603 = vpack.c.b16 %v574, %v573
      %v604 = vpack.c.b16 %v576, %v575
      %v605 = vpack.c.b16 %v578, %v577
      %v606 = vpack.c.b16 %v580, %v579
      %v607 = vpack.c.b16 %v582, %v581
      %v608 = vpack.c.b16 %v584, %v583
      %v609 = vpack.c.b16 %v586, %v585
      %v610 = vpack.c.b16 %v588, %v587
      %v611 = vpack.c.b16 %v590, %v589
      %v612 = vpack.c.b16 %v592, %v591
      %v613 = vpack.c.b16 %v594, %v593
      %v614 = vpack.c.b16 %v596, %v595
      %vm633 = vcmask 261120
      %v635 = vsel %vm633, %v447, 0
      %v638 = vsel %vm633, %v450, 0
      %v641 = vsel %vm633, %v453, 0
      %v644 = vsel %vm633, %v456, 0
      %v647 = vsel %vm633, %v459, 0
      %v650 = vsel %vm633, %v462, 0
      %v653 = vsel %vm633, %v465, 0
      %v656 = vsel %vm633, %v468, 0
      %v659 = vsel %vm633, %v471, 0
      %v662 = vsel %vm633, %v474, 0
      %v665 = vsel %vm633, %v477, 0
      %v668 = vsel %vm633, %v480, 0
      %v671 = vsel %vm633, %v483, 0
      %v674 = vsel %vm633, %v486, 0
      %v677 = vsel %vm633, %v489, 0
      %v680 = vsel %vm633, %v492, 0
      %682 = vmatprep.subr.bf16.mxu0 0
      %683 = vmatpush1.bf16.msra.mxu0 %v597
      %684 = vmatprep.subr.bf16.mxu0 0
      %685 = vmatpush1.bf16.msra.mxu0 %v598
      %686 = vmatprep.subr.bf16.mxu0 0
      %687 = vmatpush1.bf16.msra.mxu0 %v599
      %688 = vmatprep.subr.bf16.mxu0 0
      %689 = vmatpush1.bf16.msra.mxu0 %v600
      %690 = vmatprep.subr.bf16.mxu0 0
      %691 = vmatpush1.bf16.msra.mxu0 %v601
      %692 = vmatprep.subr.bf16.mxu0 0
      %693 = vmatpush1.bf16.msra.mxu0 %v602
      %694 = vmatprep.subr.bf16.mxu0 0
      %695 = vmatpush1.bf16.msra.mxu0 %v603
      %696 = vmatprep.subr.bf16.mxu0 0
      %697 = vmatpush1.bf16.msra.mxu0 %v604
      %698 = vmatprep.subr.bf16.mxu0 0
      %699 = vmatpush1.bf16.msra.mxu0 %v605
      %700 = vmatprep.subr.bf16.mxu0 0
      %701 = vmatpush1.bf16.msra.mxu0 %v606
      %702 = vmatprep.subr.bf16.mxu0 0
      %703 = vmatpush1.bf16.msra.mxu0 %v607
      %704 = vmatprep.subr.bf16.mxu0 0
      %705 = vmatpush1.bf16.msra.mxu0 %v608
      %706 = vmatprep.subr.bf16.mxu0 0
      %707 = vmatpush1.bf16.msra.mxu0 %v609
      %708 = vmatprep.subr.bf16.mxu0 0
      %709 = vmatpush1.bf16.msra.mxu0 %v610
      %710 = vmatprep.subr.bf16.mxu0 0
      %711 = vmatpush1.bf16.msra.mxu0 %v611
      %712 = vmatprep.subr.bf16.mxu0 0
      %713 = vmatpush1.bf16.msra.mxu0 %v612
      %714 = vmatprep.mubr.bf16.mxu0 %v446
      %715 = vmatmul.mubr.bf16.gmra.mrb[0].mxu0 %v445
      %v716 = vpop.f32.mrb[0].mxu0
      %v717 = vadd.f32 %v283, %v716
      %v718 = vpop.f32.mrb[0].mxu0
      %v719 = vpop.f32.mrb[0].mxu0
      %v720 = vadd.f32 %v283, %v719
      %v721 = vpop.f32.mrb[0].mxu0
      %722 = vmatprep.mubr.bf16.mxu0 %v449
      %723 = vmatmul.mubr.bf16.gmra.mrb[0].mxu0 %v448
      %v724 = vpop.f32.mrb[0].mxu0
      %v725 = vadd.f32 %v283, %v724
      %v726 = vpop.f32.mrb[0].mxu0
      %v727 = vpop.f32.mrb[0].mxu0
      %v728 = vadd.f32 %v283, %v727
      %v729 = vpop.f32.mrb[0].mxu0
      %730 = vmatprep.mubr.bf16.mxu0 %v452
      %731 = vmatmul.mubr.bf16.gmra.mrb[0].mxu0 %v451
      %v732 = vpop.f32.mrb[0].mxu0
      %v733 = vadd.f32 %v283, %v732
      %v734 = vpop.f32.mrb[0].mxu0
      %v735 = vpop.f32.mrb[0].mxu0
      %v736 = vadd.f32 %v283, %v735
      %v737 = vpop.f32.mrb[0].mxu0
      %738 = vmatprep.mubr.bf16.mxu0 %v455
      %739 = vmatmul.mubr.bf16.gmra.mrb[0].mxu0 %v454
      %v740 = vpop.f32.mrb[0].mxu0
      %v741 = vadd.f32 %v283, %v740
      %v742 = vpop.f32.mrb[0].mxu0
      %v743 = vpop.f32.mrb[0].mxu0
      %v744 = vadd.f32 %v283, %v743
      %v745 = vpop.f32.mrb[0].mxu0
      %746 = vmatprep.mubr.bf16.mxu0 %v458
      %747 = vmatmul.mubr.bf16.gmra.mrb[0].mxu0 %v457
      %v748 = vpop.f32.mrb[0].mxu0
      %v749 = vadd.f32 %v283, %v748
      %v750 = vpop.f32.mrb[0].mxu0
      %v751 = vpop.f32.mrb[0].mxu0
      %v752 = vadd.f32 %v283, %v751
      %v753 = vpop.f32.mrb[0].mxu0
      %754 = vmatprep.mubr.bf16.mxu0 %v461
      %755 = vmatmul.mubr.bf16.gmra.mrb[0].mxu0 %v460
      %v756 = vpop.f32.mrb[0].mxu0
      %v757 = vadd.f32 %v283, %v756
      %v758 = vpop.f32.mrb[0].mxu0
      %v759 = vpop.f32.mrb[0].mxu0
      %v760 = vadd.f32 %v283, %v759
      %v761 = vpop.f32.mrb[0].mxu0
      %762 = vmatprep.mubr.bf16.mxu0 %v464
      %763 = vmatmul.mubr.bf16.gmra.mrb[0].mxu0 %v463
      %v764 = vpop.f32.mrb[0].mxu0
      %v765 = vadd.f32 %v283, %v764
      %v766 = vpop.f32.mrb[0].mxu0
      %v767 = vpop.f32.mrb[0].mxu0
      %v768 = vadd.f32 %v283, %v767
      %v769 = vpop.f32.mrb[0].mxu0
      %770 = vmatprep.mubr.bf16.mxu0 %v467
      %771 = vmatmul.mubr.bf16.gmra.mrb[0].mxu0 %v466
      %v772 = vpop.f32.mrb[0].mxu0
      %v773 = vadd.f32 %v283, %v772
      %v774 = vpop.f32.mrb[0].mxu0
      %v775 = vpop.f32.mrb[0].mxu0
      %v776 = vadd.f32 %v283, %v775
      %v777 = vpop.f32.mrb[0].mxu0
      %778 = vmatprep.mubr.bf16.mxu0 %v470
      %779 = vmatmul.mubr.bf16.gmra.mrb[0].mxu0 %v469
      %v780 = vpop.f32.mrb[0].mxu0
      %v781 = vadd.f32 %v283, %v780
      %v782 = vpop.f32.mrb[0].mxu0
      %v783 = vpop.f32.mrb[0].mxu0
      %v784 = vadd.f32 %v283, %v783
      %v785 = vpop.f32.mrb[0].mxu0
      %786 = vmatprep.mubr.bf16.mxu0 %v473
      %787 = vmatmul.mubr.bf16.gmra.mrb[0].mxu0 %v472
      %v788 = vpop.f32.mrb[0].mxu0
      %v789 = vadd.f32 %v283, %v788
      %v790 = vpop.f32.mrb[0].mxu0
      %v791 = vpop.f32.mrb[0].mxu0
      %v792 = vadd.f32 %v283, %v791
      %v793 = vpop.f32.mrb[0].mxu0
      %794 = vmatprep.mubr.bf16.mxu0 %v476
      %795 = vmatmul.mubr.bf16.gmra.mrb[0].mxu0 %v475
      %v796 = vpop.f32.mrb[0].mxu0
      %v797 = vadd.f32 %v283, %v796
      %v798 = vpop.f32.mrb[0].mxu0
      %v799 = vpop.f32.mrb[0].mxu0
      %v800 = vadd.f32 %v283, %v799
      %v801 = vpop.f32.mrb[0].mxu0
      %802 = vmatprep.mubr.bf16.mxu0 %v479
      %803 = vmatmul.mubr.bf16.gmra.mrb[0].mxu0 %v478
      %v804 = vpop.f32.mrb[0].mxu0
      %v805 = vadd.f32 %v283, %v804
      %v806 = vpop.f32.mrb[0].mxu0
      %v807 = vpop.f32.mrb[0].mxu0
      %v808 = vadd.f32 %v283, %v807
      %v809 = vpop.f32.mrb[0].mxu0
      %810 = vmatprep.mubr.bf16.mxu0 %v482
      %811 = vmatmul.mubr.bf16.gmra.mrb[0].mxu0 %v481
      %v812 = vpop.f32.mrb[0].mxu0
      %v813 = vadd.f32 %v283, %v812
      %v814 = vpop.f32.mrb[0].mxu0
      %v815 = vpop.f32.mrb[0].mxu0
      %v816 = vadd.f32 %v283, %v815
      %v817 = vpop.f32.mrb[0].mxu0
      %818 = vmatprep.mubr.bf16.mxu0 %v485
      %819 = vmatmul.mubr.bf16.gmra.mrb[0].mxu0 %v484
      %v820 = vpop.f32.mrb[0].mxu0
      %v821 = vadd.f32 %v283, %v820
      %v822 = vpop.f32.mrb[0].mxu0
      %v823 = vpop.f32.mrb[0].mxu0
      %v824 = vadd.f32 %v283, %v823
      %v825 = vpop.f32.mrb[0].mxu0
      %826 = vmatprep.mubr.bf16.mxu0 %v488
      %827 = vmatmul.mubr.bf16.gmra.mrb[0].mxu0 %v487
      %v828 = vpop.f32.mrb[0].mxu0
      %v829 = vadd.f32 %v283, %v828
      %v830 = vpop.f32.mrb[0].mxu0
      %v831 = vpop.f32.mrb[0].mxu0
      %v832 = vadd.f32 %v283, %v831
      %v833 = vpop.f32.mrb[0].mxu0
      %834 = vmatprep.mubr.bf16.mxu0 %v491
      %835 = vmatmul.mubr.bf16.gmra.mrb[0].mxu0 %v490
      %v836 = vpop.f32.mrb[0].mxu0
      %v837 = vadd.f32 %v283, %v836
      %v838 = vpop.f32.mrb[0].mxu0
      %v839 = vpop.f32.mrb[0].mxu0
      %v840 = vadd.f32 %v283, %v839
      %v841 = vpop.f32.mrb[0].mxu0
      %842 = vdwg.mxu0
      %843 = vmatprep.subr.bf16.mxu0 0
      %844 = vmatpush1.bf16.msra.mxu0 %v613
      %845 = vmatprep.subr.bf16.mxu0 0
      %846 = vmatpush1.bf16.msra.mxu0 %v614
      %847 = vmatprep.subr.bf16.mxu0 0
      %848 = vmatpush1.bf16.msra.mxu0 0
      %849 = vmatprep.subr.bf16.mxu0 0
      %850 = vmatpush1.bf16.msra.mxu0 0
      %851 = vmatprep.subr.bf16.mxu0 0
      %852 = vmatpush1.bf16.msra.mxu0 0
      %853 = vmatprep.subr.bf16.mxu0 0
      %854 = vmatpush1.bf16.msra.mxu0 0
      %855 = vmatprep.subr.bf16.mxu0 0
      %856 = vmatpush1.bf16.msra.mxu0 0
      %857 = vmatprep.subr.bf16.mxu0 0
      %858 = vmatpush1.bf16.msra.mxu0 0
      %859 = vmatprep.subr.bf16.mxu0 0
      %860 = vmatpush1.bf16.msra.mxu0 0
      %861 = vmatprep.subr.bf16.mxu0 0
      %862 = vmatpush1.bf16.msra.mxu0 0
      %863 = vmatprep.subr.bf16.mxu0 0
      %864 = vmatpush1.bf16.msra.mxu0 0
      %865 = vmatprep.subr.bf16.mxu0 0
      %866 = vmatpush1.bf16.msra.mxu0 0
      %867 = vmatprep.subr.bf16.mxu0 0
      %868 = vmatpush1.bf16.msra.mxu0 0
      %869 = vmatprep.subr.bf16.mxu0 0
      %870 = vmatpush1.bf16.msra.mxu0 0
      %871 = vmatprep.subr.bf16.mxu0 0
      %872 = vmatpush1.bf16.msra.mxu0 0
      %873 = vmatprep.subr.bf16.mxu0 0
      %874 = vmatpush1.bf16.msra.mxu0 0
      %875 = vmatprep.mubr.bf16.mxu0 0
      %876 = vmatmul.mubr.bf16.gmra.mrb[0].mxu0 %v635
      %v877 = vpop.f32.mrb[0].mxu0
      %v878 = vadd.f32 %v717, %v877
      %v879 = vpop.f32.mrb[0].mxu0
      %v880 = vpop.f32.mrb[0].mxu0
      %v881 = vadd.f32 %v720, %v880
      %v882 = vpop.f32.mrb[0].mxu0
      %883 = vmatprep.mubr.bf16.mxu0 0
      %884 = vmatmul.mubr.bf16.gmra.mrb[0].mxu0 %v638
      %v885 = vpop.f32.mrb[0].mxu0
      %v886 = vadd.f32 %v725, %v885
      %v887 = vpop.f32.mrb[0].mxu0
      %v888 = vpop.f32.mrb[0].mxu0
      %v889 = vadd.f32 %v728, %v888
      %v890 = vpop.f32.mrb[0].mxu0
      %891 = vmatprep.mubr.bf16.mxu0 0
      %892 = vmatmul.mubr.bf16.gmra.mrb[0].mxu0 %v641
      %v893 = vpop.f32.mrb[0].mxu0
      %v894 = vadd.f32 %v733, %v893
      %v895 = vpop.f32.mrb[0].mxu0
      %v896 = vpop.f32.mrb[0].mxu0
      %v897 = vadd.f32 %v736, %v896
      %v898 = vpop.f32.mrb[0].mxu0
      %899 = vmatprep.mubr.bf16.mxu0 0
      %900 = vmatmul.mubr.bf16.gmra.mrb[0].mxu0 %v644
      %v901 = vpop.f32.mrb[0].mxu0
      %v902 = vadd.f32 %v741, %v901
      %v903 = vpop.f32.mrb[0].mxu0
      %v904 = vpop.f32.mrb[0].mxu0
      %v905 = vadd.f32 %v744, %v904
      %v906 = vpop.f32.mrb[0].mxu0
      %907 = vmatprep.mubr.bf16.mxu0 0
      %908 = vmatmul.mubr.bf16.gmra.mrb[0].mxu0 %v647
      %v909 = vpop.f32.mrb[0].mxu0
      %v910 = vadd.f32 %v749, %v909
      %v911 = vpop.f32.mrb[0].mxu0
      %v912 = vpop.f32.mrb[0].mxu0
      %v913 = vadd.f32 %v752, %v912
      %v914 = vpop.f32.mrb[0].mxu0
      %915 = vmatprep.mubr.bf16.mxu0 0
      %916 = vmatmul.mubr.bf16.gmra.mrb[0].mxu0 %v650
      %v917 = vpop.f32.mrb[0].mxu0
      %v918 = vadd.f32 %v757, %v917
      %v919 = vpop.f32.mrb[0].mxu0
      %v920 = vpop.f32.mrb[0].mxu0
      %v921 = vadd.f32 %v760, %v920
      %v922 = vpop.f32.mrb[0].mxu0
      %923 = vmatprep.mubr.bf16.mxu0 0
      %924 = vmatmul.mubr.bf16.gmra.mrb[0].mxu0 %v653
      %v925 = vpop.f32.mrb[0].mxu0
      %v926 = vadd.f32 %v765, %v925
      %v927 = vpop.f32.mrb[0].mxu0
      %v928 = vpop.f32.mrb[0].mxu0
      %v929 = vadd.f32 %v768, %v928
      %v930 = vpop.f32.mrb[0].mxu0
      %931 = vmatprep.mubr.bf16.mxu0 0
      %932 = vmatmul.mubr.bf16.gmra.mrb[0].mxu0 %v656
      %v933 = vpop.f32.mrb[0].mxu0
      %v934 = vadd.f32 %v773, %v933
      %v935 = vpop.f32.mrb[0].mxu0
      %v936 = vpop.f32.mrb[0].mxu0
      %v937 = vadd.f32 %v776, %v936
      %v938 = vpop.f32.mrb[0].mxu0
      %939 = vmatprep.mubr.bf16.mxu0 0
      %940 = vmatmul.mubr.bf16.gmra.mrb[0].mxu0 %v659
      %v941 = vpop.f32.mrb[0].mxu0
      %v942 = vadd.f32 %v781, %v941
      %v943 = vpop.f32.mrb[0].mxu0
      %v944 = vpop.f32.mrb[0].mxu0
      %v945 = vadd.f32 %v784, %v944
      %v946 = vpop.f32.mrb[0].mxu0
      %947 = vmatprep.mubr.bf16.mxu0 0
      %948 = vmatmul.mubr.bf16.gmra.mrb[0].mxu0 %v662
      %v949 = vpop.f32.mrb[0].mxu0
      %v950 = vadd.f32 %v789, %v949
      %v951 = vpop.f32.mrb[0].mxu0
      %v952 = vpop.f32.mrb[0].mxu0
      %v953 = vadd.f32 %v792, %v952
      %v954 = vpop.f32.mrb[0].mxu0
      %955 = vmatprep.mubr.bf16.mxu0 0
      %956 = vmatmul.mubr.bf16.gmra.mrb[0].mxu0 %v665
      %v957 = vpop.f32.mrb[0].mxu0
      %v958 = vadd.f32 %v797, %v957
      %v959 = vpop.f32.mrb[0].mxu0
      %v960 = vpop.f32.mrb[0].mxu0
      %v961 = vadd.f32 %v800, %v960
      %v962 = vpop.f32.mrb[0].mxu0
      %963 = vmatprep.mubr.bf16.mxu0 0
      %964 = vmatmul.mubr.bf16.gmra.mrb[0].mxu0 %v668
      %v965 = vpop.f32.mrb[0].mxu0
      %v966 = vadd.f32 %v805, %v965
      %v967 = vpop.f32.mrb[0].mxu0
      %v968 = vpop.f32.mrb[0].mxu0
      %v969 = vadd.f32 %v808, %v968
      %v970 = vpop.f32.mrb[0].mxu0
      %971 = vmatprep.mubr.bf16.mxu0 0
      %972 = vmatmul.mubr.bf16.gmra.mrb[0].mxu0 %v671
      %v973 = vpop.f32.mrb[0].mxu0
      %v974 = vadd.f32 %v813, %v973
      %v975 = vpop.f32.mrb[0].mxu0
      %v976 = vpop.f32.mrb[0].mxu0
      %v977 = vadd.f32 %v816, %v976
      %v978 = vpop.f32.mrb[0].mxu0
      %979 = vmatprep.mubr.bf16.mxu0 0
      %980 = vmatmul.mubr.bf16.gmra.mrb[0].mxu0 %v674
      %v981 = vpop.f32.mrb[0].mxu0
      %v982 = vadd.f32 %v821, %v981
      %v983 = vpop.f32.mrb[0].mxu0
      %v984 = vpop.f32.mrb[0].mxu0
      %v985 = vadd.f32 %v824, %v984
      %v986 = vpop.f32.mrb[0].mxu0
      %987 = vmatprep.mubr.bf16.mxu0 0
      %988 = vmatmul.mubr.bf16.gmra.mrb[0].mxu0 %v677
      %v989 = vpop.f32.mrb[0].mxu0
      %v990 = vadd.f32 %v829, %v989
      %v991 = vpop.f32.mrb[0].mxu0
      %v992 = vpop.f32.mrb[0].mxu0
      %v993 = vadd.f32 %v832, %v992
      %v994 = vpop.f32.mrb[0].mxu0
      %995 = vmatprep.mubr.bf16.mxu0 0
      %996 = vmatmul.mubr.bf16.gmra.mrb[0].mxu0 %v680
      %v997 = vpop.f32.mrb[0].mxu0
      %v998 = vadd.f32 %v837, %v997
      %v999 = vpop.f32.mrb[0].mxu0
      %v1000 = vpop.f32.mrb[0].mxu0
      %v1001 = vadd.f32 %v840, %v1000
      %v1002 = vpop.f32.mrb[0].mxu0
      %1003 = vdwg.mxu0
      %1004 = vst.msk [vmem:[%s175] sm:$0xff] %vm633, %v878
      %1005 = vst.msk [vmem:[%s175 + $0x8] sm:$0xff] %vm633, %v881
      %1006 = vst.msk [vmem:[%s175 + $0x10] sm:$0xff] %vm633, %v886
      %1007 = vst.msk [vmem:[%s175 + $0x18] sm:$0xff] %vm633, %v889
      %1008 = vst.msk [vmem:[%s175 + $0x20] sm:$0xff] %vm633, %v894
      %1009 = vst.msk [vmem:[%s175 + $0x28] sm:$0xff] %vm633, %v897
      %1010 = vst.msk [vmem:[%s175 + $0x30] sm:$0xff] %vm633, %v902
      %1011 = vst.msk [vmem:[%s175 + $0x38] sm:$0xff] %vm633, %v905
      %1012 = vst.msk [vmem:[%s175 + $0x40] sm:$0xff] %vm633, %v910
      %1013 = vst.msk [vmem:[%s175 + $0x48] sm:$0xff] %vm633, %v913
      %1014 = vst.msk [vmem:[%s175 + $0x50] sm:$0xff] %vm633, %v918
      %1015 = vst.msk [vmem:[%s175 + $0x58] sm:$0xff] %vm633, %v921
      %1016 = vst.msk [vmem:[%s175 + $0x60] sm:$0xff] %vm633, %v926
      %1017 = vst.msk [vmem:[%s175 + $0x68] sm:$0xff] %vm633, %v929
      %1018 = vst.msk [vmem:[%s175 + $0x70] sm:$0xff] %vm633, %v934
      %1019 = vst.msk [vmem:[%s175 + $0x78] sm:$0xff] %vm633, %v937
      %1020 = vst.msk [vmem:[%s175 + $0x80] sm:$0xff] %vm633, %v942
      %1021 = vst.msk [vmem:[%s175 + $0x88] sm:$0xff] %vm633, %v945
      %1022 = vst.msk [vmem:[%s175 + $0x90] sm:$0xff] %vm633, %v950
      %1023 = vst.msk [vmem:[%s175 + $0x98] sm:$0xff] %vm633, %v953
      %1024 = vst.msk [vmem:[%s175 + $0xa0] sm:$0xff] %vm633, %v958
      %1025 = vst.msk [vmem:[%s175 + $0xa8] sm:$0xff] %vm633, %v961
      %1026 = vst.msk [vmem:[%s175 + $0xb0] sm:$0xff] %vm633, %v966
      %1027 = vst.msk [vmem:[%s175 + $0xb8] sm:$0xff] %vm633, %v969
      %1028 = vst.msk [vmem:[%s175 + $0xc0] sm:$0xff] %vm633, %v974
      %1029 = vst.msk [vmem:[%s175 + $0xc8] sm:$0xff] %vm633, %v977
      %1030 = vst.msk [vmem:[%s175 + $0xd0] sm:$0xff] %vm633, %v982
      %1031 = vst.msk [vmem:[%s175 + $0xd8] sm:$0xff] %vm633, %v985
      %1032 = vst.msk [vmem:[%s175 + $0xe0] sm:$0xff] %vm633, %v990
      %1033 = vst.msk [vmem:[%s175 + $0xe8] sm:$0xff] %vm633, %v993
      %1034 = vst.msk [vmem:[%s175 + $0xf0] sm:$0xff] %vm633, %v998
      %1035 = vst.msk [vmem:[%s175 + $0xf8] sm:$0xff] %vm633, %v1001
      %s1036 = smul.u32 32, %s14
      %p1037 = scmp.lt.s32.totalorder %s1036, 63
      %s1038 = scalar_select %p1037, %s1036, 63
      %s1039 = smul.addr %s1038, 8
      %s1040 = scalar_lea.vmem %s3, %s1039
      // Predicated region
      $region33: #{stem_forward.14} parent=31 // pred_check
        %p1041 = pneg %p100
      $region34: #{stem_forward.14} parent=31 // pred_check_branch
        %1043 = sbr.rel (%p1041) target = $region36
      $region35: #{stem_forward.14} parent=31 // pred_region
        %s1044 = smul.u32 32, %s14
      $region36: #{stem_forward.14} parent=31 // pred_fallthru
        _
    $region32: #{stem_forward.14} parent=5 // pred_fallthru
      _
    %p1045 = scmp.le.s32.totalorder 2, %s9
    // Predicated region
    $region37: #{stem_forward.14} parent=5 // pred_check
      %p1046 = pneg %p1045
    $region38: #{stem_forward.14} parent=5 // pred_check_branch
      %1048 = sbr.rel (%p1046) target = $region40
    $region39: #{stem_forward.14} parent=5 // pred_region
      %s1049 = ssub.s32 %s9, 2
      // Predicated region
      $region41: #{stem_forward.14} parent=39 // pred_check
        %p1050 = pneg %p106
      $region42: #{stem_forward.14} parent=39 // pred_check_branch
        %1052 = sbr.rel (%p1050) target = $region44
      $region43: #{stem_forward.14} parent=39 // pred_region
        %s1053 = smul.u32 32, %s15
        %p1054 = scmp.lt.s32.totalorder %s1053, 63
        %s1055 = scalar_select %p1054, %s1053, 63
        %s1056 = smul.addr %s1055, 8
        %s1057 = scalar_lea.vmem %s3, %s1056
      $region44: #{stem_forward.14} parent=39 // pred_fallthru
        _
    $region40: #{stem_forward.14} parent=5 // pred_fallthru
      _
  $region6: #{stem_forward.14} parent=0 // loop_footer
    %s13 = sadd.s32 1, %s9
  $region7: #{stem_forward.14} parent=0 // loop_footer_branch
    %8 = sbr.rel target = $region3
  $region8: #{stem_forward.14} parent=0 // loop_exit
    _

// kernel: stem_forward.15
$region0: #{stem_forward.15}
  #allocation0 [shape = 'u32[]', space=smem, size = 0x4, offset = 0x4, fixed_abs, tag = 'smem constant byte address 0x4 - core index']
  #allocation1 [shape = 'u32[144,128]{1,0:T(1,128)}', space=vmem, size = 0x12000, scoped, tag = 'internal scratch']
  %s0 = inlined_call_operand.vmem [shape: bf16[512,288], index: 0, kind: input, shape index: {}]
  %s1 = inlined_call_operand.vmem [shape: bf16[288,64], index: 1, kind: input, shape index: {}]
  %s2 = inlined_call_operand.vmem [shape: f32[1,64], index: 2, kind: input, shape index: {}]
  %s3 = inlined_call_operand.vmem [shape: f32[512,64], index: 3, kind: output, shape index: {}]
  %s4 = sld [smem:[#allocation0]]
  $region45: #{stem_forward.15} parent=0
    _
  %s6 = ssub.s32 1, %s4
  %s7 = scalar_select 0, %s6, %s4
  loop: start=0, step=1, limit=4
  $region2: #{stem_forward.15} parent=0 // loop_pre_header
    _
  $region3: #{stem_forward.15} parent=0 // loop_header
    %s9 = sphi 0, %s13
    %p10 = scmp.ge.s32.totalorder %s9, 4
    %s19 = sphi 0, %s21
    %s22 = sphi 0, %s19
    %s23 = sphi 0, %s22
    %s39 = sphi 0, %s23
    %s43 = sphi 0, %s43
    %s45 = sphi 0, %s43
    %s46 = sphi 0, %s45
    %s60 = sphi 0, %s46
    %s64 = sphi 0, %s64
    %s66 = sphi 0, %s64
    %s67 = sphi 0, %s66
    %s81 = sphi 0, %s67
    %s87 = sphi 0, %s89
    %s90 = sphi 0, %s87
    %s91 = sphi 0, %s90
    %s107 = sphi 0, %s91
  $region4: #{stem_forward.15} parent=0 // loop_header_branch
    %12 = sbr.rel (%p10) target = $region8
  $region5: #{stem_forward.15} parent=0 // loop_body
    %s14 = ssub.s32 %s9, 1
    %s15 = ssub.s32 %s9, 2
    %s16 = sadd.s32 %s9, 1
    %s17 = ssub.s32 %s9, %s16
    %p18 = scmp.eq.s32.totalorder %s17, 0
    %s20 = sadd.s32 %s19, 1
    %s21 = scalar_select %p18, %s19, %s20
    %p24 = pneg %p18
    %p25 = scmp.eq.s32.totalorder %s9, 1
    %p26 = por %p24, %p25
    %p27 = scmp.ne.s32.totalorder %s19, %s22
    %p28 = scmp.eq.s32.totalorder %s9, 0
    %p29 = por %p27, %p28
    %p30 = scmp.ne.s32.totalorder %s19, %s22
    %p31 = scmp.eq.s32.totalorder %s14, 1
    %p32 = por %p30, %p31
    %p33 = scmp.ne.s32.totalorder %s22, %s23
    %p34 = scmp.eq.s32.totalorder %s14, 0
    %p35 = por %p33, %p34
    %p36 = scmp.ne.s32.totalorder %s22, %s23
    %p37 = scmp.eq.s32.totalorder %s15, 1
    %p38 = por %p36, %p37
    %p40 = scmp.ne.s32.totalorder %s23, %s39
    %p41 = scmp.eq.s32.totalorder %s15, 0
    %p42 = por %p40, %p41
    %s44 = sadd.s32 %s43, 1
    %p47 = scmp.eq.s32.totalorder %s9, 1
    %p48 = scmp.ne.s32.totalorder %s43, %s45
    %p49 = scmp.eq.s32.totalorder %s9, 0
    %p50 = por %p48, %p49
    %p51 = scmp.ne.s32.totalorder %s43, %s45
    %p52 = scmp.eq.s32.totalorder %s14, 1
    %p53 = por %p51, %p52
    %p54 = scmp.ne.s32.totalorder %s45, %s46
    %p55 = scmp.eq.s32.totalorder %s14, 0
    %p56 = por %p54, %p55
    %p57 = scmp.ne.s32.totalorder %s45, %s46
    %p58 = scmp.eq.s32.totalorder %s15, 1
    %p59 = por %p57, %p58
    %p61 = scmp.ne.s32.totalorder %s46, %s60
    %p62 = scmp.eq.s32.totalorder %s15, 0
    %p63 = por %p61, %p62
    %s65 = sadd.s32 %s64, 1
    %p68 = scmp.eq.s32.totalorder %s9, 1
    %p69 = scmp.ne.s32.totalorder %s64, %s66
    %p70 = scmp.eq.s32.totalorder %s9, 0
    %p71 = por %p69, %p70
    %p72 = scmp.ne.s32.totalorder %s64, %s66
    %p73 = scmp.eq.s32.totalorder %s14, 1
    %p74 = por %p72, %p73
    %p75 = scmp.ne.s32.totalorder %s66, %s67
    %p76 = scmp.eq.s32.totalorder %s14, 0
    %p77 = por %p75, %p76
    %p78 = scmp.ne.s32.totalorder %s66, %s67
    %p79 = scmp.eq.s32.totalorder %s15, 1
    %p80 = por %p78, %p79
    %p82 = scmp.ne.s32.totalorder %s67, %s81
    %p83 = scmp.eq.s32.totalorder %s15, 0
    %p84 = por %p82, %p83
    %s85 = ssub.s32 %s9, %s16
    %p86 = scmp.eq.s32.totalorder %s85, 0
    %s88 = sadd.s32 %s87, 1
    %s89 = scalar_select %p86, %s87, %s88
    %p92 = pneg %p86
    %p93 = scmp.eq.s32.totalorder %s9, 1
    %p94 = por %p92, %p93
    %p95 = scmp.ne.s32.totalorder %s87, %s90
    %p96 = scmp.eq.s32.totalorder %s9, 0
    %p97 = por %p95, %p96
    %p98 = scmp.ne.s32.totalorder %s87, %s90
    %p99 = scmp.eq.s32.totalorder %s14, 1
    %p100 = por %p98, %p99
    %p101 = scmp.ne.s32.totalorder %s90, %s91
    %p102 = scmp.eq.s32.totalorder %s14, 0
    %p103 = por %p101, %p102
    %p104 = scmp.ne.s32.totalorder %s90, %s91
    %p105 = scmp.eq.s32.totalorder %s15, 1
    %p106 = por %p104, %p105
    %p108 = scmp.ne.s32.totalorder %s91, %s107
    %p109 = scmp.eq.s32.totalorder %s15, 0
    %p110 = por %p108, %p109
    %p111 = scmp.le.s32.totalorder 1, %s9
    %p112 = scmp.lt.s32.totalorder %s9, 3
    %p113 = pnand %p111, %p112
    %p114 = pneg %p113
    // Predicated region
    $region9: #{stem_forward.15} parent=5 // pred_check
      _
    $region10: #{stem_forward.15} parent=5 // pred_check_branch
      %116 = sbr.rel (%p113) target = $region12
    $region11: #{stem_forward.15} parent=5 // pred_region
      %s117 = ssub.s32 %s9, 1
      // Predicated region
      $region13: #{stem_forward.15} parent=11 // pred_check
        %p118 = pneg %p56
      $region14: #{stem_forward.15} parent=11 // pred_check_branch
        %120 = sbr.rel (%p118) target = $region16
      $region15: #{stem_forward.15} parent=11 // pred_region
        _
      $region16: #{stem_forward.15} parent=11 // pred_fallthru
        _
      // Predicated region
      $region17: #{stem_forward.15} parent=11 // pred_check
        %p121 = pneg %p77
      $region18: #{stem_forward.15} parent=11 // pred_check_branch
        %123 = sbr.rel (%p121) target = $region20
      $region19: #{stem_forward.15} parent=11 // pred_region
        _
      $region20: #{stem_forward.15} parent=11 // pred_fallthru
        _
    $region12: #{stem_forward.15} parent=5 // pred_fallthru
      _
    %p124 = scmp.lt.s32.totalorder %s9, 2
    // Predicated region
    $region21: #{stem_forward.15} parent=5 // pred_check
      %p125 = pneg %p124
    $region22: #{stem_forward.15} parent=5 // pred_check_branch
      %127 = sbr.rel (%p125) target = $region24
    $region23: #{stem_forward.15} parent=5 // pred_region
      // Predicated region
      $region25: #{stem_forward.15} parent=23 // pred_check
        %p128 = pneg %p29
      $region26: #{stem_forward.15} parent=23 // pred_check_branch
        %130 = sbr.rel (%p128) target = $region28
      $region27: #{stem_forward.15} parent=23 // pred_region
        %s131 = smul.u32 32, %s9
        %p132 = scmp.lt.s32.totalorder %s131, 63
        %s133 = scalar_select %p132, %s131, 63
        %s134 = smul.addr %s133, 3
        %s135 = smul.addr %s134, 4
        %s136 = scalar_lea.vmem %s0, %s135
        %s137 = smul.u32 32, %s9
      $region28: #{stem_forward.15} parent=23 // pred_fallthru
        _
    $region24: #{stem_forward.15} parent=5 // pred_fallthru
      _
    %p138 = scmp.le.s32.totalorder 1, %s9
    %p139 = scmp.lt.s32.totalorder %s9, 3
    %p140 = pnand %p138, %p139
    %p141 = pneg %p140
    // Predicated region
    $region29: #{stem_forward.15} parent=5 // pred_check
      _
    $region30: #{stem_forward.15} parent=5 // pred_check_branch
      %143 = sbr.rel (%p140) target = $region32
    $region31: #{stem_forward.15} parent=5 // pred_region
      %s144 = ssub.s32 %s9, 1
      %s145 = smul.u32 32, %s14
      %p146 = scmp.lt.s32.totalorder %s145, 63
      %s147 = scalar_select %p146, %s145, 63
      %s148 = smul.addr %s147, 3
      %s149 = smul.addr %s148, 4
      %s150 = scalar_lea.vmem %s0, %s149
      %p151 = pneg %p35
      %p152 = pneg %p32
      %p153 = pneg %p56
      %p154 = pneg %p53
      %p155 = pneg %p77
      %p156 = pneg %p74
      %p157 = pneg %p103
      %p158 = pneg %p100
      %s159 = smul.u32 32, %s14
      %p160 = scmp.lt.s32.totalorder %s159, 63
      %s161 = scalar_select %p160, %s159, 63
      %s162 = smul.addr %s161, 8
      %s163 = scalar_lea.vmem %s3, %s162
      %s164 = smul.u32 32, %s14
      %p165 = scmp.lt.s32.totalorder %s164, 63
      %s166 = scalar_select %p165, %s164, 63
      %s167 = smul.addr %s166, 3
      %s168 = smul.addr %s167, 4
      %s169 = scalar_lea.vmem %s0, %s168
      %s170 = smul.u32 32, %s14
      %s171 = smul.u32 32, %s14
      %p172 = scmp.lt.s32.totalorder %s171, 63
      %s173 = scalar_select %p172, %s171, 63
      %s174 = smul.addr %s173, 8
      %s175 = scalar_lea.vmem %s3, %s174
      %s176 = smul.u32 32, %s14
      %v178 = vld [vmem:[%s169] sm:$0xff]
      %v179 = vld [vmem:[%s169 + $0x8] sm:$0xf]
      %v180 = vld [vmem:[%s169 + $0xc] sm:$0xff]
      %v181 = vld [vmem:[%s169 + $0x14] sm:$0xf]
      %v182 = vld [vmem:[%s169 + $0x18] sm:$0xff]
      %v183 = vld [vmem:[%s169 + $0x20] sm:$0xf]
      %v184 = vld [vmem:[%s169 + $0x24] sm:$0xff]
      %v185 = vld [vmem:[%s169 + $0x2c] sm:$0xf]
      %v186 = vld [vmem:[%s169 + $0x30] sm:$0xff]
      %v187 = vld [vmem:[%s169 + $0x38] sm:$0xf]
      %v188 = vld [vmem:[%s169 + $0x3c] sm:$0xff]
      %v189 = vld [vmem:[%s169 + $0x44] sm:$0xf]
      %v190 = vld [vmem:[%s169 + $0x48] sm:$0xff]
      %v191 = vld [vmem:[%s169 + $0x50] sm:$0xf]
      %v192 = vld [vmem:[%s169 + $0x54] sm:$0xff]
      %v193 = vld [vmem:[%s169 + $0x5c] sm:$0xf]
      %v194 = vld [vmem:[%s169 + $0x60] sm:$0xff]
      %v195 = vld [vmem:[%s169 + $0x68] sm:$0xf]
      %v196 = vld [vmem:[%s169 + $0x6c] sm:$0xff]
      %v197 = vld [vmem:[%s169 + $0x74] sm:$0xf]
      %v198 = vld [vmem:[%s169 + $0x78] sm:$0xff]
      %v199 = vld [vmem:[%s169 + $0x80] sm:$0xf]
      %v200 = vld [vmem:[%s169 + $0x84] sm:$0xff]
      %v201 = vld [vmem:[%s169 + $0x8c] sm:$0xf]
      %v202 = vld [vmem:[%s169 + $0x90] sm:$0xff]
      %v203 = vld [vmem:[%s169 + $0x98] sm:$0xf]
      %v204 = vld [vmem:[%s169 + $0x9c] sm:$0xff]
      %v205 = vld [vmem:[%s169 + $0xa4] sm:$0xf]
      %v206 = vld [vmem:[%s169 + $0xa8] sm:$0xff]
      %v207 = vld [vmem:[%s169 + $0xb0] sm:$0xf]
      %v208 = vld [vmem:[%s169 + $0xb4] sm:$0xff]
      %v209 = vld [vmem:[%s169 + $0xbc] sm:$0xf]
      %v210 = vld [vmem:[%s169 + $0xc0] sm:$0xff]
      %v211 = vld [vmem:[%s169 + $0xc8] sm:$0xf]
      %v212 = vld [vmem:[%s169 + $0xcc] sm:$0xff]
      %v213 = vld [vmem:[%s169 + $0xd4] sm:$0xf]
      %v214 = vld [vmem:[%s169 + $0xd8] sm:$0xff]
      %v215 = vld [vmem:[%s169 + $0xe0] sm:$0xf]
      %v216 = vld [vmem:[%s169 + $0xe4] sm:$0xff]
      %v217 = vld [vmem:[%s169 + $0xec] sm:$0xf]
      %v218 = vld [vmem:[%s169 + $0xf0] sm:$0xff]
      %v219 = vld [vmem:[%s169 + $0xf8] sm:$0xf]
      %v220 = vld [vmem:[%s169 + $0xfc] sm:$0xff]
      %v221 = vld [vmem:[%s169 + $0x104] sm:$0xf]
      %v222 = vld [vmem:[%s169 + $0x108] sm:$0xff]
      %v223 = vld [vmem:[%s169 + $0x110] sm:$0xf]
      %v224 = vld [vmem:[%s169 + $0x114] sm:$0xff]
      %v225 = vld [vmem:[%s169 + $0x11c] sm:$0xf]
      %v226 = vld [vmem:[%s169 + $0x120] sm:$0xff]
      %v227 = vld [vmem:[%s169 + $0x128] sm:$0xf]
      %v228 = vld [vmem:[%s169 + $0x12c] sm:$0xff]
      %v229 = vld [vmem:[%s169 + $0x134] sm:$0xf]
      %v230 = vld [vmem:[%s169 + $0x138] sm:$0xff]
      %v231 = vld [vmem:[%s169 + $0x140] sm:$0xf]
      %v232 = vld [vmem:[%s169 + $0x144] sm:$0xff]
      %v233 = vld [vmem:[%s169 + $0x14c] sm:$0xf]
      %v234 = vld [vmem:[%s169 + $0x150] sm:$0xff]
      %v235 = vld [vmem:[%s169 + $0x158] sm:$0xf]
      %v236 = vld [vmem:[%s169 + $0x15c] sm:$0xff]
      %v237 = vld [vmem:[%s169 + $0x164] sm:$0xf]
      %v238 = vld [vmem:[%s169 + $0x168] sm:$0xff]
      %v239 = vld [vmem:[%s169 + $0x170] sm:$0xf]
      %v240 = vld [vmem:[%s169 + $0x174] sm:$0xff]
      %v241 = vld [vmem:[%s169 + $0x17c] sm:$0xf]
      %v242 = vld [vmem:[%s1] sm:$0xf]
      %v243 = vld [vmem:[%s1 + $0x4] sm:$0xf]
      %v244 = vld [vmem:[%s1 + $0x8] sm:$0xf]
      %v245 = vld [vmem:[%s1 + $0xc] sm:$0xf]
      %v246 = vld [vmem:[%s1 + $0x10] sm:$0xf]
      %v247 = vld [vmem:[%s1 + $0x14] sm:$0xf]
      %v248 = vld [vmem:[%s1 + $0x18] sm:$0xf]
      %v249 = vld [vmem:[%s1 + $0x1c] sm:$0xf]
      %v250 = vld [vmem:[%s1 + $0x20] sm:$0xf]
      %v251 = vld [vmem:[%s1 + $0x24] sm:$0xf]
      %v252 = vld [vmem:[%s1 + $0x28] sm:$0xf]
      %v253 = vld [vmem:[%s1 + $0x2c] sm:$0xf]
      %v254 = vld [vmem:[%s1 + $0x30] sm:$0xf]
      %v255 = vld [vmem:[%s1 + $0x34] sm:$0xf]
      %v256 = vld [vmem:[%s1 + $0x38] sm:$0xf]
      %v257 = vld [vmem:[%s1 + $0x3c] sm:$0xf]
      %v258 = vld [vmem:[%s1 + $0x40] sm:$0xf]
      %v259 = vld [vmem:[%s1 + $0x44] sm:$0xf]
      %v260 = vld [vmem:[%s1 + $0x48] sm:$0xf]
      %v261 = vld [vmem:[%s1 + $0x4c] sm:$0xf]
      %v262 = vld [vmem:[%s1 + $0x50] sm:$0xf]
      %v263 = vld [vmem:[%s1 + $0x54] sm:$0xf]
      %v264 = vld [vmem:[%s1 + $0x58] sm:$0xf]
      %v265 = vld [vmem:[%s1 + $0x5c] sm:$0xf]
      %v266 = vld [vmem:[%s1 + $0x60] sm:$0xf]
      %v267 = vld [vmem:[%s1 + $0x64] sm:$0xf]
      %v268 = vld [vmem:[%s1 + $0x68] sm:$0xf]
      %v269 = vld [vmem:[%s1 + $0x6c] sm:$0xf]
      %v270 = vld [vmem:[%s1 + $0x70] sm:$0xf]
      %v271 = vld [vmem:[%s1 + $0x74] sm:$0xf]
      %v272 = vld [vmem:[%s1 + $0x78] sm:$0xf]
      %v273 = vld [vmem:[%s1 + $0x7c] sm:$0xf]
      %v274 = vld [vmem:[%s1 + $0x80] sm:$0xf]
      %v275 = vld [vmem:[%s1 + $0x84] sm:$0xf]
      %v276 = vld [vmem:[%s1 + $0x88] sm:$0xf]
      %v277 = vld [vmem:[%s1 + $0x8c] sm:$0xf]
      %v278 = vld [vmem:[%s2] sm:$0x1]
      %v280 = vlaneseq
      %v281 = vshrl.u32 %v280, 7
      %v282 = vsub.s32 0, %v281
      %v283 = vrot.slane %v278, %v282
      %v349 = vunpack.c.l.b16 %v178
      %v350 = vunpack.c.h.b16 %v178
      %v351 = vunpack.c.l.b16 %v179
      %v352 = vunpack.c.l.b16 %v180
      %v353 = vunpack.c.h.b16 %v180
      %v354 = vunpack.c.l.b16 %v181
      %v355 = vunpack.c.l.b16 %v182
      %v356 = vunpack.c.h.b16 %v182
      %v357 = vunpack.c.l.b16 %v183
      %v358 = vunpack.c.l.b16 %v184
      %v359 = vunpack.c.h.b16 %v184
      %v360 = vunpack.c.l.b16 %v185
      %v361 = vunpack.c.l.b16 %v186
      %v362 = vunpack.c.h.b16 %v186
      %v363 = vunpack.c.l.b16 %v187
      %v364 = vunpack.c.l.b16 %v188
      %v365 = vunpack.c.h.b16 %v188
      %v366 = vunpack.c.l.b16 %v189
      %v367 = vunpack.c.l.b16 %v190
      %v368 = vunpack.c.h.b16 %v190
      %v369 = vunpack.c.l.b16 %v191
      %v370 = vunpack.c.l.b16 %v192
      %v371 = vunpack.c.h.b16 %v192
      %v372 = vunpack.c.l.b16 %v193
      %v373 = vunpack.c.l.b16 %v194
      %v374 = vunpack.c.h.b16 %v194
      %v375 = vunpack.c.l.b16 %v195
      %v376 = vunpack.c.l.b16 %v196
      %v377 = vunpack.c.h.b16 %v196
      %v378 = vunpack.c.l.b16 %v197
      %v379 = vunpack.c.l.b16 %v198
      %v380 = vunpack.c.h.b16 %v198
      %v381 = vunpack.c.l.b16 %v199
      %v382 = vunpack.c.l.b16 %v200
      %v383 = vunpack.c.h.b16 %v200
      %v384 = vunpack.c.l.b16 %v201
      %v385 = vunpack.c.l.b16 %v202
      %v386 = vunpack.c.h.b16 %v202
      %v387 = vunpack.c.l.b16 %v203
      %v388 = vunpack.c.l.b16 %v204
      %v389 = vunpack.c.h.b16 %v204
      %v390 = vunpack.c.l.b16 %v205
      %v391 = vunpack.c.l.b16 %v206
      %v392 = vunpack.c.h.b16 %v206
      %v393 = vunpack.c.l.b16 %v207
      %v394 = vunpack.c.l.b16 %v208
      %v395 = vunpack.c.h.b16 %v208
      %v396 = vunpack.c.l.b16 %v209
      %v397 = vunpack.c.l.b16 %v210
      %v398 = vunpack.c.h.b16 %v210
      %v399 = vunpack.c.l.b16 %v211
      %v400 = vunpack.c.l.b16 %v212
      %v401 = vunpack.c.h.b16 %v212
      %v402 = vunpack.c.l.b16 %v213
      %v403 = vunpack.c.l.b16 %v214
      %v404 = vunpack.c.h.b16 %v214
      %v405 = vunpack.c.l.b16 %v215
      %v406 = vunpack.c.l.b16 %v216
      %v407 = vunpack.c.h.b16 %v216
      %v408 = vunpack.c.l.b16 %v217
      %v409 = vunpack.c.l.b16 %v218
      %v410 = vunpack.c.h.b16 %v218
      %v411 = vunpack.c.l.b16 %v219
      %v412 = vunpack.c.l.b16 %v220
      %v413 = vunpack.c.h.b16 %v220
      %v414 = vunpack.c.l.b16 %v221
      %v415 = vunpack.c.l.b16 %v222
      %v416 = vunpack.c.h.b16 %v222
      %v417 = vunpack.c.l.b16 %v223
      %v418 = vunpack.c.l.b16 %v224
      %v419 = vunpack.c.h.b16 %v224
      %v420 = vunpack.c.l.b16 %v225
      %v421 = vunpack.c.l.b16 %v226
      %v422 = vunpack.c.h.b16 %v226
      %v423 = vunpack.c.l.b16 %v227
      %v424 = vunpack.c.l.b16 %v228
      %v425 = vunpack.c.h.b16 %v228
      %v426 = vunpack.c.l.b16 %v229
      %v427 = vunpack.c.l.b16 %v230
      %v428 = vunpack.c.h.b16 %v230
      %v429 = vunpack.c.l.b16 %v231
      %v430 = vunpack.c.l.b16 %v232
      %v431 = vunpack.c.h.b16 %v232
      %v432 = vunpack.c.l.b16 %v233
      %v433 = vunpack.c.l.b16 %v234
      %v434 = vunpack.c.h.b16 %v234
      %v435 = vunpack.c.l.b16 %v235
      %v436 = vunpack.c.l.b16 %v236
      %v437 = vunpack.c.h.b16 %v236
      %v438 = vunpack.c.l.b16 %v237
      %v439 = vunpack.c.l.b16 %v238
      %v440 = vunpack.c.h.b16 %v238
      %v441 = vunpack.c.l.b16 %v239
      %v442 = vunpack.c.l.b16 %v240
      %v443 = vunpack.c.h.b16 %v240
      %v444 = vunpack.c.l.b16 %v241
      %v445 = vpack.c.b16 %v352, %v349
      %v446 = vpack.c.b16 %v353, %v350
      %v447 = vpack.c.b16 %v354, %v351
      %v448 = vpack.c.b16 %v358, %v355
      %v449 = vpack.c.b16 %v359, %v356
      %v450 = vpack.c.b16 %v360, %v357
      %v451 = vpack.c.b16 %v364, %v361
      %v452 = vpack.c.b16 %v365, %v362
      %v453 = vpack.c.b16 %v366, %v363
      %v454 = vpack.c.b16 %v370, %v367
      %v455 = vpack.c.b16 %v371, %v368
      %v456 = vpack.c.b16 %v372, %v369
      %v457 = vpack.c.b16 %v376, %v373
      %v458 = vpack.c.b16 %v377, %v374
      %v459 = vpack.c.b16 %v378, %v375
      %v460 = vpack.c.b16 %v382, %v379
      %v461 = vpack.c.b16 %v383, %v380
      %v462 = vpack.c.b16 %v384, %v381
      %v463 = vpack.c.b16 %v388, %v385
      %v464 = vpack.c.b16 %v389, %v386
      %v465 = vpack.c.b16 %v390, %v387
      %v466 = vpack.c.b16 %v394, %v391
      %v467 = vpack.c.b16 %v395, %v392
      %v468 = vpack.c.b16 %v396, %v393
      %v469 = vpack.c.b16 %v400, %v397
      %v470 = vpack.c.b16 %v401, %v398
      %v471 = vpack.c.b16 %v402, %v399
      %v472 = vpack.c.b16 %v406, %v403
      %v473 = vpack.c.b16 %v407, %v404
      %v474 = vpack.c.b16 %v408, %v405
      %v475 = vpack.c.b16 %v412, %v409
      %v476 = vpack.c.b16 %v413, %v410
      %v477 = vpack.c.b16 %v414, %v411
      %v478 = vpack.c.b16 %v418, %v415
      %v479 = vpack.c.b16 %v419, %v416
      %v480 = vpack.c.b16 %v420, %v417
      %v481 = vpack.c.b16 %v424, %v421
      %v482 = vpack.c.b16 %v425, %v422
      %v483 = vpack.c.b16 %v426, %v423
      %v484 = vpack.c.b16 %v430, %v427
      %v485 = vpack.c.b16 %v431, %v428
      %v486 = vpack.c.b16 %v432, %v429
      %v487 = vpack.c.b16 %v436, %v433
      %v488 = vpack.c.b16 %v437, %v434
      %v489 = vpack.c.b16 %v438, %v435
      %v490 = vpack.c.b16 %v442, %v439
      %v491 = vpack.c.b16 %v443, %v440
      %v492 = vpack.c.b16 %v444, %v441
      %v561 = vunpack.c.l.b16 %v242
      %v562 = vunpack.c.l.b16 %v243
      %v563 = vunpack.c.l.b16 %v244
      %v564 = vunpack.c.l.b16 %v245
      %v565 = vunpack.c.l.b16 %v246
      %v566 = vunpack.c.l.b16 %v247
      %v567 = vunpack.c.l.b16 %v248
      %v568 = vunpack.c.l.b16 %v249
      %v569 = vunpack.c.l.b16 %v250
      %v570 = vunpack.c.l.b16 %v251
      %v571 = vunpack.c.l.b16 %v252
      %v572 = vunpack.c.l.b16 %v253
      %v573 = vunpack.c.l.b16 %v254
      %v574 = vunpack.c.l.b16 %v255
      %v575 = vunpack.c.l.b16 %v256
      %v576 = vunpack.c.l.b16 %v257
      %v577 = vunpack.c.l.b16 %v258
      %v578 = vunpack.c.l.b16 %v259
      %v579 = vunpack.c.l.b16 %v260
      %v580 = vunpack.c.l.b16 %v261
      %v581 = vunpack.c.l.b16 %v262
      %v582 = vunpack.c.l.b16 %v263
      %v583 = vunpack.c.l.b16 %v264
      %v584 = vunpack.c.l.b16 %v265
      %v585 = vunpack.c.l.b16 %v266
      %v586 = vunpack.c.l.b16 %v267
      %v587 = vunpack.c.l.b16 %v268
      %v588 = vunpack.c.l.b16 %v269
      %v589 = vunpack.c.l.b16 %v270
      %v590 = vunpack.c.l.b16 %v271
      %v591 = vunpack.c.l.b16 %v272
      %v592 = vunpack.c.l.b16 %v273
      %v593 = vunpack.c.l.b16 %v274
      %v594 = vunpack.c.l.b16 %v275
      %v595 = vunpack.c.l.b16 %v276
      %v596 = vunpack.c.l.b16 %v277
      %v597 = vpack.c.b16 %v562, %v561
      %v598 = vpack.c.b16 %v564, %v563
      %v599 = vpack.c.b16 %v566, %v565
      %v600 = vpack.c.b16 %v568, %v567
      %v601 = vpack.c.b16 %v570, %v569
      %v602 = vpack.c.b16 %v572, %v571
      %v603 = vpack.c.b16 %v574, %v573
      %v604 = vpack.c.b16 %v576, %v575
      %v605 = vpack.c.b16 %v578, %v577
      %v606 = vpack.c.b16 %v580, %v579
      %v607 = vpack.c.b16 %v582, %v581
      %v608 = vpack.c.b16 %v584, %v583
      %v609 = vpack.c.b16 %v586, %v585
      %v610 = vpack.c.b16 %v588, %v587
      %v611 = vpack.c.b16 %v590, %v589
      %v612 = vpack.c.b16 %v592, %v591
      %v613 = vpack.c.b16 %v594, %v593
      %v614 = vpack.c.b16 %v596, %v595
      %vm633 = vcmask 261120
      %v635 = vsel %vm633, %v447, 0
      %v638 = vsel %vm633, %v450, 0
      %v641 = vsel %vm633, %v453, 0
      %v644 = vsel %vm633, %v456, 0
      %v647 = vsel %vm633, %v459, 0
      %v650 = vsel %vm633, %v462, 0
      %v653 = vsel %vm633, %v465, 0
      %v656 = vsel %vm633, %v468, 0
      %v659 = vsel %vm633, %v471, 0
      %v662 = vsel %vm633, %v474, 0
      %v665 = vsel %vm633, %v477, 0
      %v668 = vsel %vm633, %v480, 0
      %v671 = vsel %vm633, %v483, 0
      %v674 = vsel %vm633, %v486, 0
      %v677 = vsel %vm633, %v489, 0
      %v680 = vsel %vm633, %v492, 0
      %682 = vmatprep.subr.bf16.mxu0 0
      %683 = vmatpush1.bf16.msra.mxu0 %v597
      %684 = vmatprep.subr.bf16.mxu0 0
      %685 = vmatpush1.bf16.msra.mxu0 %v598
      %686 = vmatprep.subr.bf16.mxu0 0
      %687 = vmatpush1.bf16.msra.mxu0 %v599
      %688 = vmatprep.subr.bf16.mxu0 0
      %689 = vmatpush1.bf16.msra.mxu0 %v600
      %690 = vmatprep.subr.bf16.mxu0 0
      %691 = vmatpush1.bf16.msra.mxu0 %v601
      %692 = vmatprep.subr.bf16.mxu0 0
      %693 = vmatpush1.bf16.msra.mxu0 %v602
      %694 = vmatprep.subr.bf16.mxu0 0
      %695 = vmatpush1.bf16.msra.mxu0 %v603
      %696 = vmatprep.subr.bf16.mxu0 0
      %697 = vmatpush1.bf16.msra.mxu0 %v604
      %698 = vmatprep.subr.bf16.mxu0 0
      %699 = vmatpush1.bf16.msra.mxu0 %v605
      %700 = vmatprep.subr.bf16.mxu0 0
      %701 = vmatpush1.bf16.msra.mxu0 %v606
      %702 = vmatprep.subr.bf16.mxu0 0
      %703 = vmatpush1.bf16.msra.mxu0 %v607
      %704 = vmatprep.subr.bf16.mxu0 0
      %705 = vmatpush1.bf16.msra.mxu0 %v608
      %706 = vmatprep.subr.bf16.mxu0 0
      %707 = vmatpush1.bf16.msra.mxu0 %v609
      %708 = vmatprep.subr.bf16.mxu0 0
      %709 = vmatpush1.bf16.msra.mxu0 %v610
      %710 = vmatprep.subr.bf16.mxu0 0
      %711 = vmatpush1.bf16.msra.mxu0 %v611
      %712 = vmatprep.subr.bf16.mxu0 0
      %713 = vmatpush1.bf16.msra.mxu0 %v612
      %714 = vmatprep.mubr.bf16.mxu0 %v446
      %715 = vmatmul.mubr.bf16.gmra.mrb[0].mxu0 %v445
      %v716 = vpop.f32.mrb[0].mxu0
      %v717 = vadd.f32 %v283, %v716
      %v718 = vpop.f32.mrb[0].mxu0
      %v719 = vpop.f32.mrb[0].mxu0
      %v720 = vadd.f32 %v283, %v719
      %v721 = vpop.f32.mrb[0].mxu0
      %722 = vmatprep.mubr.bf16.mxu0 %v449
      %723 = vmatmul.mubr.bf16.gmra.mrb[0].mxu0 %v448
      %v724 = vpop.f32.mrb[0].mxu0
      %v725 = vadd.f32 %v283, %v724
      %v726 = vpop.f32.mrb[0].mxu0
      %v727 = vpop.f32.mrb[0].mxu0
      %v728 = vadd.f32 %v283, %v727
      %v729 = vpop.f32.mrb[0].mxu0
      %730 = vmatprep.mubr.bf16.mxu0 %v452
      %731 = vmatmul.mubr.bf16.gmra.mrb[0].mxu0 %v451
      %v732 = vpop.f32.mrb[0].mxu0
      %v733 = vadd.f32 %v283, %v732
      %v734 = vpop.f32.mrb[0].mxu0
      %v735 = vpop.f32.mrb[0].mxu0
      %v736 = vadd.f32 %v283, %v735
      %v737 = vpop.f32.mrb[0].mxu0
      %738 = vmatprep.mubr.bf16.mxu0 %v455
      %739 = vmatmul.mubr.bf16.gmra.mrb[0].mxu0 %v454
      %v740 = vpop.f32.mrb[0].mxu0
      %v741 = vadd.f32 %v283, %v740
      %v742 = vpop.f32.mrb[0].mxu0
      %v743 = vpop.f32.mrb[0].mxu0
      %v744 = vadd.f32 %v283, %v743
      %v745 = vpop.f32.mrb[0].mxu0
      %746 = vmatprep.mubr.bf16.mxu0 %v458
      %747 = vmatmul.mubr.bf16.gmra.mrb[0].mxu0 %v457
      %v748 = vpop.f32.mrb[0].mxu0
      %v749 = vadd.f32 %v283, %v748
      %v750 = vpop.f32.mrb[0].mxu0
      %v751 = vpop.f32.mrb[0].mxu0
      %v752 = vadd.f32 %v283, %v751
      %v753 = vpop.f32.mrb[0].mxu0
      %754 = vmatprep.mubr.bf16.mxu0 %v461
      %755 = vmatmul.mubr.bf16.gmra.mrb[0].mxu0 %v460
      %v756 = vpop.f32.mrb[0].mxu0
      %v757 = vadd.f32 %v283, %v756
      %v758 = vpop.f32.mrb[0].mxu0
      %v759 = vpop.f32.mrb[0].mxu0
      %v760 = vadd.f32 %v283, %v759
      %v761 = vpop.f32.mrb[0].mxu0
      %762 = vmatprep.mubr.bf16.mxu0 %v464
      %763 = vmatmul.mubr.bf16.gmra.mrb[0].mxu0 %v463
      %v764 = vpop.f32.mrb[0].mxu0
      %v765 = vadd.f32 %v283, %v764
      %v766 = vpop.f32.mrb[0].mxu0
      %v767 = vpop.f32.mrb[0].mxu0
      %v768 = vadd.f32 %v283, %v767
      %v769 = vpop.f32.mrb[0].mxu0
      %770 = vmatprep.mubr.bf16.mxu0 %v467
      %771 = vmatmul.mubr.bf16.gmra.mrb[0].mxu0 %v466
      %v772 = vpop.f32.mrb[0].mxu0
      %v773 = vadd.f32 %v283, %v772
      %v774 = vpop.f32.mrb[0].mxu0
      %v775 = vpop.f32.mrb[0].mxu0
      %v776 = vadd.f32 %v283, %v775
      %v777 = vpop.f32.mrb[0].mxu0
      %778 = vmatprep.mubr.bf16.mxu0 %v470
      %779 = vmatmul.mubr.bf16.gmra.mrb[0].mxu0 %v469
      %v780 = vpop.f32.mrb[0].mxu0
      %v781 = vadd.f32 %v283, %v780
      %v782 = vpop.f32.mrb[0].mxu0
      %v783 = vpop.f32.mrb[0].mxu0
      %v784 = vadd.f32 %v283, %v783
      %v785 = vpop.f32.mrb[0].mxu0
      %786 = vmatprep.mubr.bf16.mxu0 %v473
      %787 = vmatmul.mubr.bf16.gmra.mrb[0].mxu0 %v472
      %v788 = vpop.f32.mrb[0].mxu0
      %v789 = vadd.f32 %v283, %v788
      %v790 = vpop.f32.mrb[0].mxu0
      %v791 = vpop.f32.mrb[0].mxu0
      %v792 = vadd.f32 %v283, %v791
      %v793 = vpop.f32.mrb[0].mxu0
      %794 = vmatprep.mubr.bf16.mxu0 %v476
      %795 = vmatmul.mubr.bf16.gmra.mrb[0].mxu0 %v475
      %v796 = vpop.f32.mrb[0].mxu0
      %v797 = vadd.f32 %v283, %v796
      %v798 = vpop.f32.mrb[0].mxu0
      %v799 = vpop.f32.mrb[0].mxu0
      %v800 = vadd.f32 %v283, %v799
      %v801 = vpop.f32.mrb[0].mxu0
      %802 = vmatprep.mubr.bf16.mxu0 %v479
      %803 = vmatmul.mubr.bf16.gmra.mrb[0].mxu0 %v478
      %v804 = vpop.f32.mrb[0].mxu0
      %v805 = vadd.f32 %v283, %v804
      %v806 = vpop.f32.mrb[0].mxu0
      %v807 = vpop.f32.mrb[0].mxu0
      %v808 = vadd.f32 %v283, %v807
      %v809 = vpop.f32.mrb[0].mxu0
      %810 = vmatprep.mubr.bf16.mxu0 %v482
      %811 = vmatmul.mubr.bf16.gmra.mrb[0].mxu0 %v481
      %v812 = vpop.f32.mrb[0].mxu0
      %v813 = vadd.f32 %v283, %v812
      %v814 = vpop.f32.mrb[0].mxu0
      %v815 = vpop.f32.mrb[0].mxu0
      %v816 = vadd.f32 %v283, %v815
      %v817 = vpop.f32.mrb[0].mxu0
      %818 = vmatprep.mubr.bf16.mxu0 %v485
      %819 = vmatmul.mubr.bf16.gmra.mrb[0].mxu0 %v484
      %v820 = vpop.f32.mrb[0].mxu0
      %v821 = vadd.f32 %v283, %v820
      %v822 = vpop.f32.mrb[0].mxu0
      %v823 = vpop.f32.mrb[0].mxu0
      %v824 = vadd.f32 %v283, %v823
      %v825 = vpop.f32.mrb[0].mxu0
      %826 = vmatprep.mubr.bf16.mxu0 %v488
      %827 = vmatmul.mubr.bf16.gmra.mrb[0].mxu0 %v487
      %v828 = vpop.f32.mrb[0].mxu0
      %v829 = vadd.f32 %v283, %v828
      %v830 = vpop.f32.mrb[0].mxu0
      %v831 = vpop.f32.mrb[0].mxu0
      %v832 = vadd.f32 %v283, %v831
      %v833 = vpop.f32.mrb[0].mxu0
      %834 = vmatprep.mubr.bf16.mxu0 %v491
      %835 = vmatmul.mubr.bf16.gmra.mrb[0].mxu0 %v490
      %v836 = vpop.f32.mrb[0].mxu0
      %v837 = vadd.f32 %v283, %v836
      %v838 = vpop.f32.mrb[0].mxu0
      %v839 = vpop.f32.mrb[0].mxu0
      %v840 = vadd.f32 %v283, %v839
      %v841 = vpop.f32.mrb[0].mxu0
      %842 = vdwg.mxu0
      %843 = vmatprep.subr.bf16.mxu0 0
      %844 = vmatpush1.bf16.msra.mxu0 %v613
      %845 = vmatprep.subr.bf16.mxu0 0
      %846 = vmatpush1.bf16.msra.mxu0 %v614
      %847 = vmatprep.subr.bf16.mxu0 0
      %848 = vmatpush1.bf16.msra.mxu0 0
      %849 = vmatprep.subr.bf16.mxu0 0
      %850 = vmatpush1.bf16.msra.mxu0 0
      %851 = vmatprep.subr.bf16.mxu0 0
      %852 = vmatpush1.bf16.msra.mxu0 0
      %853 = vmatprep.subr.bf16.mxu0 0
      %854 = vmatpush1.bf16.msra.mxu0 0
      %855 = vmatprep.subr.bf16.mxu0 0
      %856 = vmatpush1.bf16.msra.mxu0 0
      %857 = vmatprep.subr.bf16.mxu0 0
      %858 = vmatpush1.bf16.msra.mxu0 0
      %859 = vmatprep.subr.bf16.mxu0 0
      %860 = vmatpush1.bf16.msra.mxu0 0
      %861 = vmatprep.subr.bf16.mxu0 0
      %862 = vmatpush1.bf16.msra.mxu0 0
      %863 = vmatprep.subr.bf16.mxu0 0
      %864 = vmatpush1.bf16.msra.mxu0 0
      %865 = vmatprep.subr.bf16.mxu0 0
      %866 = vmatpush1.bf16.msra.mxu0 0
      %867 = vmatprep.subr.bf16.mxu0 0
      %868 = vmatpush1.bf16.msra.mxu0 0
      %869 = vmatprep.subr.bf16.mxu0 0
      %870 = vmatpush1.bf16.msra.mxu0 0
      %871 = vmatprep.subr.bf16.mxu0 0
      %872 = vmatpush1.bf16.msra.mxu0 0
      %873 = vmatprep.subr.bf16.mxu0 0
      %874 = vmatpush1.bf16.msra.mxu0 0
      %875 = vmatprep.mubr.bf16.mxu0 0
      %876 = vmatmul.mubr.bf16.gmra.mrb[0].mxu0 %v635
      %v877 = vpop.f32.mrb[0].mxu0
      %v878 = vadd.f32 %v717, %v877
      %v879 = vpop.f32.mrb[0].mxu0
      %v880 = vpop.f32.mrb[0].mxu0
      %v881 = vadd.f32 %v720, %v880
      %v882 = vpop.f32.mrb[0].mxu0
      %883 = vmatprep.mubr.bf16.mxu0 0
      %884 = vmatmul.mubr.bf16.gmra.mrb[0].mxu0 %v638
      %v885 = vpop.f32.mrb[0].mxu0
      %v886 = vadd.f32 %v725, %v885
      %v887 = vpop.f32.mrb[0].mxu0
      %v888 = vpop.f32.mrb[0].mxu0
      %v889 = vadd.f32 %v728, %v888
      %v890 = vpop.f32.mrb[0].mxu0
      %891 = vmatprep.mubr.bf16.mxu0 0
      %892 = vmatmul.mubr.bf16.gmra.mrb[0].mxu0 %v641
      %v893 = vpop.f32.mrb[0].mxu0
      %v894 = vadd.f32 %v733, %v893
      %v895 = vpop.f32.mrb[0].mxu0
      %v896 = vpop.f32.mrb[0].mxu0
      %v897 = vadd.f32 %v736, %v896
      %v898 = vpop.f32.mrb[0].mxu0
      %899 = vmatprep.mubr.bf16.mxu0 0
      %900 = vmatmul.mubr.bf16.gmra.mrb[0].mxu0 %v644
      %v901 = vpop.f32.mrb[0].mxu0
      %v902 = vadd.f32 %v741, %v901
      %v903 = vpop.f32.mrb[0].mxu0
      %v904 = vpop.f32.mrb[0].mxu0
      %v905 = vadd.f32 %v744, %v904
      %v906 = vpop.f32.mrb[0].mxu0
      %907 = vmatprep.mubr.bf16.mxu0 0
      %908 = vmatmul.mubr.bf16.gmra.mrb[0].mxu0 %v647
      %v909 = vpop.f32.mrb[0].mxu0
      %v910 = vadd.f32 %v749, %v909
      %v911 = vpop.f32.mrb[0].mxu0
      %v912 = vpop.f32.mrb[0].mxu0
      %v913 = vadd.f32 %v752, %v912
      %v914 = vpop.f32.mrb[0].mxu0
      %915 = vmatprep.mubr.bf16.mxu0 0
      %916 = vmatmul.mubr.bf16.gmra.mrb[0].mxu0 %v650
      %v917 = vpop.f32.mrb[0].mxu0
      %v918 = vadd.f32 %v757, %v917
      %v919 = vpop.f32.mrb[0].mxu0
      %v920 = vpop.f32.mrb[0].mxu0
      %v921 = vadd.f32 %v760, %v920
      %v922 = vpop.f32.mrb[0].mxu0
      %923 = vmatprep.mubr.bf16.mxu0 0
      %924 = vmatmul.mubr.bf16.gmra.mrb[0].mxu0 %v653
      %v925 = vpop.f32.mrb[0].mxu0
      %v926 = vadd.f32 %v765, %v925
      %v927 = vpop.f32.mrb[0].mxu0
      %v928 = vpop.f32.mrb[0].mxu0
      %v929 = vadd.f32 %v768, %v928
      %v930 = vpop.f32.mrb[0].mxu0
      %931 = vmatprep.mubr.bf16.mxu0 0
      %932 = vmatmul.mubr.bf16.gmra.mrb[0].mxu0 %v656
      %v933 = vpop.f32.mrb[0].mxu0
      %v934 = vadd.f32 %v773, %v933
      %v935 = vpop.f32.mrb[0].mxu0
      %v936 = vpop.f32.mrb[0].mxu0
      %v937 = vadd.f32 %v776, %v936
      %v938 = vpop.f32.mrb[0].mxu0
      %939 = vmatprep.mubr.bf16.mxu0 0
      %940 = vmatmul.mubr.bf16.gmra.mrb[0].mxu0 %v659
      %v941 = vpop.f32.mrb[0].mxu0
      %v942 = vadd.f32 %v781, %v941
      %v943 = vpop.f32.mrb[0].mxu0
      %v944 = vpop.f32.mrb[0].mxu0
      %v945 = vadd.f32 %v784, %v944
      %v946 = vpop.f32.mrb[0].mxu0
      %947 = vmatprep.mubr.bf16.mxu0 0
      %948 = vmatmul.mubr.bf16.gmra.mrb[0].mxu0 %v662
      %v949 = vpop.f32.mrb[0].mxu0
      %v950 = vadd.f32 %v789, %v949
      %v951 = vpop.f32.mrb[0].mxu0
      %v952 = vpop.f32.mrb[0].mxu0
      %v953 = vadd.f32 %v792, %v952
      %v954 = vpop.f32.mrb[0].mxu0
      %955 = vmatprep.mubr.bf16.mxu0 0
      %956 = vmatmul.mubr.bf16.gmra.mrb[0].mxu0 %v665
      %v957 = vpop.f32.mrb[0].mxu0
      %v958 = vadd.f32 %v797, %v957
      %v959 = vpop.f32.mrb[0].mxu0
      %v960 = vpop.f32.mrb[0].mxu0
      %v961 = vadd.f32 %v800, %v960
      %v962 = vpop.f32.mrb[0].mxu0
      %963 = vmatprep.mubr.bf16.mxu0 0
      %964 = vmatmul.mubr.bf16.gmra.mrb[0].mxu0 %v668
      %v965 = vpop.f32.mrb[0].mxu0
      %v966 = vadd.f32 %v805, %v965
      %v967 = vpop.f32.mrb[0].mxu0
      %v968 = vpop.f32.mrb[0].mxu0
      %v969 = vadd.f32 %v808, %v968
      %v970 = vpop.f32.mrb[0].mxu0
      %971 = vmatprep.mubr.bf16.mxu0 0
      %972 = vmatmul.mubr.bf16.gmra.mrb[0].mxu0 %v671
      %v973 = vpop.f32.mrb[0].mxu0
      %v974 = vadd.f32 %v813, %v973
      %v975 = vpop.f32.mrb[0].mxu0
      %v976 = vpop.f32.mrb[0].mxu0
      %v977 = vadd.f32 %v816, %v976
      %v978 = vpop.f32.mrb[0].mxu0
      %979 = vmatprep.mubr.bf16.mxu0 0
      %980 = vmatmul.mubr.bf16.gmra.mrb[0].mxu0 %v674
      %v981 = vpop.f32.mrb[0].mxu0
      %v982 = vadd.f32 %v821, %v981
      %v983 = vpop.f32.mrb[0].mxu0
      %v984 = vpop.f32.mrb[0].mxu0
      %v985 = vadd.f32 %v824, %v984
      %v986 = vpop.f32.mrb[0].mxu0
      %987 = vmatprep.mubr.bf16.mxu0 0
      %988 = vmatmul.mubr.bf16.gmra.mrb[0].mxu0 %v677
      %v989 = vpop.f32.mrb[0].mxu0
      %v990 = vadd.f32 %v829, %v989
      %v991 = vpop.f32.mrb[0].mxu0
      %v992 = vpop.f32.mrb[0].mxu0
      %v993 = vadd.f32 %v832, %v992
      %v994 = vpop.f32.mrb[0].mxu0
      %995 = vmatprep.mubr.bf16.mxu0 0
      %996 = vmatmul.mubr.bf16.gmra.mrb[0].mxu0 %v680
      %v997 = vpop.f32.mrb[0].mxu0
      %v998 = vadd.f32 %v837, %v997
      %v999 = vpop.f32.mrb[0].mxu0
      %v1000 = vpop.f32.mrb[0].mxu0
      %v1001 = vadd.f32 %v840, %v1000
      %v1002 = vpop.f32.mrb[0].mxu0
      %1003 = vdwg.mxu0
      %vm1004 = vcmask 523264
      %1005 = vst.msk [vmem:[%s175] sm:$0xff] %vm1004, %v878
      %1006 = vst.msk [vmem:[%s175 + $0x8] sm:$0xff] %vm1004, %v881
      %1007 = vst.msk [vmem:[%s175 + $0x10] sm:$0xff] %vm1004, %v886
      %1008 = vst.msk [vmem:[%s175 + $0x18] sm:$0xff] %vm1004, %v889
      %1009 = vst.msk [vmem:[%s175 + $0x20] sm:$0xff] %vm1004, %v894
      %1010 = vst.msk [vmem:[%s175 + $0x28] sm:$0xff] %vm1004, %v897
      %1011 = vst.msk [vmem:[%s175 + $0x30] sm:$0xff] %vm1004, %v902
      %1012 = vst.msk [vmem:[%s175 + $0x38] sm:$0xff] %vm1004, %v905
      %1013 = vst.msk [vmem:[%s175 + $0x40] sm:$0xff] %vm1004, %v910
      %1014 = vst.msk [vmem:[%s175 + $0x48] sm:$0xff] %vm1004, %v913
      %1015 = vst.msk [vmem:[%s175 + $0x50] sm:$0xff] %vm1004, %v918
      %1016 = vst.msk [vmem:[%s175 + $0x58] sm:$0xff] %vm1004, %v921
      %1017 = vst.msk [vmem:[%s175 + $0x60] sm:$0xff] %vm1004, %v926
      %1018 = vst.msk [vmem:[%s175 + $0x68] sm:$0xff] %vm1004, %v929
      %1019 = vst.msk [vmem:[%s175 + $0x70] sm:$0xff] %vm1004, %v934
      %1020 = vst.msk [vmem:[%s175 + $0x78] sm:$0xff] %vm1004, %v937
      %1021 = vst.msk [vmem:[%s175 + $0x80] sm:$0xff] %vm1004, %v942
      %1022 = vst.msk [vmem:[%s175 + $0x88] sm:$0xff] %vm1004, %v945
      %1023 = vst.msk [vmem:[%s175 + $0x90] sm:$0xff] %vm1004, %v950
      %1024 = vst.msk [vmem:[%s175 + $0x98] sm:$0xff] %vm1004, %v953
      %1025 = vst.msk [vmem:[%s175 + $0xa0] sm:$0xff] %vm1004, %v958
      %1026 = vst.msk [vmem:[%s175 + $0xa8] sm:$0xff] %vm1004, %v961
      %1027 = vst.msk [vmem:[%s175 + $0xb0] sm:$0xff] %vm1004, %v966
      %1028 = vst.msk [vmem:[%s175 + $0xb8] sm:$0xff] %vm1004, %v969
      %1029 = vst.msk [vmem:[%s175 + $0xc0] sm:$0xff] %vm1004, %v974
      %1030 = vst.msk [vmem:[%s175 + $0xc8] sm:$0xff] %vm1004, %v977
      %1031 = vst.msk [vmem:[%s175 + $0xd0] sm:$0xff] %vm1004, %v982
      %1032 = vst.msk [vmem:[%s175 + $0xd8] sm:$0xff] %vm1004, %v985
      %1033 = vst.msk [vmem:[%s175 + $0xe0] sm:$0xff] %vm1004, %v990
      %1034 = vst.msk [vmem:[%s175 + $0xe8] sm:$0xff] %vm1004, %v993
      %1035 = vst.msk [vmem:[%s175 + $0xf0] sm:$0xff] %vm1004, %v998
      %1036 = vst.msk [vmem:[%s175 + $0xf8] sm:$0xff] %vm1004, %v1001
      %s1037 = smul.u32 32, %s14
      %p1038 = scmp.lt.s32.totalorder %s1037, 63
      %s1039 = scalar_select %p1038, %s1037, 63
      %s1040 = smul.addr %s1039, 8
      %s1041 = scalar_lea.vmem %s3, %s1040
      // Predicated region
      $region33: #{stem_forward.15} parent=31 // pred_check
        %p1042 = pneg %p100
      $region34: #{stem_forward.15} parent=31 // pred_check_branch
        %1044 = sbr.rel (%p1042) target = $region36
      $region35: #{stem_forward.15} parent=31 // pred_region
        %s1045 = smul.u32 32, %s14
      $region36: #{stem_forward.15} parent=31 // pred_fallthru
        _
    $region32: #{stem_forward.15} parent=5 // pred_fallthru
      _
    %p1046 = scmp.le.s32.totalorder 2, %s9
    // Predicated region
    $region37: #{stem_forward.15} parent=5 // pred_check
      %p1047 = pneg %p1046
    $region38: #{stem_forward.15} parent=5 // pred_check_branch
      %1049 = sbr.rel (%p1047) target = $region40
    $region39: #{stem_forward.15} parent=5 // pred_region
      %s1050 = ssub.s32 %s9, 2
      // Predicated region
      $region41: #{stem_forward.15} parent=39 // pred_check
        %p1051 = pneg %p106
      $region42: #{stem_forward.15} parent=39 // pred_check_branch
        %1053 = sbr.rel (%p1051) target = $region44
      $region43: #{stem_forward.15} parent=39 // pred_region
        %s1054 = smul.u32 32, %s15
        %p1055 = scmp.lt.s32.totalorder %s1054, 63
        %s1056 = scalar_select %p1055, %s1054, 63
        %s1057 = smul.addr %s1056, 8
        %s1058 = scalar_lea.vmem %s3, %s1057
      $region44: #{stem_forward.15} parent=39 // pred_fallthru
        _
    $region40: #{stem_forward.15} parent=5 // pred_fallthru
      _
  $region6: #{stem_forward.15} parent=0 // loop_footer
    %s13 = sadd.s32 1, %s9
  $region7: #{stem_forward.15} parent=0 // loop_footer_branch
    %8 = sbr.rel target = $region3
  $region8: #{stem_forward.15} parent=0 // loop_exit
    _

// kernel: stem_forward.16
$region0: #{stem_forward.16}
  #allocation0 [shape = 'u32[]', space=smem, size = 0x4, offset = 0x4, fixed_abs, tag = 'smem constant byte address 0x4 - core index']
  #allocation1 [shape = 'u32[144,128]{1,0:T(1,128)}', space=vmem, size = 0x12000, scoped, tag = 'internal scratch']
  %s0 = inlined_call_operand.vmem [shape: bf16[104,576], index: 0, kind: input, shape index: {}]
  %s1 = inlined_call_operand.vmem [shape: bf16[576,96], index: 1, kind: input, shape index: {}]
  %s2 = inlined_call_operand.vmem [shape: f32[1,96], index: 2, kind: input, shape index: {}]
  %s3 = inlined_call_operand.vmem [shape: f32[104,96], index: 3, kind: output, shape index: {}]
  %s4 = sld [smem:[#allocation0]]
  $region22: #{stem_forward.16} parent=0
    _
  %s6 = ssub.s32 1, %s4
  %s7 = scalar_select 0, %s6, %s4
  // Predicated region
  $region2: #{stem_forward.16} parent=0 // pred_check
    _
  $region3: #{stem_forward.16} parent=0 // pred_check_branch
    %9 = sbr.rel (0) target = $region5
  $region4: #{stem_forward.16} parent=0 // pred_region
    _
  $region5: #{stem_forward.16} parent=0 // pred_fallthru
    _
  // Predicated region
  $region6: #{stem_forward.16} parent=0 // pred_check
    _
  $region7: #{stem_forward.16} parent=0 // pred_check_branch
    %11 = sbr.rel (0) target = $region9
  $region8: #{stem_forward.16} parent=0 // pred_region
    _
  $region9: #{stem_forward.16} parent=0 // pred_fallthru
    _
  // Predicated region
  $region10: #{stem_forward.16} parent=0 // pred_check
    _
  $region11: #{stem_forward.16} parent=0 // pred_check_branch
    %13 = sbr.rel (0) target = $region13
  $region12: #{stem_forward.16} parent=0 // pred_region
    _
  $region13: #{stem_forward.16} parent=0 // pred_fallthru
    _
  %v15 = vld [vmem:[%s0] sm:$0xff]
  %v16 = vld [vmem:[%s0 + $0x8] sm:$0xff]
  %v17 = vld [vmem:[%s0 + $0x10] sm:$0xf]
  %v18 = vld [vmem:[%s0 + $0x14] sm:$0xff]
  %v19 = vld [vmem:[%s0 + $0x1c] sm:$0xff]
  %v20 = vld [vmem:[%s0 + $0x24] sm:$0xf]
  %v21 = vld [vmem:[%s0 + $0x28] sm:$0xff]
  %v22 = vld [vmem:[%s0 + $0x30] sm:$0xff]
  %v23 = vld [vmem:[%s0 + $0x38] sm:$0xf]
  %v24 = vld [vmem:[%s0 + $0x3c] sm:$0xff]
  %v25 = vld [vmem:[%s0 + $0x44] sm:$0xff]
  %v26 = vld [vmem:[%s0 + $0x4c] sm:$0xf]
  %v27 = vld [vmem:[%s0 + $0x50] sm:$0xff]
  %v28 = vld [vmem:[%s0 + $0x58] sm:$0xff]
  %v29 = vld [vmem:[%s0 + $0x60] sm:$0xf]
  %v30 = vld [vmem:[%s0 + $0x64] sm:$0xff]
  %v31 = vld [vmem:[%s0 + $0x6c] sm:$0xff]
  %v32 = vld [vmem:[%s0 + $0x74] sm:$0xf]
  %v33 = vld [vmem:[%s0 + $0x78] sm:$0xff]
  %v34 = vld [vmem:[%s0 + $0x80] sm:$0xff]
  %v35 = vld [vmem:[%s0 + $0x88] sm:$0xf]
  %v36 = vld [vmem:[%s0 + $0x8c] sm:$0xff]
  %v37 = vld [vmem:[%s0 + $0x94] sm:$0xff]
  %v38 = vld [vmem:[%s0 + $0x9c] sm:$0xf]
  %v39 = vld [vmem:[%s0 + $0xa0] sm:$0xff]
  %v40 = vld [vmem:[%s0 + $0xa8] sm:$0xff]
  %v41 = vld [vmem:[%s0 + $0xb0] sm:$0xf]
  %v42 = vld [vmem:[%s0 + $0xb4] sm:$0xff]
  %v43 = vld [vmem:[%s0 + $0xbc] sm:$0xff]
  %v44 = vld [vmem:[%s0 + $0xc4] sm:$0xf]
  %v45 = vld [vmem:[%s0 + $0xc8] sm:$0xff]
  %v46 = vld [vmem:[%s0 + $0xd0] sm:$0xff]
  %v47 = vld [vmem:[%s0 + $0xd8] sm:$0xf]
  %v48 = vld [vmem:[%s0 + $0xdc] sm:$0xff]
  %v49 = vld [vmem:[%s0 + $0xe4] sm:$0xff]
  %v50 = vld [vmem:[%s0 + $0xec] sm:$0xf]
  %v51 = vld [vmem:[%s0 + $0xf0] sm:$0xff]
  %v52 = vld [vmem:[%s0 + $0xf8] sm:$0xff]
  %v53 = vld [vmem:[%s0 + $0x100] sm:$0xf]
  %v54 = vld [vmem:[%s1] sm:$0xf]
  %v55 = vld [vmem:[%s1 + $0x4] sm:$0xf]
  %v56 = vld [vmem:[%s1 + $0x8] sm:$0xf]
  %v57 = vld [vmem:[%s1 + $0xc] sm:$0xf]
  %v58 = vld [vmem:[%s1 + $0x10] sm:$0xf]
  %v59 = vld [vmem:[%s1 + $0x14] sm:$0xf]
  %v60 = vld [vmem:[%s1 + $0x18] sm:$0xf]
  %v61 = vld [vmem:[%s1 + $0x1c] sm:$0xf]
  %v62 = vld [vmem:[%s1 + $0x20] sm:$0xf]
  %v63 = vld [vmem:[%s1 + $0x24] sm:$0xf]
  %v64 = vld [vmem:[%s1 + $0x28] sm:$0xf]
  %v65 = vld [vmem:[%s1 + $0x2c] sm:$0xf]
  %v66 = vld [vmem:[%s1 + $0x30] sm:$0xf]
  %v67 = vld [vmem:[%s1 + $0x34] sm:$0xf]
  %v68 = vld [vmem:[%s1 + $0x38] sm:$0xf]
  %v69 = vld [vmem:[%s1 + $0x3c] sm:$0xf]
  %v70 = vld [vmem:[%s1 + $0x40] sm:$0xf]
  %v71 = vld [vmem:[%s1 + $0x44] sm:$0xf]
  %v72 = vld [vmem:[%s1 + $0x48] sm:$0xf]
  %v73 = vld [vmem:[%s1 + $0x4c] sm:$0xf]
  %v74 = vld [vmem:[%s1 + $0x50] sm:$0xf]
  %v75 = vld [vmem:[%s1 + $0x54] sm:$0xf]
  %v76 = vld [vmem:[%s1 + $0x58] sm:$0xf]
  %v77 = vld [vmem:[%s1 + $0x5c] sm:$0xf]
  %v78 = vld [vmem:[%s1 + $0x60] sm:$0xf]
  %v79 = vld [vmem:[%s1 + $0x64] sm:$0xf]
  %v80 = vld [vmem:[%s1 + $0x68] sm:$0xf]
  %v81 = vld [vmem:[%s1 + $0x6c] sm:$0xf]
  %v82 = vld [vmem:[%s1 + $0x70] sm:$0xf]
  %v83 = vld [vmem:[%s1 + $0x74] sm:$0xf]
  %v84 = vld [vmem:[%s1 + $0x78] sm:$0xf]
  %v85 = vld [vmem:[%s1 + $0x7c] sm:$0xf]
  %v86 = vld [vmem:[%s1 + $0x80] sm:$0xf]
  %v87 = vld [vmem:[%s1 + $0x84] sm:$0xf]
  %v88 = vld [vmem:[%s1 + $0x88] sm:$0xf]
  %v89 = vld [vmem:[%s1 + $0x8c] sm:$0xf]
  %v90 = vld [vmem:[%s1 + $0x90] sm:$0xf]
  %v91 = vld [vmem:[%s1 + $0x94] sm:$0xf]
  %v92 = vld [vmem:[%s1 + $0x98] sm:$0xf]
  %v93 = vld [vmem:[%s1 + $0x9c] sm:$0xf]
  %v94 = vld [vmem:[%s1 + $0xa0] sm:$0xf]
  %v95 = vld [vmem:[%s1 + $0xa4] sm:$0xf]
  %v96 = vld [vmem:[%s1 + $0xa8] sm:$0xf]
  %v97 = vld [vmem:[%s1 + $0xac] sm:$0xf]
  %v98 = vld [vmem:[%s1 + $0xb0] sm:$0xf]
  %v99 = vld [vmem:[%s1 + $0xb4] sm:$0xf]
  %v100 = vld [vmem:[%s1 + $0xb8] sm:$0xf]
  %v101 = vld [vmem:[%s1 + $0xbc] sm:$0xf]
  %v102 = vld [vmem:[%s1 + $0xc0] sm:$0xf]
  %v103 = vld [vmem:[%s1 + $0xc4] sm:$0xf]
  %v104 = vld [vmem:[%s1 + $0xc8] sm:$0xf]
  %v105 = vld [vmem:[%s1 + $0xcc] sm:$0xf]
  %v106 = vld [vmem:[%s1 + $0xd0] sm:$0xf]
  %v107 = vld [vmem:[%s1 + $0xd4] sm:$0xf]
  %v108 = vld [vmem:[%s1 + $0xd8] sm:$0xf]
  %v109 = vld [vmem:[%s1 + $0xdc] sm:$0xf]
  %v110 = vld [vmem:[%s1 + $0xe0] sm:$0xf]
  %v111 = vld [vmem:[%s1 + $0xe4] sm:$0xf]
  %v112 = vld [vmem:[%s1 + $0xe8] sm:$0xf]
  %v113 = vld [vmem:[%s1 + $0xec] sm:$0xf]
  %v114 = vld [vmem:[%s1 + $0xf0] sm:$0xf]
  %v115 = vld [vmem:[%s1 + $0xf4] sm:$0xf]
  %v116 = vld [vmem:[%s1 + $0xf8] sm:$0xf]
  %v117 = vld [vmem:[%s1 + $0xfc] sm:$0xf]
  %v118 = vld [vmem:[%s1 + $0x100] sm:$0xf]
  %v119 = vld [vmem:[%s1 + $0x104] sm:$0xf]
  %v120 = vld [vmem:[%s1 + $0x108] sm:$0xf]
  %v121 = vld [vmem:[%s1 + $0x10c] sm:$0xf]
  %v122 = vld [vmem:[%s1 + $0x110] sm:$0xf]
  %v123 = vld [vmem:[%s1 + $0x114] sm:$0xf]
  %v124 = vld [vmem:[%s1 + $0x118] sm:$0xf]
  %v125 = vld [vmem:[%s1 + $0x11c] sm:$0xf]
  %v126 = vld [vmem:[%s2] sm:$0x1]
  %v128 = vlaneseq
  %v129 = vshrl.u32 %v128, 7
  %v130 = vsub.s32 0, %v129
  %v131 = vrot.slane %v126, %v130
  %v172 = vunpack.c.l.b16 %v15
  %v173 = vunpack.c.h.b16 %v15
  %v174 = vunpack.c.l.b16 %v16
  %v175 = vunpack.c.h.b16 %v16
  %v176 = vunpack.c.l.b16 %v17
  %v177 = vunpack.c.l.b16 %v18
  %v178 = vunpack.c.h.b16 %v18
  %v179 = vunpack.c.l.b16 %v19
  %v180 = vunpack.c.h.b16 %v19
  %v181 = vunpack.c.l.b16 %v20
  %v182 = vunpack.c.l.b16 %v21
  %v183 = vunpack.c.h.b16 %v21
  %v184 = vunpack.c.l.b16 %v22
  %v185 = vunpack.c.h.b16 %v22
  %v186 = vunpack.c.l.b16 %v23
  %v187 = vunpack.c.l.b16 %v24
  %v188 = vunpack.c.h.b16 %v24
  %v189 = vunpack.c.l.b16 %v25
  %v190 = vunpack.c.h.b16 %v25
  %v191 = vunpack.c.l.b16 %v26
  %v192 = vunpack.c.l.b16 %v27
  %v193 = vunpack.c.h.b16 %v27
  %v194 = vunpack.c.l.b16 %v28
  %v195 = vunpack.c.h.b16 %v28
  %v196 = vunpack.c.l.b16 %v29
  %v197 = vunpack.c.l.b16 %v30
  %v198 = vunpack.c.h.b16 %v30
  %v199 = vunpack.c.l.b16 %v31
  %v200 = vunpack.c.h.b16 %v31
  %v201 = vunpack.c.l.b16 %v32
  %v202 = vunpack.c.l.b16 %v33
  %v203 = vunpack.c.h.b16 %v33
  %v204 = vunpack.c.l.b16 %v34
  %v205 = vunpack.c.h.b16 %v34
  %v206 = vunpack.c.l.b16 %v35
  %v207 = vunpack.c.l.b16 %v36
  %v208 = vunpack.c.h.b16 %v36
  %v209 = vunpack.c.l.b16 %v37
  %v210 = vunpack.c.h.b16 %v37
  %v211 = vunpack.c.l.b16 %v38
  %v212 = vunpack.c.l.b16 %v39
  %v213 = vunpack.c.h.b16 %v39
  %v214 = vunpack.c.l.b16 %v40
  %v215 = vunpack.c.h.b16 %v40
  %v216 = vunpack.c.l.b16 %v41
  %v217 = vunpack.c.l.b16 %v42
  %v218 = vunpack.c.h.b16 %v42
  %v219 = vunpack.c.l.b16 %v43
  %v220 = vunpack.c.h.b16 %v43
  %v221 = vunpack.c.l.b16 %v44
  %v222 = vunpack.c.l.b16 %v45
  %v223 = vunpack.c.h.b16 %v45
  %v224 = vunpack.c.l.b16 %v46
  %v225 = vunpack.c.h.b16 %v46
  %v226 = vunpack.c.l.b16 %v47
  %v227 = vunpack.c.l.b16 %v48
  %v228 = vunpack.c.h.b16 %v48
  %v229 = vunpack.c.l.b16 %v49
  %v230 = vunpack.c.h.b16 %v49
  %v231 = vunpack.c.l.b16 %v50
  %v232 = vunpack.c.l.b16 %v51
  %v233 = vunpack.c.h.b16 %v51
  %v234 = vunpack.c.l.b16 %v52
  %v235 = vunpack.c.h.b16 %v52
  %v236 = vunpack.c.l.b16 %v53
  %v237 = vpack.c.b16 %v177, %v172
  %v238 = vpack.c.b16 %v178, %v173
  %v239 = vpack.c.b16 %v179, %v174
  %v240 = vpack.c.b16 %v180, %v175
  %v241 = vpack.c.b16 %v181, %v176
  %v242 = vpack.c.b16 %v187, %v182
  %v243 = vpack.c.b16 %v188, %v183
  %v244 = vpack.c.b16 %v189, %v184
  %v245 = vpack.c.b16 %v190, %v185
  %v246 = vpack.c.b16 %v191, %v186
  %v247 = vpack.c.b16 %v197, %v192
  %v248 = vpack.c.b16 %v198, %v193
  %v249 = vpack.c.b16 %v199, %v194
  %v250 = vpack.c.b16 %v200, %v195
  %v251 = vpack.c.b16 %v201, %v196
  %v252 = vpack.c.b16 %v207, %v202
  %v253 = vpack.c.b16 %v208, %v203
  %v254 = vpack.c.b16 %v209, %v204
  %v255 = vpack.c.b16 %v210, %v205
  %v256 = vpack.c.b16 %v211, %v206
  %v257 = vpack.c.b16 %v217, %v212
  %v258 = vpack.c.b16 %v218, %v213
  %v259 = vpack.c.b16 %v219, %v214
  %v260 = vpack.c.b16 %v220, %v215
  %v261 = vpack.c.b16 %v221, %v216
  %v262 = vpack.c.b16 %v227, %v222
  %v263 = vpack.c.b16 %v228, %v223
  %v264 = vpack.c.b16 %v229, %v224
  %v265 = vpack.c.b16 %v230, %v225
  %v266 = vpack.c.b16 %v231, %v226
  %v267 = vpack.c.b16 %v232, %v232
  %v268 = vpack.c.b16 %v233, %v233
  %v269 = vpack.c.b16 %v234, %v234
  %v270 = vpack.c.b16 %v235, %v235
  %v271 = vpack.c.b16 %v236, %v236
  %v372 = vunpack.c.l.b16 %v54
  %v373 = vunpack.c.l.b16 %v55
  %v374 = vunpack.c.l.b16 %v56
  %v375 = vunpack.c.l.b16 %v57
  %v376 = vunpack.c.l.b16 %v58
  %v377 = vunpack.c.l.b16 %v59
  %v378 = vunpack.c.l.b16 %v60
  %v379 = vunpack.c.l.b16 %v61
  %v380 = vunpack.c.l.b16 %v62
  %v381 = vunpack.c.l.b16 %v63
  %v382 = vunpack.c.l.b16 %v64
  %v383 = vunpack.c.l.b16 %v65
  %v384 = vunpack.c.l.b16 %v66
  %v385 = vunpack.c.l.b16 %v67
  %v386 = vunpack.c.l.b16 %v68
  %v387 = vunpack.c.l.b16 %v69
  %v388 = vunpack.c.l.b16 %v70
  %v389 = vunpack.c.l.b16 %v71
  %v390 = vunpack.c.l.b16 %v72
  %v391 = vunpack.c.l.b16 %v73
  %v392 = vunpack.c.l.b16 %v74
  %v393 = vunpack.c.l.b16 %v75
  %v394 = vunpack.c.l.b16 %v76
  %v395 = vunpack.c.l.b16 %v77
  %v396 = vunpack.c.l.b16 %v78
  %v397 = vunpack.c.l.b16 %v79
  %v398 = vunpack.c.l.b16 %v80
  %v399 = vunpack.c.l.b16 %v81
  %v400 = vunpack.c.l.b16 %v82
  %v401 = vunpack.c.l.b16 %v83
  %v402 = vunpack.c.l.b16 %v84
  %v403 = vunpack.c.l.b16 %v85
  %v404 = vunpack.c.l.b16 %v86
  %v405 = vunpack.c.l.b16 %v87
  %v406 = vunpack.c.l.b16 %v88
  %v407 = vunpack.c.l.b16 %v89
  %v408 = vunpack.c.l.b16 %v90
  %v409 = vunpack.c.l.b16 %v91
  %v410 = vunpack.c.l.b16 %v92
  %v411 = vunpack.c.l.b16 %v93
  %v412 = vunpack.c.l.b16 %v94
  %v413 = vunpack.c.l.b16 %v95
  %v414 = vunpack.c.l.b16 %v96
  %v415 = vunpack.c.l.b16 %v97
  %v416 = vunpack.c.l.b16 %v98
  %v417 = vunpack.c.l.b16 %v99
  %v418 = vunpack.c.l.b16 %v100
  %v419 = vunpack.c.l.b16 %v101
  %v420 = vunpack.c.l.b16 %v102
  %v421 = vunpack.c.l.b16 %v103
  %v422 = vunpack.c.l.b16 %v104
  %v423 = vunpack.c.l.b16 %v105
  %v424 = vunpack.c.l.b16 %v106
  %v425 = vunpack.c.l.b16 %v107
  %v426 = vunpack.c.l.b16 %v108
  %v427 = vunpack.c.l.b16 %v109
  %v428 = vunpack.c.l.b16 %v110
  %v429 = vunpack.c.l.b16 %v111
  %v430 = vunpack.c.l.b16 %v112
  %v431 = vunpack.c.l.b16 %v113
  %v432 = vunpack.c.l.b16 %v114
  %v433 = vunpack.c.l.b16 %v115
  %v434 = vunpack.c.l.b16 %v116
  %v435 = vunpack.c.l.b16 %v117
  %v436 = vunpack.c.l.b16 %v118
  %v437 = vunpack.c.l.b16 %v119
  %v438 = vunpack.c.l.b16 %v120
  %v439 = vunpack.c.l.b16 %v121
  %v440 = vunpack.c.l.b16 %v122
  %v441 = vunpack.c.l.b16 %v123
  %v442 = vunpack.c.l.b16 %v124
  %v443 = vunpack.c.l.b16 %v125
  %v444 = vpack.c.b16 %v373, %v372
  %v445 = vpack.c.b16 %v375, %v374
  %v446 = vpack.c.b16 %v377, %v376
  %v447 = vpack.c.b16 %v379, %v378
  %v448 = vpack.c.b16 %v381, %v380
  %v449 = vpack.c.b16 %v383, %v382
  %v450 = vpack.c.b16 %v385, %v384
  %v451 = vpack.c.b16 %v387, %v386
  %v452 = vpack.c.b16 %v389, %v388
  %v453 = vpack.c.b16 %v391, %v390
  %v454 = vpack.c.b16 %v393, %v392
  %v455 = vpack.c.b16 %v395, %v394
  %v456 = vpack.c.b16 %v397, %v396
  %v457 = vpack.c.b16 %v399, %v398
  %v458 = vpack.c.b16 %v401, %v400
  %v459 = vpack.c.b16 %v403, %v402
  %v460 = vpack.c.b16 %v405, %v404
  %v461 = vpack.c.b16 %v407, %v406
  %v462 = vpack.c.b16 %v409, %v408
  %v463 = vpack.c.b16 %v411, %v410
  %v464 = vpack.c.b16 %v413, %v412
  %v465 = vpack.c.b16 %v415, %v414
  %v466 = vpack.c.b16 %v417, %v416
  %v467 = vpack.c.b16 %v419, %v418
  %v468 = vpack.c.b16 %v421, %v420
  %v469 = vpack.c.b16 %v423, %v422
  %v470 = vpack.c.b16 %v425, %v424
  %v471 = vpack.c.b16 %v427, %v426
  %v472 = vpack.c.b16 %v429, %v428
  %v473 = vpack.c.b16 %v431, %v430
  %v474 = vpack.c.b16 %v433, %v432
  %v475 = vpack.c.b16 %v435, %v434
  %v476 = vpack.c.b16 %v437, %v436
  %v477 = vpack.c.b16 %v439, %v438
  %v478 = vpack.c.b16 %v441, %v440
  %v479 = vpack.c.b16 %v443, %v442
  %vm516 = vcmask 523264
  %v518 = vsel %vm516, %v241, 0
  %v521 = vsel %vm516, %v246, 0
  %v524 = vsel %vm516, %v251, 0
  %v527 = vsel %vm516, %v256, 0
  %v530 = vsel %vm516, %v261, 0
  %v533 = vsel %vm516, %v266, 0
  %v536 = vsel %vm516, %v271, 0
  %538 = vmatprep.subr.bf16.mxu0 0
  %539 = vmatpush1.bf16.msra.mxu0 %v444
  %540 = vmatprep.subr.bf16.mxu0 0
  %541 = vmatpush1.bf16.msra.mxu0 %v445
  %542 = vmatprep.subr.bf16.mxu0 0
  %543 = vmatpush1.bf16.msra.mxu0 %v446
  %544 = vmatprep.subr.bf16.mxu0 0
  %545 = vmatpush1.bf16.msra.mxu0 %v447
  %546 = vmatprep.subr.bf16.mxu0 0
  %547 = vmatpush1.bf16.msra.mxu0 %v448
  %548 = vmatprep.subr.bf16.mxu0 0
  %549 = vmatpush1.bf16.msra.mxu0 %v449
  %550 = vmatprep.subr.bf16.mxu0 0
  %551 = vmatpush1.bf16.msra.mxu0 %v450
  %552 = vmatprep.subr.bf16.mxu0 0
  %553 = vmatpush1.bf16.msra.mxu0 %v451
  %554 = vmatprep.subr.bf16.mxu0 0
  %555 = vmatpush1.bf16.msra.mxu0 %v452
  %556 = vmatprep.subr.bf16.mxu0 0
  %557 = vmatpush1.bf16.msra.mxu0 %v453
  %558 = vmatprep.subr.bf16.mxu0 0
  %559 = vmatpush1.bf16.msra.mxu0 %v454
  %560 = vmatprep.subr.bf16.mxu0 0
  %561 = vmatpush1.bf16.msra.mxu0 %v455
  %562 = vmatprep.subr.bf16.mxu0 0
  %563 = vmatpush1.bf16.msra.mxu0 %v456
  %564 = vmatprep.subr.bf16.mxu0 0
  %565 = vmatpush1.bf16.msra.mxu0 %v457
  %566 = vmatprep.subr.bf16.mxu0 0
  %567 = vmatpush1.bf16.msra.mxu0 %v458
  %568 = vmatprep.subr.bf16.mxu0 0
  %569 = vmatpush1.bf16.msra.mxu0 %v459
  %570 = vmatprep.mubr.bf16.mxu0 %v238
  %571 = vmatmul.mubr.bf16.gmra.mrb[0].mxu0 %v237
  %v572 = vpop.f32.mrb[0].mxu0
  %v573 = vadd.f32 %v131, %v572
  %v574 = vpop.f32.mrb[0].mxu0
  %v575 = vpop.f32.mrb[0].mxu0
  %v576 = vadd.f32 %v131, %v575
  %v577 = vpop.f32.mrb[0].mxu0
  %578 = vmatprep.mubr.bf16.mxu0 %v243
  %579 = vmatmul.mubr.bf16.gmra.mrb[0].mxu0 %v242
  %v580 = vpop.f32.mrb[0].mxu0
  %v581 = vadd.f32 %v131, %v580
  %v582 = vpop.f32.mrb[0].mxu0
  %v583 = vpop.f32.mrb[0].mxu0
  %v584 = vadd.f32 %v131, %v583
  %v585 = vpop.f32.mrb[0].mxu0
  %586 = vmatprep.mubr.bf16.mxu0 %v248
  %587 = vmatmul.mubr.bf16.gmra.mrb[0].mxu0 %v247
  %v588 = vpop.f32.mrb[0].mxu0
  %v589 = vadd.f32 %v131, %v588
  %v590 = vpop.f32.mrb[0].mxu0
  %v591 = vpop.f32.mrb[0].mxu0
  %v592 = vadd.f32 %v131, %v591
  %v593 = vpop.f32.mrb[0].mxu0
  %594 = vmatprep.mubr.bf16.mxu0 %v253
  %595 = vmatmul.mubr.bf16.gmra.mrb[0].mxu0 %v252
  %v596 = vpop.f32.mrb[0].mxu0
  %v597 = vadd.f32 %v131, %v596
  %v598 = vpop.f32.mrb[0].mxu0
  %v599 = vpop.f32.mrb[0].mxu0
  %v600 = vadd.f32 %v131, %v599
  %v601 = vpop.f32.mrb[0].mxu0
  %602 = vmatprep.mubr.bf16.mxu0 %v258
  %603 = vmatmul.mubr.bf16.gmra.mrb[0].mxu0 %v257
  %v604 = vpop.f32.mrb[0].mxu0
  %v605 = vadd.f32 %v131, %v604
  %v606 = vpop.f32.mrb[0].mxu0
  %v607 = vpop.f32.mrb[0].mxu0
  %v608 = vadd.f32 %v131, %v607
  %v609 = vpop.f32.mrb[0].mxu0
  %610 = vmatprep.mubr.bf16.mxu0 %v263
  %611 = vmatmul.mubr.bf16.gmra.mrb[0].mxu0 %v262
  %v612 = vpop.f32.mrb[0].mxu0
  %v613 = vadd.f32 %v131, %v612
  %v614 = vpop.f32.mrb[0].mxu0
  %v615 = vpop.f32.mrb[0].mxu0
  %v616 = vadd.f32 %v131, %v615
  %v617 = vpop.f32.mrb[0].mxu0
  %618 = vmatprep.mubr.bf16.mxu0 %v268
  %619 = vmatmul.mubr.bf16.gmra.mrb[0].mxu0 %v267
  %v620 = vpop.f32.mrb[0].mxu0
  %v621 = vadd.f32 %v131, %v620
  %v622 = vpop.f32.mrb[0].mxu0
  %v623 = vpop.f32.mrb[0].mxu0
  %v624 = vpop.f32.mrb[0].mxu0
  %625 = vdwg.mxu0
  %626 = vmatprep.subr.bf16.mxu0 0
  %627 = vmatpush1.bf16.msra.mxu0 %v460
  %628 = vmatprep.subr.bf16.mxu0 0
  %629 = vmatpush1.bf16.msra.mxu0 %v461
  %630 = vmatprep.subr.bf16.mxu0 0
  %631 = vmatpush1.bf16.msra.mxu0 %v462
  %632 = vmatprep.subr.bf16.mxu0 0
  %633 = vmatpush1.bf16.msra.mxu0 %v463
  %634 = vmatprep.subr.bf16.mxu0 0
  %635 = vmatpush1.bf16.msra.mxu0 %v464
  %636 = vmatprep.subr.bf16.mxu0 0
  %637 = vmatpush1.bf16.msra.mxu0 %v465
  %638 = vmatprep.subr.bf16.mxu0 0
  %639 = vmatpush1.bf16.msra.mxu0 %v466
  %640 = vmatprep.subr.bf16.mxu0 0
  %641 = vmatpush1.bf16.msra.mxu0 %v467
  %642 = vmatprep.subr.bf16.mxu0 0
  %643 = vmatpush1.bf16.msra.mxu0 %v468
  %644 = vmatprep.subr.bf16.mxu0 0
  %645 = vmatpush1.bf16.msra.mxu0 %v469
  %646 = vmatprep.subr.bf16.mxu0 0
  %647 = vmatpush1.bf16.msra.mxu0 %v470
  %648 = vmatprep.subr.bf16.mxu0 0
  %649 = vmatpush1.bf16.msra.mxu0 %v471
  %650 = vmatprep.subr.bf16.mxu0 0
  %651 = vmatpush1.bf16.msra.mxu0 %v472
  %652 = vmatprep.subr.bf16.mxu0 0
  %653 = vmatpush1.bf16.msra.mxu0 %v473
  %654 = vmatprep.subr.bf16.mxu0 0
  %655 = vmatpush1.bf16.msra.mxu0 %v474
  %656 = vmatprep.subr.bf16.mxu0 0
  %657 = vmatpush1.bf16.msra.mxu0 %v475
  %658 = vmatprep.mubr.bf16.mxu0 %v240
  %659 = vmatmul.mubr.bf16.gmra.mrb[0].mxu0 %v239
  %v660 = vpop.f32.mrb[0].mxu0
  %v661 = vadd.f32 %v573, %v660
  %v662 = vpop.f32.mrb[0].mxu0
  %v663 = vpop.f32.mrb[0].mxu0
  %v664 = vadd.f32 %v576, %v663
  %v665 = vpop.f32.mrb[0].mxu0
  %666 = vmatprep.mubr.bf16.mxu0 %v245
  %667 = vmatmul.mubr.bf16.gmra.mrb[0].mxu0 %v244
  %v668 = vpop.f32.mrb[0].mxu0
  %v669 = vadd.f32 %v581, %v668
  %v670 = vpop.f32.mrb[0].mxu0
  %v671 = vpop.f32.mrb[0].mxu0
  %v672 = vadd.f32 %v584, %v671
  %v673 = vpop.f32.mrb[0].mxu0
  %674 = vmatprep.mubr.bf16.mxu0 %v250
  %675 = vmatmul.mubr.bf16.gmra.mrb[0].mxu0 %v249
  %v676 = vpop.f32.mrb[0].mxu0
  %v677 = vadd.f32 %v589, %v676
  %v678 = vpop.f32.mrb[0].mxu0
  %v679 = vpop.f32.mrb[0].mxu0
  %v680 = vadd.f32 %v592, %v679
  %v681 = vpop.f32.mrb[0].mxu0
  %682 = vmatprep.mubr.bf16.mxu0 %v255
  %683 = vmatmul.mubr.bf16.gmra.mrb[0].mxu0 %v254
  %v684 = vpop.f32.mrb[0].mxu0
  %v685 = vadd.f32 %v597, %v684
  %v686 = vpop.f32.mrb[0].mxu0
  %v687 = vpop.f32.mrb[0].mxu0
  %v688 = vadd.f32 %v600, %v687
  %v689 = vpop.f32.mrb[0].mxu0
  %690 = vmatprep.mubr.bf16.mxu0 %v260
  %691 = vmatmul.mubr.bf16.gmra.mrb[0].mxu0 %v259
  %v692 = vpop.f32.mrb[0].mxu0
  %v693 = vadd.f32 %v605, %v692
  %v694 = vpop.f32.mrb[0].mxu0
  %v695 = vpop.f32.mrb[0].mxu0
  %v696 = vadd.f32 %v608, %v695
  %v697 = vpop.f32.mrb[0].mxu0
  %698 = vmatprep.mubr.bf16.mxu0 %v265
  %699 = vmatmul.mubr.bf16.gmra.mrb[0].mxu0 %v264
  %v700 = vpop.f32.mrb[0].mxu0
  %v701 = vadd.f32 %v613, %v700
  %v702 = vpop.f32.mrb[0].mxu0
  %v703 = vpop.f32.mrb[0].mxu0
  %v704 = vadd.f32 %v616, %v703
  %v705 = vpop.f32.mrb[0].mxu0
  %706 = vmatprep.mubr.bf16.mxu0 %v270
  %707 = vmatmul.mubr.bf16.gmra.mrb[0].mxu0 %v269
  %v708 = vpop.f32.mrb[0].mxu0
  %v709 = vadd.f32 %v621, %v708
  %v710 = vpop.f32.mrb[0].mxu0
  %v711 = vpop.f32.mrb[0].mxu0
  %v712 = vpop.f32.mrb[0].mxu0
  %713 = vdwg.mxu0
  %714 = vmatprep.subr.bf16.mxu0 0
  %715 = vmatpush1.bf16.msra.mxu0 %v476
  %716 = vmatprep.subr.bf16.mxu0 0
  %717 = vmatpush1.bf16.msra.mxu0 %v477
  %718 = vmatprep.subr.bf16.mxu0 0
  %719 = vmatpush1.bf16.msra.mxu0 %v478
  %720 = vmatprep.subr.bf16.mxu0 0
  %721 = vmatpush1.bf16.msra.mxu0 %v479
  %722 = vmatprep.subr.bf16.mxu0 0
  %723 = vmatpush1.bf16.msra.mxu0 0
  %724 = vmatprep.subr.bf16.mxu0 0
  %725 = vmatpush1.bf16.msra.mxu0 0
  %726 = vmatprep.subr.bf16.mxu0 0
  %727 = vmatpush1.bf16.msra.mxu0 0
  %728 = vmatprep.subr.bf16.mxu0 0
  %729 = vmatpush1.bf16.msra.mxu0 0
  %730 = vmatprep.subr.bf16.mxu0 0
  %731 = vmatpush1.bf16.msra.mxu0 0
  %732 = vmatprep.subr.bf16.mxu0 0
  %733 = vmatpush1.bf16.msra.mxu0 0
  %734 = vmatprep.subr.bf16.mxu0 0
  %735 = vmatpush1.bf16.msra.mxu0 0
  %736 = vmatprep.subr.bf16.mxu0 0
  %737 = vmatpush1.bf16.msra.mxu0 0
  %738 = vmatprep.subr.bf16.mxu0 0
  %739 = vmatpush1.bf16.msra.mxu0 0
  %740 = vmatprep.subr.bf16.mxu0 0
  %741 = vmatpush1.bf16.msra.mxu0 0
  %742 = vmatprep.subr.bf16.mxu0 0
  %743 = vmatpush1.bf16.msra.mxu0 0
  %744 = vmatprep.subr.bf16.mxu0 0
  %745 = vmatpush1.bf16.msra.mxu0 0
  %746 = vmatprep.mubr.bf16.mxu0 0
  %747 = vmatmul.mubr.bf16.gmra.mrb[0].mxu0 %v518
  %v748 = vpop.f32.mrb[0].mxu0
  %v749 = vadd.f32 %v661, %v748
  %v750 = vpop.f32.mrb[0].mxu0
  %v751 = vpop.f32.mrb[0].mxu0
  %v752 = vadd.f32 %v664, %v751
  %v753 = vpop.f32.mrb[0].mxu0
  %754 = vmatprep.mubr.bf16.mxu0 0
  %755 = vmatmul.mubr.bf16.gmra.mrb[0].mxu0 %v521
  %v756 = vpop.f32.mrb[0].mxu0
  %v757 = vadd.f32 %v669, %v756
  %v758 = vpop.f32.mrb[0].mxu0
  %v759 = vpop.f32.mrb[0].mxu0
  %v760 = vadd.f32 %v672, %v759
  %v761 = vpop.f32.mrb[0].mxu0
  %762 = vmatprep.mubr.bf16.mxu0 0
  %763 = vmatmul.mubr.bf16.gmra.mrb[0].mxu0 %v524
  %v764 = vpop.f32.mrb[0].mxu0
  %v765 = vadd.f32 %v677, %v764
  %v766 = vpop.f32.mrb[0].mxu0
  %v767 = vpop.f32.mrb[0].mxu0
  %v768 = vadd.f32 %v680, %v767
  %v769 = vpop.f32.mrb[0].mxu0
  %770 = vmatprep.mubr.bf16.mxu0 0
  %771 = vmatmul.mubr.bf16.gmra.mrb[0].mxu0 %v527
  %v772 = vpop.f32.mrb[0].mxu0
  %v773 = vadd.f32 %v685, %v772
  %v774 = vpop.f32.mrb[0].mxu0
  %v775 = vpop.f32.mrb[0].mxu0
  %v776 = vadd.f32 %v688, %v775
  %v777 = vpop.f32.mrb[0].mxu0
  %778 = vmatprep.mubr.bf16.mxu0 0
  %779 = vmatmul.mubr.bf16.gmra.mrb[0].mxu0 %v530
  %v780 = vpop.f32.mrb[0].mxu0
  %v781 = vadd.f32 %v693, %v780
  %v782 = vpop.f32.mrb[0].mxu0
  %v783 = vpop.f32.mrb[0].mxu0
  %v784 = vadd.f32 %v696, %v783
  %v785 = vpop.f32.mrb[0].mxu0
  %786 = vmatprep.mubr.bf16.mxu0 0
  %787 = vmatmul.mubr.bf16.gmra.mrb[0].mxu0 %v533
  %v788 = vpop.f32.mrb[0].mxu0
  %v789 = vadd.f32 %v701, %v788
  %v790 = vpop.f32.mrb[0].mxu0
  %v791 = vpop.f32.mrb[0].mxu0
  %v792 = vadd.f32 %v704, %v791
  %v793 = vpop.f32.mrb[0].mxu0
  %794 = vmatprep.mubr.bf16.mxu0 0
  %795 = vmatmul.mubr.bf16.gmra.mrb[0].mxu0 %v536
  %v796 = vpop.f32.mrb[0].mxu0
  %v797 = vadd.f32 %v709, %v796
  %v798 = vpop.f32.mrb[0].mxu0
  %v799 = vpop.f32.mrb[0].mxu0
  %v800 = vpop.f32.mrb[0].mxu0
  %801 = vdwg.mxu0
  %vm802 = vcmask 785408
  %803 = vst.msk [vmem:[%s3] sm:$0xff] %vm802, %v749
  %804 = vst.msk [vmem:[%s3 + $0x8] sm:$0xff] %vm802, %v752
  %805 = vst.msk [vmem:[%s3 + $0x10] sm:$0xff] %vm802, %v757
  %806 = vst.msk [vmem:[%s3 + $0x18] sm:$0xff] %vm802, %v760
  %807 = vst.msk [vmem:[%s3 + $0x20] sm:$0xff] %vm802, %v765
  %808 = vst.msk [vmem:[%s3 + $0x28] sm:$0xff] %vm802, %v768
  %809 = vst.msk [vmem:[%s3 + $0x30] sm:$0xff] %vm802, %v773
  %810 = vst.msk [vmem:[%s3 + $0x38] sm:$0xff] %vm802, %v776
  %811 = vst.msk [vmem:[%s3 + $0x40] sm:$0xff] %vm802, %v781
  %812 = vst.msk [vmem:[%s3 + $0x48] sm:$0xff] %vm802, %v784
  %813 = vst.msk [vmem:[%s3 + $0x50] sm:$0xff] %vm802, %v789
  %814 = vst.msk [vmem:[%s3 + $0x58] sm:$0xff] %vm802, %v792
  %815 = vst.msk [vmem:[%s3 + $0x60] sm:$0xff] %vm802, %v797
  // Predicated region
  $region14: #{stem_forward.16} parent=0 // pred_check
    _
  $region15: #{stem_forward.16} parent=0 // pred_check_branch
    %817 = sbr.rel (0) target = $region17
  $region16: #{stem_forward.16} parent=0 // pred_region
    _
  $region17: #{stem_forward.16} parent=0 // pred_fallthru
    _
  // Predicated region
  $region18: #{stem_forward.16} parent=0 // pred_check
    _
  $region19: #{stem_forward.16} parent=0 // pred_check_branch
    %819 = sbr.rel (0) target = $region21
  $region20: #{stem_forward.16} parent=0 // pred_region
    _
  $region21: #{stem_forward.16} parent=0 // pred_fallthru
    _

// kernel: stem_forward.17
$region0: #{stem_forward.17}
  #allocation0 [shape = 'u32[]', space=smem, size = 0x4, offset = 0x4, fixed_abs, tag = 'smem constant byte address 0x4 - core index']
  #allocation1 [shape = 'u32[144,128]{1,0:T(1,128)}', space=vmem, size = 0x12000, scoped, tag = 'internal scratch']
  #allocation2 [shape = 'f32[104,64]{1,0:T(8,128)}', space=vmem, size = 0xd000, scoped, tag = 'scratch operand']
  %s0 = inlined_call_operand.vmem [shape: f32[9,104,64], index: 0, kind: input, shape index: {}]
  %s1 = inlined_call_operand.vmem [shape: f32[104,64], index: 1, kind: output, shape index: {}]
  %s2 = sld [smem:[#allocation0]]
  $region45: #{stem_forward.17} parent=0
    _
  %s4 = ssub.s32 1, %s2
  %s5 = scalar_select 0, %s4, %s2
  loop: start=0, step=1, limit=11
  $region2: #{stem_forward.17} parent=0 // loop_pre_header
    _
  $region3: #{stem_forward.17} parent=0 // loop_header
    %s7 = sphi 0, %s11
    %p8 = scmp.ge.s32.totalorder %s7, 11
    %s14 = sphi 0, %s26
    %s15 = sphi 0, %s22
    %s16 = sphi 0, %s14
    %s17 = sphi 0, %s15
    %s18 = sphi 0, %s16
    %s19 = sphi 0, %s17
    %s31 = sphi 0, %s33
    %s34 = sphi 0, %s31
    %s35 = sphi 0, %s34
    %s51 = sphi 0, %s35
    %s57 = sphi 0, %s59
    %s60 = sphi 0, %s57
    %s61 = sphi 0, %s60
    %s77 = sphi 0, %s61
  $region4: #{stem_forward.17} parent=0 // loop_header_branch
    %10 = sbr.rel (%p8) target = $region8
  $region5: #{stem_forward.17} parent=0 // loop_body
    %s12 = ssub.s32 %s7, 1
    %s13 = ssub.s32 %s7, 2
    %s20 = sadd.s32 1, %s15
    %p21 = scmp.ge.s32.totalorder %s20, 9
    %s22 = scalar_select %p21, 0, %s20
    %s23 = sadd.s32 1, %s14
    %s24 = scalar_select %p21, %s23, %s14
    %p25 = scmp.ge.s32.totalorder %s24, 1
    %s26 = scalar_select %p25, 0, %s24
    %s27 = ssub.s32 %s15, %s22
    %s28 = ssub.s32 %s14, %s26
    %s29 = sor.u32 %s27, %s28
    %p30 = scmp.eq.s32.totalorder %s29, 0
    %s32 = sadd.s32 %s31, 1
    %s33 = scalar_select %p30, %s31, %s32
    %p36 = pneg %p30
    %p37 = scmp.eq.s32.totalorder %s7, 8
    %p38 = por %p36, %p37
    %p39 = scmp.ne.s32.totalorder %s31, %s34
    %p40 = scmp.eq.s32.totalorder %s7, 0
    %p41 = por %p39, %p40
    %p42 = scmp.ne.s32.totalorder %s31, %s34
    %p43 = scmp.eq.s32.totalorder %s12, 8
    %p44 = por %p42, %p43
    %p45 = scmp.ne.s32.totalorder %s34, %s35
    %p46 = scmp.eq.s32.totalorder %s12, 0
    %p47 = por %p45, %p46
    %p48 = scmp.ne.s32.totalorder %s34, %s35
    %p49 = scmp.eq.s32.totalorder %s13, 8
    %p50 = por %p48, %p49
    %p52 = scmp.ne.s32.totalorder %s35, %s51
    %p53 = scmp.eq.s32.totalorder %s13, 0
    %p54 = por %p52, %p53
    %s55 = ssub.s32 %s14, %s26
    %p56 = scmp.eq.s32.totalorder %s55, 0
    %s58 = sadd.s32 %s57, 1
    %s59 = scalar_select %p56, %s57, %s58
    %p62 = pneg %p56
    %p63 = scmp.eq.s32.totalorder %s7, 8
    %p64 = por %p62, %p63
    %p65 = scmp.ne.s32.totalorder %s57, %s60
    %p66 = scmp.eq.s32.totalorder %s7, 0
    %p67 = por %p65, %p66
    %p68 = scmp.ne.s32.totalorder %s57, %s60
    %p69 = scmp.eq.s32.totalorder %s12, 8
    %p70 = por %p68, %p69
    %p71 = scmp.ne.s32.totalorder %s60, %s61
    %p72 = scmp.eq.s32.totalorder %s12, 0
    %p73 = por %p71, %p72
    %p74 = scmp.ne.s32.totalorder %s60, %s61
    %p75 = scmp.eq.s32.totalorder %s13, 8
    %p76 = por %p74, %p75
    %p78 = scmp.ne.s32.totalorder %s61, %s77
    %p79 = scmp.eq.s32.totalorder %s13, 0
    %p80 = por %p78, %p79
    %p81 = scmp.le.s32.totalorder 1, %s7
    %p82 = scmp.lt.s32.totalorder %s7, 10
    %p83 = pnand %p81, %p82
    %p84 = pneg %p83
    // Predicated region
    $region9: #{stem_forward.17} parent=5 // pred_check
      _
    $region10: #{stem_forward.17} parent=5 // pred_check_branch
      %86 = sbr.rel (%p83) target = $region12
    $region11: #{stem_forward.17} parent=5 // pred_region
      %s87 = ssub.s32 %s7, 1
    $region12: #{stem_forward.17} parent=5 // pred_fallthru
      _
    %p88 = scmp.lt.s32.totalorder %s7, 9
    // Predicated region
    $region13: #{stem_forward.17} parent=5 // pred_check
      %p89 = pneg %p88
    $region14: #{stem_forward.17} parent=5 // pred_check_branch
      %91 = sbr.rel (%p89) target = $region16
    $region15: #{stem_forward.17} parent=5 // pred_region
      // Predicated region
      $region17: #{stem_forward.17} parent=15 // pred_check
        %p92 = pneg %p41
      $region18: #{stem_forward.17} parent=15 // pred_check_branch
        %94 = sbr.rel (%p92) target = $region20
      $region19: #{stem_forward.17} parent=15 // pred_region
        %s95 = smul.u32 13, %s14
        %p96 = scmp.lt.s32.totalorder %s15, 8
        %s97 = scalar_select %p96, %s15, 8
        %p98 = scmp.lt.s32.totalorder %s95, 12
        %s99 = scalar_select %p98, %s95, 12
        %s100 = smul.addr %s97, 13
        %s101 = sadd.s32 %s99, %s100
        %s102 = smul.addr %s101, 8
        %s103 = scalar_lea.vmem %s0, %s102
        %s104 = smul.u32 13, %s14
      $region20: #{stem_forward.17} parent=15 // pred_fallthru
        _
    $region16: #{stem_forward.17} parent=5 // pred_fallthru
      _
    %p105 = scmp.le.s32.totalorder 1, %s7
    %p106 = scmp.lt.s32.totalorder %s7, 10
    %p107 = pnand %p105, %p106
    %p108 = pneg %p107
    // Predicated region
    $region21: #{stem_forward.17} parent=5 // pred_check
      _
    $region22: #{stem_forward.17} parent=5 // pred_check_branch
      %110 = sbr.rel (%p107) target = $region24
    $region23: #{stem_forward.17} parent=5 // pred_region
      %s111 = ssub.s32 %s7, 1
      %s112 = smul.u32 13, %s16
      %p113 = scmp.lt.s32.totalorder %s17, 8
      %s114 = scalar_select %p113, %s17, 8
      %p115 = scmp.lt.s32.totalorder %s112, 12
      %s116 = scalar_select %p115, %s112, 12
      %s117 = smul.addr %s114, 13
      %s118 = sadd.s32 %s116, %s117
      %s119 = smul.addr %s118, 8
      %s120 = scalar_lea.vmem %s0, %s119
      %p121 = pneg %p47
      %p122 = pneg %p44
      %p123 = pneg %p73
      %p124 = pneg %p70
      %s125 = smul.u32 13, %s16
      %p126 = scmp.lt.s32.totalorder %s125, 12
      %s127 = scalar_select %p126, %s125, 12
      %s128 = smul.addr %s127, 8
      %s129 = scalar_lea.vmem %s1, %s128
      %s130 = smul.u32 13, %s16
      %p131 = scmp.lt.s32.totalorder %s17, 8
      %s132 = scalar_select %p131, %s17, 8
      %p133 = scmp.lt.s32.totalorder %s130, 12
      %s134 = scalar_select %p133, %s130, 12
      %s135 = smul.addr %s132, 13
      %s136 = sadd.s32 %s134, %s135
      %s137 = smul.addr %s136, 8
      %s138 = scalar_lea.vmem %s0, %s137
      %s139 = smul.u32 13, %s16
      %s140 = smul.u32 13, %s16
      %p141 = scmp.lt.s32.totalorder %s140, 12
      %s142 = scalar_select %p141, %s140, 12
      %s143 = smul.addr %s142, 8
      %s144 = scalar_lea.vmem %s1, %s143
      %s145 = smul.u32 13, %s16
      %p146 = scmp.eq.s32.totalorder %s17, 0
      // Predicated region
      $region25: #{stem_forward.17} parent=23 // pred_check
        %p147 = pneg %p146
      $region26: #{stem_forward.17} parent=23 // pred_check_branch
        %149 = sbr.rel (%p147) target = $region28
      $region27: #{stem_forward.17} parent=23 // pred_region
        %vm150 = vcmask 523264
        %151 = vst.msk [vmem:[#allocation2] sm:$0xff] %vm150, -inf
        %152 = vst.msk [vmem:[#allocation2 + $0x8] sm:$0xff] %vm150, -inf
        %153 = vst.msk [vmem:[#allocation2 + $0x10] sm:$0xff] %vm150, -inf
        %154 = vst.msk [vmem:[#allocation2 + $0x18] sm:$0xff] %vm150, -inf
        %155 = vst.msk [vmem:[#allocation2 + $0x20] sm:$0xff] %vm150, -inf
        %156 = vst.msk [vmem:[#allocation2 + $0x28] sm:$0xff] %vm150, -inf
        %157 = vst.msk [vmem:[#allocation2 + $0x30] sm:$0xff] %vm150, -inf
        %158 = vst.msk [vmem:[#allocation2 + $0x38] sm:$0xff] %vm150, -inf
        %159 = vst.msk [vmem:[#allocation2 + $0x40] sm:$0xff] %vm150, -inf
        %160 = vst.msk [vmem:[#allocation2 + $0x48] sm:$0xff] %vm150, -inf
        %161 = vst.msk [vmem:[#allocation2 + $0x50] sm:$0xff] %vm150, -inf
        %162 = vst.msk [vmem:[#allocation2 + $0x58] sm:$0xff] %vm150, -inf
        %163 = vst.msk [vmem:[#allocation2 + $0x60] sm:$0xff] %vm150, -inf
      $region28: #{stem_forward.17} parent=23 // pred_fallthru
        _
      %v164 = vld [vmem:[#allocation2] sm:$0xff]
      %v165 = vld [vmem:[#allocation2 + $0x8] sm:$0xff]
      %v166 = vld [vmem:[#allocation2 + $0x10] sm:$0xff]
      %v167 = vld [vmem:[#allocation2 + $0x18] sm:$0xff]
      %v168 = vld [vmem:[#allocation2 + $0x20] sm:$0xff]
      %v169 = vld [vmem:[#allocation2 + $0x28] sm:$0xff]
      %v170 = vld [vmem:[#allocation2 + $0x30] sm:$0xff]
      %v171 = vld [vmem:[#allocation2 + $0x38] sm:$0xff]
      %v172 = vld [vmem:[#allocation2 + $0x40] sm:$0xff]
      %v173 = vld [vmem:[#allocation2 + $0x48] sm:$0xff]
      %v174 = vld [vmem:[#allocation2 + $0x50] sm:$0xff]
      %v175 = vld [vmem:[#allocation2 + $0x58] sm:$0xff]
      %v176 = vld [vmem:[#allocation2 + $0x60] sm:$0xff]
      %v177 = vld [vmem:[%s138] sm:$0xff]
      %v178 = vld [vmem:[%s138 + $0x8] sm:$0xff]
      %v179 = vld [vmem:[%s138 + $0x10] sm:$0xff]
      %v180 = vld [vmem:[%s138 + $0x18] sm:$0xff]
      %v181 = vld [vmem:[%s138 + $0x20] sm:$0xff]
      %v182 = vld [vmem:[%s138 + $0x28] sm:$0xff]
      %v183 = vld [vmem:[%s138 + $0x30] sm:$0xff]
      %v184 = vld [vmem:[%s138 + $0x38] sm:$0xff]
      %v185 = vld [vmem:[%s138 + $0x40] sm:$0xff]
      %v186 = vld [vmem:[%s138 + $0x48] sm:$0xff]
      %v187 = vld [vmem:[%s138 + $0x50] sm:$0xff]
      %v188 = vld [vmem:[%s138 + $0x58] sm:$0xff]
      %v189 = vld [vmem:[%s138 + $0x60] sm:$0xff]
      %v190 = vmax.f32 %v164, %v177
      %v191 = vmax.f32 %v165, %v178
      %v192 = vmax.f32 %v166, %v179
      %v193 = vmax.f32 %v167, %v180
      %v194 = vmax.f32 %v168, %v181
      %v195 = vmax.f32 %v169, %v182
      %v196 = vmax.f32 %v170, %v183
      %v197 = vmax.f32 %v171, %v184
      %v198 = vmax.f32 %v172, %v185
      %v199 = vmax.f32 %v173, %v186
      %v200 = vmax.f32 %v174, %v187
      %v201 = vmax.f32 %v175, %v188
      %v202 = vmax.f32 %v176, %v189
      %vm203 = vcmask 523264
      %204 = vst.msk [vmem:[#allocation2] sm:$0xff] %vm203, %v190
      %205 = vst.msk [vmem:[#allocation2 + $0x8] sm:$0xff] %vm203, %v191
      %206 = vst.msk [vmem:[#allocation2 + $0x10] sm:$0xff] %vm203, %v192
      %207 = vst.msk [vmem:[#allocation2 + $0x18] sm:$0xff] %vm203, %v193
      %208 = vst.msk [vmem:[#allocation2 + $0x20] sm:$0xff] %vm203, %v194
      %209 = vst.msk [vmem:[#allocation2 + $0x28] sm:$0xff] %vm203, %v195
      %210 = vst.msk [vmem:[#allocation2 + $0x30] sm:$0xff] %vm203, %v196
      %211 = vst.msk [vmem:[#allocation2 + $0x38] sm:$0xff] %vm203, %v197
      %212 = vst.msk [vmem:[#allocation2 + $0x40] sm:$0xff] %vm203, %v198
      %213 = vst.msk [vmem:[#allocation2 + $0x48] sm:$0xff] %vm203, %v199
      %214 = vst.msk [vmem:[#allocation2 + $0x50] sm:$0xff] %vm203, %v200
      %215 = vst.msk [vmem:[#allocation2 + $0x58] sm:$0xff] %vm203, %v201
      %216 = vst.msk [vmem:[#allocation2 + $0x60] sm:$0xff] %vm203, %v202
      %p217 = scmp.eq.s32.totalorder %s17, 8
      // Predicated region
      $region29: #{stem_forward.17} parent=23 // pred_check
        %p218 = pneg %p217
      $region30: #{stem_forward.17} parent=23 // pred_check_branch
        %220 = sbr.rel (%p218) target = $region32
      $region31: #{stem_forward.17} parent=23 // pred_region
        %v221 = vld [vmem:[#allocation2] sm:$0xff]
        %v222 = vld [vmem:[#allocation2 + $0x8] sm:$0xff]
        %v223 = vld [vmem:[#allocation2 + $0x10] sm:$0xff]
        %v224 = vld [vmem:[#allocation2 + $0x18] sm:$0xff]
        %v225 = vld [vmem:[#allocation2 + $0x20] sm:$0xff]
        %v226 = vld [vmem:[#allocation2 + $0x28] sm:$0xff]
        %v227 = vld [vmem:[#allocation2 + $0x30] sm:$0xff]
        %v228 = vld [vmem:[#allocation2 + $0x38] sm:$0xff]
        %v229 = vld [vmem:[#allocation2 + $0x40] sm:$0xff]
        %v230 = vld [vmem:[#allocation2 + $0x48] sm:$0xff]
        %v231 = vld [vmem:[#allocation2 + $0x50] sm:$0xff]
        %v232 = vld [vmem:[#allocation2 + $0x58] sm:$0xff]
        %v233 = vld [vmem:[#allocation2 + $0x60] sm:$0xff]
        %234 = vst.msk [vmem:[%s144] sm:$0xff] %vm203, %v221
        %235 = vst.msk [vmem:[%s144 + $0x8] sm:$0xff] %vm203, %v222
        %236 = vst.msk [vmem:[%s144 + $0x10] sm:$0xff] %vm203, %v223
        %237 = vst.msk [vmem:[%s144 + $0x18] sm:$0xff] %vm203, %v224
        %238 = vst.msk [vmem:[%s144 + $0x20] sm:$0xff] %vm203, %v225
        %239 = vst.msk [vmem:[%s144 + $0x28] sm:$0xff] %vm203, %v226
        %240 = vst.msk [vmem:[%s144 + $0x30] sm:$0xff] %vm203, %v227
        %241 = vst.msk [vmem:[%s144 + $0x38] sm:$0xff] %vm203, %v228
        %242 = vst.msk [vmem:[%s144 + $0x40] sm:$0xff] %vm203, %v229
        %243 = vst.msk [vmem:[%s144 + $0x48] sm:$0xff] %vm203, %v230
        %244 = vst.msk [vmem:[%s144 + $0x50] sm:$0xff] %vm203, %v231
        %245 = vst.msk [vmem:[%s144 + $0x58] sm:$0xff] %vm203, %v232
        %246 = vst.msk [vmem:[%s144 + $0x60] sm:$0xff] %vm203, %v233
      $region32: #{stem_forward.17} parent=23 // pred_fallthru
        _
      %s247 = smul.u32 13, %s16
      %p248 = scmp.lt.s32.totalorder %s247, 12
      %s249 = scalar_select %p248, %s247, 12
      %s250 = smul.addr %s249, 8
      %s251 = scalar_lea.vmem %s1, %s250
      // Predicated region
      $region33: #{stem_forward.17} parent=23 // pred_check
        %p252 = pneg %p70
      $region34: #{stem_forward.17} parent=23 // pred_check_branch
        %254 = sbr.rel (%p252) target = $region36
      $region35: #{stem_forward.17} parent=23 // pred_region
        %s255 = smul.u32 13, %s16
      $region36: #{stem_forward.17} parent=23 // pred_fallthru
        _
      // Predicated region
      $region37: #{stem_forward.17} parent=23 // pred_check
        %p256 = pneg %p70
      $region38: #{stem_forward.17} parent=23 // pred_check_branch
        %258 = sbr.rel (%p256) target = $region40
      $region39: #{stem_forward.17} parent=23 // pred_region
        %s259 = smul.u32 13, %s16
        %p260 = scmp.lt.s32.totalorder %s259, 12
        %s261 = scalar_select %p260, %s259, 12
        %s262 = smul.addr %s261, 8
        %s263 = scalar_lea.vmem %s1, %s262
      $region40: #{stem_forward.17} parent=23 // pred_fallthru
        _
    $region24: #{stem_forward.17} parent=5 // pred_fallthru
      _
    %p264 = scmp.le.s32.totalorder 2, %s7
    // Predicated region
    $region41: #{stem_forward.17} parent=5 // pred_check
      %p265 = pneg %p264
    $region42: #{stem_forward.17} parent=5 // pred_check_branch
      %267 = sbr.rel (%p265) target = $region44
    $region43: #{stem_forward.17} parent=5 // pred_region
      %s268 = ssub.s32 %s7, 2
    $region44: #{stem_forward.17} parent=5 // pred_fallthru
      _
  $region6: #{stem_forward.17} parent=0 // loop_footer
    %s11 = sadd.s32 1, %s7
  $region7: #{stem_forward.17} parent=0 // loop_footer_branch
    %6 = sbr.rel target = $region3
  $region8: #{stem_forward.17} parent=0 // loop_exit
    _

// kernel: stem_forward.18
$region0: #{stem_forward.18}
  #allocation0 [shape = 'u32[]', space=smem, size = 0x4, offset = 0x4, fixed_abs, tag = 'smem constant byte address 0x4 - core index']
  #allocation1 [shape = 'u32[144,128]{1,0:T(1,128)}', space=vmem, size = 0x12000, scoped, tag = 'internal scratch']
  %s0 = inlined_call_operand.vmem [shape: bf16[104,160], index: 0, kind: input, shape index: {}]
  %s1 = inlined_call_operand.vmem [shape: bf16[160,64], index: 1, kind: input, shape index: {}]
  %s2 = inlined_call_operand.vmem [shape: f32[1,64], index: 2, kind: input, shape index: {}]
  %s3 = inlined_call_operand.vmem [shape: f32[104,64], index: 3, kind: output, shape index: {}]
  %s4 = sld [smem:[#allocation0]]
  $region22: #{stem_forward.18} parent=0
    _
  %s6 = ssub.s32 1, %s4
  %s7 = scalar_select 0, %s6, %s4
  // Predicated region
  $region2: #{stem_forward.18} parent=0 // pred_check
    _
  $region3: #{stem_forward.18} parent=0 // pred_check_branch
    %9 = sbr.rel (0) target = $region5
  $region4: #{stem_forward.18} parent=0 // pred_region
    _
  $region5: #{stem_forward.18} parent=0 // pred_fallthru
    _
  // Predicated region
  $region6: #{stem_forward.18} parent=0 // pred_check
    _
  $region7: #{stem_forward.18} parent=0 // pred_check_branch
    %11 = sbr.rel (0) target = $region9
  $region8: #{stem_forward.18} parent=0 // pred_region
    _
  $region9: #{stem_forward.18} parent=0 // pred_fallthru
    _
  // Predicated region
  $region10: #{stem_forward.18} parent=0 // pred_check
    _
  $region11: #{stem_forward.18} parent=0 // pred_check_branch
    %13 = sbr.rel (0) target = $region13
  $region12: #{stem_forward.18} parent=0 // pred_region
    _
  $region13: #{stem_forward.18} parent=0 // pred_fallthru
    _
  %v15 = vld [vmem:[%s0] sm:$0xff]
  %v16 = vld [vmem:[%s0 + $0x8] sm:$0xff]
  %v17 = vld [vmem:[%s0 + $0x10] sm:$0xff]
  %v18 = vld [vmem:[%s0 + $0x18] sm:$0xff]
  %v19 = vld [vmem:[%s0 + $0x20] sm:$0xff]
  %v20 = vld [vmem:[%s0 + $0x28] sm:$0xff]
  %v21 = vld [vmem:[%s0 + $0x30] sm:$0xff]
  %v22 = vld [vmem:[%s0 + $0x38] sm:$0xff]
  %v23 = vld [vmem:[%s0 + $0x40] sm:$0xff]
  %v24 = vld [vmem:[%s0 + $0x48] sm:$0xff]
  %v25 = vld [vmem:[%s0 + $0x50] sm:$0xff]
  %v26 = vld [vmem:[%s0 + $0x58] sm:$0xff]
  %v27 = vld [vmem:[%s0 + $0x60] sm:$0xff]
  %v28 = vld [vmem:[%s1] sm:$0xf]
  %v29 = vld [vmem:[%s1 + $0x4] sm:$0xf]
  %v30 = vld [vmem:[%s1 + $0x8] sm:$0xf]
  %v31 = vld [vmem:[%s1 + $0xc] sm:$0xf]
  %v32 = vld [vmem:[%s1 + $0x10] sm:$0xf]
  %v33 = vld [vmem:[%s1 + $0x14] sm:$0xf]
  %v34 = vld [vmem:[%s1 + $0x18] sm:$0xf]
  %v35 = vld [vmem:[%s1 + $0x1c] sm:$0xf]
  %v36 = vld [vmem:[%s1 + $0x20] sm:$0xf]
  %v37 = vld [vmem:[%s1 + $0x24] sm:$0xf]
  %v38 = vld [vmem:[%s1 + $0x28] sm:$0xf]
  %v39 = vld [vmem:[%s1 + $0x2c] sm:$0xf]
  %v40 = vld [vmem:[%s1 + $0x30] sm:$0xf]
  %v41 = vld [vmem:[%s1 + $0x34] sm:$0xf]
  %v42 = vld [vmem:[%s1 + $0x38] sm:$0xf]
  %v43 = vld [vmem:[%s1 + $0x3c] sm:$0xf]
  %v44 = vld [vmem:[%s1 + $0x40] sm:$0xf]
  %v45 = vld [vmem:[%s1 + $0x44] sm:$0xf]
  %v46 = vld [vmem:[%s1 + $0x48] sm:$0xf]
  %v47 = vld [vmem:[%s1 + $0x4c] sm:$0xf]
  %v48 = vld [vmem:[%s2] sm:$0x1]
  %v50 = vlaneseq
  %v51 = vshrl.u32 %v50, 7
  %v52 = vsub.s32 0, %v51
  %v53 = vrot.slane %v48, %v52
  %v68 = vunpack.c.l.b16 %v15
  %v69 = vunpack.c.h.b16 %v15
  %v70 = vunpack.c.l.b16 %v16
  %v71 = vunpack.c.h.b16 %v16
  %v72 = vunpack.c.l.b16 %v17
  %v73 = vunpack.c.h.b16 %v17
  %v74 = vunpack.c.l.b16 %v18
  %v75 = vunpack.c.h.b16 %v18
  %v76 = vunpack.c.l.b16 %v19
  %v77 = vunpack.c.h.b16 %v19
  %v78 = vunpack.c.l.b16 %v20
  %v79 = vunpack.c.h.b16 %v20
  %v80 = vunpack.c.l.b16 %v21
  %v81 = vunpack.c.h.b16 %v21
  %v82 = vunpack.c.l.b16 %v22
  %v83 = vunpack.c.h.b16 %v22
  %v84 = vunpack.c.l.b16 %v23
  %v85 = vunpack.c.h.b16 %v23
  %v86 = vunpack.c.l.b16 %v24
  %v87 = vunpack.c.h.b16 %v24
  %v88 = vunpack.c.l.b16 %v25
  %v89 = vunpack.c.h.b16 %v25
  %v90 = vunpack.c.l.b16 %v26
  %v91 = vunpack.c.h.b16 %v26
  %v92 = vunpack.c.l.b16 %v27
  %v93 = vunpack.c.h.b16 %v27
  %v94 = vpack.c.b16 %v70, %v68
  %v95 = vpack.c.b16 %v71, %v69
  %v96 = vpack.c.b16 %v74, %v72
  %v97 = vpack.c.b16 %v75, %v73
  %v98 = vpack.c.b16 %v78, %v76
  %v99 = vpack.c.b16 %v79, %v77
  %v100 = vpack.c.b16 %v82, %v80
  %v101 = vpack.c.b16 %v83, %v81
  %v102 = vpack.c.b16 %v86, %v84
  %v103 = vpack.c.b16 %v87, %v85
  %v104 = vpack.c.b16 %v90, %v88
  %v105 = vpack.c.b16 %v91, %v89
  %v106 = vpack.c.b16 %v92, %v92
  %v107 = vpack.c.b16 %v93, %v93
  %v135 = vunpack.c.l.b16 %v28
  %v136 = vunpack.c.l.b16 %v29
  %v137 = vunpack.c.l.b16 %v30
  %v138 = vunpack.c.l.b16 %v31
  %v139 = vunpack.c.l.b16 %v32
  %v140 = vunpack.c.l.b16 %v33
  %v141 = vunpack.c.l.b16 %v34
  %v142 = vunpack.c.l.b16 %v35
  %v143 = vunpack.c.l.b16 %v36
  %v144 = vunpack.c.l.b16 %v37
  %v145 = vunpack.c.l.b16 %v38
  %v146 = vunpack.c.l.b16 %v39
  %v147 = vunpack.c.l.b16 %v40
  %v148 = vunpack.c.l.b16 %v41
  %v149 = vunpack.c.l.b16 %v42
  %v150 = vunpack.c.l.b16 %v43
  %v151 = vunpack.c.l.b16 %v44
  %v152 = vunpack.c.l.b16 %v45
  %v153 = vunpack.c.l.b16 %v46
  %v154 = vunpack.c.l.b16 %v47
  %v155 = vpack.c.b16 %v136, %v135
  %v156 = vpack.c.b16 %v138, %v137
  %v157 = vpack.c.b16 %v140, %v139
  %v158 = vpack.c.b16 %v142, %v141
  %v159 = vpack.c.b16 %v144, %v143
  %v160 = vpack.c.b16 %v146, %v145
  %v161 = vpack.c.b16 %v148, %v147
  %v162 = vpack.c.b16 %v150, %v149
  %v163 = vpack.c.b16 %v152, %v151
  %v164 = vpack.c.b16 %v154, %v153
  %vm175 = vcmask 261120
  %v177 = vsel %vm175, %v95, 0
  %v180 = vsel %vm175, %v97, 0
  %v183 = vsel %vm175, %v99, 0
  %v186 = vsel %vm175, %v101, 0
  %v189 = vsel %vm175, %v103, 0
  %v192 = vsel %vm175, %v105, 0
  %v195 = vsel %vm175, %v107, 0
  %197 = vmatprep.subr.bf16.mxu0 0
  %198 = vmatpush1.bf16.msra.mxu0 %v155
  %199 = vmatprep.subr.bf16.mxu0 0
  %200 = vmatpush1.bf16.msra.mxu0 %v156
  %201 = vmatprep.subr.bf16.mxu0 0
  %202 = vmatpush1.bf16.msra.mxu0 %v157
  %203 = vmatprep.subr.bf16.mxu0 0
  %204 = vmatpush1.bf16.msra.mxu0 %v158
  %205 = vmatprep.subr.bf16.mxu0 0
  %206 = vmatpush1.bf16.msra.mxu0 %v159
  %207 = vmatprep.subr.bf16.mxu0 0
  %208 = vmatpush1.bf16.msra.mxu0 %v160
  %209 = vmatprep.subr.bf16.mxu0 0
  %210 = vmatpush1.bf16.msra.mxu0 %v161
  %211 = vmatprep.subr.bf16.mxu0 0
  %212 = vmatpush1.bf16.msra.mxu0 %v162
  %213 = vmatprep.subr.bf16.mxu0 0
  %214 = vmatpush1.bf16.msra.mxu0 %v163
  %215 = vmatprep.subr.bf16.mxu0 0
  %216 = vmatpush1.bf16.msra.mxu0 %v164
  %217 = vmatprep.subr.bf16.mxu0 0
  %218 = vmatpush1.bf16.msra.mxu0 0
  %219 = vmatprep.subr.bf16.mxu0 0
  %220 = vmatpush1.bf16.msra.mxu0 0
  %221 = vmatprep.subr.bf16.mxu0 0
  %222 = vmatpush1.bf16.msra.mxu0 0
  %223 = vmatprep.subr.bf16.mxu0 0
  %224 = vmatpush1.bf16.msra.mxu0 0
  %225 = vmatprep.subr.bf16.mxu0 0
  %226 = vmatpush1.bf16.msra.mxu0 0
  %227 = vmatprep.subr.bf16.mxu0 0
  %228 = vmatpush1.bf16.msra.mxu0 0
  %229 = vmatprep.mubr.bf16.mxu0 %v177
  %230 = vmatmul.mubr.bf16.gmra.mrb[0].mxu0 %v94
  %v231 = vpop.f32.mrb[0].mxu0
  %v232 = vadd.f32 %v53, %v231
  %v233 = vpop.f32.mrb[0].mxu0
  %v234 = vpop.f32.mrb[0].mxu0
  %v235 = vadd.f32 %v53, %v234
  %v236 = vpop.f32.mrb[0].mxu0
  %237 = vmatprep.mubr.bf16.mxu0 %v180
  %238 = vmatmul.mubr.bf16.gmra.mrb[0].mxu0 %v96
  %v239 = vpop.f32.mrb[0].mxu0
  %v240 = vadd.f32 %v53, %v239
  %v241 = vpop.f32.mrb[0].mxu0
  %v242 = vpop.f32.mrb[0].mxu0
  %v243 = vadd.f32 %v53, %v242
  %v244 = vpop.f32.mrb[0].mxu0
  %245 = vmatprep.mubr.bf16.mxu0 %v183
  %246 = vmatmul.mubr.bf16.gmra.mrb[0].mxu0 %v98
  %v247 = vpop.f32.mrb[0].mxu0
  %v248 = vadd.f32 %v53, %v247
  %v249 = vpop.f32.mrb[0].mxu0
  %v250 = vpop.f32.mrb[0].mxu0
  %v251 = vadd.f32 %v53, %v250
  %v252 = vpop.f32.mrb[0].mxu0
  %253 = vmatprep.mubr.bf16.mxu0 %v186
  %254 = vmatmul.mubr.bf16.gmra.mrb[0].mxu0 %v100
  %v255 = vpop.f32.mrb[0].mxu0
  %v256 = vadd.f32 %v53, %v255
  %v257 = vpop.f32.mrb[0].mxu0
  %v258 = vpop.f32.mrb[0].mxu0
  %v259 = vadd.f32 %v53, %v258
  %v260 = vpop.f32.mrb[0].mxu0
  %261 = vmatprep.mubr.bf16.mxu0 %v189
  %262 = vmatmul.mubr.bf16.gmra.mrb[0].mxu0 %v102
  %v263 = vpop.f32.mrb[0].mxu0
  %v264 = vadd.f32 %v53, %v263
  %v265 = vpop.f32.mrb[0].mxu0
  %v266 = vpop.f32.mrb[0].mxu0
  %v267 = vadd.f32 %v53, %v266
  %v268 = vpop.f32.mrb[0].mxu0
  %269 = vmatprep.mubr.bf16.mxu0 %v192
  %270 = vmatmul.mubr.bf16.gmra.mrb[0].mxu0 %v104
  %v271 = vpop.f32.mrb[0].mxu0
  %v272 = vadd.f32 %v53, %v271
  %v273 = vpop.f32.mrb[0].mxu0
  %v274 = vpop.f32.mrb[0].mxu0
  %v275 = vadd.f32 %v53, %v274
  %v276 = vpop.f32.mrb[0].mxu0
  %277 = vmatprep.mubr.bf16.mxu0 %v195
  %278 = vmatmul.mubr.bf16.gmra.mrb[0].mxu0 %v106
  %v279 = vpop.f32.mrb[0].mxu0
  %v280 = vadd.f32 %v53, %v279
  %v281 = vpop.f32.mrb[0].mxu0
  %v282 = vpop.f32.mrb[0].mxu0
  %v283 = vpop.f32.mrb[0].mxu0
  %284 = vdwg.mxu0
  %vm285 = vcmask 523264
  %286 = vst.msk [vmem:[%s3] sm:$0xff] %vm285, %v232
  %287 = vst.msk [vmem:[%s3 + $0x8] sm:$0xff] %vm285, %v235
  %288 = vst.msk [vmem:[%s3 + $0x10] sm:$0xff] %vm285, %v240
  %289 = vst.msk [vmem:[%s3 + $0x18] sm:$0xff] %vm285, %v243
  %290 = vst.msk [vmem:[%s3 + $0x20] sm:$0xff] %vm285, %v248
  %291 = vst.msk [vmem:[%s3 + $0x28] sm:$0xff] %vm285, %v251
  %292 = vst.msk [vmem:[%s3 + $0x30] sm:$0xff] %vm285, %v256
  %293 = vst.msk [vmem:[%s3 + $0x38] sm:$0xff] %vm285, %v259
  %294 = vst.msk [vmem:[%s3 + $0x40] sm:$0xff] %vm285, %v264
  %295 = vst.msk [vmem:[%s3 + $0x48] sm:$0xff] %vm285, %v267
  %296 = vst.msk [vmem:[%s3 + $0x50] sm:$0xff] %vm285, %v272
  %297 = vst.msk [vmem:[%s3 + $0x58] sm:$0xff] %vm285, %v275
  %298 = vst.msk [vmem:[%s3 + $0x60] sm:$0xff] %vm285, %v280
  // Predicated region
  $region14: #{stem_forward.18} parent=0 // pred_check
    _
  $region15: #{stem_forward.18} parent=0 // pred_check_branch
    %300 = sbr.rel (0) target = $region17
  $region16: #{stem_forward.18} parent=0 // pred_region
    _
  $region17: #{stem_forward.18} parent=0 // pred_fallthru
    _
  // Predicated region
  $region18: #{stem_forward.18} parent=0 // pred_check
    _
  $region19: #{stem_forward.18} parent=0 // pred_check_branch
    %302 = sbr.rel (0) target = $region21
  $region20: #{stem_forward.18} parent=0 // pred_region
    _
  $region21: #{stem_forward.18} parent=0 // pred_fallthru
    _

// kernel: stem_forward.19
$region0: #{stem_forward.19}
  #allocation0 [shape = 'u32[]', space=smem, size = 0x4, offset = 0x4, fixed_abs, tag = 'smem constant byte address 0x4 - core index']
  #allocation1 [shape = 'u32[144,128]{1,0:T(1,128)}', space=vmem, size = 0x12000, scoped, tag = 'internal scratch']
  %s0 = inlined_call_operand.vmem [shape: bf16[104,448], index: 0, kind: input, shape index: {}]
  %s1 = inlined_call_operand.vmem [shape: bf16[448,64], index: 1, kind: input, shape index: {}]
  %s2 = inlined_call_operand.vmem [shape: f32[1,64], index: 2, kind: input, shape index: {}]
  %s3 = inlined_call_operand.vmem [shape: f32[104,64], index: 3, kind: output, shape index: {}]
  %s4 = sld [smem:[#allocation0]]
  $region22: #{stem_forward.19} parent=0
    _
  %s6 = ssub.s32 1, %s4
  %s7 = scalar_select 0, %s6, %s4
  // Predicated region
  $region2: #{stem_forward.19} parent=0 // pred_check
    _
  $region3: #{stem_forward.19} parent=0 // pred_check_branch
    %9 = sbr.rel (0) target = $region5
  $region4: #{stem_forward.19} parent=0 // pred_region
    _
  $region5: #{stem_forward.19} parent=0 // pred_fallthru
    _
  // Predicated region
  $region6: #{stem_forward.19} parent=0 // pred_check
    _
  $region7: #{stem_forward.19} parent=0 // pred_check_branch
    %11 = sbr.rel (0) target = $region9
  $region8: #{stem_forward.19} parent=0 // pred_region
    _
  $region9: #{stem_forward.19} parent=0 // pred_fallthru
    _
  // Predicated region
  $region10: #{stem_forward.19} parent=0 // pred_check
    _
  $region11: #{stem_forward.19} parent=0 // pred_check_branch
    %13 = sbr.rel (0) target = $region13
  $region12: #{stem_forward.19} parent=0 // pred_region
    _
  $region13: #{stem_forward.19} parent=0 // pred_fallthru
    _
  %v15 = vld [vmem:[%s0] sm:$0xff]
  %v16 = vld [vmem:[%s0 + $0x8] sm:$0xff]
  %v17 = vld [vmem:[%s0 + $0x10] sm:$0xff]
  %v18 = vld [vmem:[%s0 + $0x18] sm:$0xff]
  %v19 = vld [vmem:[%s0 + $0x20] sm:$0xff]
  %v20 = vld [vmem:[%s0 + $0x28] sm:$0xff]
  %v21 = vld [vmem:[%s0 + $0x30] sm:$0xff]
  %v22 = vld [vmem:[%s0 + $0x38] sm:$0xff]
  %v23 = vld [vmem:[%s0 + $0x40] sm:$0xff]
  %v24 = vld [vmem:[%s0 + $0x48] sm:$0xff]
  %v25 = vld [vmem:[%s0 + $0x50] sm:$0xff]
  %v26 = vld [vmem:[%s0 + $0x58] sm:$0xff]
  %v27 = vld [vmem:[%s0 + $0x60] sm:$0xff]
  %v28 = vld [vmem:[%s0 + $0x68] sm:$0xff]
  %v29 = vld [vmem:[%s0 + $0x70] sm:$0xff]
  %v30 = vld [vmem:[%s0 + $0x78] sm:$0xff]
  %v31 = vld [vmem:[%s0 + $0x80] sm:$0xff]
  %v32 = vld [vmem:[%s0 + $0x88] sm:$0xff]
  %v33 = vld [vmem:[%s0 + $0x90] sm:$0xff]
  %v34 = vld [vmem:[%s0 + $0x98] sm:$0xff]
  %v35 = vld [vmem:[%s0 + $0xa0] sm:$0xff]
  %v36 = vld [vmem:[%s0 + $0xa8] sm:$0xff]
  %v37 = vld [vmem:[%s0 + $0xb0] sm:$0xff]
  %v38 = vld [vmem:[%s0 + $0xb8] sm:$0xff]
  %v39 = vld [vmem:[%s0 + $0xc0] sm:$0xff]
  %v40 = vld [vmem:[%s0 + $0xc8] sm:$0xff]
  %v41 = vld [vmem:[%s1] sm:$0xf]
  %v42 = vld [vmem:[%s1 + $0x4] sm:$0xf]
  %v43 = vld [vmem:[%s1 + $0x8] sm:$0xf]
  %v44 = vld [vmem:[%s1 + $0xc] sm:$0xf]
  %v45 = vld [vmem:[%s1 + $0x10] sm:$0xf]
  %v46 = vld [vmem:[%s1 + $0x14] sm:$0xf]
  %v47 = vld [vmem:[%s1 + $0x18] sm:$0xf]
  %v48 = vld [vmem:[%s1 + $0x1c] sm:$0xf]
  %v49 = vld [vmem:[%s1 + $0x20] sm:$0xf]
  %v50 = vld [vmem:[%s1 + $0x24] sm:$0xf]
  %v51 = vld [vmem:[%s1 + $0x28] sm:$0xf]
  %v52 = vld [vmem:[%s1 + $0x2c] sm:$0xf]
  %v53 = vld [vmem:[%s1 + $0x30] sm:$0xf]
  %v54 = vld [vmem:[%s1 + $0x34] sm:$0xf]
  %v55 = vld [vmem:[%s1 + $0x38] sm:$0xf]
  %v56 = vld [vmem:[%s1 + $0x3c] sm:$0xf]
  %v57 = vld [vmem:[%s1 + $0x40] sm:$0xf]
  %v58 = vld [vmem:[%s1 + $0x44] sm:$0xf]
  %v59 = vld [vmem:[%s1 + $0x48] sm:$0xf]
  %v60 = vld [vmem:[%s1 + $0x4c] sm:$0xf]
  %v61 = vld [vmem:[%s1 + $0x50] sm:$0xf]
  %v62 = vld [vmem:[%s1 + $0x54] sm:$0xf]
  %v63 = vld [vmem:[%s1 + $0x58] sm:$0xf]
  %v64 = vld [vmem:[%s1 + $0x5c] sm:$0xf]
  %v65 = vld [vmem:[%s1 + $0x60] sm:$0xf]
  %v66 = vld [vmem:[%s1 + $0x64] sm:$0xf]
  %v67 = vld [vmem:[%s1 + $0x68] sm:$0xf]
  %v68 = vld [vmem:[%s1 + $0x6c] sm:$0xf]
  %v69 = vld [vmem:[%s1 + $0x70] sm:$0xf]
  %v70 = vld [vmem:[%s1 + $0x74] sm:$0xf]
  %v71 = vld [vmem:[%s1 + $0x78] sm:$0xf]
  %v72 = vld [vmem:[%s1 + $0x7c] sm:$0xf]
  %v73 = vld [vmem:[%s1 + $0x80] sm:$0xf]
  %v74 = vld [vmem:[%s1 + $0x84] sm:$0xf]
  %v75 = vld [vmem:[%s1 + $0x88] sm:$0xf]
  %v76 = vld [vmem:[%s1 + $0x8c] sm:$0xf]
  %v77 = vld [vmem:[%s1 + $0x90] sm:$0xf]
  %v78 = vld [vmem:[%s1 + $0x94] sm:$0xf]
  %v79 = vld [vmem:[%s1 + $0x98] sm:$0xf]
  %v80 = vld [vmem:[%s1 + $0x9c] sm:$0xf]
  %v81 = vld [vmem:[%s1 + $0xa0] sm:$0xf]
  %v82 = vld [vmem:[%s1 + $0xa4] sm:$0xf]
  %v83 = vld [vmem:[%s1 + $0xa8] sm:$0xf]
  %v84 = vld [vmem:[%s1 + $0xac] sm:$0xf]
  %v85 = vld [vmem:[%s1 + $0xb0] sm:$0xf]
  %v86 = vld [vmem:[%s1 + $0xb4] sm:$0xf]
  %v87 = vld [vmem:[%s1 + $0xb8] sm:$0xf]
  %v88 = vld [vmem:[%s1 + $0xbc] sm:$0xf]
  %v89 = vld [vmem:[%s1 + $0xc0] sm:$0xf]
  %v90 = vld [vmem:[%s1 + $0xc4] sm:$0xf]
  %v91 = vld [vmem:[%s1 + $0xc8] sm:$0xf]
  %v92 = vld [vmem:[%s1 + $0xcc] sm:$0xf]
  %v93 = vld [vmem:[%s1 + $0xd0] sm:$0xf]
  %v94 = vld [vmem:[%s1 + $0xd4] sm:$0xf]
  %v95 = vld [vmem:[%s1 + $0xd8] sm:$0xf]
  %v96 = vld [vmem:[%s1 + $0xdc] sm:$0xf]
  %v97 = vld [vmem:[%s2] sm:$0x1]
  %v99 = vlaneseq
  %v100 = vshrl.u32 %v99, 7
  %v101 = vsub.s32 0, %v100
  %v102 = vrot.slane %v97, %v101
  %v130 = vunpack.c.l.b16 %v15
  %v131 = vunpack.c.h.b16 %v15
  %v132 = vunpack.c.l.b16 %v16
  %v133 = vunpack.c.h.b16 %v16
  %v134 = vunpack.c.l.b16 %v17
  %v135 = vunpack.c.h.b16 %v17
  %v136 = vunpack.c.l.b16 %v18
  %v137 = vunpack.c.h.b16 %v18
  %v138 = vunpack.c.l.b16 %v19
  %v139 = vunpack.c.h.b16 %v19
  %v140 = vunpack.c.l.b16 %v20
  %v141 = vunpack.c.h.b16 %v20
  %v142 = vunpack.c.l.b16 %v21
  %v143 = vunpack.c.h.b16 %v21
  %v144 = vunpack.c.l.b16 %v22
  %v145 = vunpack.c.h.b16 %v22
  %v146 = vunpack.c.l.b16 %v23
  %v147 = vunpack.c.h.b16 %v23
  %v148 = vunpack.c.l.b16 %v24
  %v149 = vunpack.c.h.b16 %v24
  %v150 = vunpack.c.l.b16 %v25
  %v151 = vunpack.c.h.b16 %v25
  %v152 = vunpack.c.l.b16 %v26
  %v153 = vunpack.c.h.b16 %v26
  %v154 = vunpack.c.l.b16 %v27
  %v155 = vunpack.c.h.b16 %v27
  %v156 = vunpack.c.l.b16 %v28
  %v157 = vunpack.c.h.b16 %v28
  %v158 = vunpack.c.l.b16 %v29
  %v159 = vunpack.c.h.b16 %v29
  %v160 = vunpack.c.l.b16 %v30
  %v161 = vunpack.c.h.b16 %v30
  %v162 = vunpack.c.l.b16 %v31
  %v163 = vunpack.c.h.b16 %v31
  %v164 = vunpack.c.l.b16 %v32
  %v165 = vunpack.c.h.b16 %v32
  %v166 = vunpack.c.l.b16 %v33
  %v167 = vunpack.c.h.b16 %v33
  %v168 = vunpack.c.l.b16 %v34
  %v169 = vunpack.c.h.b16 %v34
  %v170 = vunpack.c.l.b16 %v35
  %v171 = vunpack.c.h.b16 %v35
  %v172 = vunpack.c.l.b16 %v36
  %v173 = vunpack.c.h.b16 %v36
  %v174 = vunpack.c.l.b16 %v37
  %v175 = vunpack.c.h.b16 %v37
  %v176 = vunpack.c.l.b16 %v38
  %v177 = vunpack.c.h.b16 %v38
  %v178 = vunpack.c.l.b16 %v39
  %v179 = vunpack.c.h.b16 %v39
  %v180 = vunpack.c.l.b16 %v40
  %v181 = vunpack.c.h.b16 %v40
  %v182 = vpack.c.b16 %v134, %v130
  %v183 = vpack.c.b16 %v135, %v131
  %v184 = vpack.c.b16 %v136, %v132
  %v185 = vpack.c.b16 %v137, %v133
  %v186 = vpack.c.b16 %v142, %v138
  %v187 = vpack.c.b16 %v143, %v139
  %v188 = vpack.c.b16 %v144, %v140
  %v189 = vpack.c.b16 %v145, %v141
  %v190 = vpack.c.b16 %v150, %v146
  %v191 = vpack.c.b16 %v151, %v147
  %v192 = vpack.c.b16 %v152, %v148
  %v193 = vpack.c.b16 %v153, %v149
  %v194 = vpack.c.b16 %v158, %v154
  %v195 = vpack.c.b16 %v159, %v155
  %v196 = vpack.c.b16 %v160, %v156
  %v197 = vpack.c.b16 %v161, %v157
  %v198 = vpack.c.b16 %v166, %v162
  %v199 = vpack.c.b16 %v167, %v163
  %v200 = vpack.c.b16 %v168, %v164
  %v201 = vpack.c.b16 %v169, %v165
  %v202 = vpack.c.b16 %v174, %v170
  %v203 = vpack.c.b16 %v175, %v171
  %v204 = vpack.c.b16 %v176, %v172
  %v205 = vpack.c.b16 %v177, %v173
  %v206 = vpack.c.b16 %v178, %v178
  %v207 = vpack.c.b16 %v179, %v179
  %v208 = vpack.c.b16 %v180, %v180
  %v209 = vpack.c.b16 %v181, %v181
  %v287 = vunpack.c.l.b16 %v41
  %v288 = vunpack.c.l.b16 %v42
  %v289 = vunpack.c.l.b16 %v43
  %v290 = vunpack.c.l.b16 %v44
  %v291 = vunpack.c.l.b16 %v45
  %v292 = vunpack.c.l.b16 %v46
  %v293 = vunpack.c.l.b16 %v47
  %v294 = vunpack.c.l.b16 %v48
  %v295 = vunpack.c.l.b16 %v49
  %v296 = vunpack.c.l.b16 %v50
  %v297 = vunpack.c.l.b16 %v51
  %v298 = vunpack.c.l.b16 %v52
  %v299 = vunpack.c.l.b16 %v53
  %v300 = vunpack.c.l.b16 %v54
  %v301 = vunpack.c.l.b16 %v55
  %v302 = vunpack.c.l.b16 %v56
  %v303 = vunpack.c.l.b16 %v57
  %v304 = vunpack.c.l.b16 %v58
  %v305 = vunpack.c.l.b16 %v59
  %v306 = vunpack.c.l.b16 %v60
  %v307 = vunpack.c.l.b16 %v61
  %v308 = vunpack.c.l.b16 %v62
  %v309 = vunpack.c.l.b16 %v63
  %v310 = vunpack.c.l.b16 %v64
  %v311 = vunpack.c.l.b16 %v65
  %v312 = vunpack.c.l.b16 %v66
  %v313 = vunpack.c.l.b16 %v67
  %v314 = vunpack.c.l.b16 %v68
  %v315 = vunpack.c.l.b16 %v69
  %v316 = vunpack.c.l.b16 %v70
  %v317 = vunpack.c.l.b16 %v71
  %v318 = vunpack.c.l.b16 %v72
  %v319 = vunpack.c.l.b16 %v73
  %v320 = vunpack.c.l.b16 %v74
  %v321 = vunpack.c.l.b16 %v75
  %v322 = vunpack.c.l.b16 %v76
  %v323 = vunpack.c.l.b16 %v77
  %v324 = vunpack.c.l.b16 %v78
  %v325 = vunpack.c.l.b16 %v79
  %v326 = vunpack.c.l.b16 %v80
  %v327 = vunpack.c.l.b16 %v81
  %v328 = vunpack.c.l.b16 %v82
  %v329 = vunpack.c.l.b16 %v83
  %v330 = vunpack.c.l.b16 %v84
  %v331 = vunpack.c.l.b16 %v85
  %v332 = vunpack.c.l.b16 %v86
  %v333 = vunpack.c.l.b16 %v87
  %v334 = vunpack.c.l.b16 %v88
  %v335 = vunpack.c.l.b16 %v89
  %v336 = vunpack.c.l.b16 %v90
  %v337 = vunpack.c.l.b16 %v91
  %v338 = vunpack.c.l.b16 %v92
  %v339 = vunpack.c.l.b16 %v93
  %v340 = vunpack.c.l.b16 %v94
  %v341 = vunpack.c.l.b16 %v95
  %v342 = vunpack.c.l.b16 %v96
  %v343 = vpack.c.b16 %v288, %v287
  %v344 = vpack.c.b16 %v290, %v289
  %v345 = vpack.c.b16 %v292, %v291
  %v346 = vpack.c.b16 %v294, %v293
  %v347 = vpack.c.b16 %v296, %v295
  %v348 = vpack.c.b16 %v298, %v297
  %v349 = vpack.c.b16 %v300, %v299
  %v350 = vpack.c.b16 %v302, %v301
  %v351 = vpack.c.b16 %v304, %v303
  %v352 = vpack.c.b16 %v306, %v305
  %v353 = vpack.c.b16 %v308, %v307
  %v354 = vpack.c.b16 %v310, %v309
  %v355 = vpack.c.b16 %v312, %v311
  %v356 = vpack.c.b16 %v314, %v313
  %v357 = vpack.c.b16 %v316, %v315
  %v358 = vpack.c.b16 %v318, %v317
  %v359 = vpack.c.b16 %v320, %v319
  %v360 = vpack.c.b16 %v322, %v321
  %v361 = vpack.c.b16 %v324, %v323
  %v362 = vpack.c.b16 %v326, %v325
  %v363 = vpack.c.b16 %v328, %v327
  %v364 = vpack.c.b16 %v330, %v329
  %v365 = vpack.c.b16 %v332, %v331
  %v366 = vpack.c.b16 %v334, %v333
  %v367 = vpack.c.b16 %v336, %v335
  %v368 = vpack.c.b16 %v338, %v337
  %v369 = vpack.c.b16 %v340, %v339
  %v370 = vpack.c.b16 %v342, %v341
  %vm399 = vcmask 523264
  %v401 = vsel %vm399, %v185, 0
  %v404 = vsel %vm399, %v189, 0
  %v407 = vsel %vm399, %v193, 0
  %v410 = vsel %vm399, %v197, 0
  %v413 = vsel %vm399, %v201, 0
  %v416 = vsel %vm399, %v205, 0
  %v419 = vsel %vm399, %v209, 0
  %421 = vmatprep.subr.bf16.mxu0 0
  %422 = vmatpush1.bf16.msra.mxu0 %v343
  %423 = vmatprep.subr.bf16.mxu0 0
  %424 = vmatpush1.bf16.msra.mxu0 %v344
  %425 = vmatprep.subr.bf16.mxu0 0
  %426 = vmatpush1.bf16.msra.mxu0 %v345
  %427 = vmatprep.subr.bf16.mxu0 0
  %428 = vmatpush1.bf16.msra.mxu0 %v346
  %429 = vmatprep.subr.bf16.mxu0 0
  %430 = vmatpush1.bf16.msra.mxu0 %v347
  %431 = vmatprep.subr.bf16.mxu0 0
  %432 = vmatpush1.bf16.msra.mxu0 %v348
  %433 = vmatprep.subr.bf16.mxu0 0
  %434 = vmatpush1.bf16.msra.mxu0 %v349
  %435 = vmatprep.subr.bf16.mxu0 0
  %436 = vmatpush1.bf16.msra.mxu0 %v350
  %437 = vmatprep.subr.bf16.mxu0 0
  %438 = vmatpush1.bf16.msra.mxu0 %v351
  %439 = vmatprep.subr.bf16.mxu0 0
  %440 = vmatpush1.bf16.msra.mxu0 %v352
  %441 = vmatprep.subr.bf16.mxu0 0
  %442 = vmatpush1.bf16.msra.mxu0 %v353
  %443 = vmatprep.subr.bf16.mxu0 0
  %444 = vmatpush1.bf16.msra.mxu0 %v354
  %445 = vmatprep.subr.bf16.mxu0 0
  %446 = vmatpush1.bf16.msra.mxu0 %v355
  %447 = vmatprep.subr.bf16.mxu0 0
  %448 = vmatpush1.bf16.msra.mxu0 %v356
  %449 = vmatprep.subr.bf16.mxu0 0
  %450 = vmatpush1.bf16.msra.mxu0 %v357
  %451 = vmatprep.subr.bf16.mxu0 0
  %452 = vmatpush1.bf16.msra.mxu0 %v358
  %453 = vmatprep.mubr.bf16.mxu0 %v183
  %454 = vmatmul.mubr.bf16.gmra.mrb[0].mxu0 %v182
  %v455 = vpop.f32.mrb[0].mxu0
  %v456 = vadd.f32 %v102, %v455
  %v457 = vpop.f32.mrb[0].mxu0
  %v458 = vpop.f32.mrb[0].mxu0
  %v459 = vadd.f32 %v102, %v458
  %v460 = vpop.f32.mrb[0].mxu0
  %461 = vmatprep.mubr.bf16.mxu0 %v187
  %462 = vmatmul.mubr.bf16.gmra.mrb[0].mxu0 %v186
  %v463 = vpop.f32.mrb[0].mxu0
  %v464 = vadd.f32 %v102, %v463
  %v465 = vpop.f32.mrb[0].mxu0
  %v466 = vpop.f32.mrb[0].mxu0
  %v467 = vadd.f32 %v102, %v466
  %v468 = vpop.f32.mrb[0].mxu0
  %469 = vmatprep.mubr.bf16.mxu0 %v191
  %470 = vmatmul.mubr.bf16.gmra.mrb[0].mxu0 %v190
  %v471 = vpop.f32.mrb[0].mxu0
  %v472 = vadd.f32 %v102, %v471
  %v473 = vpop.f32.mrb[0].mxu0
  %v474 = vpop.f32.mrb[0].mxu0
  %v475 = vadd.f32 %v102, %v474
  %v476 = vpop.f32.mrb[0].mxu0
  %477 = vmatprep.mubr.bf16.mxu0 %v195
  %478 = vmatmul.mubr.bf16.gmra.mrb[0].mxu0 %v194
  %v479 = vpop.f32.mrb[0].mxu0
  %v480 = vadd.f32 %v102, %v479
  %v481 = vpop.f32.mrb[0].mxu0
  %v482 = vpop.f32.mrb[0].mxu0
  %v483 = vadd.f32 %v102, %v482
  %v484 = vpop.f32.mrb[0].mxu0
  %485 = vmatprep.mubr.bf16.mxu0 %v199
  %486 = vmatmul.mubr.bf16.gmra.mrb[0].mxu0 %v198
  %v487 = vpop.f32.mrb[0].mxu0
  %v488 = vadd.f32 %v102, %v487
  %v489 = vpop.f32.mrb[0].mxu0
  %v490 = vpop.f32.mrb[0].mxu0
  %v491 = vadd.f32 %v102, %v490
  %v492 = vpop.f32.mrb[0].mxu0
  %493 = vmatprep.mubr.bf16.mxu0 %v203
  %494 = vmatmul.mubr.bf16.gmra.mrb[0].mxu0 %v202
  %v495 = vpop.f32.mrb[0].mxu0
  %v496 = vadd.f32 %v102, %v495
  %v497 = vpop.f32.mrb[0].mxu0
  %v498 = vpop.f32.mrb[0].mxu0
  %v499 = vadd.f32 %v102, %v498
  %v500 = vpop.f32.mrb[0].mxu0
  %501 = vmatprep.mubr.bf16.mxu0 %v207
  %502 = vmatmul.mubr.bf16.gmra.mrb[0].mxu0 %v206
  %v503 = vpop.f32.mrb[0].mxu0
  %v504 = vadd.f32 %v102, %v503
  %v505 = vpop.f32.mrb[0].mxu0
  %v506 = vpop.f32.mrb[0].mxu0
  %v507 = vpop.f32.mrb[0].mxu0
  %508 = vdwg.mxu0
  %509 = vmatprep.subr.bf16.mxu0 0
  %510 = vmatpush1.bf16.msra.mxu0 %v359
  %511 = vmatprep.subr.bf16.mxu0 0
  %512 = vmatpush1.bf16.msra.mxu0 %v360
  %513 = vmatprep.subr.bf16.mxu0 0
  %514 = vmatpush1.bf16.msra.mxu0 %v361
  %515 = vmatprep.subr.bf16.mxu0 0
  %516 = vmatpush1.bf16.msra.mxu0 %v362
  %517 = vmatprep.subr.bf16.mxu0 0
  %518 = vmatpush1.bf16.msra.mxu0 %v363
  %519 = vmatprep.subr.bf16.mxu0 0
  %520 = vmatpush1.bf16.msra.mxu0 %v364
  %521 = vmatprep.subr.bf16.mxu0 0
  %522 = vmatpush1.bf16.msra.mxu0 %v365
  %523 = vmatprep.subr.bf16.mxu0 0
  %524 = vmatpush1.bf16.msra.mxu0 %v366
  %525 = vmatprep.subr.bf16.mxu0 0
  %526 = vmatpush1.bf16.msra.mxu0 %v367
  %527 = vmatprep.subr.bf16.mxu0 0
  %528 = vmatpush1.bf16.msra.mxu0 %v368
  %529 = vmatprep.subr.bf16.mxu0 0
  %530 = vmatpush1.bf16.msra.mxu0 %v369
  %531 = vmatprep.subr.bf16.mxu0 0
  %532 = vmatpush1.bf16.msra.mxu0 %v370
  %533 = vmatprep.subr.bf16.mxu0 0
  %534 = vmatpush1.bf16.msra.mxu0 0
  %535 = vmatprep.subr.bf16.mxu0 0
  %536 = vmatpush1.bf16.msra.mxu0 0
  %537 = vmatprep.subr.bf16.mxu0 0
  %538 = vmatpush1.bf16.msra.mxu0 0
  %539 = vmatprep.subr.bf16.mxu0 0
  %540 = vmatpush1.bf16.msra.mxu0 0
  %541 = vmatprep.mubr.bf16.mxu0 %v401
  %542 = vmatmul.mubr.bf16.gmra.mrb[0].mxu0 %v184
  %v543 = vpop.f32.mrb[0].mxu0
  %v544 = vadd.f32 %v456, %v543
  %v545 = vpop.f32.mrb[0].mxu0
  %v546 = vpop.f32.mrb[0].mxu0
  %v547 = vadd.f32 %v459, %v546
  %v548 = vpop.f32.mrb[0].mxu0
  %549 = vmatprep.mubr.bf16.mxu0 %v404
  %550 = vmatmul.mubr.bf16.gmra.mrb[0].mxu0 %v188
  %v551 = vpop.f32.mrb[0].mxu0
  %v552 = vadd.f32 %v464, %v551
  %v553 = vpop.f32.mrb[0].mxu0
  %v554 = vpop.f32.mrb[0].mxu0
  %v555 = vadd.f32 %v467, %v554
  %v556 = vpop.f32.mrb[0].mxu0
  %557 = vmatprep.mubr.bf16.mxu0 %v407
  %558 = vmatmul.mubr.bf16.gmra.mrb[0].mxu0 %v192
  %v559 = vpop.f32.mrb[0].mxu0
  %v560 = vadd.f32 %v472, %v559
  %v561 = vpop.f32.mrb[0].mxu0
  %v562 = vpop.f32.mrb[0].mxu0
  %v563 = vadd.f32 %v475, %v562
  %v564 = vpop.f32.mrb[0].mxu0
  %565 = vmatprep.mubr.bf16.mxu0 %v410
  %566 = vmatmul.mubr.bf16.gmra.mrb[0].mxu0 %v196
  %v567 = vpop.f32.mrb[0].mxu0
  %v568 = vadd.f32 %v480, %v567
  %v569 = vpop.f32.mrb[0].mxu0
  %v570 = vpop.f32.mrb[0].mxu0
  %v571 = vadd.f32 %v483, %v570
  %v572 = vpop.f32.mrb[0].mxu0
  %573 = vmatprep.mubr.bf16.mxu0 %v413
  %574 = vmatmul.mubr.bf16.gmra.mrb[0].mxu0 %v200
  %v575 = vpop.f32.mrb[0].mxu0
  %v576 = vadd.f32 %v488, %v575
  %v577 = vpop.f32.mrb[0].mxu0
  %v578 = vpop.f32.mrb[0].mxu0
  %v579 = vadd.f32 %v491, %v578
  %v580 = vpop.f32.mrb[0].mxu0
  %581 = vmatprep.mubr.bf16.mxu0 %v416
  %582 = vmatmul.mubr.bf16.gmra.mrb[0].mxu0 %v204
  %v583 = vpop.f32.mrb[0].mxu0
  %v584 = vadd.f32 %v496, %v583
  %v585 = vpop.f32.mrb[0].mxu0
  %v586 = vpop.f32.mrb[0].mxu0
  %v587 = vadd.f32 %v499, %v586
  %v588 = vpop.f32.mrb[0].mxu0
  %589 = vmatprep.mubr.bf16.mxu0 %v419
  %590 = vmatmul.mubr.bf16.gmra.mrb[0].mxu0 %v208
  %v591 = vpop.f32.mrb[0].mxu0
  %v592 = vadd.f32 %v504, %v591
  %v593 = vpop.f32.mrb[0].mxu0
  %v594 = vpop.f32.mrb[0].mxu0
  %v595 = vpop.f32.mrb[0].mxu0
  %596 = vdwg.mxu0
  %597 = vst.msk [vmem:[%s3] sm:$0xff] %vm399, %v544
  %598 = vst.msk [vmem:[%s3 + $0x8] sm:$0xff] %vm399, %v547
  %599 = vst.msk [vmem:[%s3 + $0x10] sm:$0xff] %vm399, %v552
  %600 = vst.msk [vmem:[%s3 + $0x18] sm:$0xff] %vm399, %v555
  %601 = vst.msk [vmem:[%s3 + $0x20] sm:$0xff] %vm399, %v560
  %602 = vst.msk [vmem:[%s3 + $0x28] sm:$0xff] %vm399, %v563
  %603 = vst.msk [vmem:[%s3 + $0x30] sm:$0xff] %vm399, %v568
  %604 = vst.msk [vmem:[%s3 + $0x38] sm:$0xff] %vm399, %v571
  %605 = vst.msk [vmem:[%s3 + $0x40] sm:$0xff] %vm399, %v576
  %606 = vst.msk [vmem:[%s3 + $0x48] sm:$0xff] %vm399, %v579
  %607 = vst.msk [vmem:[%s3 + $0x50] sm:$0xff] %vm399, %v584
  %608 = vst.msk [vmem:[%s3 + $0x58] sm:$0xff] %vm399, %v587
  %609 = vst.msk [vmem:[%s3 + $0x60] sm:$0xff] %vm399, %v592
  // Predicated region
  $region14: #{stem_forward.19} parent=0 // pred_check
    _
  $region15: #{stem_forward.19} parent=0 // pred_check_branch
    %611 = sbr.rel (0) target = $region17
  $region16: #{stem_forward.19} parent=0 // pred_region
    _
  $region17: #{stem_forward.19} parent=0 // pred_fallthru
    _
  // Predicated region
  $region18: #{stem_forward.19} parent=0 // pred_check
    _
  $region19: #{stem_forward.19} parent=0 // pred_check_branch
    %613 = sbr.rel (0) target = $region21
  $region20: #{stem_forward.19} parent=0 // pred_region
    _
  $region21: #{stem_forward.19} parent=0 // pred_fallthru
    _

// kernel: stem_forward.21
$region0: #{stem_forward.21}
  #allocation0 [shape = 'u32[]', space=smem, size = 0x4, offset = 0x4, fixed_abs, tag = 'smem constant byte address 0x4 - core index']
  #allocation1 [shape = 'u32[144,128]{1,0:T(1,128)}', space=vmem, size = 0x12000, scoped, tag = 'internal scratch']
  %s0 = inlined_call_operand.vmem [shape: bf16[56,576], index: 0, kind: input, shape index: {}]
  %s1 = inlined_call_operand.vmem [shape: bf16[576,96], index: 1, kind: input, shape index: {}]
  %s2 = inlined_call_operand.vmem [shape: f32[1,96], index: 2, kind: input, shape index: {}]
  %s3 = inlined_call_operand.vmem [shape: f32[56,96], index: 3, kind: output, shape index: {}]
  %s4 = sld [smem:[#allocation0]]
  $region22: #{stem_forward.21} parent=0
    _
  %s6 = ssub.s32 1, %s4
  %s7 = scalar_select 0, %s6, %s4
  // Predicated region
  $region2: #{stem_forward.21} parent=0 // pred_check
    _
  $region3: #{stem_forward.21} parent=0 // pred_check_branch
    %9 = sbr.rel (0) target = $region5
  $region4: #{stem_forward.21} parent=0 // pred_region
    _
  $region5: #{stem_forward.21} parent=0 // pred_fallthru
    _
  // Predicated region
  $region6: #{stem_forward.21} parent=0 // pred_check
    _
  $region7: #{stem_forward.21} parent=0 // pred_check_branch
    %11 = sbr.rel (0) target = $region9
  $region8: #{stem_forward.21} parent=0 // pred_region
    _
  $region9: #{stem_forward.21} parent=0 // pred_fallthru
    _
  // Predicated region
  $region10: #{stem_forward.21} parent=0 // pred_check
    _
  $region11: #{stem_forward.21} parent=0 // pred_check_branch
    %13 = sbr.rel (0) target = $region13
  $region12: #{stem_forward.21} parent=0 // pred_region
    _
  $region13: #{stem_forward.21} parent=0 // pred_fallthru
    _
  %v15 = vld [vmem:[%s0] sm:$0xff]
  %v16 = vld [vmem:[%s0 + $0x8] sm:$0xff]
  %v17 = vld [vmem:[%s0 + $0x10] sm:$0xf]
  %v18 = vld [vmem:[%s0 + $0x14] sm:$0xff]
  %v19 = vld [vmem:[%s0 + $0x1c] sm:$0xff]
  %v20 = vld [vmem:[%s0 + $0x24] sm:$0xf]
  %v21 = vld [vmem:[%s0 + $0x28] sm:$0xff]
  %v22 = vld [vmem:[%s0 + $0x30] sm:$0xff]
  %v23 = vld [vmem:[%s0 + $0x38] sm:$0xf]
  %v24 = vld [vmem:[%s0 + $0x3c] sm:$0xff]
  %v25 = vld [vmem:[%s0 + $0x44] sm:$0xff]
  %v26 = vld [vmem:[%s0 + $0x4c] sm:$0xf]
  %v27 = vld [vmem:[%s0 + $0x50] sm:$0xff]
  %v28 = vld [vmem:[%s0 + $0x58] sm:$0xff]
  %v29 = vld [vmem:[%s0 + $0x60] sm:$0xf]
  %v30 = vld [vmem:[%s0 + $0x64] sm:$0xff]
  %v31 = vld [vmem:[%s0 + $0x6c] sm:$0xff]
  %v32 = vld [vmem:[%s0 + $0x74] sm:$0xf]
  %v33 = vld [vmem:[%s0 + $0x78] sm:$0xff]
  %v34 = vld [vmem:[%s0 + $0x80] sm:$0xff]
  %v35 = vld [vmem:[%s0 + $0x88] sm:$0xf]
  %v36 = vld [vmem:[%s1] sm:$0xf]
  %v37 = vld [vmem:[%s1 + $0x4] sm:$0xf]
  %v38 = vld [vmem:[%s1 + $0x8] sm:$0xf]
  %v39 = vld [vmem:[%s1 + $0xc] sm:$0xf]
  %v40 = vld [vmem:[%s1 + $0x10] sm:$0xf]
  %v41 = vld [vmem:[%s1 + $0x14] sm:$0xf]
  %v42 = vld [vmem:[%s1 + $0x18] sm:$0xf]
  %v43 = vld [vmem:[%s1 + $0x1c] sm:$0xf]
  %v44 = vld [vmem:[%s1 + $0x20] sm:$0xf]
  %v45 = vld [vmem:[%s1 + $0x24] sm:$0xf]
  %v46 = vld [vmem:[%s1 + $0x28] sm:$0xf]
  %v47 = vld [vmem:[%s1 + $0x2c] sm:$0xf]
  %v48 = vld [vmem:[%s1 + $0x30] sm:$0xf]
  %v49 = vld [vmem:[%s1 + $0x34] sm:$0xf]
  %v50 = vld [vmem:[%s1 + $0x38] sm:$0xf]
  %v51 = vld [vmem:[%s1 + $0x3c] sm:$0xf]
  %v52 = vld [vmem:[%s1 + $0x40] sm:$0xf]
  %v53 = vld [vmem:[%s1 + $0x44] sm:$0xf]
  %v54 = vld [vmem:[%s1 + $0x48] sm:$0xf]
  %v55 = vld [vmem:[%s1 + $0x4c] sm:$0xf]
  %v56 = vld [vmem:[%s1 + $0x50] sm:$0xf]
  %v57 = vld [vmem:[%s1 + $0x54] sm:$0xf]
  %v58 = vld [vmem:[%s1 + $0x58] sm:$0xf]
  %v59 = vld [vmem:[%s1 + $0x5c] sm:$0xf]
  %v60 = vld [vmem:[%s1 + $0x60] sm:$0xf]
  %v61 = vld [vmem:[%s1 + $0x64] sm:$0xf]
  %v62 = vld [vmem:[%s1 + $0x68] sm:$0xf]
  %v63 = vld [vmem:[%s1 + $0x6c] sm:$0xf]
  %v64 = vld [vmem:[%s1 + $0x70] sm:$0xf]
  %v65 = vld [vmem:[%s1 + $0x74] sm:$0xf]
  %v66 = vld [vmem:[%s1 + $0x78] sm:$0xf]
  %v67 = vld [vmem:[%s1 + $0x7c] sm:$0xf]
  %v68 = vld [vmem:[%s1 + $0x80] sm:$0xf]
  %v69 = vld [vmem:[%s1 + $0x84] sm:$0xf]
  %v70 = vld [vmem:[%s1 + $0x88] sm:$0xf]
  %v71 = vld [vmem:[%s1 + $0x8c] sm:$0xf]
  %v72 = vld [vmem:[%s1 + $0x90] sm:$0xf]
  %v73 = vld [vmem:[%s1 + $0x94] sm:$0xf]
  %v74 = vld [vmem:[%s1 + $0x98] sm:$0xf]
  %v75 = vld [vmem:[%s1 + $0x9c] sm:$0xf]
  %v76 = vld [vmem:[%s1 + $0xa0] sm:$0xf]
  %v77 = vld [vmem:[%s1 + $0xa4] sm:$0xf]
  %v78 = vld [vmem:[%s1 + $0xa8] sm:$0xf]
  %v79 = vld [vmem:[%s1 + $0xac] sm:$0xf]
  %v80 = vld [vmem:[%s1 + $0xb0] sm:$0xf]
  %v81 = vld [vmem:[%s1 + $0xb4] sm:$0xf]
  %v82 = vld [vmem:[%s1 + $0xb8] sm:$0xf]
  %v83 = vld [vmem:[%s1 + $0xbc] sm:$0xf]
  %v84 = vld [vmem:[%s1 + $0xc0] sm:$0xf]
  %v85 = vld [vmem:[%s1 + $0xc4] sm:$0xf]
  %v86 = vld [vmem:[%s1 + $0xc8] sm:$0xf]
  %v87 = vld [vmem:[%s1 + $0xcc] sm:$0xf]
  %v88 = vld [vmem:[%s1 + $0xd0] sm:$0xf]
  %v89 = vld [vmem:[%s1 + $0xd4] sm:$0xf]
  %v90 = vld [vmem:[%s1 + $0xd8] sm:$0xf]
  %v91 = vld [vmem:[%s1 + $0xdc] sm:$0xf]
  %v92 = vld [vmem:[%s1 + $0xe0] sm:$0xf]
  %v93 = vld [vmem:[%s1 + $0xe4] sm:$0xf]
  %v94 = vld [vmem:[%s1 + $0xe8] sm:$0xf]
  %v95 = vld [vmem:[%s1 + $0xec] sm:$0xf]
  %v96 = vld [vmem:[%s1 + $0xf0] sm:$0xf]
  %v97 = vld [vmem:[%s1 + $0xf4] sm:$0xf]
  %v98 = vld [vmem:[%s1 + $0xf8] sm:$0xf]
  %v99 = vld [vmem:[%s1 + $0xfc] sm:$0xf]
  %v100 = vld [vmem:[%s1 + $0x100] sm:$0xf]
  %v101 = vld [vmem:[%s1 + $0x104] sm:$0xf]
  %v102 = vld [vmem:[%s1 + $0x108] sm:$0xf]
  %v103 = vld [vmem:[%s1 + $0x10c] sm:$0xf]
  %v104 = vld [vmem:[%s1 + $0x110] sm:$0xf]
  %v105 = vld [vmem:[%s1 + $0x114] sm:$0xf]
  %v106 = vld [vmem:[%s1 + $0x118] sm:$0xf]
  %v107 = vld [vmem:[%s1 + $0x11c] sm:$0xf]
  %v108 = vld [vmem:[%s2] sm:$0x1]
  %v110 = vlaneseq
  %v111 = vshrl.u32 %v110, 7
  %v112 = vsub.s32 0, %v111
  %v113 = vrot.slane %v108, %v112
  %v136 = vunpack.c.l.b16 %v15
  %v137 = vunpack.c.h.b16 %v15
  %v138 = vunpack.c.l.b16 %v16
  %v139 = vunpack.c.h.b16 %v16
  %v140 = vunpack.c.l.b16 %v17
  %v141 = vunpack.c.l.b16 %v18
  %v142 = vunpack.c.h.b16 %v18
  %v143 = vunpack.c.l.b16 %v19
  %v144 = vunpack.c.h.b16 %v19
  %v145 = vunpack.c.l.b16 %v20
  %v146 = vunpack.c.l.b16 %v21
  %v147 = vunpack.c.h.b16 %v21
  %v148 = vunpack.c.l.b16 %v22
  %v149 = vunpack.c.h.b16 %v22
  %v150 = vunpack.c.l.b16 %v23
  %v151 = vunpack.c.l.b16 %v24
  %v152 = vunpack.c.h.b16 %v24
  %v153 = vunpack.c.l.b16 %v25
  %v154 = vunpack.c.h.b16 %v25
  %v155 = vunpack.c.l.b16 %v26
  %v156 = vunpack.c.l.b16 %v27
  %v157 = vunpack.c.h.b16 %v27
  %v158 = vunpack.c.l.b16 %v28
  %v159 = vunpack.c.h.b16 %v28
  %v160 = vunpack.c.l.b16 %v29
  %v161 = vunpack.c.l.b16 %v30
  %v162 = vunpack.c.h.b16 %v30
  %v163 = vunpack.c.l.b16 %v31
  %v164 = vunpack.c.h.b16 %v31
  %v165 = vunpack.c.l.b16 %v32
  %v166 = vunpack.c.l.b16 %v33
  %v167 = vunpack.c.h.b16 %v33
  %v168 = vunpack.c.l.b16 %v34
  %v169 = vunpack.c.h.b16 %v34
  %v170 = vunpack.c.l.b16 %v35
  %v171 = vpack.c.b16 %v141, %v136
  %v172 = vpack.c.b16 %v142, %v137
  %v173 = vpack.c.b16 %v143, %v138
  %v174 = vpack.c.b16 %v144, %v139
  %v175 = vpack.c.b16 %v145, %v140
  %v176 = vpack.c.b16 %v151, %v146
  %v177 = vpack.c.b16 %v152, %v147
  %v178 = vpack.c.b16 %v153, %v148
  %v179 = vpack.c.b16 %v154, %v149
  %v180 = vpack.c.b16 %v155, %v150
  %v181 = vpack.c.b16 %v161, %v156
  %v182 = vpack.c.b16 %v162, %v157
  %v183 = vpack.c.b16 %v163, %v158
  %v184 = vpack.c.b16 %v164, %v159
  %v185 = vpack.c.b16 %v165, %v160
  %v186 = vpack.c.b16 %v166, %v166
  %v187 = vpack.c.b16 %v167, %v167
  %v188 = vpack.c.b16 %v168, %v168
  %v189 = vpack.c.b16 %v169, %v169
  %v190 = vpack.c.b16 %v170, %v170
  %v279 = vunpack.c.l.b16 %v36
  %v280 = vunpack.c.l.b16 %v37
  %v281 = vunpack.c.l.b16 %v38
  %v282 = vunpack.c.l.b16 %v39
  %v283 = vunpack.c.l.b16 %v40
  %v284 = vunpack.c.l.b16 %v41
  %v285 = vunpack.c.l.b16 %v42
  %v286 = vunpack.c.l.b16 %v43
  %v287 = vunpack.c.l.b16 %v44
  %v288 = vunpack.c.l.b16 %v45
  %v289 = vunpack.c.l.b16 %v46
  %v290 = vunpack.c.l.b16 %v47
  %v291 = vunpack.c.l.b16 %v48
  %v292 = vunpack.c.l.b16 %v49
  %v293 = vunpack.c.l.b16 %v50
  %v294 = vunpack.c.l.b16 %v51
  %v295 = vunpack.c.l.b16 %v52
  %v296 = vunpack.c.l.b16 %v53
  %v297 = vunpack.c.l.b16 %v54
  %v298 = vunpack.c.l.b16 %v55
  %v299 = vunpack.c.l.b16 %v56
  %v300 = vunpack.c.l.b16 %v57
  %v301 = vunpack.c.l.b16 %v58
  %v302 = vunpack.c.l.b16 %v59
  %v303 = vunpack.c.l.b16 %v60
  %v304 = vunpack.c.l.b16 %v61
  %v305 = vunpack.c.l.b16 %v62
  %v306 = vunpack.c.l.b16 %v63
  %v307 = vunpack.c.l.b16 %v64
  %v308 = vunpack.c.l.b16 %v65
  %v309 = vunpack.c.l.b16 %v66
  %v310 = vunpack.c.l.b16 %v67
  %v311 = vunpack.c.l.b16 %v68
  %v312 = vunpack.c.l.b16 %v69
  %v313 = vunpack.c.l.b16 %v70
  %v314 = vunpack.c.l.b16 %v71
  %v315 = vunpack.c.l.b16 %v72
  %v316 = vunpack.c.l.b16 %v73
  %v317 = vunpack.c.l.b16 %v74
  %v318 = vunpack.c.l.b16 %v75
  %v319 = vunpack.c.l.b16 %v76
  %v320 = vunpack.c.l.b16 %v77
  %v321 = vunpack.c.l.b16 %v78
  %v322 = vunpack.c.l.b16 %v79
  %v323 = vunpack.c.l.b16 %v80
  %v324 = vunpack.c.l.b16 %v81
  %v325 = vunpack.c.l.b16 %v82
  %v326 = vunpack.c.l.b16 %v83
  %v327 = vunpack.c.l.b16 %v84
  %v328 = vunpack.c.l.b16 %v85
  %v329 = vunpack.c.l.b16 %v86
  %v330 = vunpack.c.l.b16 %v87
  %v331 = vunpack.c.l.b16 %v88
  %v332 = vunpack.c.l.b16 %v89
  %v333 = vunpack.c.l.b16 %v90
  %v334 = vunpack.c.l.b16 %v91
  %v335 = vunpack.c.l.b16 %v92
  %v336 = vunpack.c.l.b16 %v93
  %v337 = vunpack.c.l.b16 %v94
  %v338 = vunpack.c.l.b16 %v95
  %v339 = vunpack.c.l.b16 %v96
  %v340 = vunpack.c.l.b16 %v97
  %v341 = vunpack.c.l.b16 %v98
  %v342 = vunpack.c.l.b16 %v99
  %v343 = vunpack.c.l.b16 %v100
  %v344 = vunpack.c.l.b16 %v101
  %v345 = vunpack.c.l.b16 %v102
  %v346 = vunpack.c.l.b16 %v103
  %v347 = vunpack.c.l.b16 %v104
  %v348 = vunpack.c.l.b16 %v105
  %v349 = vunpack.c.l.b16 %v106
  %v350 = vunpack.c.l.b16 %v107
  %v351 = vpack.c.b16 %v280, %v279
  %v352 = vpack.c.b16 %v282, %v281
  %v353 = vpack.c.b16 %v284, %v283
  %v354 = vpack.c.b16 %v286, %v285
  %v355 = vpack.c.b16 %v288, %v287
  %v356 = vpack.c.b16 %v290, %v289
  %v357 = vpack.c.b16 %v292, %v291
  %v358 = vpack.c.b16 %v294, %v293
  %v359 = vpack.c.b16 %v296, %v295
  %v360 = vpack.c.b16 %v298, %v297
  %v361 = vpack.c.b16 %v300, %v299
  %v362 = vpack.c.b16 %v302, %v301
  %v363 = vpack.c.b16 %v304, %v303
  %v364 = vpack.c.b16 %v306, %v305
  %v365 = vpack.c.b16 %v308, %v307
  %v366 = vpack.c.b16 %v310, %v309
  %v367 = vpack.c.b16 %v312, %v311
  %v368 = vpack.c.b16 %v314, %v313
  %v369 = vpack.c.b16 %v316, %v315
  %v370 = vpack.c.b16 %v318, %v317
  %v371 = vpack.c.b16 %v320, %v319
  %v372 = vpack.c.b16 %v322, %v321
  %v373 = vpack.c.b16 %v324, %v323
  %v374 = vpack.c.b16 %v326, %v325
  %v375 = vpack.c.b16 %v328, %v327
  %v376 = vpack.c.b16 %v330, %v329
  %v377 = vpack.c.b16 %v332, %v331
  %v378 = vpack.c.b16 %v334, %v333
  %v379 = vpack.c.b16 %v336, %v335
  %v380 = vpack.c.b16 %v338, %v337
  %v381 = vpack.c.b16 %v340, %v339
  %v382 = vpack.c.b16 %v342, %v341
  %v383 = vpack.c.b16 %v344, %v343
  %v384 = vpack.c.b16 %v346, %v345
  %v385 = vpack.c.b16 %v348, %v347
  %v386 = vpack.c.b16 %v350, %v349
  %vm423 = vcmask 523264
  %v425 = vsel %vm423, %v175, 0
  %v428 = vsel %vm423, %v180, 0
  %v431 = vsel %vm423, %v185, 0
  %v434 = vsel %vm423, %v190, 0
  %436 = vmatprep.subr.bf16.mxu0 0
  %437 = vmatpush1.bf16.msra.mxu0 %v351
  %438 = vmatprep.subr.bf16.mxu0 0
  %439 = vmatpush1.bf16.msra.mxu0 %v352
  %440 = vmatprep.subr.bf16.mxu0 0
  %441 = vmatpush1.bf16.msra.mxu0 %v353
  %442 = vmatprep.subr.bf16.mxu0 0
  %443 = vmatpush1.bf16.msra.mxu0 %v354
  %444 = vmatprep.subr.bf16.mxu0 0
  %445 = vmatpush1.bf16.msra.mxu0 %v355
  %446 = vmatprep.subr.bf16.mxu0 0
  %447 = vmatpush1.bf16.msra.mxu0 %v356
  %448 = vmatprep.subr.bf16.mxu0 0
  %449 = vmatpush1.bf16.msra.mxu0 %v357
  %450 = vmatprep.subr.bf16.mxu0 0
  %451 = vmatpush1.bf16.msra.mxu0 %v358
  %452 = vmatprep.subr.bf16.mxu0 0
  %453 = vmatpush1.bf16.msra.mxu0 %v359
  %454 = vmatprep.subr.bf16.mxu0 0
  %455 = vmatpush1.bf16.msra.mxu0 %v360
  %456 = vmatprep.subr.bf16.mxu0 0
  %457 = vmatpush1.bf16.msra.mxu0 %v361
  %458 = vmatprep.subr.bf16.mxu0 0
  %459 = vmatpush1.bf16.msra.mxu0 %v362
  %460 = vmatprep.subr.bf16.mxu0 0
  %461 = vmatpush1.bf16.msra.mxu0 %v363
  %462 = vmatprep.subr.bf16.mxu0 0
  %463 = vmatpush1.bf16.msra.mxu0 %v364
  %464 = vmatprep.subr.bf16.mxu0 0
  %465 = vmatpush1.bf16.msra.mxu0 %v365
  %466 = vmatprep.subr.bf16.mxu0 0
  %467 = vmatpush1.bf16.msra.mxu0 %v366
  %468 = vmatprep.mubr.bf16.mxu0 %v172
  %469 = vmatmul.mubr.bf16.gmra.mrb[0].mxu0 %v171
  %v470 = vpop.f32.mrb[0].mxu0
  %v471 = vadd.f32 %v113, %v470
  %v472 = vpop.f32.mrb[0].mxu0
  %v473 = vpop.f32.mrb[0].mxu0
  %v474 = vadd.f32 %v113, %v473
  %v475 = vpop.f32.mrb[0].mxu0
  %476 = vmatprep.mubr.bf16.mxu0 %v177
  %477 = vmatmul.mubr.bf16.gmra.mrb[0].mxu0 %v176
  %v478 = vpop.f32.mrb[0].mxu0
  %v479 = vadd.f32 %v113, %v478
  %v480 = vpop.f32.mrb[0].mxu0
  %v481 = vpop.f32.mrb[0].mxu0
  %v482 = vadd.f32 %v113, %v481
  %v483 = vpop.f32.mrb[0].mxu0
  %484 = vmatprep.mubr.bf16.mxu0 %v182
  %485 = vmatmul.mubr.bf16.gmra.mrb[0].mxu0 %v181
  %v486 = vpop.f32.mrb[0].mxu0
  %v487 = vadd.f32 %v113, %v486
  %v488 = vpop.f32.mrb[0].mxu0
  %v489 = vpop.f32.mrb[0].mxu0
  %v490 = vadd.f32 %v113, %v489
  %v491 = vpop.f32.mrb[0].mxu0
  %492 = vmatprep.mubr.bf16.mxu0 %v187
  %493 = vmatmul.mubr.bf16.gmra.mrb[0].mxu0 %v186
  %v494 = vpop.f32.mrb[0].mxu0
  %v495 = vadd.f32 %v113, %v494
  %v496 = vpop.f32.mrb[0].mxu0
  %v497 = vpop.f32.mrb[0].mxu0
  %v498 = vpop.f32.mrb[0].mxu0
  %499 = vdwg.mxu0
  %500 = vmatprep.subr.bf16.mxu0 0
  %501 = vmatpush1.bf16.msra.mxu0 %v367
  %502 = vmatprep.subr.bf16.mxu0 0
  %503 = vmatpush1.bf16.msra.mxu0 %v368
  %504 = vmatprep.subr.bf16.mxu0 0
  %505 = vmatpush1.bf16.msra.mxu0 %v369
  %506 = vmatprep.subr.bf16.mxu0 0
  %507 = vmatpush1.bf16.msra.mxu0 %v370
  %508 = vmatprep.subr.bf16.mxu0 0
  %509 = vmatpush1.bf16.msra.mxu0 %v371
  %510 = vmatprep.subr.bf16.mxu0 0
  %511 = vmatpush1.bf16.msra.mxu0 %v372
  %512 = vmatprep.subr.bf16.mxu0 0
  %513 = vmatpush1.bf16.msra.mxu0 %v373
  %514 = vmatprep.subr.bf16.mxu0 0
  %515 = vmatpush1.bf16.msra.mxu0 %v374
  %516 = vmatprep.subr.bf16.mxu0 0
  %517 = vmatpush1.bf16.msra.mxu0 %v375
  %518 = vmatprep.subr.bf16.mxu0 0
  %519 = vmatpush1.bf16.msra.mxu0 %v376
  %520 = vmatprep.subr.bf16.mxu0 0
  %521 = vmatpush1.bf16.msra.mxu0 %v377
  %522 = vmatprep.subr.bf16.mxu0 0
  %523 = vmatpush1.bf16.msra.mxu0 %v378
  %524 = vmatprep.subr.bf16.mxu0 0
  %525 = vmatpush1.bf16.msra.mxu0 %v379
  %526 = vmatprep.subr.bf16.mxu0 0
  %527 = vmatpush1.bf16.msra.mxu0 %v380
  %528 = vmatprep.subr.bf16.mxu0 0
  %529 = vmatpush1.bf16.msra.mxu0 %v381
  %530 = vmatprep.subr.bf16.mxu0 0
  %531 = vmatpush1.bf16.msra.mxu0 %v382
  %532 = vmatprep.mubr.bf16.mxu0 %v174
  %533 = vmatmul.mubr.bf16.gmra.mrb[0].mxu0 %v173
  %v534 = vpop.f32.mrb[0].mxu0
  %v535 = vadd.f32 %v471, %v534
  %v536 = vpop.f32.mrb[0].mxu0
  %v537 = vpop.f32.mrb[0].mxu0
  %v538 = vadd.f32 %v474, %v537
  %v539 = vpop.f32.mrb[0].mxu0
  %540 = vmatprep.mubr.bf16.mxu0 %v179
  %541 = vmatmul.mubr.bf16.gmra.mrb[0].mxu0 %v178
  %v542 = vpop.f32.mrb[0].mxu0
  %v543 = vadd.f32 %v479, %v542
  %v544 = vpop.f32.mrb[0].mxu0
  %v545 = vpop.f32.mrb[0].mxu0
  %v546 = vadd.f32 %v482, %v545
  %v547 = vpop.f32.mrb[0].mxu0
  %548 = vmatprep.mubr.bf16.mxu0 %v184
  %549 = vmatmul.mubr.bf16.gmra.mrb[0].mxu0 %v183
  %v550 = vpop.f32.mrb[0].mxu0
  %v551 = vadd.f32 %v487, %v550
  %v552 = vpop.f32.mrb[0].mxu0
  %v553 = vpop.f32.mrb[0].mxu0
  %v554 = vadd.f32 %v490, %v553
  %v555 = vpop.f32.mrb[0].mxu0
  %556 = vmatprep.mubr.bf16.mxu0 %v189
  %557 = vmatmul.mubr.bf16.gmra.mrb[0].mxu0 %v188
  %v558 = vpop.f32.mrb[0].mxu0
  %v559 = vadd.f32 %v495, %v558
  %v560 = vpop.f32.mrb[0].mxu0
  %v561 = vpop.f32.mrb[0].mxu0
  %v562 = vpop.f32.mrb[0].mxu0
  %563 = vdwg.mxu0
  %564 = vmatprep.subr.bf16.mxu0 0
  %565 = vmatpush1.bf16.msra.mxu0 %v383
  %566 = vmatprep.subr.bf16.mxu0 0
  %567 = vmatpush1.bf16.msra.mxu0 %v384
  %568 = vmatprep.subr.bf16.mxu0 0
  %569 = vmatpush1.bf16.msra.mxu0 %v385
  %570 = vmatprep.subr.bf16.mxu0 0
  %571 = vmatpush1.bf16.msra.mxu0 %v386
  %572 = vmatprep.subr.bf16.mxu0 0
  %573 = vmatpush1.bf16.msra.mxu0 0
  %574 = vmatprep.subr.bf16.mxu0 0
  %575 = vmatpush1.bf16.msra.mxu0 0
  %576 = vmatprep.subr.bf16.mxu0 0
  %577 = vmatpush1.bf16.msra.mxu0 0
  %578 = vmatprep.subr.bf16.mxu0 0
  %579 = vmatpush1.bf16.msra.mxu0 0
  %580 = vmatprep.subr.bf16.mxu0 0
  %581 = vmatpush1.bf16.msra.mxu0 0
  %582 = vmatprep.subr.bf16.mxu0 0
  %583 = vmatpush1.bf16.msra.mxu0 0
  %584 = vmatprep.subr.bf16.mxu0 0
  %585 = vmatpush1.bf16.msra.mxu0 0
  %586 = vmatprep.subr.bf16.mxu0 0
  %587 = vmatpush1.bf16.msra.mxu0 0
  %588 = vmatprep.subr.bf16.mxu0 0
  %589 = vmatpush1.bf16.msra.mxu0 0
  %590 = vmatprep.subr.bf16.mxu0 0
  %591 = vmatpush1.bf16.msra.mxu0 0
  %592 = vmatprep.subr.bf16.mxu0 0
  %593 = vmatpush1.bf16.msra.mxu0 0
  %594 = vmatprep.subr.bf16.mxu0 0
  %595 = vmatpush1.bf16.msra.mxu0 0
  %596 = vmatprep.mubr.bf16.mxu0 0
  %597 = vmatmul.mubr.bf16.gmra.mrb[0].mxu0 %v425
  %v598 = vpop.f32.mrb[0].mxu0
  %v599 = vadd.f32 %v535, %v598
  %v600 = vpop.f32.mrb[0].mxu0
  %v601 = vpop.f32.mrb[0].mxu0
  %v602 = vadd.f32 %v538, %v601
  %v603 = vpop.f32.mrb[0].mxu0
  %604 = vmatprep.mubr.bf16.mxu0 0
  %605 = vmatmul.mubr.bf16.gmra.mrb[0].mxu0 %v428
  %v606 = vpop.f32.mrb[0].mxu0
  %v607 = vadd.f32 %v543, %v606
  %v608 = vpop.f32.mrb[0].mxu0
  %v609 = vpop.f32.mrb[0].mxu0
  %v610 = vadd.f32 %v546, %v609
  %v611 = vpop.f32.mrb[0].mxu0
  %612 = vmatprep.mubr.bf16.mxu0 0
  %613 = vmatmul.mubr.bf16.gmra.mrb[0].mxu0 %v431
  %v614 = vpop.f32.mrb[0].mxu0
  %v615 = vadd.f32 %v551, %v614
  %v616 = vpop.f32.mrb[0].mxu0
  %v617 = vpop.f32.mrb[0].mxu0
  %v618 = vadd.f32 %v554, %v617
  %v619 = vpop.f32.mrb[0].mxu0
  %620 = vmatprep.mubr.bf16.mxu0 0
  %621 = vmatmul.mubr.bf16.gmra.mrb[0].mxu0 %v434
  %v622 = vpop.f32.mrb[0].mxu0
  %v623 = vadd.f32 %v559, %v622
  %v624 = vpop.f32.mrb[0].mxu0
  %v625 = vpop.f32.mrb[0].mxu0
  %v626 = vpop.f32.mrb[0].mxu0
  %627 = vdwg.mxu0
  %vm628 = vcmask 785408
  %629 = vst.msk [vmem:[%s3] sm:$0xff] %vm628, %v599
  %630 = vst.msk [vmem:[%s3 + $0x8] sm:$0xff] %vm628, %v602
  %631 = vst.msk [vmem:[%s3 + $0x10] sm:$0xff] %vm628, %v607
  %632 = vst.msk [vmem:[%s3 + $0x18] sm:$0xff] %vm628, %v610
  %633 = vst.msk [vmem:[%s3 + $0x20] sm:$0xff] %vm628, %v615
  %634 = vst.msk [vmem:[%s3 + $0x28] sm:$0xff] %vm628, %v618
  %635 = vst.msk [vmem:[%s3 + $0x30] sm:$0xff] %vm628, %v623
  // Predicated region
  $region14: #{stem_forward.21} parent=0 // pred_check
    _
  $region15: #{stem_forward.21} parent=0 // pred_check_branch
    %637 = sbr.rel (0) target = $region17
  $region16: #{stem_forward.21} parent=0 // pred_region
    _
  $region17: #{stem_forward.21} parent=0 // pred_fallthru
    _
  // Predicated region
  $region18: #{stem_forward.21} parent=0 // pred_check
    _
  $region19: #{stem_forward.21} parent=0 // pred_check_branch
    %639 = sbr.rel (0) target = $region21
  $region20: #{stem_forward.21} parent=0 // pred_region
    _
  $region21: #{stem_forward.21} parent=0 // pred_fallthru
    _

// kernel: stem_forward.24
$region0: #{stem_forward.24}
  #allocation0 [shape = 'u32[]', space=smem, size = 0x4, offset = 0x4, fixed_abs, tag = 'smem constant byte address 0x4 - core index']
  #allocation1 [shape = 'u32[144,128]{1,0:T(1,128)}', space=vmem, size = 0x12000, scoped, tag = 'internal scratch']
  #allocation2 [shape = 'f32[8,192]{1,0:T(8,128)}', space=vmem, size = 0x2000, scoped, tag = 'scratch operand']
  %s0 = inlined_call_operand.vmem [shape: f32[9,8,192], index: 0, kind: input, shape index: {}]
  %s1 = inlined_call_operand.vmem [shape: f32[8,192], index: 1, kind: output, shape index: {}]
  %s2 = sld [smem:[#allocation0]]
  $region45: #{stem_forward.24} parent=0
    _
  %s4 = ssub.s32 1, %s2
  %s5 = scalar_select 0, %s4, %s2
  loop: start=0, step=1, limit=11
  $region2: #{stem_forward.24} parent=0 // loop_pre_header
    _
  $region3: #{stem_forward.24} parent=0 // loop_header
    %s7 = sphi 0, %s11
    %p8 = scmp.ge.s32.totalorder %s7, 11
    %s14 = sphi 0, %s26
    %s15 = sphi 0, %s22
    %s16 = sphi 0, %s14
    %s17 = sphi 0, %s15
    %s18 = sphi 0, %s16
    %s19 = sphi 0, %s17
    %s31 = sphi 0, %s33
    %s34 = sphi 0, %s31
    %s35 = sphi 0, %s34
    %s51 = sphi 0, %s35
    %s57 = sphi 0, %s59
    %s60 = sphi 0, %s57
    %s61 = sphi 0, %s60
    %s77 = sphi 0, %s61
  $region4: #{stem_forward.24} parent=0 // loop_header_branch
    %10 = sbr.rel (%p8) target = $region8
  $region5: #{stem_forward.24} parent=0 // loop_body
    %s12 = ssub.s32 %s7, 1
    %s13 = ssub.s32 %s7, 2
    %s20 = sadd.s32 1, %s15
    %p21 = scmp.ge.s32.totalorder %s20, 9
    %s22 = scalar_select %p21, 0, %s20
    %s23 = sadd.s32 1, %s14
    %s24 = scalar_select %p21, %s23, %s14
    %p25 = scmp.ge.s32.totalorder %s24, 1
    %s26 = scalar_select %p25, 0, %s24
    %s27 = ssub.s32 %s15, %s22
    %s28 = ssub.s32 %s14, %s26
    %s29 = sor.u32 %s27, %s28
    %p30 = scmp.eq.s32.totalorder %s29, 0
    %s32 = sadd.s32 %s31, 1
    %s33 = scalar_select %p30, %s31, %s32
    %p36 = pneg %p30
    %p37 = scmp.eq.s32.totalorder %s7, 8
    %p38 = por %p36, %p37
    %p39 = scmp.ne.s32.totalorder %s31, %s34
    %p40 = scmp.eq.s32.totalorder %s7, 0
    %p41 = por %p39, %p40
    %p42 = scmp.ne.s32.totalorder %s31, %s34
    %p43 = scmp.eq.s32.totalorder %s12, 8
    %p44 = por %p42, %p43
    %p45 = scmp.ne.s32.totalorder %s34, %s35
    %p46 = scmp.eq.s32.totalorder %s12, 0
    %p47 = por %p45, %p46
    %p48 = scmp.ne.s32.totalorder %s34, %s35
    %p49 = scmp.eq.s32.totalorder %s13, 8
    %p50 = por %p48, %p49
    %p52 = scmp.ne.s32.totalorder %s35, %s51
    %p53 = scmp.eq.s32.totalorder %s13, 0
    %p54 = por %p52, %p53
    %s55 = ssub.s32 %s14, %s26
    %p56 = scmp.eq.s32.totalorder %s55, 0
    %s58 = sadd.s32 %s57, 1
    %s59 = scalar_select %p56, %s57, %s58
    %p62 = pneg %p56
    %p63 = scmp.eq.s32.totalorder %s7, 8
    %p64 = por %p62, %p63
    %p65 = scmp.ne.s32.totalorder %s57, %s60
    %p66 = scmp.eq.s32.totalorder %s7, 0
    %p67 = por %p65, %p66
    %p68 = scmp.ne.s32.totalorder %s57, %s60
    %p69 = scmp.eq.s32.totalorder %s12, 8
    %p70 = por %p68, %p69
    %p71 = scmp.ne.s32.totalorder %s60, %s61
    %p72 = scmp.eq.s32.totalorder %s12, 0
    %p73 = por %p71, %p72
    %p74 = scmp.ne.s32.totalorder %s60, %s61
    %p75 = scmp.eq.s32.totalorder %s13, 8
    %p76 = por %p74, %p75
    %p78 = scmp.ne.s32.totalorder %s61, %s77
    %p79 = scmp.eq.s32.totalorder %s13, 0
    %p80 = por %p78, %p79
    %p81 = scmp.le.s32.totalorder 1, %s7
    %p82 = scmp.lt.s32.totalorder %s7, 10
    %p83 = pnand %p81, %p82
    %p84 = pneg %p83
    // Predicated region
    $region9: #{stem_forward.24} parent=5 // pred_check
      _
    $region10: #{stem_forward.24} parent=5 // pred_check_branch
      %86 = sbr.rel (%p83) target = $region12
    $region11: #{stem_forward.24} parent=5 // pred_region
      %s87 = ssub.s32 %s7, 1
    $region12: #{stem_forward.24} parent=5 // pred_fallthru
      _
    %p88 = scmp.lt.s32.totalorder %s7, 9
    // Predicated region
    $region13: #{stem_forward.24} parent=5 // pred_check
      %p89 = pneg %p88
    $region14: #{stem_forward.24} parent=5 // pred_check_branch
      %91 = sbr.rel (%p89) target = $region16
    $region15: #{stem_forward.24} parent=5 // pred_region
      // Predicated region
      $region17: #{stem_forward.24} parent=15 // pred_check
        %p92 = pneg %p41
      $region18: #{stem_forward.24} parent=15 // pred_check_branch
        %94 = sbr.rel (%p92) target = $region20
      $region19: #{stem_forward.24} parent=15 // pred_region
        %p95 = scmp.lt.s32.totalorder %s15, 8
        %s96 = scalar_select %p95, %s15, 8
        %p97 = scmp.lt.s32.totalorder %s14, 0
        %s98 = scalar_select %p97, %s14, 0
        %s99 = smul.addr %s98, 2
        %s100 = smul.addr %s96, 2
        %s101 = sadd.s32 %s99, %s100
        %s102 = smul.addr %s101, 8
        %s103 = scalar_lea.vmem %s0, %s102
      $region20: #{stem_forward.24} parent=15 // pred_fallthru
        _
    $region16: #{stem_forward.24} parent=5 // pred_fallthru
      _
    %p104 = scmp.le.s32.totalorder 1, %s7
    %p105 = scmp.lt.s32.totalorder %s7, 10
    %p106 = pnand %p104, %p105
    %p107 = pneg %p106
    // Predicated region
    $region21: #{stem_forward.24} parent=5 // pred_check
      _
    $region22: #{stem_forward.24} parent=5 // pred_check_branch
      %109 = sbr.rel (%p106) target = $region24
    $region23: #{stem_forward.24} parent=5 // pred_region
      %s110 = ssub.s32 %s7, 1
      %p111 = scmp.lt.s32.totalorder %s17, 8
      %s112 = scalar_select %p111, %s17, 8
      %p113 = scmp.lt.s32.totalorder %s16, 0
      %s114 = scalar_select %p113, %s16, 0
      %s115 = smul.addr %s114, 2
      %s116 = smul.addr %s112, 2
      %s117 = sadd.s32 %s115, %s116
      %s118 = smul.addr %s117, 8
      %s119 = scalar_lea.vmem %s0, %s118
      %p120 = pneg %p47
      %p121 = pneg %p44
      %p122 = pneg %p73
      %p123 = pneg %p70
      %p124 = scmp.lt.s32.totalorder %s16, 0
      %s125 = scalar_select %p124, %s16, 0
      %s126 = smul.addr %s125, 2
      %s127 = smul.addr %s126, 8
      %s128 = scalar_lea.vmem %s1, %s127
      %p129 = scmp.lt.s32.totalorder %s17, 8
      %s130 = scalar_select %p129, %s17, 8
      %p131 = scmp.lt.s32.totalorder %s16, 0
      %s132 = scalar_select %p131, %s16, 0
      %s133 = smul.addr %s132, 2
      %s134 = smul.addr %s130, 2
      %s135 = sadd.s32 %s133, %s134
      %s136 = smul.addr %s135, 8
      %s137 = scalar_lea.vmem %s0, %s136
      %p138 = scmp.lt.s32.totalorder %s16, 0
      %s139 = scalar_select %p138, %s16, 0
      %s140 = smul.addr %s139, 2
      %s141 = smul.addr %s140, 8
      %s142 = scalar_lea.vmem %s1, %s141
      %p143 = scmp.eq.s32.totalorder %s17, 0
      // Predicated region
      $region25: #{stem_forward.24} parent=23 // pred_check
        %p144 = pneg %p143
      $region26: #{stem_forward.24} parent=23 // pred_check_branch
        %146 = sbr.rel (%p144) target = $region28
      $region27: #{stem_forward.24} parent=23 // pred_region
        %147 = vst [vmem:[#allocation2] sm:$0xff] -inf
        %vm148 = vcmask 523264
        %149 = vst.msk [vmem:[#allocation2 + $0x8] sm:$0xff] %vm148, -inf
      $region28: #{stem_forward.24} parent=23 // pred_fallthru
        _
      %v150 = vld [vmem:[#allocation2] sm:$0xff]
      %v151 = vld [vmem:[#allocation2 + $0x8] sm:$0xff]
      %v152 = vld [vmem:[%s137] sm:$0xff]
      %v153 = vld [vmem:[%s137 + $0x8] sm:$0xff]
      %v154 = vmax.f32 %v150, %v152
      %v155 = vmax.f32 %v151, %v153
      %156 = vst [vmem:[#allocation2] sm:$0xff] %v154
      %vm157 = vcmask 523264
      %158 = vst.msk [vmem:[#allocation2 + $0x8] sm:$0xff] %vm157, %v155
      %p159 = scmp.eq.s32.totalorder %s17, 8
      // Predicated region
      $region29: #{stem_forward.24} parent=23 // pred_check
        %p160 = pneg %p159
      $region30: #{stem_forward.24} parent=23 // pred_check_branch
        %162 = sbr.rel (%p160) target = $region32
      $region31: #{stem_forward.24} parent=23 // pred_region
        %v163 = vld [vmem:[#allocation2] sm:$0xff]
        %v164 = vld [vmem:[#allocation2 + $0x8] sm:$0xff]
        %165 = vst [vmem:[%s142] sm:$0xff] %v163
        %166 = vst.msk [vmem:[%s142 + $0x8] sm:$0xff] %vm157, %v164
      $region32: #{stem_forward.24} parent=23 // pred_fallthru
        _
      %p167 = scmp.lt.s32.totalorder %s16, 0
      %s168 = scalar_select %p167, %s16, 0
      %s169 = smul.addr %s168, 2
      %s170 = smul.addr %s169, 8
      %s171 = scalar_lea.vmem %s1, %s170
      // Predicated region
      $region33: #{stem_forward.24} parent=23 // pred_check
        %p172 = pneg %p70
      $region34: #{stem_forward.24} parent=23 // pred_check_branch
        %174 = sbr.rel (%p172) target = $region36
      $region35: #{stem_forward.24} parent=23 // pred_region
        _
      $region36: #{stem_forward.24} parent=23 // pred_fallthru
        _
      // Predicated region
      $region37: #{stem_forward.24} parent=23 // pred_check
        %p175 = pneg %p70
      $region38: #{stem_forward.24} parent=23 // pred_check_branch
        %177 = sbr.rel (%p175) target = $region40
      $region39: #{stem_forward.24} parent=23 // pred_region
        %p178 = scmp.lt.s32.totalorder %s16, 0
        %s179 = scalar_select %p178, %s16, 0
        %s180 = smul.addr %s179, 2
        %s181 = smul.addr %s180, 8
        %s182 = scalar_lea.vmem %s1, %s181
      $region40: #{stem_forward.24} parent=23 // pred_fallthru
        _
    $region24: #{stem_forward.24} parent=5 // pred_fallthru
      _
    %p183 = scmp.le.s32.totalorder 2, %s7
    // Predicated region
    $region41: #{stem_forward.24} parent=5 // pred_check
      %p184 = pneg %p183
    $region42: #{stem_forward.24} parent=5 // pred_check_branch
      %186 = sbr.rel (%p184) target = $region44
    $region43: #{stem_forward.24} parent=5 // pred_region
      %s187 = ssub.s32 %s7, 2
    $region44: #{stem_forward.24} parent=5 // pred_fallthru
      _
  $region6: #{stem_forward.24} parent=0 // loop_footer
    %s11 = sadd.s32 1, %s7
  $region7: #{stem_forward.24} parent=0 // loop_footer_branch
    %6 = sbr.rel target = $region3
  $region8: #{stem_forward.24} parent=0 // loop_exit
    _

// kernel: stem_forward.25
$region0: #{stem_forward.25}
  #allocation0 [shape = 'u32[]', space=smem, size = 0x4, offset = 0x4, fixed_abs, tag = 'smem constant byte address 0x4 - core index']
  #allocation1 [shape = 'u32[144,128]{1,0:T(1,128)}', space=vmem, size = 0x12000, scoped, tag = 'internal scratch']
  %s0 = inlined_call_operand.vmem [shape: bf16[8,1728], index: 0, kind: input, shape index: {}]
  %s1 = inlined_call_operand.vmem [shape: bf16[1728,192], index: 1, kind: input, shape index: {}]
  %s2 = inlined_call_operand.vmem [shape: f32[1,192], index: 2, kind: input, shape index: {}]
  %s3 = inlined_call_operand.vmem [shape: f32[8,192], index: 3, kind: output, shape index: {}]
  %s4 = sld [smem:[#allocation0]]
  $region22: #{stem_forward.25} parent=0
    _
  %s6 = ssub.s32 1, %s4
  %s7 = scalar_select 0, %s6, %s4
  // Predicated region
  $region2: #{stem_forward.25} parent=0 // pred_check
    _
  $region3: #{stem_forward.25} parent=0 // pred_check_branch
    %9 = sbr.rel (0) target = $region5
  $region4: #{stem_forward.25} parent=0 // pred_region
    _
  $region5: #{stem_forward.25} parent=0 // pred_fallthru
    _
  // Predicated region
  $region6: #{stem_forward.25} parent=0 // pred_check
    _
  $region7: #{stem_forward.25} parent=0 // pred_check_branch
    %11 = sbr.rel (0) target = $region9
  $region8: #{stem_forward.25} parent=0 // pred_region
    _
  $region9: #{stem_forward.25} parent=0 // pred_fallthru
    _
  // Predicated region
  $region10: #{stem_forward.25} parent=0 // pred_check
    _
  $region11: #{stem_forward.25} parent=0 // pred_check_branch
    %13 = sbr.rel (0) target = $region13
  $region12: #{stem_forward.25} parent=0 // pred_region
    _
  $region13: #{stem_forward.25} parent=0 // pred_fallthru
    _
  %v15 = vld [vmem:[%s0] sm:$0xff]
  %v16 = vld [vmem:[%s0 + $0x8] sm:$0xff]
  %v17 = vld [vmem:[%s0 + $0x10] sm:$0xff]
  %v18 = vld [vmem:[%s0 + $0x18] sm:$0xff]
  %v19 = vld [vmem:[%s0 + $0x20] sm:$0xff]
  %v20 = vld [vmem:[%s0 + $0x28] sm:$0xff]
  %v21 = vld [vmem:[%s0 + $0x30] sm:$0xff]
  %v22 = vld [vmem:[%s1] sm:$0xff]
  %v23 = vld [vmem:[%s1 + $0x8] sm:$0xff]
  %v24 = vld [vmem:[%s1 + $0x10] sm:$0xff]
  %v25 = vld [vmem:[%s1 + $0x18] sm:$0xff]
  %v26 = vld [vmem:[%s1 + $0x20] sm:$0xff]
  %v27 = vld [vmem:[%s1 + $0x28] sm:$0xff]
  %v28 = vld [vmem:[%s1 + $0x30] sm:$0xff]
  %v29 = vld [vmem:[%s1 + $0x38] sm:$0xff]
  %v30 = vld [vmem:[%s1 + $0x40] sm:$0xff]
  %v31 = vld [vmem:[%s1 + $0x48] sm:$0xff]
  %v32 = vld [vmem:[%s1 + $0x50] sm:$0xff]
  %v33 = vld [vmem:[%s1 + $0x58] sm:$0xff]
  %v34 = vld [vmem:[%s1 + $0x60] sm:$0xff]
  %v35 = vld [vmem:[%s1 + $0x68] sm:$0xff]
  %v36 = vld [vmem:[%s1 + $0x70] sm:$0xff]
  %v37 = vld [vmem:[%s1 + $0x78] sm:$0xff]
  %v38 = vld [vmem:[%s1 + $0x80] sm:$0xff]
  %v39 = vld [vmem:[%s1 + $0x88] sm:$0xff]
  %v40 = vld [vmem:[%s1 + $0x90] sm:$0xff]
  %v41 = vld [vmem:[%s1 + $0x98] sm:$0xff]
  %v42 = vld [vmem:[%s1 + $0xa0] sm:$0xff]
  %v43 = vld [vmem:[%s1 + $0xa8] sm:$0xff]
  %v44 = vld [vmem:[%s1 + $0xb0] sm:$0xff]
  %v45 = vld [vmem:[%s1 + $0xb8] sm:$0xff]
  %v46 = vld [vmem:[%s1 + $0xc0] sm:$0xff]
  %v47 = vld [vmem:[%s1 + $0xc8] sm:$0xff]
  %v48 = vld [vmem:[%s1 + $0xd0] sm:$0xff]
  %v49 = vld [vmem:[%s1 + $0xd8] sm:$0xff]
  %v50 = vld [vmem:[%s1 + $0xe0] sm:$0xff]
  %v51 = vld [vmem:[%s1 + $0xe8] sm:$0xff]
  %v52 = vld [vmem:[%s1 + $0xf0] sm:$0xff]
  %v53 = vld [vmem:[%s1 + $0xf8] sm:$0xff]
  %v54 = vld [vmem:[%s1 + $0x100] sm:$0xff]
  %v55 = vld [vmem:[%s1 + $0x108] sm:$0xff]
  %v56 = vld [vmem:[%s1 + $0x110] sm:$0xff]
  %v57 = vld [vmem:[%s1 + $0x118] sm:$0xff]
  %v58 = vld [vmem:[%s1 + $0x120] sm:$0xff]
  %v59 = vld [vmem:[%s1 + $0x128] sm:$0xff]
  %v60 = vld [vmem:[%s1 + $0x130] sm:$0xff]
  %v61 = vld [vmem:[%s1 + $0x138] sm:$0xff]
  %v62 = vld [vmem:[%s1 + $0x140] sm:$0xff]
  %v63 = vld [vmem:[%s1 + $0x148] sm:$0xff]
  %v64 = vld [vmem:[%s1 + $0x150] sm:$0xff]
  %v65 = vld [vmem:[%s1 + $0x158] sm:$0xff]
  %v66 = vld [vmem:[%s1 + $0x160] sm:$0xff]
  %v67 = vld [vmem:[%s1 + $0x168] sm:$0xff]
  %v68 = vld [vmem:[%s1 + $0x170] sm:$0xff]
  %v69 = vld [vmem:[%s1 + $0x178] sm:$0xff]
  %v70 = vld [vmem:[%s1 + $0x180] sm:$0xff]
  %v71 = vld [vmem:[%s1 + $0x188] sm:$0xff]
  %v72 = vld [vmem:[%s1 + $0x190] sm:$0xff]
  %v73 = vld [vmem:[%s1 + $0x198] sm:$0xff]
  %v74 = vld [vmem:[%s1 + $0x1a0] sm:$0xff]
  %v75 = vld [vmem:[%s1 + $0x1a8] sm:$0xff]
  %v76 = vld [vmem:[%s1 + $0x1b0] sm:$0xff]
  %v77 = vld [vmem:[%s1 + $0x1b8] sm:$0xff]
  %v78 = vld [vmem:[%s1 + $0x1c0] sm:$0xff]
  %v79 = vld [vmem:[%s1 + $0x1c8] sm:$0xff]
  %v80 = vld [vmem:[%s1 + $0x1d0] sm:$0xff]
  %v81 = vld [vmem:[%s1 + $0x1d8] sm:$0xff]
  %v82 = vld [vmem:[%s1 + $0x1e0] sm:$0xff]
  %v83 = vld [vmem:[%s1 + $0x1e8] sm:$0xff]
  %v84 = vld [vmem:[%s1 + $0x1f0] sm:$0xff]
  %v85 = vld [vmem:[%s1 + $0x1f8] sm:$0xff]
  %v86 = vld [vmem:[%s1 + $0x200] sm:$0xff]
  %v87 = vld [vmem:[%s1 + $0x208] sm:$0xff]
  %v88 = vld [vmem:[%s1 + $0x210] sm:$0xff]
  %v89 = vld [vmem:[%s1 + $0x218] sm:$0xff]
  %v90 = vld [vmem:[%s1 + $0x220] sm:$0xff]
  %v91 = vld [vmem:[%s1 + $0x228] sm:$0xff]
  %v92 = vld [vmem:[%s1 + $0x230] sm:$0xff]
  %v93 = vld [vmem:[%s1 + $0x238] sm:$0xff]
  %v94 = vld [vmem:[%s1 + $0x240] sm:$0xff]
  %v95 = vld [vmem:[%s1 + $0x248] sm:$0xff]
  %v96 = vld [vmem:[%s1 + $0x250] sm:$0xff]
  %v97 = vld [vmem:[%s1 + $0x258] sm:$0xff]
  %v98 = vld [vmem:[%s1 + $0x260] sm:$0xff]
  %v99 = vld [vmem:[%s1 + $0x268] sm:$0xff]
  %v100 = vld [vmem:[%s1 + $0x270] sm:$0xff]
  %v101 = vld [vmem:[%s1 + $0x278] sm:$0xff]
  %v102 = vld [vmem:[%s1 + $0x280] sm:$0xff]
  %v103 = vld [vmem:[%s1 + $0x288] sm:$0xff]
  %v104 = vld [vmem:[%s1 + $0x290] sm:$0xff]
  %v105 = vld [vmem:[%s1 + $0x298] sm:$0xff]
  %v106 = vld [vmem:[%s1 + $0x2a0] sm:$0xff]
  %v107 = vld [vmem:[%s1 + $0x2a8] sm:$0xff]
  %v108 = vld [vmem:[%s1 + $0x2b0] sm:$0xff]
  %v109 = vld [vmem:[%s1 + $0x2b8] sm:$0xff]
  %v110 = vld [vmem:[%s1 + $0x2c0] sm:$0xff]
  %v111 = vld [vmem:[%s1 + $0x2c8] sm:$0xff]
  %v112 = vld [vmem:[%s1 + $0x2d0] sm:$0xff]
  %v113 = vld [vmem:[%s1 + $0x2d8] sm:$0xff]
  %v114 = vld [vmem:[%s1 + $0x2e0] sm:$0xff]
  %v115 = vld [vmem:[%s1 + $0x2e8] sm:$0xff]
  %v116 = vld [vmem:[%s1 + $0x2f0] sm:$0xff]
  %v117 = vld [vmem:[%s1 + $0x2f8] sm:$0xff]
  %v118 = vld [vmem:[%s1 + $0x300] sm:$0xff]
  %v119 = vld [vmem:[%s1 + $0x308] sm:$0xff]
  %v120 = vld [vmem:[%s1 + $0x310] sm:$0xff]
  %v121 = vld [vmem:[%s1 + $0x318] sm:$0xff]
  %v122 = vld [vmem:[%s1 + $0x320] sm:$0xff]
  %v123 = vld [vmem:[%s1 + $0x328] sm:$0xff]
  %v124 = vld [vmem:[%s1 + $0x330] sm:$0xff]
  %v125 = vld [vmem:[%s1 + $0x338] sm:$0xff]
  %v126 = vld [vmem:[%s1 + $0x340] sm:$0xff]
  %v127 = vld [vmem:[%s1 + $0x348] sm:$0xff]
  %v128 = vld [vmem:[%s1 + $0x350] sm:$0xff]
  %v129 = vld [vmem:[%s1 + $0x358] sm:$0xff]
  %v130 = vld [vmem:[%s1 + $0x360] sm:$0xff]
  %v131 = vld [vmem:[%s1 + $0x368] sm:$0xff]
  %v132 = vld [vmem:[%s1 + $0x370] sm:$0xff]
  %v133 = vld [vmem:[%s1 + $0x378] sm:$0xff]
  %v134 = vld [vmem:[%s1 + $0x380] sm:$0xff]
  %v135 = vld [vmem:[%s1 + $0x388] sm:$0xff]
  %v136 = vld [vmem:[%s1 + $0x390] sm:$0xff]
  %v137 = vld [vmem:[%s1 + $0x398] sm:$0xff]
  %v138 = vld [vmem:[%s1 + $0x3a0] sm:$0xff]
  %v139 = vld [vmem:[%s1 + $0x3a8] sm:$0xff]
  %v140 = vld [vmem:[%s1 + $0x3b0] sm:$0xff]
  %v141 = vld [vmem:[%s1 + $0x3b8] sm:$0xff]
  %v142 = vld [vmem:[%s1 + $0x3c0] sm:$0xff]
  %v143 = vld [vmem:[%s1 + $0x3c8] sm:$0xff]
  %v144 = vld [vmem:[%s1 + $0x3d0] sm:$0xff]
  %v145 = vld [vmem:[%s1 + $0x3d8] sm:$0xff]
  %v146 = vld [vmem:[%s1 + $0x3e0] sm:$0xff]
  %v147 = vld [vmem:[%s1 + $0x3e8] sm:$0xff]
  %v148 = vld [vmem:[%s1 + $0x3f0] sm:$0xff]
  %v149 = vld [vmem:[%s1 + $0x3f8] sm:$0xff]
  %v150 = vld [vmem:[%s1 + $0x400] sm:$0xff]
  %v151 = vld [vmem:[%s1 + $0x408] sm:$0xff]
  %v152 = vld [vmem:[%s1 + $0x410] sm:$0xff]
  %v153 = vld [vmem:[%s1 + $0x418] sm:$0xff]
  %v154 = vld [vmem:[%s1 + $0x420] sm:$0xff]
  %v155 = vld [vmem:[%s1 + $0x428] sm:$0xff]
  %v156 = vld [vmem:[%s1 + $0x430] sm:$0xff]
  %v157 = vld [vmem:[%s1 + $0x438] sm:$0xff]
  %v158 = vld [vmem:[%s1 + $0x440] sm:$0xff]
  %v159 = vld [vmem:[%s1 + $0x448] sm:$0xff]
  %v160 = vld [vmem:[%s1 + $0x450] sm:$0xff]
  %v161 = vld [vmem:[%s1 + $0x458] sm:$0xff]
  %v162 = vld [vmem:[%s1 + $0x460] sm:$0xff]
  %v163 = vld [vmem:[%s1 + $0x468] sm:$0xff]
  %v164 = vld [vmem:[%s1 + $0x470] sm:$0xff]
  %v165 = vld [vmem:[%s1 + $0x478] sm:$0xff]
  %v166 = vld [vmem:[%s1 + $0x480] sm:$0xff]
  %v167 = vld [vmem:[%s1 + $0x488] sm:$0xff]
  %v168 = vld [vmem:[%s1 + $0x490] sm:$0xff]
  %v169 = vld [vmem:[%s1 + $0x498] sm:$0xff]
  %v170 = vld [vmem:[%s1 + $0x4a0] sm:$0xff]
  %v171 = vld [vmem:[%s1 + $0x4a8] sm:$0xff]
  %v172 = vld [vmem:[%s1 + $0x4b0] sm:$0xff]
  %v173 = vld [vmem:[%s1 + $0x4b8] sm:$0xff]
  %v174 = vld [vmem:[%s1 + $0x4c0] sm:$0xff]
  %v175 = vld [vmem:[%s1 + $0x4c8] sm:$0xff]
  %v176 = vld [vmem:[%s1 + $0x4d0] sm:$0xff]
  %v177 = vld [vmem:[%s1 + $0x4d8] sm:$0xff]
  %v178 = vld [vmem:[%s1 + $0x4e0] sm:$0xff]
  %v179 = vld [vmem:[%s1 + $0x4e8] sm:$0xff]
  %v180 = vld [vmem:[%s1 + $0x4f0] sm:$0xff]
  %v181 = vld [vmem:[%s1 + $0x4f8] sm:$0xff]
  %v182 = vld [vmem:[%s1 + $0x500] sm:$0xff]
  %v183 = vld [vmem:[%s1 + $0x508] sm:$0xff]
  %v184 = vld [vmem:[%s1 + $0x510] sm:$0xff]
  %v185 = vld [vmem:[%s1 + $0x518] sm:$0xff]
  %v186 = vld [vmem:[%s1 + $0x520] sm:$0xff]
  %v187 = vld [vmem:[%s1 + $0x528] sm:$0xff]
  %v188 = vld [vmem:[%s1 + $0x530] sm:$0xff]
  %v189 = vld [vmem:[%s1 + $0x538] sm:$0xff]
  %v190 = vld [vmem:[%s1 + $0x540] sm:$0xff]
  %v191 = vld [vmem:[%s1 + $0x548] sm:$0xff]
  %v192 = vld [vmem:[%s1 + $0x550] sm:$0xff]
  %v193 = vld [vmem:[%s1 + $0x558] sm:$0xff]
  %v194 = vld [vmem:[%s1 + $0x560] sm:$0xff]
  %v195 = vld [vmem:[%s1 + $0x568] sm:$0xff]
  %v196 = vld [vmem:[%s1 + $0x570] sm:$0xff]
  %v197 = vld [vmem:[%s1 + $0x578] sm:$0xff]
  %v198 = vld [vmem:[%s1 + $0x580] sm:$0xff]
  %v199 = vld [vmem:[%s1 + $0x588] sm:$0xff]
  %v200 = vld [vmem:[%s1 + $0x590] sm:$0xff]
  %v201 = vld [vmem:[%s1 + $0x598] sm:$0xff]
  %v202 = vld [vmem:[%s1 + $0x5a0] sm:$0xff]
  %v203 = vld [vmem:[%s1 + $0x5a8] sm:$0xff]
  %v204 = vld [vmem:[%s1 + $0x5b0] sm:$0xff]
  %v205 = vld [vmem:[%s1 + $0x5b8] sm:$0xff]
  %v206 = vld [vmem:[%s1 + $0x5c0] sm:$0xff]
  %v207 = vld [vmem:[%s1 + $0x5c8] sm:$0xff]
  %v208 = vld [vmem:[%s1 + $0x5d0] sm:$0xff]
  %v209 = vld [vmem:[%s1 + $0x5d8] sm:$0xff]
  %v210 = vld [vmem:[%s1 + $0x5e0] sm:$0xff]
  %v211 = vld [vmem:[%s1 + $0x5e8] sm:$0xff]
  %v212 = vld [vmem:[%s1 + $0x5f0] sm:$0xff]
  %v213 = vld [vmem:[%s1 + $0x5f8] sm:$0xff]
  %v214 = vld [vmem:[%s1 + $0x600] sm:$0xff]
  %v215 = vld [vmem:[%s1 + $0x608] sm:$0xff]
  %v216 = vld [vmem:[%s1 + $0x610] sm:$0xff]
  %v217 = vld [vmem:[%s1 + $0x618] sm:$0xff]
  %v218 = vld [vmem:[%s1 + $0x620] sm:$0xff]
  %v219 = vld [vmem:[%s1 + $0x628] sm:$0xff]
  %v220 = vld [vmem:[%s1 + $0x630] sm:$0xff]
  %v221 = vld [vmem:[%s1 + $0x638] sm:$0xff]
  %v222 = vld [vmem:[%s1 + $0x640] sm:$0xff]
  %v223 = vld [vmem:[%s1 + $0x648] sm:$0xff]
  %v224 = vld [vmem:[%s1 + $0x650] sm:$0xff]
  %v225 = vld [vmem:[%s1 + $0x658] sm:$0xff]
  %v226 = vld [vmem:[%s1 + $0x660] sm:$0xff]
  %v227 = vld [vmem:[%s1 + $0x668] sm:$0xff]
  %v228 = vld [vmem:[%s1 + $0x670] sm:$0xff]
  %v229 = vld [vmem:[%s1 + $0x678] sm:$0xff]
  %v230 = vld [vmem:[%s1 + $0x680] sm:$0xff]
  %v231 = vld [vmem:[%s1 + $0x688] sm:$0xff]
  %v232 = vld [vmem:[%s1 + $0x690] sm:$0xff]
  %v233 = vld [vmem:[%s1 + $0x698] sm:$0xff]
  %v234 = vld [vmem:[%s1 + $0x6a0] sm:$0xff]
  %v235 = vld [vmem:[%s1 + $0x6a8] sm:$0xff]
  %v236 = vld [vmem:[%s1 + $0x6b0] sm:$0xff]
  %v237 = vld [vmem:[%s1 + $0x6b8] sm:$0xff]
  %v238 = vld [vmem:[%s2] sm:$0x3]
  %v240 = vlaneseq
  %v241 = vshrl.u32 %v240, 7
  %v242 = vsub.s32 0, %v241
  %v243 = vrot.slane %v238, %v242
  %v244 = vlaneseq
  %v245 = vshrl.u32 %v244, 7
  %v246 = vsub.s32 1, %v245
  %v247 = vrot.slane %v238, %v246
  %v257 = vunpack.c.l.b16 %v15
  %v258 = vunpack.c.h.b16 %v15
  %v259 = vunpack.c.l.b16 %v16
  %v260 = vunpack.c.h.b16 %v16
  %v261 = vunpack.c.l.b16 %v17
  %v262 = vunpack.c.h.b16 %v17
  %v263 = vunpack.c.l.b16 %v18
  %v264 = vunpack.c.h.b16 %v18
  %v265 = vunpack.c.l.b16 %v19
  %v266 = vunpack.c.h.b16 %v19
  %v267 = vunpack.c.l.b16 %v20
  %v268 = vunpack.c.h.b16 %v20
  %v269 = vunpack.c.l.b16 %v21
  %v270 = vunpack.c.h.b16 %v21
  %v271 = vpack.c.b16 %v257, %v257
  %v272 = vpack.c.b16 %v258, %v258
  %v273 = vpack.c.b16 %v259, %v259
  %v274 = vpack.c.b16 %v260, %v260
  %v275 = vpack.c.b16 %v261, %v261
  %v276 = vpack.c.b16 %v262, %v262
  %v277 = vpack.c.b16 %v263, %v263
  %v278 = vpack.c.b16 %v264, %v264
  %v279 = vpack.c.b16 %v265, %v265
  %v280 = vpack.c.b16 %v266, %v266
  %v281 = vpack.c.b16 %v267, %v267
  %v282 = vpack.c.b16 %v268, %v268
  %v283 = vpack.c.b16 %v269, %v269
  %v284 = vpack.c.b16 %v270, %v270
  %v514 = vunpack.c.l.b16 %v22
  %v515 = vunpack.c.h.b16 %v22
  %v516 = vunpack.c.l.b16 %v23
  %v517 = vunpack.c.h.b16 %v23
  %v518 = vunpack.c.l.b16 %v24
  %v519 = vunpack.c.h.b16 %v24
  %v520 = vunpack.c.l.b16 %v25
  %v521 = vunpack.c.h.b16 %v25
  %v522 = vunpack.c.l.b16 %v26
  %v523 = vunpack.c.h.b16 %v26
  %v524 = vunpack.c.l.b16 %v27
  %v525 = vunpack.c.h.b16 %v27
  %v526 = vunpack.c.l.b16 %v28
  %v527 = vunpack.c.h.b16 %v28
  %v528 = vunpack.c.l.b16 %v29
  %v529 = vunpack.c.h.b16 %v29
  %v530 = vunpack.c.l.b16 %v30
  %v531 = vunpack.c.h.b16 %v30
  %v532 = vunpack.c.l.b16 %v31
  %v533 = vunpack.c.h.b16 %v31
  %v534 = vunpack.c.l.b16 %v32
  %v535 = vunpack.c.h.b16 %v32
  %v536 = vunpack.c.l.b16 %v33
  %v537 = vunpack.c.h.b16 %v33
  %v538 = vunpack.c.l.b16 %v34
  %v539 = vunpack.c.h.b16 %v34
  %v540 = vunpack.c.l.b16 %v35
  %v541 = vunpack.c.h.b16 %v35
  %v542 = vunpack.c.l.b16 %v36
  %v543 = vunpack.c.h.b16 %v36
  %v544 = vunpack.c.l.b16 %v37
  %v545 = vunpack.c.h.b16 %v37
  %v546 = vunpack.c.l.b16 %v38
  %v547 = vunpack.c.h.b16 %v38
  %v548 = vunpack.c.l.b16 %v39
  %v549 = vunpack.c.h.b16 %v39
  %v550 = vunpack.c.l.b16 %v40
  %v551 = vunpack.c.h.b16 %v40
  %v552 = vunpack.c.l.b16 %v41
  %v553 = vunpack.c.h.b16 %v41
  %v554 = vunpack.c.l.b16 %v42
  %v555 = vunpack.c.h.b16 %v42
  %v556 = vunpack.c.l.b16 %v43
  %v557 = vunpack.c.h.b16 %v43
  %v558 = vunpack.c.l.b16 %v44
  %v559 = vunpack.c.h.b16 %v44
  %v560 = vunpack.c.l.b16 %v45
  %v561 = vunpack.c.h.b16 %v45
  %v562 = vunpack.c.l.b16 %v46
  %v563 = vunpack.c.h.b16 %v46
  %v564 = vunpack.c.l.b16 %v47
  %v565 = vunpack.c.h.b16 %v47
  %v566 = vunpack.c.l.b16 %v48
  %v567 = vunpack.c.h.b16 %v48
  %v568 = vunpack.c.l.b16 %v49
  %v569 = vunpack.c.h.b16 %v49
  %v570 = vunpack.c.l.b16 %v50
  %v571 = vunpack.c.h.b16 %v50
  %v572 = vunpack.c.l.b16 %v51
  %v573 = vunpack.c.h.b16 %v51
  %v574 = vunpack.c.l.b16 %v52
  %v575 = vunpack.c.h.b16 %v52
  %v576 = vunpack.c.l.b16 %v53
  %v577 = vunpack.c.h.b16 %v53
  %v578 = vunpack.c.l.b16 %v54
  %v579 = vunpack.c.h.b16 %v54
  %v580 = vunpack.c.l.b16 %v55
  %v581 = vunpack.c.h.b16 %v55
  %v582 = vunpack.c.l.b16 %v56
  %v583 = vunpack.c.h.b16 %v56
  %v584 = vunpack.c.l.b16 %v57
  %v585 = vunpack.c.h.b16 %v57
  %v586 = vunpack.c.l.b16 %v58
  %v587 = vunpack.c.h.b16 %v58
  %v588 = vunpack.c.l.b16 %v59
  %v589 = vunpack.c.h.b16 %v59
  %v590 = vunpack.c.l.b16 %v60
  %v591 = vunpack.c.h.b16 %v60
  %v592 = vunpack.c.l.b16 %v61
  %v593 = vunpack.c.h.b16 %v61
  %v594 = vunpack.c.l.b16 %v62
  %v595 = vunpack.c.h.b16 %v62
  %v596 = vunpack.c.l.b16 %v63
  %v597 = vunpack.c.h.b16 %v63
  %v598 = vunpack.c.l.b16 %v64
  %v599 = vunpack.c.h.b16 %v64
  %v600 = vunpack.c.l.b16 %v65
  %v601 = vunpack.c.h.b16 %v65
  %v602 = vunpack.c.l.b16 %v66
  %v603 = vunpack.c.h.b16 %v66
  %v604 = vunpack.c.l.b16 %v67
  %v605 = vunpack.c.h.b16 %v67
  %v606 = vunpack.c.l.b16 %v68
  %v607 = vunpack.c.h.b16 %v68
  %v608 = vunpack.c.l.b16 %v69
  %v609 = vunpack.c.h.b16 %v69
  %v610 = vunpack.c.l.b16 %v70
  %v611 = vunpack.c.h.b16 %v70
  %v612 = vunpack.c.l.b16 %v71
  %v613 = vunpack.c.h.b16 %v71
  %v614 = vunpack.c.l.b16 %v72
  %v615 = vunpack.c.h.b16 %v72
  %v616 = vunpack.c.l.b16 %v73
  %v617 = vunpack.c.h.b16 %v73
  %v618 = vunpack.c.l.b16 %v74
  %v619 = vunpack.c.h.b16 %v74
  %v620 = vunpack.c.l.b16 %v75
  %v621 = vunpack.c.h.b16 %v75
  %v622 = vunpack.c.l.b16 %v76
  %v623 = vunpack.c.h.b16 %v76
  %v624 = vunpack.c.l.b16 %v77
  %v625 = vunpack.c.h.b16 %v77
  %v626 = vunpack.c.l.b16 %v78
  %v627 = vunpack.c.h.b16 %v78
  %v628 = vunpack.c.l.b16 %v79
  %v629 = vunpack.c.h.b16 %v79
  %v630 = vunpack.c.l.b16 %v80
  %v631 = vunpack.c.h.b16 %v80
  %v632 = vunpack.c.l.b16 %v81
  %v633 = vunpack.c.h.b16 %v81
  %v634 = vunpack.c.l.b16 %v82
  %v635 = vunpack.c.h.b16 %v82
  %v636 = vunpack.c.l.b16 %v83
  %v637 = vunpack.c.h.b16 %v83
  %v638 = vunpack.c.l.b16 %v84
  %v639 = vunpack.c.h.b16 %v84
  %v640 = vunpack.c.l.b16 %v85
  %v641 = vunpack.c.h.b16 %v85
  %v642 = vunpack.c.l.b16 %v86
  %v643 = vunpack.c.h.b16 %v86
  %v644 = vunpack.c.l.b16 %v87
  %v645 = vunpack.c.h.b16 %v87
  %v646 = vunpack.c.l.b16 %v88
  %v647 = vunpack.c.h.b16 %v88
  %v648 = vunpack.c.l.b16 %v89
  %v649 = vunpack.c.h.b16 %v89
  %v650 = vunpack.c.l.b16 %v90
  %v651 = vunpack.c.h.b16 %v90
  %v652 = vunpack.c.l.b16 %v91
  %v653 = vunpack.c.h.b16 %v91
  %v654 = vunpack.c.l.b16 %v92
  %v655 = vunpack.c.h.b16 %v92
  %v656 = vunpack.c.l.b16 %v93
  %v657 = vunpack.c.h.b16 %v93
  %v658 = vunpack.c.l.b16 %v94
  %v659 = vunpack.c.h.b16 %v94
  %v660 = vunpack.c.l.b16 %v95
  %v661 = vunpack.c.h.b16 %v95
  %v662 = vunpack.c.l.b16 %v96
  %v663 = vunpack.c.h.b16 %v96
  %v664 = vunpack.c.l.b16 %v97
  %v665 = vunpack.c.h.b16 %v97
  %v666 = vunpack.c.l.b16 %v98
  %v667 = vunpack.c.h.b16 %v98
  %v668 = vunpack.c.l.b16 %v99
  %v669 = vunpack.c.h.b16 %v99
  %v670 = vunpack.c.l.b16 %v100
  %v671 = vunpack.c.h.b16 %v100
  %v672 = vunpack.c.l.b16 %v101
  %v673 = vunpack.c.h.b16 %v101
  %v674 = vunpack.c.l.b16 %v102
  %v675 = vunpack.c.h.b16 %v102
  %v676 = vunpack.c.l.b16 %v103
  %v677 = vunpack.c.h.b16 %v103
  %v678 = vunpack.c.l.b16 %v104
  %v679 = vunpack.c.h.b16 %v104
  %v680 = vunpack.c.l.b16 %v105
  %v681 = vunpack.c.h.b16 %v105
  %v682 = vunpack.c.l.b16 %v106
  %v683 = vunpack.c.h.b16 %v106
  %v684 = vunpack.c.l.b16 %v107
  %v685 = vunpack.c.h.b16 %v107
  %v686 = vunpack.c.l.b16 %v108
  %v687 = vunpack.c.h.b16 %v108
  %v688 = vunpack.c.l.b16 %v109
  %v689 = vunpack.c.h.b16 %v109
  %v690 = vunpack.c.l.b16 %v110
  %v691 = vunpack.c.h.b16 %v110
  %v692 = vunpack.c.l.b16 %v111
  %v693 = vunpack.c.h.b16 %v111
  %v694 = vunpack.c.l.b16 %v112
  %v695 = vunpack.c.h.b16 %v112
  %v696 = vunpack.c.l.b16 %v113
  %v697 = vunpack.c.h.b16 %v113
  %v698 = vunpack.c.l.b16 %v114
  %v699 = vunpack.c.h.b16 %v114
  %v700 = vunpack.c.l.b16 %v115
  %v701 = vunpack.c.h.b16 %v115
  %v702 = vunpack.c.l.b16 %v116
  %v703 = vunpack.c.h.b16 %v116
  %v704 = vunpack.c.l.b16 %v117
  %v705 = vunpack.c.h.b16 %v117
  %v706 = vunpack.c.l.b16 %v118
  %v707 = vunpack.c.h.b16 %v118
  %v708 = vunpack.c.l.b16 %v119
  %v709 = vunpack.c.h.b16 %v119
  %v710 = vunpack.c.l.b16 %v120
  %v711 = vunpack.c.h.b16 %v120
  %v712 = vunpack.c.l.b16 %v121
  %v713 = vunpack.c.h.b16 %v121
  %v714 = vunpack.c.l.b16 %v122
  %v715 = vunpack.c.h.b16 %v122
  %v716 = vunpack.c.l.b16 %v123
  %v717 = vunpack.c.h.b16 %v123
  %v718 = vunpack.c.l.b16 %v124
  %v719 = vunpack.c.h.b16 %v124
  %v720 = vunpack.c.l.b16 %v125
  %v721 = vunpack.c.h.b16 %v125
  %v722 = vunpack.c.l.b16 %v126
  %v723 = vunpack.c.h.b16 %v126
  %v724 = vunpack.c.l.b16 %v127
  %v725 = vunpack.c.h.b16 %v127
  %v726 = vunpack.c.l.b16 %v128
  %v727 = vunpack.c.h.b16 %v128
  %v728 = vunpack.c.l.b16 %v129
  %v729 = vunpack.c.h.b16 %v129
  %v730 = vunpack.c.l.b16 %v130
  %v731 = vunpack.c.h.b16 %v130
  %v732 = vunpack.c.l.b16 %v131
  %v733 = vunpack.c.h.b16 %v131
  %v734 = vunpack.c.l.b16 %v132
  %v735 = vunpack.c.h.b16 %v132
  %v736 = vunpack.c.l.b16 %v133
  %v737 = vunpack.c.h.b16 %v133
  %v738 = vunpack.c.l.b16 %v134
  %v739 = vunpack.c.h.b16 %v134
  %v740 = vunpack.c.l.b16 %v135
  %v741 = vunpack.c.h.b16 %v135
  %v742 = vunpack.c.l.b16 %v136
  %v743 = vunpack.c.h.b16 %v136
  %v744 = vunpack.c.l.b16 %v137
  %v745 = vunpack.c.h.b16 %v137
  %v746 = vunpack.c.l.b16 %v138
  %v747 = vunpack.c.h.b16 %v138
  %v748 = vunpack.c.l.b16 %v139
  %v749 = vunpack.c.h.b16 %v139
  %v750 = vunpack.c.l.b16 %v140
  %v751 = vunpack.c.h.b16 %v140
  %v752 = vunpack.c.l.b16 %v141
  %v753 = vunpack.c.h.b16 %v141
  %v754 = vunpack.c.l.b16 %v142
  %v755 = vunpack.c.h.b16 %v142
  %v756 = vunpack.c.l.b16 %v143
  %v757 = vunpack.c.h.b16 %v143
  %v758 = vunpack.c.l.b16 %v144
  %v759 = vunpack.c.h.b16 %v144
  %v760 = vunpack.c.l.b16 %v145
  %v761 = vunpack.c.h.b16 %v145
  %v762 = vunpack.c.l.b16 %v146
  %v763 = vunpack.c.h.b16 %v146
  %v764 = vunpack.c.l.b16 %v147
  %v765 = vunpack.c.h.b16 %v147
  %v766 = vunpack.c.l.b16 %v148
  %v767 = vunpack.c.h.b16 %v148
  %v768 = vunpack.c.l.b16 %v149
  %v769 = vunpack.c.h.b16 %v149
  %v770 = vunpack.c.l.b16 %v150
  %v771 = vunpack.c.h.b16 %v150
  %v772 = vunpack.c.l.b16 %v151
  %v773 = vunpack.c.h.b16 %v151
  %v774 = vunpack.c.l.b16 %v152
  %v775 = vunpack.c.h.b16 %v152
  %v776 = vunpack.c.l.b16 %v153
  %v777 = vunpack.c.h.b16 %v153
  %v778 = vunpack.c.l.b16 %v154
  %v779 = vunpack.c.h.b16 %v154
  %v780 = vunpack.c.l.b16 %v155
  %v781 = vunpack.c.h.b16 %v155
  %v782 = vunpack.c.l.b16 %v156
  %v783 = vunpack.c.h.b16 %v156
  %v784 = vunpack.c.l.b16 %v157
  %v785 = vunpack.c.h.b16 %v157
  %v786 = vunpack.c.l.b16 %v158
  %v787 = vunpack.c.h.b16 %v158
  %v788 = vunpack.c.l.b16 %v159
  %v789 = vunpack.c.h.b16 %v159
  %v790 = vunpack.c.l.b16 %v160
  %v791 = vunpack.c.h.b16 %v160
  %v792 = vunpack.c.l.b16 %v161
  %v793 = vunpack.c.h.b16 %v161
  %v794 = vunpack.c.l.b16 %v162
  %v795 = vunpack.c.h.b16 %v162
  %v796 = vunpack.c.l.b16 %v163
  %v797 = vunpack.c.h.b16 %v163
  %v798 = vunpack.c.l.b16 %v164
  %v799 = vunpack.c.h.b16 %v164
  %v800 = vunpack.c.l.b16 %v165
  %v801 = vunpack.c.h.b16 %v165
  %v802 = vunpack.c.l.b16 %v166
  %v803 = vunpack.c.h.b16 %v166
  %v804 = vunpack.c.l.b16 %v167
  %v805 = vunpack.c.h.b16 %v167
  %v806 = vunpack.c.l.b16 %v168
  %v807 = vunpack.c.h.b16 %v168
  %v808 = vunpack.c.l.b16 %v169
  %v809 = vunpack.c.h.b16 %v169
  %v810 = vunpack.c.l.b16 %v170
  %v811 = vunpack.c.h.b16 %v170
  %v812 = vunpack.c.l.b16 %v171
  %v813 = vunpack.c.h.b16 %v171
  %v814 = vunpack.c.l.b16 %v172
  %v815 = vunpack.c.h.b16 %v172
  %v816 = vunpack.c.l.b16 %v173
  %v817 = vunpack.c.h.b16 %v173
  %v818 = vunpack.c.l.b16 %v174
  %v819 = vunpack.c.h.b16 %v174
  %v820 = vunpack.c.l.b16 %v175
  %v821 = vunpack.c.h.b16 %v175
  %v822 = vunpack.c.l.b16 %v176
  %v823 = vunpack.c.h.b16 %v176
  %v824 = vunpack.c.l.b16 %v177
  %v825 = vunpack.c.h.b16 %v177
  %v826 = vunpack.c.l.b16 %v178
  %v827 = vunpack.c.h.b16 %v178
  %v828 = vunpack.c.l.b16 %v179
  %v829 = vunpack.c.h.b16 %v179
  %v830 = vunpack.c.l.b16 %v180
  %v831 = vunpack.c.h.b16 %v180
  %v832 = vunpack.c.l.b16 %v181
  %v833 = vunpack.c.h.b16 %v181
  %v834 = vunpack.c.l.b16 %v182
  %v835 = vunpack.c.h.b16 %v182
  %v836 = vunpack.c.l.b16 %v183
  %v837 = vunpack.c.h.b16 %v183
  %v838 = vunpack.c.l.b16 %v184
  %v839 = vunpack.c.h.b16 %v184
  %v840 = vunpack.c.l.b16 %v185
  %v841 = vunpack.c.h.b16 %v185
  %v842 = vunpack.c.l.b16 %v186
  %v843 = vunpack.c.h.b16 %v186
  %v844 = vunpack.c.l.b16 %v187
  %v845 = vunpack.c.h.b16 %v187
  %v846 = vunpack.c.l.b16 %v188
  %v847 = vunpack.c.h.b16 %v188
  %v848 = vunpack.c.l.b16 %v189
  %v849 = vunpack.c.h.b16 %v189
  %v850 = vunpack.c.l.b16 %v190
  %v851 = vunpack.c.h.b16 %v190
  %v852 = vunpack.c.l.b16 %v191
  %v853 = vunpack.c.h.b16 %v191
  %v854 = vunpack.c.l.b16 %v192
  %v855 = vunpack.c.h.b16 %v192
  %v856 = vunpack.c.l.b16 %v193
  %v857 = vunpack.c.h.b16 %v193
  %v858 = vunpack.c.l.b16 %v194
  %v859 = vunpack.c.h.b16 %v194
  %v860 = vunpack.c.l.b16 %v195
  %v861 = vunpack.c.h.b16 %v195
  %v862 = vunpack.c.l.b16 %v196
  %v863 = vunpack.c.h.b16 %v196
  %v864 = vunpack.c.l.b16 %v197
  %v865 = vunpack.c.h.b16 %v197
  %v866 = vunpack.c.l.b16 %v198
  %v867 = vunpack.c.h.b16 %v198
  %v868 = vunpack.c.l.b16 %v199
  %v869 = vunpack.c.h.b16 %v199
  %v870 = vunpack.c.l.b16 %v200
  %v871 = vunpack.c.h.b16 %v200
  %v872 = vunpack.c.l.b16 %v201
  %v873 = vunpack.c.h.b16 %v201
  %v874 = vunpack.c.l.b16 %v202
  %v875 = vunpack.c.h.b16 %v202
  %v876 = vunpack.c.l.b16 %v203
  %v877 = vunpack.c.h.b16 %v203
  %v878 = vunpack.c.l.b16 %v204
  %v879 = vunpack.c.h.b16 %v204
  %v880 = vunpack.c.l.b16 %v205
  %v881 = vunpack.c.h.b16 %v205
  %v882 = vunpack.c.l.b16 %v206
  %v883 = vunpack.c.h.b16 %v206
  %v884 = vunpack.c.l.b16 %v207
  %v885 = vunpack.c.h.b16 %v207
  %v886 = vunpack.c.l.b16 %v208
  %v887 = vunpack.c.h.b16 %v208
  %v888 = vunpack.c.l.b16 %v209
  %v889 = vunpack.c.h.b16 %v209
  %v890 = vunpack.c.l.b16 %v210
  %v891 = vunpack.c.h.b16 %v210
  %v892 = vunpack.c.l.b16 %v211
  %v893 = vunpack.c.h.b16 %v211
  %v894 = vunpack.c.l.b16 %v212
  %v895 = vunpack.c.h.b16 %v212
  %v896 = vunpack.c.l.b16 %v213
  %v897 = vunpack.c.h.b16 %v213
  %v898 = vunpack.c.l.b16 %v214
  %v899 = vunpack.c.h.b16 %v214
  %v900 = vunpack.c.l.b16 %v215
  %v901 = vunpack.c.h.b16 %v215
  %v902 = vunpack.c.l.b16 %v216
  %v903 = vunpack.c.h.b16 %v216
  %v904 = vunpack.c.l.b16 %v217
  %v905 = vunpack.c.h.b16 %v217
  %v906 = vunpack.c.l.b16 %v218
  %v907 = vunpack.c.h.b16 %v218
  %v908 = vunpack.c.l.b16 %v219
  %v909 = vunpack.c.h.b16 %v219
  %v910 = vunpack.c.l.b16 %v220
  %v911 = vunpack.c.h.b16 %v220
  %v912 = vunpack.c.l.b16 %v221
  %v913 = vunpack.c.h.b16 %v221
  %v914 = vunpack.c.l.b16 %v222
  %v915 = vunpack.c.h.b16 %v222
  %v916 = vunpack.c.l.b16 %v223
  %v917 = vunpack.c.h.b16 %v223
  %v918 = vunpack.c.l.b16 %v224
  %v919 = vunpack.c.h.b16 %v224
  %v920 = vunpack.c.l.b16 %v225
  %v921 = vunpack.c.h.b16 %v225
  %v922 = vunpack.c.l.b16 %v226
  %v923 = vunpack.c.h.b16 %v226
  %v924 = vunpack.c.l.b16 %v227
  %v925 = vunpack.c.h.b16 %v227
  %v926 = vunpack.c.l.b16 %v228
  %v927 = vunpack.c.h.b16 %v228
  %v928 = vunpack.c.l.b16 %v229
  %v929 = vunpack.c.h.b16 %v229
  %v930 = vunpack.c.l.b16 %v230
  %v931 = vunpack.c.h.b16 %v230
  %v932 = vunpack.c.l.b16 %v231
  %v933 = vunpack.c.h.b16 %v231
  %v934 = vunpack.c.l.b16 %v232
  %v935 = vunpack.c.h.b16 %v232
  %v936 = vunpack.c.l.b16 %v233
  %v937 = vunpack.c.h.b16 %v233
  %v938 = vunpack.c.l.b16 %v234
  %v939 = vunpack.c.h.b16 %v234
  %v940 = vunpack.c.l.b16 %v235
  %v941 = vunpack.c.h.b16 %v235
  %v942 = vunpack.c.l.b16 %v236
  %v943 = vunpack.c.h.b16 %v236
  %v944 = vunpack.c.l.b16 %v237
  %v945 = vunpack.c.h.b16 %v237
  %v946 = vpack.c.b16 %v516, %v514
  %v947 = vpack.c.b16 %v517, %v515
  %v948 = vpack.c.b16 %v520, %v518
  %v949 = vpack.c.b16 %v521, %v519
  %v950 = vpack.c.b16 %v524, %v522
  %v951 = vpack.c.b16 %v525, %v523
  %v952 = vpack.c.b16 %v528, %v526
  %v953 = vpack.c.b16 %v529, %v527
  %v954 = vpack.c.b16 %v532, %v530
  %v955 = vpack.c.b16 %v533, %v531
  %v956 = vpack.c.b16 %v536, %v534
  %v957 = vpack.c.b16 %v537, %v535
  %v958 = vpack.c.b16 %v540, %v538
  %v959 = vpack.c.b16 %v541, %v539
  %v960 = vpack.c.b16 %v544, %v542
  %v961 = vpack.c.b16 %v545, %v543
  %v962 = vpack.c.b16 %v548, %v546
  %v963 = vpack.c.b16 %v549, %v547
  %v964 = vpack.c.b16 %v552, %v550
  %v965 = vpack.c.b16 %v553, %v551
  %v966 = vpack.c.b16 %v556, %v554
  %v967 = vpack.c.b16 %v557, %v555
  %v968 = vpack.c.b16 %v560, %v558
  %v969 = vpack.c.b16 %v561, %v559
  %v970 = vpack.c.b16 %v564, %v562
  %v971 = vpack.c.b16 %v565, %v563
  %v972 = vpack.c.b16 %v568, %v566
  %v973 = vpack.c.b16 %v569, %v567
  %v974 = vpack.c.b16 %v572, %v570
  %v975 = vpack.c.b16 %v573, %v571
  %v976 = vpack.c.b16 %v576, %v574
  %v977 = vpack.c.b16 %v577, %v575
  %v978 = vpack.c.b16 %v580, %v578
  %v979 = vpack.c.b16 %v581, %v579
  %v980 = vpack.c.b16 %v584, %v582
  %v981 = vpack.c.b16 %v585, %v583
  %v982 = vpack.c.b16 %v588, %v586
  %v983 = vpack.c.b16 %v589, %v587
  %v984 = vpack.c.b16 %v592, %v590
  %v985 = vpack.c.b16 %v593, %v591
  %v986 = vpack.c.b16 %v596, %v594
  %v987 = vpack.c.b16 %v597, %v595
  %v988 = vpack.c.b16 %v600, %v598
  %v989 = vpack.c.b16 %v601, %v599
  %v990 = vpack.c.b16 %v604, %v602
  %v991 = vpack.c.b16 %v605, %v603
  %v992 = vpack.c.b16 %v608, %v606
  %v993 = vpack.c.b16 %v609, %v607
  %v994 = vpack.c.b16 %v612, %v610
  %v995 = vpack.c.b16 %v613, %v611
  %v996 = vpack.c.b16 %v616, %v614
  %v997 = vpack.c.b16 %v617, %v615
  %v998 = vpack.c.b16 %v620, %v618
  %v999 = vpack.c.b16 %v621, %v619
  %v1000 = vpack.c.b16 %v624, %v622
  %v1001 = vpack.c.b16 %v625, %v623
  %v1002 = vpack.c.b16 %v628, %v626
  %v1003 = vpack.c.b16 %v629, %v627
  %v1004 = vpack.c.b16 %v632, %v630
  %v1005 = vpack.c.b16 %v633, %v631
  %v1006 = vpack.c.b16 %v636, %v634
  %v1007 = vpack.c.b16 %v637, %v635
  %v1008 = vpack.c.b16 %v640, %v638
  %v1009 = vpack.c.b16 %v641, %v639
  %v1010 = vpack.c.b16 %v644, %v642
  %v1011 = vpack.c.b16 %v645, %v643
  %v1012 = vpack.c.b16 %v648, %v646
  %v1013 = vpack.c.b16 %v649, %v647
  %v1014 = vpack.c.b16 %v652, %v650
  %v1015 = vpack.c.b16 %v653, %v651
  %v1016 = vpack.c.b16 %v656, %v654
  %v1017 = vpack.c.b16 %v657, %v655
  %v1018 = vpack.c.b16 %v660, %v658
  %v1019 = vpack.c.b16 %v661, %v659
  %v1020 = vpack.c.b16 %v664, %v662
  %v1021 = vpack.c.b16 %v665, %v663
  %v1022 = vpack.c.b16 %v668, %v666
  %v1023 = vpack.c.b16 %v669, %v667
  %v1024 = vpack.c.b16 %v672, %v670
  %v1025 = vpack.c.b16 %v673, %v671
  %v1026 = vpack.c.b16 %v676, %v674
  %v1027 = vpack.c.b16 %v677, %v675
  %v1028 = vpack.c.b16 %v680, %v678
  %v1029 = vpack.c.b16 %v681, %v679
  %v1030 = vpack.c.b16 %v684, %v682
  %v1031 = vpack.c.b16 %v685, %v683
  %v1032 = vpack.c.b16 %v688, %v686
  %v1033 = vpack.c.b16 %v689, %v687
  %v1034 = vpack.c.b16 %v692, %v690
  %v1035 = vpack.c.b16 %v693, %v691
  %v1036 = vpack.c.b16 %v696, %v694
  %v1037 = vpack.c.b16 %v697, %v695
  %v1038 = vpack.c.b16 %v700, %v698
  %v1039 = vpack.c.b16 %v701, %v699
  %v1040 = vpack.c.b16 %v704, %v702
  %v1041 = vpack.c.b16 %v705, %v703
  %v1042 = vpack.c.b16 %v708, %v706
  %v1043 = vpack.c.b16 %v709, %v707
  %v1044 = vpack.c.b16 %v712, %v710
  %v1045 = vpack.c.b16 %v713, %v711
  %v1046 = vpack.c.b16 %v716, %v714
  %v1047 = vpack.c.b16 %v717, %v715
  %v1048 = vpack.c.b16 %v720, %v718
  %v1049 = vpack.c.b16 %v721, %v719
  %v1050 = vpack.c.b16 %v724, %v722
  %v1051 = vpack.c.b16 %v725, %v723
  %v1052 = vpack.c.b16 %v728, %v726
  %v1053 = vpack.c.b16 %v729, %v727
  %v1054 = vpack.c.b16 %v732, %v730
  %v1055 = vpack.c.b16 %v733, %v731
  %v1056 = vpack.c.b16 %v736, %v734
  %v1057 = vpack.c.b16 %v737, %v735
  %v1058 = vpack.c.b16 %v740, %v738
  %v1059 = vpack.c.b16 %v741, %v739
  %v1060 = vpack.c.b16 %v744, %v742
  %v1061 = vpack.c.b16 %v745, %v743
  %v1062 = vpack.c.b16 %v748, %v746
  %v1063 = vpack.c.b16 %v749, %v747
  %v1064 = vpack.c.b16 %v752, %v750
  %v1065 = vpack.c.b16 %v753, %v751
  %v1066 = vpack.c.b16 %v756, %v754
  %v1067 = vpack.c.b16 %v757, %v755
  %v1068 = vpack.c.b16 %v760, %v758
  %v1069 = vpack.c.b16 %v761, %v759
  %v1070 = vpack.c.b16 %v764, %v762
  %v1071 = vpack.c.b16 %v765, %v763
  %v1072 = vpack.c.b16 %v768, %v766
  %v1073 = vpack.c.b16 %v769, %v767
  %v1074 = vpack.c.b16 %v772, %v770
  %v1075 = vpack.c.b16 %v773, %v771
  %v1076 = vpack.c.b16 %v776, %v774
  %v1077 = vpack.c.b16 %v777, %v775
  %v1078 = vpack.c.b16 %v780, %v778
  %v1079 = vpack.c.b16 %v781, %v779
  %v1080 = vpack.c.b16 %v784, %v782
  %v1081 = vpack.c.b16 %v785, %v783
  %v1082 = vpack.c.b16 %v788, %v786
  %v1083 = vpack.c.b16 %v789, %v787
  %v1084 = vpack.c.b16 %v792, %v790
  %v1085 = vpack.c.b16 %v793, %v791
  %v1086 = vpack.c.b16 %v796, %v794
  %v1087 = vpack.c.b16 %v797, %v795
  %v1088 = vpack.c.b16 %v800, %v798
  %v1089 = vpack.c.b16 %v801, %v799
  %v1090 = vpack.c.b16 %v804, %v802
  %v1091 = vpack.c.b16 %v805, %v803
  %v1092 = vpack.c.b16 %v808, %v806
  %v1093 = vpack.c.b16 %v809, %v807
  %v1094 = vpack.c.b16 %v812, %v810
  %v1095 = vpack.c.b16 %v813, %v811
  %v1096 = vpack.c.b16 %v816, %v814
  %v1097 = vpack.c.b16 %v817, %v815
  %v1098 = vpack.c.b16 %v820, %v818
  %v1099 = vpack.c.b16 %v821, %v819
  %v1100 = vpack.c.b16 %v824, %v822
  %v1101 = vpack.c.b16 %v825, %v823
  %v1102 = vpack.c.b16 %v828, %v826
  %v1103 = vpack.c.b16 %v829, %v827
  %v1104 = vpack.c.b16 %v832, %v830
  %v1105 = vpack.c.b16 %v833, %v831
  %v1106 = vpack.c.b16 %v836, %v834
  %v1107 = vpack.c.b16 %v837, %v835
  %v1108 = vpack.c.b16 %v840, %v838
  %v1109 = vpack.c.b16 %v841, %v839
  %v1110 = vpack.c.b16 %v844, %v842
  %v1111 = vpack.c.b16 %v845, %v843
  %v1112 = vpack.c.b16 %v848, %v846
  %v1113 = vpack.c.b16 %v849, %v847
  %v1114 = vpack.c.b16 %v852, %v850
  %v1115 = vpack.c.b16 %v853, %v851
  %v1116 = vpack.c.b16 %v856, %v854
  %v1117 = vpack.c.b16 %v857, %v855
  %v1118 = vpack.c.b16 %v860, %v858
  %v1119 = vpack.c.b16 %v861, %v859
  %v1120 = vpack.c.b16 %v864, %v862
  %v1121 = vpack.c.b16 %v865, %v863
  %v1122 = vpack.c.b16 %v868, %v866
  %v1123 = vpack.c.b16 %v869, %v867
  %v1124 = vpack.c.b16 %v872, %v870
  %v1125 = vpack.c.b16 %v873, %v871
  %v1126 = vpack.c.b16 %v876, %v874
  %v1127 = vpack.c.b16 %v877, %v875
  %v1128 = vpack.c.b16 %v880, %v878
  %v1129 = vpack.c.b16 %v881, %v879
  %v1130 = vpack.c.b16 %v884, %v882
  %v1131 = vpack.c.b16 %v885, %v883
  %v1132 = vpack.c.b16 %v888, %v886
  %v1133 = vpack.c.b16 %v889, %v887
  %v1134 = vpack.c.b16 %v892, %v890
  %v1135 = vpack.c.b16 %v893, %v891
  %v1136 = vpack.c.b16 %v896, %v894
  %v1137 = vpack.c.b16 %v897, %v895
  %v1138 = vpack.c.b16 %v900, %v898
  %v1139 = vpack.c.b16 %v901, %v899
  %v1140 = vpack.c.b16 %v904, %v902
  %v1141 = vpack.c.b16 %v905, %v903
  %v1142 = vpack.c.b16 %v908, %v906
  %v1143 = vpack.c.b16 %v909, %v907
  %v1144 = vpack.c.b16 %v912, %v910
  %v1145 = vpack.c.b16 %v913, %v911
  %v1146 = vpack.c.b16 %v916, %v914
  %v1147 = vpack.c.b16 %v917, %v915
  %v1148 = vpack.c.b16 %v920, %v918
  %v1149 = vpack.c.b16 %v921, %v919
  %v1150 = vpack.c.b16 %v924, %v922
  %v1151 = vpack.c.b16 %v925, %v923
  %v1152 = vpack.c.b16 %v928, %v926
  %v1153 = vpack.c.b16 %v929, %v927
  %v1154 = vpack.c.b16 %v932, %v930
  %v1155 = vpack.c.b16 %v933, %v931
  %v1156 = vpack.c.b16 %v936, %v934
  %v1157 = vpack.c.b16 %v937, %v935
  %v1158 = vpack.c.b16 %v940, %v938
  %v1159 = vpack.c.b16 %v941, %v939
  %v1160 = vpack.c.b16 %v944, %v942
  %v1161 = vpack.c.b16 %v945, %v943
  %vm1378 = vcmask 523264
  %v1380 = vsel %vm1378, %v284, 0
  %1382 = vmatprep.subr.bf16.mxu0 %v947
  %1383 = vmatpush1.bf16.msra.mxu0 %v946
  %1384 = vmatprep.subr.bf16.mxu0 %v949
  %1385 = vmatpush1.bf16.msra.mxu0 %v948
  %1386 = vmatprep.subr.bf16.mxu0 %v951
  %1387 = vmatpush1.bf16.msra.mxu0 %v950
  %1388 = vmatprep.subr.bf16.mxu0 %v953
  %1389 = vmatpush1.bf16.msra.mxu0 %v952
  %1390 = vmatprep.subr.bf16.mxu0 %v955
  %1391 = vmatpush1.bf16.msra.mxu0 %v954
  %1392 = vmatprep.subr.bf16.mxu0 %v957
  %1393 = vmatpush1.bf16.msra.mxu0 %v956
  %1394 = vmatprep.subr.bf16.mxu0 %v959
  %1395 = vmatpush1.bf16.msra.mxu0 %v958
  %1396 = vmatprep.subr.bf16.mxu0 %v961
  %1397 = vmatpush1.bf16.msra.mxu0 %v960
  %1398 = vmatprep.subr.bf16.mxu0 %v963
  %1399 = vmatpush1.bf16.msra.mxu0 %v962
  %1400 = vmatprep.subr.bf16.mxu0 %v965
  %1401 = vmatpush1.bf16.msra.mxu0 %v964
  %1402 = vmatprep.subr.bf16.mxu0 %v967
  %1403 = vmatpush1.bf16.msra.mxu0 %v966
  %1404 = vmatprep.subr.bf16.mxu0 %v969
  %1405 = vmatpush1.bf16.msra.mxu0 %v968
  %1406 = vmatprep.subr.bf16.mxu0 %v971
  %1407 = vmatpush1.bf16.msra.mxu0 %v970
  %1408 = vmatprep.subr.bf16.mxu0 %v973
  %1409 = vmatpush1.bf16.msra.mxu0 %v972
  %1410 = vmatprep.subr.bf16.mxu0 %v975
  %1411 = vmatpush1.bf16.msra.mxu0 %v974
  %1412 = vmatprep.subr.bf16.mxu0 %v977
  %1413 = vmatpush1.bf16.msra.mxu0 %v976
  %1414 = vmatprep.mubr.bf16.mxu0 %v272
  %1415 = vmatmul.mubr.bf16.gmra.mrb[0].mxu0 %v271
  %v1416 = vpop.f32.mrb[0].mxu0
  %v1417 = vadd.f32 %v243, %v1416
  %v1418 = vpop.f32.mrb[0].mxu0
  %v1419 = vadd.f32 %v247, %v1418
  %v1420 = vpop.f32.mrb[0].mxu0
  %v1421 = vpop.f32.mrb[0].mxu0
  %1422 = vdwg.mxu0
  %1423 = vmatprep.subr.bf16.mxu0 %v979
  %1424 = vmatpush1.bf16.msra.mxu0 %v978
  %1425 = vmatprep.subr.bf16.mxu0 %v981
  %1426 = vmatpush1.bf16.msra.mxu0 %v980
  %1427 = vmatprep.subr.bf16.mxu0 %v983
  %1428 = vmatpush1.bf16.msra.mxu0 %v982
  %1429 = vmatprep.subr.bf16.mxu0 %v985
  %1430 = vmatpush1.bf16.msra.mxu0 %v984
  %1431 = vmatprep.subr.bf16.mxu0 %v987
  %1432 = vmatpush1.bf16.msra.mxu0 %v986
  %1433 = vmatprep.subr.bf16.mxu0 %v989
  %1434 = vmatpush1.bf16.msra.mxu0 %v988
  %1435 = vmatprep.subr.bf16.mxu0 %v991
  %1436 = vmatpush1.bf16.msra.mxu0 %v990
  %1437 = vmatprep.subr.bf16.mxu0 %v993
  %1438 = vmatpush1.bf16.msra.mxu0 %v992
  %1439 = vmatprep.subr.bf16.mxu0 %v995
  %1440 = vmatpush1.bf16.msra.mxu0 %v994
  %1441 = vmatprep.subr.bf16.mxu0 %v997
  %1442 = vmatpush1.bf16.msra.mxu0 %v996
  %1443 = vmatprep.subr.bf16.mxu0 %v999
  %1444 = vmatpush1.bf16.msra.mxu0 %v998
  %1445 = vmatprep.subr.bf16.mxu0 %v1001
  %1446 = vmatpush1.bf16.msra.mxu0 %v1000
  %1447 = vmatprep.subr.bf16.mxu0 %v1003
  %1448 = vmatpush1.bf16.msra.mxu0 %v1002
  %1449 = vmatprep.subr.bf16.mxu0 %v1005
  %1450 = vmatpush1.bf16.msra.mxu0 %v1004
  %1451 = vmatprep.subr.bf16.mxu0 %v1007
  %1452 = vmatpush1.bf16.msra.mxu0 %v1006
  %1453 = vmatprep.subr.bf16.mxu0 %v1009
  %1454 = vmatpush1.bf16.msra.mxu0 %v1008
  %1455 = vmatprep.mubr.bf16.mxu0 %v274
  %1456 = vmatmul.mubr.bf16.gmra.mrb[0].mxu0 %v273
  %v1457 = vpop.f32.mrb[0].mxu0
  %v1458 = vadd.f32 %v1417, %v1457
  %v1459 = vpop.f32.mrb[0].mxu0
  %v1460 = vadd.f32 %v1419, %v1459
  %v1461 = vpop.f32.mrb[0].mxu0
  %v1462 = vpop.f32.mrb[0].mxu0
  %1463 = vdwg.mxu0
  %1464 = vmatprep.subr.bf16.mxu0 %v1011
  %1465 = vmatpush1.bf16.msra.mxu0 %v1010
  %1466 = vmatprep.subr.bf16.mxu0 %v1013
  %1467 = vmatpush1.bf16.msra.mxu0 %v1012
  %1468 = vmatprep.subr.bf16.mxu0 %v1015
  %1469 = vmatpush1.bf16.msra.mxu0 %v1014
  %1470 = vmatprep.subr.bf16.mxu0 %v1017
  %1471 = vmatpush1.bf16.msra.mxu0 %v1016
  %1472 = vmatprep.subr.bf16.mxu0 %v1019
  %1473 = vmatpush1.bf16.msra.mxu0 %v1018
  %1474 = vmatprep.subr.bf16.mxu0 %v1021
  %1475 = vmatpush1.bf16.msra.mxu0 %v1020
  %1476 = vmatprep.subr.bf16.mxu0 %v1023
  %1477 = vmatpush1.bf16.msra.mxu0 %v1022
  %1478 = vmatprep.subr.bf16.mxu0 %v1025
  %1479 = vmatpush1.bf16.msra.mxu0 %v1024
  %1480 = vmatprep.subr.bf16.mxu0 %v1027
  %1481 = vmatpush1.bf16.msra.mxu0 %v1026
  %1482 = vmatprep.subr.bf16.mxu0 %v1029
  %1483 = vmatpush1.bf16.msra.mxu0 %v1028
  %1484 = vmatprep.subr.bf16.mxu0 %v1031
  %1485 = vmatpush1.bf16.msra.mxu0 %v1030
  %1486 = vmatprep.subr.bf16.mxu0 %v1033
  %1487 = vmatpush1.bf16.msra.mxu0 %v1032
  %1488 = vmatprep.subr.bf16.mxu0 %v1035
  %1489 = vmatpush1.bf16.msra.mxu0 %v1034
  %1490 = vmatprep.subr.bf16.mxu0 %v1037
  %1491 = vmatpush1.bf16.msra.mxu0 %v1036
  %1492 = vmatprep.subr.bf16.mxu0 %v1039
  %1493 = vmatpush1.bf16.msra.mxu0 %v1038
  %1494 = vmatprep.subr.bf16.mxu0 %v1041
  %1495 = vmatpush1.bf16.msra.mxu0 %v1040
  %1496 = vmatprep.mubr.bf16.mxu0 %v276
  %1497 = vmatmul.mubr.bf16.gmra.mrb[0].mxu0 %v275
  %v1498 = vpop.f32.mrb[0].mxu0
  %v1499 = vadd.f32 %v1458, %v1498
  %v1500 = vpop.f32.mrb[0].mxu0
  %v1501 = vadd.f32 %v1460, %v1500
  %v1502 = vpop.f32.mrb[0].mxu0
  %v1503 = vpop.f32.mrb[0].mxu0
  %1504 = vdwg.mxu0
  %1505 = vmatprep.subr.bf16.mxu0 %v1043
  %1506 = vmatpush1.bf16.msra.mxu0 %v1042
  %1507 = vmatprep.subr.bf16.mxu0 %v1045
  %1508 = vmatpush1.bf16.msra.mxu0 %v1044
  %1509 = vmatprep.subr.bf16.mxu0 %v1047
  %1510 = vmatpush1.bf16.msra.mxu0 %v1046
  %1511 = vmatprep.subr.bf16.mxu0 %v1049
  %1512 = vmatpush1.bf16.msra.mxu0 %v1048
  %1513 = vmatprep.subr.bf16.mxu0 %v1051
  %1514 = vmatpush1.bf16.msra.mxu0 %v1050
  %1515 = vmatprep.subr.bf16.mxu0 %v1053
  %1516 = vmatpush1.bf16.msra.mxu0 %v1052
  %1517 = vmatprep.subr.bf16.mxu0 %v1055
  %1518 = vmatpush1.bf16.msra.mxu0 %v1054
  %1519 = vmatprep.subr.bf16.mxu0 %v1057
  %1520 = vmatpush1.bf16.msra.mxu0 %v1056
  %1521 = vmatprep.subr.bf16.mxu0 %v1059
  %1522 = vmatpush1.bf16.msra.mxu0 %v1058
  %1523 = vmatprep.subr.bf16.mxu0 %v1061
  %1524 = vmatpush1.bf16.msra.mxu0 %v1060
  %1525 = vmatprep.subr.bf16.mxu0 %v1063
  %1526 = vmatpush1.bf16.msra.mxu0 %v1062
  %1527 = vmatprep.subr.bf16.mxu0 %v1065
  %1528 = vmatpush1.bf16.msra.mxu0 %v1064
  %1529 = vmatprep.subr.bf16.mxu0 %v1067
  %1530 = vmatpush1.bf16.msra.mxu0 %v1066
  %1531 = vmatprep.subr.bf16.mxu0 %v1069
  %1532 = vmatpush1.bf16.msra.mxu0 %v1068
  %1533 = vmatprep.subr.bf16.mxu0 %v1071
  %1534 = vmatpush1.bf16.msra.mxu0 %v1070
  %1535 = vmatprep.subr.bf16.mxu0 %v1073
  %1536 = vmatpush1.bf16.msra.mxu0 %v1072
  %1537 = vmatprep.mubr.bf16.mxu0 %v278
  %1538 = vmatmul.mubr.bf16.gmra.mrb[0].mxu0 %v277
  %v1539 = vpop.f32.mrb[0].mxu0
  %v1540 = vadd.f32 %v1499, %v1539
  %v1541 = vpop.f32.mrb[0].mxu0
  %v1542 = vadd.f32 %v1501, %v1541
  %v1543 = vpop.f32.mrb[0].mxu0
  %v1544 = vpop.f32.mrb[0].mxu0
  %1545 = vdwg.mxu0
  %1546 = vmatprep.subr.bf16.mxu0 %v1075
  %1547 = vmatpush1.bf16.msra.mxu0 %v1074
  %1548 = vmatprep.subr.bf16.mxu0 %v1077
  %1549 = vmatpush1.bf16.msra.mxu0 %v1076
  %1550 = vmatprep.subr.bf16.mxu0 %v1079
  %1551 = vmatpush1.bf16.msra.mxu0 %v1078
  %1552 = vmatprep.subr.bf16.mxu0 %v1081
  %1553 = vmatpush1.bf16.msra.mxu0 %v1080
  %1554 = vmatprep.subr.bf16.mxu0 %v1083
  %1555 = vmatpush1.bf16.msra.mxu0 %v1082
  %1556 = vmatprep.subr.bf16.mxu0 %v1085
  %1557 = vmatpush1.bf16.msra.mxu0 %v1084
  %1558 = vmatprep.subr.bf16.mxu0 %v1087
  %1559 = vmatpush1.bf16.msra.mxu0 %v1086
  %1560 = vmatprep.subr.bf16.mxu0 %v1089
  %1561 = vmatpush1.bf16.msra.mxu0 %v1088
  %1562 = vmatprep.subr.bf16.mxu0 %v1091
  %1563 = vmatpush1.bf16.msra.mxu0 %v1090
  %1564 = vmatprep.subr.bf16.mxu0 %v1093
  %1565 = vmatpush1.bf16.msra.mxu0 %v1092
  %1566 = vmatprep.subr.bf16.mxu0 %v1095
  %1567 = vmatpush1.bf16.msra.mxu0 %v1094
  %1568 = vmatprep.subr.bf16.mxu0 %v1097
  %1569 = vmatpush1.bf16.msra.mxu0 %v1096
  %1570 = vmatprep.subr.bf16.mxu0 %v1099
  %1571 = vmatpush1.bf16.msra.mxu0 %v1098
  %1572 = vmatprep.subr.bf16.mxu0 %v1101
  %1573 = vmatpush1.bf16.msra.mxu0 %v1100
  %1574 = vmatprep.subr.bf16.mxu0 %v1103
  %1575 = vmatpush1.bf16.msra.mxu0 %v1102
  %1576 = vmatprep.subr.bf16.mxu0 %v1105
  %1577 = vmatpush1.bf16.msra.mxu0 %v1104
  %1578 = vmatprep.mubr.bf16.mxu0 %v280
  %1579 = vmatmul.mubr.bf16.gmra.mrb[0].mxu0 %v279
  %v1580 = vpop.f32.mrb[0].mxu0
  %v1581 = vadd.f32 %v1540, %v1580
  %v1582 = vpop.f32.mrb[0].mxu0
  %v1583 = vadd.f32 %v1542, %v1582
  %v1584 = vpop.f32.mrb[0].mxu0
  %v1585 = vpop.f32.mrb[0].mxu0
  %1586 = vdwg.mxu0
  %1587 = vmatprep.subr.bf16.mxu0 %v1107
  %1588 = vmatpush1.bf16.msra.mxu0 %v1106
  %1589 = vmatprep.subr.bf16.mxu0 %v1109
  %1590 = vmatpush1.bf16.msra.mxu0 %v1108
  %1591 = vmatprep.subr.bf16.mxu0 %v1111
  %1592 = vmatpush1.bf16.msra.mxu0 %v1110
  %1593 = vmatprep.subr.bf16.mxu0 %v1113
  %1594 = vmatpush1.bf16.msra.mxu0 %v1112
  %1595 = vmatprep.subr.bf16.mxu0 %v1115
  %1596 = vmatpush1.bf16.msra.mxu0 %v1114
  %1597 = vmatprep.subr.bf16.mxu0 %v1117
  %1598 = vmatpush1.bf16.msra.mxu0 %v1116
  %1599 = vmatprep.subr.bf16.mxu0 %v1119
  %1600 = vmatpush1.bf16.msra.mxu0 %v1118
  %1601 = vmatprep.subr.bf16.mxu0 %v1121
  %1602 = vmatpush1.bf16.msra.mxu0 %v1120
  %1603 = vmatprep.subr.bf16.mxu0 %v1123
  %1604 = vmatpush1.bf16.msra.mxu0 %v1122
  %1605 = vmatprep.subr.bf16.mxu0 %v1125
  %1606 = vmatpush1.bf16.msra.mxu0 %v1124
  %1607 = vmatprep.subr.bf16.mxu0 %v1127
  %1608 = vmatpush1.bf16.msra.mxu0 %v1126
  %1609 = vmatprep.subr.bf16.mxu0 %v1129
  %1610 = vmatpush1.bf16.msra.mxu0 %v1128
  %1611 = vmatprep.subr.bf16.mxu0 %v1131
  %1612 = vmatpush1.bf16.msra.mxu0 %v1130
  %1613 = vmatprep.subr.bf16.mxu0 %v1133
  %1614 = vmatpush1.bf16.msra.mxu0 %v1132
  %1615 = vmatprep.subr.bf16.mxu0 %v1135
  %1616 = vmatpush1.bf16.msra.mxu0 %v1134
  %1617 = vmatprep.subr.bf16.mxu0 %v1137
  %1618 = vmatpush1.bf16.msra.mxu0 %v1136
  %1619 = vmatprep.mubr.bf16.mxu0 %v282
  %1620 = vmatmul.mubr.bf16.gmra.mrb[0].mxu0 %v281
  %v1621 = vpop.f32.mrb[0].mxu0
  %v1622 = vadd.f32 %v1581, %v1621
  %v1623 = vpop.f32.mrb[0].mxu0
  %v1624 = vadd.f32 %v1583, %v1623
  %v1625 = vpop.f32.mrb[0].mxu0
  %v1626 = vpop.f32.mrb[0].mxu0
  %1627 = vdwg.mxu0
  %1628 = vmatprep.subr.bf16.mxu0 %v1139
  %1629 = vmatpush1.bf16.msra.mxu0 %v1138
  %1630 = vmatprep.subr.bf16.mxu0 %v1141
  %1631 = vmatpush1.bf16.msra.mxu0 %v1140
  %1632 = vmatprep.subr.bf16.mxu0 %v1143
  %1633 = vmatpush1.bf16.msra.mxu0 %v1142
  %1634 = vmatprep.subr.bf16.mxu0 %v1145
  %1635 = vmatpush1.bf16.msra.mxu0 %v1144
  %1636 = vmatprep.subr.bf16.mxu0 %v1147
  %1637 = vmatpush1.bf16.msra.mxu0 %v1146
  %1638 = vmatprep.subr.bf16.mxu0 %v1149
  %1639 = vmatpush1.bf16.msra.mxu0 %v1148
  %1640 = vmatprep.subr.bf16.mxu0 %v1151
  %1641 = vmatpush1.bf16.msra.mxu0 %v1150
  %1642 = vmatprep.subr.bf16.mxu0 %v1153
  %1643 = vmatpush1.bf16.msra.mxu0 %v1152
  %1644 = vmatprep.subr.bf16.mxu0 %v1155
  %1645 = vmatpush1.bf16.msra.mxu0 %v1154
  %1646 = vmatprep.subr.bf16.mxu0 %v1157
  %1647 = vmatpush1.bf16.msra.mxu0 %v1156
  %1648 = vmatprep.subr.bf16.mxu0 %v1159
  %1649 = vmatpush1.bf16.msra.mxu0 %v1158
  %1650 = vmatprep.subr.bf16.mxu0 %v1161
  %1651 = vmatpush1.bf16.msra.mxu0 %v1160
  %1652 = vmatprep.subr.bf16.mxu0 0
  %1653 = vmatpush1.bf16.msra.mxu0 0
  %1654 = vmatprep.subr.bf16.mxu0 0
  %1655 = vmatpush1.bf16.msra.mxu0 0
  %1656 = vmatprep.subr.bf16.mxu0 0
  %1657 = vmatpush1.bf16.msra.mxu0 0
  %1658 = vmatprep.subr.bf16.mxu0 0
  %1659 = vmatpush1.bf16.msra.mxu0 0
  %1660 = vmatprep.mubr.bf16.mxu0 %v1380
  %1661 = vmatmul.mubr.bf16.gmra.mrb[0].mxu0 %v283
  %v1662 = vpop.f32.mrb[0].mxu0
  %v1663 = vadd.f32 %v1622, %v1662
  %v1664 = vpop.f32.mrb[0].mxu0
  %v1665 = vadd.f32 %v1624, %v1664
  %v1666 = vpop.f32.mrb[0].mxu0
  %v1667 = vpop.f32.mrb[0].mxu0
  %1668 = vdwg.mxu0
  %1669 = vst [vmem:[%s3] sm:$0xff] %v1663
  %1670 = vst.msk [vmem:[%s3 + $0x8] sm:$0xff] %vm1378, %v1665
  // Predicated region
  $region14: #{stem_forward.25} parent=0 // pred_check
    _
  $region15: #{stem_forward.25} parent=0 // pred_check_branch
    %1672 = sbr.rel (0) target = $region17
  $region16: #{stem_forward.25} parent=0 // pred_region
    _
  $region17: #{stem_forward.25} parent=0 // pred_fallthru
    _
  // Predicated region
  $region18: #{stem_forward.25} parent=0 // pred_check
    _
  $region19: #{stem_forward.25} parent=0 // pred_check_branch
    %1674 = sbr.rel (0) target = $region21
  $region20: #{stem_forward.25} parent=0 // pred_region
    _
  $region21: #{stem_forward.25} parent=0 // pred_fallthru
    _

</llo_original>
